<compile_context>
chip_gen: v6e
topology: v6e:2x2x1
jax: 0.10.0
libtpu: 0.0.40
codegen_flags: <defaults>
</compile_context>

<pallas_src>
import functools

import jax
import jax.numpy as jnp
from jax import lax
from jax.experimental import pallas as pl
from jax.experimental.pallas import tpu as pltpu

C_FEAT = 1024 * 2          # global feature channels
C_X = 128                  # per-point feature channels
C_IN = C_FEAT + C_X        # 2176 (only used by the reference)
C1, C2, C3, C4 = 1024, 512, 256, 1
GROUPS = 32
EPS = 1e-5                 # GroupNorm eps (PyTorch default)
SLOPE = 0.01               # leaky_relu negative_slope (PyTorch default)


# ----------------------------- Pallas kernel -------------------------------

def _gn_lrelu(z0, bias, gamma, beta, mt, n_valid, out_dtype):
    """GroupNorm (over N x channels-in-group, per sample) + LeakyReLU, fused.

    z0:    (Bt, N, C) f32 pre-activation WITHOUT the per-channel bias.
    bias:  (Bt, C) or (1, C) f32 per-channel bias (conv bias / folded feature);
           folded analytically into the statistics and the affine shift, so it
           is never broadcast over the (Bt*N, C) tensor.
    gamma, beta: (1, C).  mt: (G, C) 0/1 group indicator.
    n_valid: number of real (non-padded) points; padded rows of z0 are zero.
    """
    bt, n, c = z0.shape
    g = mt.shape[0]
    cg = c // g
    nf = jnp.float32(n_valid)

    s0 = jnp.sum(z0, axis=1)                               # (Bt, C)
    ss0 = jnp.sum(z0 * z0, axis=1)                         # (Bt, C)
    s_c = s0 + nf * bias                                   # sums of z0 + bias
    ss_c = ss0 + (2.0 * bias) * s0 + nf * (bias * bias)

    dn = (((1,), (1,)), ((), ()))                          # contract on C
    s_g = lax.dot_general(s_c, mt, dn, preferred_element_type=jnp.float32)
    ss_g = lax.dot_general(ss_c, mt, dn, preferred_element_type=jnp.float32)

    cnt = nf * jnp.float32(cg)
    mean_g = s_g / cnt                                     # (Bt, G)
    var_g = ss_g / cnt - mean_g * mean_g                   # biased (torch GN)
    rstd_g = lax.rsqrt(var_g + EPS)

    mean_c = jnp.dot(mean_g, mt, preferred_element_type=jnp.float32)  # (Bt, C)
    rstd_c = jnp.dot(rstd_g, mt, preferred_element_type=jnp.float32)  # (Bt, C)
    scale_c = gamma * rstd_c
    shift_c = beta + (bias - mean_c) * scale_c

    y = z0 * scale_c[:, None, :] + shift_c[:, None, :]
    y = jnp.where(y >= 0.0, y, SLOPE * y)
    return y.astype(out_dtype)


def _make_kernel(n_valid, needs_mask):
    def kernel(x_ref, fb_ref,
               w1_ref, g1_ref, be1_ref, mt1_ref,
               w2_ref, b2_ref, g2_ref, be2_ref, mt2_ref,
               w3_ref, b3_ref, g3_ref, be3_ref, mt3_ref,
               w4_ref, b4_ref,
               out_ref):
        bt, n, cx = x_ref.shape
        x2d = x_ref[...].reshape(bt * n, cx)                 # bf16 (Bt*N, 128)

        if needs_mask:
            row_mask = lax.broadcasted_iota(jnp.int32, (1, n, 1), 1) < n_valid

        # layer 1: per-point half of conv1; global feature + b1 arrive as fb.
        z = jnp.dot(x2d, w1_ref[...],
                    preferred_element_type=jnp.float32).reshape(bt, n, C1)
        h = _gn_lrelu(z, fb_ref[...], g1_ref[...], be1_ref[...], mt1_ref[...],
                      n_valid, jnp.bfloat16)
        if needs_mask:
            h = jnp.where(row_mask, h, jnp.array(0, h.dtype))

        # layer 2
        z = jnp.dot(h.reshape(bt * n, C1), w2_ref[...],
                    preferred_element_type=jnp.float32).reshape(bt, n, C2)
        h = _gn_lrelu(z, b2_ref[...], g2_ref[...], be2_ref[...], mt2_ref[...],
                      n_valid, jnp.bfloat16)
        if needs_mask:
            h = jnp.where(row_mask, h, jnp.array(0, h.dtype))

        # layer 3 (kept f32: feeds the VPU multiply-reduce below)
        z = jnp.dot(h.reshape(bt * n, C2), w3_ref[...],
                    preferred_element_type=jnp.float32).reshape(bt, n, C3)
        h = _gn_lrelu(z, b3_ref[...], g3_ref[...], be3_ref[...], mt3_ref[...],
                      n_valid, jnp.float32)

        # layer 4 (Cout=1): VPU multiply-and-reduce, lane-dense (Bt, N) store.
        out_ref[...] = jnp.sum(h * w4_ref[...], axis=-1) + b4_ref[0, 0]

    return kernel


# ----------------------------- glue / wrapper -------------------------------

def _standardize(w):
    """Weight standardization of the custom Conv1d (w: (Cout, Cin, 1))."""
    mean = w.mean(axis=1, keepdims=True).mean(axis=2, keepdims=True)
    w = w - mean
    flat = w.reshape(w.shape[0], -1)
    std = jnp.std(flat, axis=1, ddof=1).reshape(-1, 1, 1) + 1e-5  # unbiased
    return w / std


def _group_indicators(c, groups=GROUPS):
    """Lane-dense (G, C) 0/1 indicator."""
    ch = jnp.arange(c) // (c // groups)
    return (jnp.arange(groups)[:, None] == ch[None, :]).astype(jnp.float32)


def _budgets():
    """Generation-aware row budget + VMEM limit (v7x only has 64 MiB VMEM)."""
    try:
        vmem = pltpu.get_tpu_info().vmem_capacity_bytes
    except Exception:
        vmem = 128 << 20
    if vmem <= (64 << 20):                       # v7x-class
        return 512, 1536, min(int(vmem * 3 // 4), 48 << 20)
    return 1024, 4096, min(int(vmem * 3 // 4), 96 << 20)


def _pick_block_batch(b, n, row_target, row_cap, min_grid):
    """Largest divisor of b with Bt*N <= row_cap and B/Bt >= min_grid;
    stop growing once the row target is met."""
    best = 1
    for cand in range(1, b + 1):
        if b % cand:
            continue
        if cand * n > row_cap or b // cand < min_grid:
            break
        best = cand
        if cand * n >= row_target:
            break
    return best


def pointnet_segment_pallas(x, feat, p):
    """x: (B, 128, N), feat: (B, 2048, 1) -> (B, 1, N) (PyTorch NCL layout)."""
    B, cx, N = x.shape
    assert cx == C_X

    row_target, row_cap, vmem_limit = _budgets()

    # Pad N to a multiple of 16 (bf16 sublane pack) so in-kernel reshapes are
    # free views; padded rows are zero and masked out of the GN statistics.
    n_pad = -(-N // 16) * 16
    needs_mask = n_pad != N

    bt = _pick_block_batch(B, n_pad, row_target, row_cap, min(B, 2))
    G = B // bt

    # Weight standardization + transpose to (Cin, Cout); split W1 into the
    # global-feature half (folded into a per-sample bias) and the x half.
    w1s = _standardize(p["w1"])[:, :, 0]                         # (1024, 2176)
    w1_feat = w1s[:, :C_FEAT].T                                   # (2048, 1024)
    w1_x = w1s[:, C_FEAT:].T.astype(jnp.bfloat16)                 # (128, 1024)
    w2 = _standardize(p["w2"])[:, :, 0].T.astype(jnp.bfloat16)    # (1024, 512)
    w3 = _standardize(p["w3"])[:, :, 0].T.astype(jnp.bfloat16)    # (512, 256)
    w4_row = p["w4"][:, :, 0]                                     # (1, 256) f32
    b4 = p["b4"].reshape(1, 1).astype(jnp.float32)                # scalar, SMEM

    # Fold the N-broadcast global feature AND b1 into a per-sample bias (f32).
    fbias = (jnp.dot(feat[:, :, 0], w1_feat)
             + p["b1"][None, :]).astype(jnp.float32)              # (B, 1024)
    fbias = fbias.reshape(G, bt, C1)

    # Per-point features, points-major, bf16 for the MXU.
    xin = jnp.transpose(x, (0, 2, 1)).astype(jnp.bfloat16)        # (B, N, 128)
    if needs_mask:
        xin = jnp.pad(xin, ((0, 0), (0, n_pad - N), (0, 0)))
    xin = xin.reshape(G, bt, n_pad, C_X)

    b2, b3 = p["b2"][None, :], p["b3"][None, :]
    g1, g2, g3 = p["g1"][None, :], p["g2"][None, :], p["g3"][None, :]
    be1, be2, be3 = p["be1"][None, :], p["be2"][None, :], p["be3"][None, :]
    mt1, mt2, mt3 = _group_indicators(C1), _group_indicators(C2), _group_indicators(C3)

    def const2d(arr):
        return pl.BlockSpec(arr.shape, lambda g: (0, 0))

    in_specs = [
        pl.BlockSpec((None, bt, n_pad, C_X), lambda g: (g, 0, 0, 0)),  # x
        pl.BlockSpec((None, bt, C1), lambda g: (g, 0, 0)),             # fbias
        const2d(w1_x), const2d(g1), const2d(be1), const2d(mt1),
        const2d(w2), const2d(b2), const2d(g2), const2d(be2), const2d(mt2),
        const2d(w3), const2d(b3), const2d(g3), const2d(be3), const2d(mt3),
        const2d(w4_row),
        pl.BlockSpec(memory_space=pltpu.MemorySpace.SMEM),             # b4
    ]

    kernel = _make_kernel(N, needs_mask)

    out = pl.pallas_call(
        kernel,
        out_shape=jax.ShapeDtypeStruct((G, bt, n_pad), jnp.float32),
        grid_spec=pltpu.PrefetchScalarGridSpec(
            num_scalar_prefetch=0,
            grid=(G,),
            in_specs=in_specs,
            out_specs=pl.BlockSpec((None, bt, n_pad), lambda g: (g, 0, 0)),
        ),
        compiler_params=pltpu.CompilerParams(
            dimension_semantics=("parallel",),
            vmem_limit_bytes=vmem_limit,
        ),
    )(xin, fbias,
      w1_x, g1, be1, mt1,
      w2, b2, g2, be2, mt2,
      w3, b3, g3, be3, mt3,
      w4_row, b4)

    out = out.reshape(B, 1, n_pad)            # lane-dense: plain reshape only
    if needs_mask:
        out = out[:, :, :N]
    return out


# ----------------------------- pure-JAX reference ---------------------------

def _ref_forward(x, feat, p):
    B, _, N = x.shape
    h = jnp.concatenate([jnp.broadcast_to(feat, (B, C_FEAT, N)), x], axis=1)

    def conv1x1(h, w, b):
        return jnp.einsum("bin,oi->bon", h, w[:, :, 0]) + b[None, :, None]

    def gn(h, gamma, beta):
        B_, C, N_ = h.shape
        hg = h.reshape(B_, GROUPS, (C // GROUPS) * N_)
        mean = hg.mean(axis=2, keepdims=True)
        var = hg.var(axis=2, keepdims=True)
        hn = ((hg - mean) / jnp.sqrt(var + EPS)).reshape(B_, C, N_)
        return hn * gamma[None, :, None] + beta[None, :, None]

    def lrelu(h):
        return jnp.where(h >= 0, h, SLOPE * h)

    h = lrelu(gn(conv1x1(h, _standardize(p["w1"]), p["b1"]), p["g1"], p["be1"]))
    h = lrelu(gn(conv1x1(h, _standardize(p["w2"]), p["b2"]), p["g2"], p["be2"]))
    h = lrelu(gn(conv1x1(h, _standardize(p["w3"]), p["b3"]), p["g3"], p["be3"]))
    return conv1x1(h, p["w4"], p["b4"])


# ----------------------------- params & main --------------------------------

def init_params(key):
    ks = jax.random.split(key, 14)
    f32 = jnp.float32
    return {
        "w1": 0.02 * jax.random.normal(ks[0], (C1, C_IN, 1), f32),
        "b1": 0.01 * jax.random.normal(ks[1], (C1,), f32),
        "g1": 1.0 + 0.1 * jax.random.normal(ks[2], (C1,), f32),
        "be1": 0.1 * jax.random.normal(ks[3], (C1,), f32),
        "w2": 0.02 * jax.random.normal(ks[4], (C2, C1, 1), f32),
        "b2": 0.01 * jax.random.normal(ks[5], (C2,), f32),
        "g2": 1.0 + 0.1 * jax.random.normal(ks[6], (C2,), f32),
        "be2": 0.1 * jax.random.normal(ks[7], (C2,), f32),
        "w3": 0.02 * jax.random.normal(ks[8], (C3, C2, 1), f32),
        "b3": 0.01 * jax.random.normal(ks[9], (C3,), f32),
        "g3": 1.0 + 0.1 * jax.random.normal(ks[10], (C3,), f32),
        "be3": 0.1 * jax.random.normal(ks[11], (C3,), f32),
        "w4": 0.05 * jax.random.normal(ks[12], (C4, C3, 1), f32),
        "b4": 0.01 * jax.random.normal(ks[13], (C4,), f32),
    }


if __name__ == "__main__":
    key = jax.random.PRNGKey(0)
    kx, kf, kp = jax.random.split(key, 3)
    B, N = 2, 64                                   # small batch / point count
    x = jax.random.normal(kx, (B, C_X, N), jnp.float32)        # per-point feats
    feat = jax.random.normal(kf, (B, C_FEAT, 1), jnp.float32)  # global feature
    params = init_params(kp)

    out = jax.block_until_ready(pointnet_segment_pallas(x, feat, params))
    ref = jax.block_until_ready(_ref_forward(x, feat, params))

    assert out.shape == (B, 1, N), out.shape
    rel_err = float(jnp.max(jnp.abs(out - ref)) / (jnp.max(jnp.abs(ref)) + 1e-6))
    assert rel_err < 5e-2, f"mismatch vs reference: rel_err={rel_err}"
    print("KERNEL_OK")
</pallas_src>

<mosaic_0001>
module attributes {stable_mosaic.version = 11 : i64} {
  func.func @kernel(%arg0: i32, %arg1: memref<1x1x64x128xbf16, #tpu.memory_space<vmem>>, %arg2: memref<1x1x1024xf32, #tpu.memory_space<vmem>>, %arg3: memref<128x1024xbf16, #tpu.memory_space<vmem>>, %arg4: memref<1x1024xf32, #tpu.memory_space<vmem>>, %arg5: memref<1x1024xf32, #tpu.memory_space<vmem>>, %arg6: memref<32x1024xf32, #tpu.memory_space<vmem>>, %arg7: memref<1024x512xbf16, #tpu.memory_space<vmem>>, %arg8: memref<1x512xf32, #tpu.memory_space<vmem>>, %arg9: memref<1x512xf32, #tpu.memory_space<vmem>>, %arg10: memref<1x512xf32, #tpu.memory_space<vmem>>, %arg11: memref<32x512xf32, #tpu.memory_space<vmem>>, %arg12: memref<512x256xbf16, #tpu.memory_space<vmem>>, %arg13: memref<1x256xf32, #tpu.memory_space<vmem>>, %arg14: memref<1x256xf32, #tpu.memory_space<vmem>>, %arg15: memref<1x256xf32, #tpu.memory_space<vmem>>, %arg16: memref<32x256xf32, #tpu.memory_space<vmem>>, %arg17: memref<1x256xf32, #tpu.memory_space<vmem>>, %arg18: memref<1x1xf32, #tpu.memory_space<smem>>, %arg19: memref<1x1x64xf32, #tpu.memory_space<vmem>>) attributes {dimension_semantics = [#tpu.dimension_semantics<parallel>], iteration_bounds = array<i64: 2>, scalar_prefetch = 0 : i64, scratch_operands = 0 : i64, tpu.core_type = #tpu.core_type<tc>, window_params = [{transform_indices = @transform_0, window_bounds = array<i64: 1, 1, 64, 128>}, {transform_indices = @transform_1, window_bounds = array<i64: 1, 1, 1024>}, {pipeline_mode = #tpu.pipeline_mode<synchronous>, transform_indices = @transform_2, window_bounds = array<i64: 128, 1024>}, {pipeline_mode = #tpu.pipeline_mode<synchronous>, transform_indices = @transform_3, window_bounds = array<i64: 1, 1024>}, {pipeline_mode = #tpu.pipeline_mode<synchronous>, transform_indices = @transform_4, window_bounds = array<i64: 1, 1024>}, {pipeline_mode = #tpu.pipeline_mode<synchronous>, transform_indices = @transform_5, window_bounds = array<i64: 32, 1024>}, {pipeline_mode = #tpu.pipeline_mode<synchronous>, transform_indices = @transform_6, window_bounds = array<i64: 1024, 512>}, {pipeline_mode = #tpu.pipeline_mode<synchronous>, transform_indices = @transform_7, window_bounds = array<i64: 1, 512>}, {pipeline_mode = #tpu.pipeline_mode<synchronous>, transform_indices = @transform_8, window_bounds = array<i64: 1, 512>}, {pipeline_mode = #tpu.pipeline_mode<synchronous>, transform_indices = @transform_9, window_bounds = array<i64: 1, 512>}, {pipeline_mode = #tpu.pipeline_mode<synchronous>, transform_indices = @transform_10, window_bounds = array<i64: 32, 512>}, {pipeline_mode = #tpu.pipeline_mode<synchronous>, transform_indices = @transform_11, window_bounds = array<i64: 512, 256>}, {pipeline_mode = #tpu.pipeline_mode<synchronous>, transform_indices = @transform_12, window_bounds = array<i64: 1, 256>}, {pipeline_mode = #tpu.pipeline_mode<synchronous>, transform_indices = @transform_13, window_bounds = array<i64: 1, 256>}, {pipeline_mode = #tpu.pipeline_mode<synchronous>, transform_indices = @transform_14, window_bounds = array<i64: 1, 256>}, {pipeline_mode = #tpu.pipeline_mode<synchronous>, transform_indices = @transform_15, window_bounds = array<i64: 32, 256>}, {pipeline_mode = #tpu.pipeline_mode<synchronous>, transform_indices = @transform_16, window_bounds = array<i64: 1, 256>}, {transform_indices = @transform_17, window_bounds = array<i64: 1, 1>}, {transform_indices = @transform_18, window_bounds = array<i64: 1, 1, 64>}]} {
    %c0 = arith.constant 0 : index
    %c0_0 = arith.constant 0 : index
    %c0_1 = arith.constant 0 : index
    %c0_2 = arith.constant 0 : index
    %0 = vector.load %arg1[%c0, %c0_0, %c0_1, %c0_2] : memref<1x1x64x128xbf16, #tpu.memory_space<vmem>>, vector<1x1x64x128xbf16>
    %1 = vector.shape_cast %0 : vector<1x1x64x128xbf16> to vector<1x64x128xbf16>
    %2 = vector.shape_cast %1 : vector<1x64x128xbf16> to vector<64x128xbf16>
    %c0_3 = arith.constant 0 : index
    %c0_4 = arith.constant 0 : index
    %3 = vector.load %arg3[%c0_3, %c0_4] : memref<128x1024xbf16, #tpu.memory_space<vmem>>, vector<128x1024xbf16>
    %cst = arith.constant dense<0.000000e+00> : vector<64x1024xf32>
    %4 = tpu.matmul %2, %3, %cst {dimension_numbers = #tpu.dot_dimension_numbers<[1], [0], [0], [1], [0, 0, 1, 1], [], []>} : vector<64x128xbf16>, vector<128x1024xbf16>, vector<64x1024xf32> -> vector<64x1024xf32>
    %5 = vector.shape_cast %4 : vector<64x1024xf32> to vector<1x64x1024xf32>
    %c0_5 = arith.constant 0 : index
    %c0_6 = arith.constant 0 : index
    %c0_7 = arith.constant 0 : index
    %6 = vector.load %arg2[%c0_5, %c0_6, %c0_7] : memref<1x1x1024xf32, #tpu.memory_space<vmem>>, vector<1x1x1024xf32>
    %7 = vector.shape_cast %6 : vector<1x1x1024xf32> to vector<1x1024xf32>
    %c0_8 = arith.constant 0 : index
    %c0_9 = arith.constant 0 : index
    %8 = vector.load %arg4[%c0_8, %c0_9] : memref<1x1024xf32, #tpu.memory_space<vmem>>, vector<1x1024xf32>
    %c0_10 = arith.constant 0 : index
    %c0_11 = arith.constant 0 : index
    %9 = vector.load %arg5[%c0_10, %c0_11] : memref<1x1024xf32, #tpu.memory_space<vmem>>, vector<1x1024xf32>
    %c0_12 = arith.constant 0 : index
    %c0_13 = arith.constant 0 : index
    %10 = vector.load %arg6[%c0_12, %c0_13] : memref<32x1024xf32, #tpu.memory_space<vmem>>, vector<32x1024xf32>
    %cst_14 = arith.constant dense<0.000000e+00> : vector<1x1024xf32>
    %11 = vector.multi_reduction <add>, %5, %cst_14 [1] : vector<1x64x1024xf32> to vector<1x1024xf32>
    %12 = arith.mulf %5, %5 : vector<1x64x1024xf32>
    %cst_15 = arith.constant dense<0.000000e+00> : vector<1x1024xf32>
    %13 = vector.multi_reduction <add>, %12, %cst_15 [1] : vector<1x64x1024xf32> to vector<1x1024xf32>
    %cst_16 = arith.constant 6.400000e+01 : f32
    %14 = vector.broadcast %cst_16 : f32 to vector<1x1024xf32>
    %15 = arith.mulf %14, %7 : vector<1x1024xf32>
    %16 = arith.addf %11, %15 : vector<1x1024xf32>
    %cst_17 = arith.constant 2.000000e+00 : f32
    %17 = vector.broadcast %cst_17 : f32 to vector<1x1024xf32>
    %18 = arith.mulf %17, %7 : vector<1x1024xf32>
    %19 = arith.mulf %18, %11 : vector<1x1024xf32>
    %20 = arith.addf %13, %19 : vector<1x1024xf32>
    %21 = arith.mulf %7, %7 : vector<1x1024xf32>
    %cst_18 = arith.constant 6.400000e+01 : f32
    %22 = vector.broadcast %cst_18 : f32 to vector<1x1024xf32>
    %23 = arith.mulf %22, %21 : vector<1x1024xf32>
    %24 = arith.addf %20, %23 : vector<1x1024xf32>
    %cst_19 = arith.constant dense<0.000000e+00> : vector<1x32xf32>
    %25 = tpu.matmul %16, %10, %cst_19 {dimension_numbers = #tpu.dot_dimension_numbers<[1], [1], [0], [0], [0, 0, 1, 0], [], []>} : vector<1x1024xf32>, vector<32x1024xf32>, vector<1x32xf32> -> vector<1x32xf32>
    %cst_20 = arith.constant dense<0.000000e+00> : vector<1x32xf32>
    %26 = tpu.matmul %24, %10, %cst_20 {dimension_numbers = #tpu.dot_dimension_numbers<[1], [1], [0], [0], [0, 0, 1, 0], [], []>} : vector<1x1024xf32>, vector<32x1024xf32>, vector<1x32xf32> -> vector<1x32xf32>
    %cst_21 = arith.constant 6.400000e+01 : f32
    %cst_22 = arith.constant 3.200000e+01 : f32
    %27 = arith.mulf %cst_21, %cst_22 : f32
    %28 = vector.broadcast %27 : f32 to vector<1x32xf32>
    %29 = arith.divf %25, %28 : vector<1x32xf32>
    %30 = vector.broadcast %27 : f32 to vector<1x32xf32>
    %31 = arith.divf %26, %30 : vector<1x32xf32>
    %32 = arith.mulf %29, %29 : vector<1x32xf32>
    %33 = arith.subf %31, %32 : vector<1x32xf32>
    %cst_23 = arith.constant 9.99999974E-6 : f32
    %34 = vector.broadcast %cst_23 : f32 to vector<1x32xf32>
    %35 = arith.addf %33, %34 : vector<1x32xf32>
    %36 = math.rsqrt %35 : vector<1x32xf32>
    %cst_24 = arith.constant dense<0.000000e+00> : vector<1x1024xf32>
    %37 = tpu.matmul %29, %10, %cst_24 {dimension_numbers = #tpu.dot_dimension_numbers<[1], [0], [0], [1], [0, 0, 1, 1], [], []>} : vector<1x32xf32>, vector<32x1024xf32>, vector<1x1024xf32> -> vector<1x1024xf32>
    %cst_25 = arith.constant dense<0.000000e+00> : vector<1x1024xf32>
    %38 = tpu.matmul %36, %10, %cst_25 {dimension_numbers = #tpu.dot_dimension_numbers<[1], [0], [0], [1], [0, 0, 1, 1], [], []>} : vector<1x32xf32>, vector<32x1024xf32>, vector<1x1024xf32> -> vector<1x1024xf32>
    %39 = arith.mulf %8, %38 : vector<1x1024xf32>
    %40 = arith.subf %7, %37 : vector<1x1024xf32>
    %41 = arith.mulf %40, %39 : vector<1x1024xf32>
    %42 = arith.addf %9, %41 : vector<1x1024xf32>
    %43 = vector.shape_cast %39 : vector<1x1024xf32> to vector<1x1x1024xf32>
    %44 = vector.broadcast %43 : vector<1x1x1024xf32> to vector<1x64x1024xf32>
    %45 = arith.mulf %5, %44 : vector<1x64x1024xf32>
    %46 = vector.shape_cast %42 : vector<1x1024xf32> to vector<1x1x1024xf32>
    %47 = vector.broadcast %46 : vector<1x1x1024xf32> to vector<1x64x1024xf32>
    %48 = arith.addf %45, %47 : vector<1x64x1024xf32>
    %cst_26 = arith.constant 0.000000e+00 : f32
    %49 = vector.broadcast %cst_26 : f32 to vector<1x64x1024xf32>
    %50 = arith.cmpf oge, %48, %49 : vector<1x64x1024xf32>
    %cst_27 = arith.constant 0.00999999977 : f32
    %51 = vector.broadcast %cst_27 : f32 to vector<1x64x1024xf32>
    %52 = arith.mulf %51, %48 : vector<1x64x1024xf32>
    %53 = arith.select %50, %48, %52 : vector<1x64x1024xi1>, vector<1x64x1024xf32>
    %54 = arith.truncf %53 : vector<1x64x1024xf32> to vector<1x64x1024xbf16>
    %55 = vector.shape_cast %54 : vector<1x64x1024xbf16> to vector<64x1024xbf16>
    %c0_28 = arith.constant 0 : index
    %c0_29 = arith.constant 0 : index
    %56 = vector.load %arg7[%c0_28, %c0_29] : memref<1024x512xbf16, #tpu.memory_space<vmem>>, vector<1024x512xbf16>
    %cst_30 = arith.constant dense<0.000000e+00> : vector<64x512xf32>
    %57 = tpu.matmul %55, %56, %cst_30 {dimension_numbers = #tpu.dot_dimension_numbers<[1], [0], [0], [1], [0, 0, 1, 1], [], []>} : vector<64x1024xbf16>, vector<1024x512xbf16>, vector<64x512xf32> -> vector<64x512xf32>
    %58 = vector.shape_cast %57 : vector<64x512xf32> to vector<1x64x512xf32>
    %c0_31 = arith.constant 0 : index
    %c0_32 = arith.constant 0 : index
    %59 = vector.load %arg8[%c0_31, %c0_32] : memref<1x512xf32, #tpu.memory_space<vmem>>, vector<1x512xf32>
    %c0_33 = arith.constant 0 : index
    %c0_34 = arith.constant 0 : index
    %60 = vector.load %arg9[%c0_33, %c0_34] : memref<1x512xf32, #tpu.memory_space<vmem>>, vector<1x512xf32>
    %c0_35 = arith.constant 0 : index
    %c0_36 = arith.constant 0 : index
    %61 = vector.load %arg10[%c0_35, %c0_36] : memref<1x512xf32, #tpu.memory_space<vmem>>, vector<1x512xf32>
    %c0_37 = arith.constant 0 : index
    %c0_38 = arith.constant 0 : index
    %62 = vector.load %arg11[%c0_37, %c0_38] : memref<32x512xf32, #tpu.memory_space<vmem>>, vector<32x512xf32>
    %cst_39 = arith.constant dense<0.000000e+00> : vector<1x512xf32>
    %63 = vector.multi_reduction <add>, %58, %cst_39 [1] : vector<1x64x512xf32> to vector<1x512xf32>
    %64 = arith.mulf %58, %58 : vector<1x64x512xf32>
    %cst_40 = arith.constant dense<0.000000e+00> : vector<1x512xf32>
    %65 = vector.multi_reduction <add>, %64, %cst_40 [1] : vector<1x64x512xf32> to vector<1x512xf32>
    %cst_41 = arith.constant 6.400000e+01 : f32
    %66 = vector.broadcast %cst_41 : f32 to vector<1x512xf32>
    %67 = arith.mulf %66, %59 : vector<1x512xf32>
    %68 = arith.addf %63, %67 : vector<1x512xf32>
    %cst_42 = arith.constant 2.000000e+00 : f32
    %69 = vector.broadcast %cst_42 : f32 to vector<1x512xf32>
    %70 = arith.mulf %69, %59 : vector<1x512xf32>
    %71 = arith.mulf %70, %63 : vector<1x512xf32>
    %72 = arith.addf %65, %71 : vector<1x512xf32>
    %73 = arith.mulf %59, %59 : vector<1x512xf32>
    %cst_43 = arith.constant 6.400000e+01 : f32
    %74 = vector.broadcast %cst_43 : f32 to vector<1x512xf32>
    %75 = arith.mulf %74, %73 : vector<1x512xf32>
    %76 = arith.addf %72, %75 : vector<1x512xf32>
    %cst_44 = arith.constant dense<0.000000e+00> : vector<1x32xf32>
    %77 = tpu.matmul %68, %62, %cst_44 {dimension_numbers = #tpu.dot_dimension_numbers<[1], [1], [0], [0], [0, 0, 1, 0], [], []>} : vector<1x512xf32>, vector<32x512xf32>, vector<1x32xf32> -> vector<1x32xf32>
    %cst_45 = arith.constant dense<0.000000e+00> : vector<1x32xf32>
    %78 = tpu.matmul %76, %62, %cst_45 {dimension_numbers = #tpu.dot_dimension_numbers<[1], [1], [0], [0], [0, 0, 1, 0], [], []>} : vector<1x512xf32>, vector<32x512xf32>, vector<1x32xf32> -> vector<1x32xf32>
    %cst_46 = arith.constant 6.400000e+01 : f32
    %cst_47 = arith.constant 1.600000e+01 : f32
    %79 = arith.mulf %cst_46, %cst_47 : f32
    %80 = vector.broadcast %79 : f32 to vector<1x32xf32>
    %81 = arith.divf %77, %80 : vector<1x32xf32>
    %82 = vector.broadcast %79 : f32 to vector<1x32xf32>
    %83 = arith.divf %78, %82 : vector<1x32xf32>
    %84 = arith.mulf %81, %81 : vector<1x32xf32>
    %85 = arith.subf %83, %84 : vector<1x32xf32>
    %cst_48 = arith.constant 9.99999974E-6 : f32
    %86 = vector.broadcast %cst_48 : f32 to vector<1x32xf32>
    %87 = arith.addf %85, %86 : vector<1x32xf32>
    %88 = math.rsqrt %87 : vector<1x32xf32>
    %cst_49 = arith.constant dense<0.000000e+00> : vector<1x512xf32>
    %89 = tpu.matmul %81, %62, %cst_49 {dimension_numbers = #tpu.dot_dimension_numbers<[1], [0], [0], [1], [0, 0, 1, 1], [], []>} : vector<1x32xf32>, vector<32x512xf32>, vector<1x512xf32> -> vector<1x512xf32>
    %cst_50 = arith.constant dense<0.000000e+00> : vector<1x512xf32>
    %90 = tpu.matmul %88, %62, %cst_50 {dimension_numbers = #tpu.dot_dimension_numbers<[1], [0], [0], [1], [0, 0, 1, 1], [], []>} : vector<1x32xf32>, vector<32x512xf32>, vector<1x512xf32> -> vector<1x512xf32>
    %91 = arith.mulf %60, %90 : vector<1x512xf32>
    %92 = arith.subf %59, %89 : vector<1x512xf32>
    %93 = arith.mulf %92, %91 : vector<1x512xf32>
    %94 = arith.addf %61, %93 : vector<1x512xf32>
    %95 = vector.shape_cast %91 : vector<1x512xf32> to vector<1x1x512xf32>
    %96 = vector.broadcast %95 : vector<1x1x512xf32> to vector<1x64x512xf32>
    %97 = arith.mulf %58, %96 : vector<1x64x512xf32>
    %98 = vector.shape_cast %94 : vector<1x512xf32> to vector<1x1x512xf32>
    %99 = vector.broadcast %98 : vector<1x1x512xf32> to vector<1x64x512xf32>
    %100 = arith.addf %97, %99 : vector<1x64x512xf32>
    %cst_51 = arith.constant 0.000000e+00 : f32
    %101 = vector.broadcast %cst_51 : f32 to vector<1x64x512xf32>
    %102 = arith.cmpf oge, %100, %101 : vector<1x64x512xf32>
    %cst_52 = arith.constant 0.00999999977 : f32
    %103 = vector.broadcast %cst_52 : f32 to vector<1x64x512xf32>
    %104 = arith.mulf %103, %100 : vector<1x64x512xf32>
    %105 = arith.select %102, %100, %104 : vector<1x64x512xi1>, vector<1x64x512xf32>
    %106 = arith.truncf %105 : vector<1x64x512xf32> to vector<1x64x512xbf16>
    %107 = vector.shape_cast %106 : vector<1x64x512xbf16> to vector<64x512xbf16>
    %c0_53 = arith.constant 0 : index
    %c0_54 = arith.constant 0 : index
    %108 = vector.load %arg12[%c0_53, %c0_54] : memref<512x256xbf16, #tpu.memory_space<vmem>>, vector<512x256xbf16>
    %cst_55 = arith.constant dense<0.000000e+00> : vector<64x256xf32>
    %109 = tpu.matmul %107, %108, %cst_55 {dimension_numbers = #tpu.dot_dimension_numbers<[1], [0], [0], [1], [0, 0, 1, 1], [], []>} : vector<64x512xbf16>, vector<512x256xbf16>, vector<64x256xf32> -> vector<64x256xf32>
    %110 = vector.shape_cast %109 : vector<64x256xf32> to vector<1x64x256xf32>
    %c0_56 = arith.constant 0 : index
    %c0_57 = arith.constant 0 : index
    %111 = vector.load %arg13[%c0_56, %c0_57] : memref<1x256xf32, #tpu.memory_space<vmem>>, vector<1x256xf32>
    %c0_58 = arith.constant 0 : index
    %c0_59 = arith.constant 0 : index
    %112 = vector.load %arg14[%c0_58, %c0_59] : memref<1x256xf32, #tpu.memory_space<vmem>>, vector<1x256xf32>
    %c0_60 = arith.constant 0 : index
    %c0_61 = arith.constant 0 : index
    %113 = vector.load %arg15[%c0_60, %c0_61] : memref<1x256xf32, #tpu.memory_space<vmem>>, vector<1x256xf32>
    %c0_62 = arith.constant 0 : index
    %c0_63 = arith.constant 0 : index
    %114 = vector.load %arg16[%c0_62, %c0_63] : memref<32x256xf32, #tpu.memory_space<vmem>>, vector<32x256xf32>
    %cst_64 = arith.constant dense<0.000000e+00> : vector<1x256xf32>
    %115 = vector.multi_reduction <add>, %110, %cst_64 [1] : vector<1x64x256xf32> to vector<1x256xf32>
    %116 = arith.mulf %110, %110 : vector<1x64x256xf32>
    %cst_65 = arith.constant dense<0.000000e+00> : vector<1x256xf32>
    %117 = vector.multi_reduction <add>, %116, %cst_65 [1] : vector<1x64x256xf32> to vector<1x256xf32>
    %cst_66 = arith.constant 6.400000e+01 : f32
    %118 = vector.broadcast %cst_66 : f32 to vector<1x256xf32>
    %119 = arith.mulf %118, %111 : vector<1x256xf32>
    %120 = arith.addf %115, %119 : vector<1x256xf32>
    %cst_67 = arith.constant 2.000000e+00 : f32
    %121 = vector.broadcast %cst_67 : f32 to vector<1x256xf32>
    %122 = arith.mulf %121, %111 : vector<1x256xf32>
    %123 = arith.mulf %122, %115 : vector<1x256xf32>
    %124 = arith.addf %117, %123 : vector<1x256xf32>
    %125 = arith.mulf %111, %111 : vector<1x256xf32>
    %cst_68 = arith.constant 6.400000e+01 : f32
    %126 = vector.broadcast %cst_68 : f32 to vector<1x256xf32>
    %127 = arith.mulf %126, %125 : vector<1x256xf32>
    %128 = arith.addf %124, %127 : vector<1x256xf32>
    %cst_69 = arith.constant dense<0.000000e+00> : vector<1x32xf32>
    %129 = tpu.matmul %120, %114, %cst_69 {dimension_numbers = #tpu.dot_dimension_numbers<[1], [1], [0], [0], [0, 0, 1, 0], [], []>} : vector<1x256xf32>, vector<32x256xf32>, vector<1x32xf32> -> vector<1x32xf32>
    %cst_70 = arith.constant dense<0.000000e+00> : vector<1x32xf32>
    %130 = tpu.matmul %128, %114, %cst_70 {dimension_numbers = #tpu.dot_dimension_numbers<[1], [1], [0], [0], [0, 0, 1, 0], [], []>} : vector<1x256xf32>, vector<32x256xf32>, vector<1x32xf32> -> vector<1x32xf32>
    %cst_71 = arith.constant 6.400000e+01 : f32
    %cst_72 = arith.constant 8.000000e+00 : f32
    %131 = arith.mulf %cst_71, %cst_72 : f32
    %132 = vector.broadcast %131 : f32 to vector<1x32xf32>
    %133 = arith.divf %129, %132 : vector<1x32xf32>
    %134 = vector.broadcast %131 : f32 to vector<1x32xf32>
    %135 = arith.divf %130, %134 : vector<1x32xf32>
    %136 = arith.mulf %133, %133 : vector<1x32xf32>
    %137 = arith.subf %135, %136 : vector<1x32xf32>
    %cst_73 = arith.constant 9.99999974E-6 : f32
    %138 = vector.broadcast %cst_73 : f32 to vector<1x32xf32>
    %139 = arith.addf %137, %138 : vector<1x32xf32>
    %140 = math.rsqrt %139 : vector<1x32xf32>
    %cst_74 = arith.constant dense<0.000000e+00> : vector<1x256xf32>
    %141 = tpu.matmul %133, %114, %cst_74 {dimension_numbers = #tpu.dot_dimension_numbers<[1], [0], [0], [1], [0, 0, 1, 1], [], []>} : vector<1x32xf32>, vector<32x256xf32>, vector<1x256xf32> -> vector<1x256xf32>
    %cst_75 = arith.constant dense<0.000000e+00> : vector<1x256xf32>
    %142 = tpu.matmul %140, %114, %cst_75 {dimension_numbers = #tpu.dot_dimension_numbers<[1], [0], [0], [1], [0, 0, 1, 1], [], []>} : vector<1x32xf32>, vector<32x256xf32>, vector<1x256xf32> -> vector<1x256xf32>
    %143 = arith.mulf %112, %142 : vector<1x256xf32>
    %144 = arith.subf %111, %141 : vector<1x256xf32>
    %145 = arith.mulf %144, %143 : vector<1x256xf32>
    %146 = arith.addf %113, %145 : vector<1x256xf32>
    %147 = vector.shape_cast %143 : vector<1x256xf32> to vector<1x1x256xf32>
    %148 = vector.broadcast %147 : vector<1x1x256xf32> to vector<1x64x256xf32>
    %149 = arith.mulf %110, %148 : vector<1x64x256xf32>
    %150 = vector.shape_cast %146 : vector<1x256xf32> to vector<1x1x256xf32>
    %151 = vector.broadcast %150 : vector<1x1x256xf32> to vector<1x64x256xf32>
    %152 = arith.addf %149, %151 : vector<1x64x256xf32>
    %cst_76 = arith.constant 0.000000e+00 : f32
    %153 = vector.broadcast %cst_76 : f32 to vector<1x64x256xf32>
    %154 = arith.cmpf oge, %152, %153 : vector<1x64x256xf32>
    %cst_77 = arith.constant 0.00999999977 : f32
    %155 = vector.broadcast %cst_77 : f32 to vector<1x64x256xf32>
    %156 = arith.mulf %155, %152 : vector<1x64x256xf32>
    %157 = arith.select %154, %152, %156 : vector<1x64x256xi1>, vector<1x64x256xf32>
    %c0_78 = arith.constant 0 : index
    %c0_79 = arith.constant 0 : index
    %158 = vector.load %arg17[%c0_78, %c0_79] : memref<1x256xf32, #tpu.memory_space<vmem>>, vector<1x256xf32>
    %159 = vector.shape_cast %158 : vector<1x256xf32> to vector<1x1x256xf32>
    %160 = vector.broadcast %159 : vector<1x1x256xf32> to vector<1x64x256xf32>
    %161 = arith.mulf %157, %160 : vector<1x64x256xf32>
    %cst_80 = arith.constant dense<0.000000e+00> : vector<1x64xf32>
    %162 = vector.multi_reduction <add>, %161, %cst_80 [2] : vector<1x64x256xf32> to vector<1x64xf32>
    %c0_81 = arith.constant 0 : index
    %c0_82 = arith.constant 0 : index
    %163 = memref.load %arg18[%c0_81, %c0_82] : memref<1x1xf32, #tpu.memory_space<smem>>
    %164 = vector.broadcast %163 : f32 to vector<1x64xf32>
    %165 = arith.addf %162, %164 : vector<1x64xf32>
    %c0_83 = arith.constant 0 : index
    %c0_84 = arith.constant 0 : index
    %c0_85 = arith.constant 0 : index
    %166 = vector.load %arg19[%c0_83, %c0_84, %c0_85] : memref<1x1x64xf32, #tpu.memory_space<vmem>>, vector<1x1x64xf32>
    %167 = vector.shape_cast %166 : vector<1x1x64xf32> to vector<1x64xf32>
    %168 = vector.shape_cast %165 : vector<1x64xf32> to vector<1x1x64xf32>
    tpu.vector_store %arg19[%c0_83, %c0_84, %c0_85], %168 {strides = array<i32>} : memref<1x1x64xf32, #tpu.memory_space<vmem>>, vector<1x1x64xf32>,
    return
  }
  func.func @transform_0(%arg0: i32) -> (i32, i32, i32, i32) {
    %c0_i32 = arith.constant 0 : i32
    %c0_i32_0 = arith.constant 0 : i32
    %c0_i32_1 = arith.constant 0 : i32
    %c0_i32_2 = arith.constant 0 : i32
    return %arg0, %c0_i32, %c0_i32_0, %c0_i32_1 : i32, i32, i32, i32
  }
  func.func @transform_1(%arg0: i32) -> (i32, i32, i32) {
    %c0_i32 = arith.constant 0 : i32
    %c0_i32_0 = arith.constant 0 : i32
    %c0_i32_1 = arith.constant 0 : i32
    return %arg0, %c0_i32, %c0_i32_0 : i32, i32, i32
  }
  func.func @transform_2(%arg0: i32) -> (i32, i32) {
    %c0_i32 = arith.constant 0 : i32
    %c0_i32_0 = arith.constant 0 : i32
    %c0_i32_1 = arith.constant 0 : i32
    return %c0_i32, %c0_i32_0 : i32, i32
  }
  func.func @transform_3(%arg0: i32) -> (i32, i32) {
    %c0_i32 = arith.constant 0 : i32
    %c0_i32_0 = arith.constant 0 : i32
    %c0_i32_1 = arith.constant 0 : i32
    return %c0_i32, %c0_i32_0 : i32, i32
  }
  func.func @transform_4(%arg0: i32) -> (i32, i32) {
    %c0_i32 = arith.constant 0 : i32
    %c0_i32_0 = arith.constant 0 : i32
    %c0_i32_1 = arith.constant 0 : i32
    return %c0_i32, %c0_i32_0 : i32, i32
  }
  func.func @transform_5(%arg0: i32) -> (i32, i32) {
    %c0_i32 = arith.constant 0 : i32
    %c0_i32_0 = arith.constant 0 : i32
    %c0_i32_1 = arith.constant 0 : i32
    return %c0_i32, %c0_i32_0 : i32, i32
  }
  func.func @transform_6(%arg0: i32) -> (i32, i32) {
    %c0_i32 = arith.constant 0 : i32
    %c0_i32_0 = arith.constant 0 : i32
    %c0_i32_1 = arith.constant 0 : i32
    return %c0_i32, %c0_i32_0 : i32, i32
  }
  func.func @transform_7(%arg0: i32) -> (i32, i32) {
    %c0_i32 = arith.constant 0 : i32
    %c0_i32_0 = arith.constant 0 : i32
    %c0_i32_1 = arith.constant 0 : i32
    return %c0_i32, %c0_i32_0 : i32, i32
  }
  func.func @transform_8(%arg0: i32) -> (i32, i32) {
    %c0_i32 = arith.constant 0 : i32
    %c0_i32_0 = arith.constant 0 : i32
    %c0_i32_1 = arith.constant 0 : i32
    return %c0_i32, %c0_i32_0 : i32, i32
  }
  func.func @transform_9(%arg0: i32) -> (i32, i32) {
    %c0_i32 = arith.constant 0 : i32
    %c0_i32_0 = arith.constant 0 : i32
    %c0_i32_1 = arith.constant 0 : i32
    return %c0_i32, %c0_i32_0 : i32, i32
  }
  func.func @transform_10(%arg0: i32) -> (i32, i32) {
    %c0_i32 = arith.constant 0 : i32
    %c0_i32_0 = arith.constant 0 : i32
    %c0_i32_1 = arith.constant 0 : i32
    return %c0_i32, %c0_i32_0 : i32, i32
  }
  func.func @transform_11(%arg0: i32) -> (i32, i32) {
    %c0_i32 = arith.constant 0 : i32
    %c0_i32_0 = arith.constant 0 : i32
    %c0_i32_1 = arith.constant 0 : i32
    return %c0_i32, %c0_i32_0 : i32, i32
  }
  func.func @transform_12(%arg0: i32) -> (i32, i32) {
    %c0_i32 = arith.constant 0 : i32
    %c0_i32_0 = arith.constant 0 : i32
    %c0_i32_1 = arith.constant 0 : i32
    return %c0_i32, %c0_i32_0 : i32, i32
  }
  func.func @transform_13(%arg0: i32) -> (i32, i32) {
    %c0_i32 = arith.constant 0 : i32
    %c0_i32_0 = arith.constant 0 : i32
    %c0_i32_1 = arith.constant 0 : i32
    return %c0_i32, %c0_i32_0 : i32, i32
  }
  func.func @transform_14(%arg0: i32) -> (i32, i32) {
    %c0_i32 = arith.constant 0 : i32
    %c0_i32_0 = arith.constant 0 : i32
    %c0_i32_1 = arith.constant 0 : i32
    return %c0_i32, %c0_i32_0 : i32, i32
  }
  func.func @transform_15(%arg0: i32) -> (i32, i32) {
    %c0_i32 = arith.constant 0 : i32
    %c0_i32_0 = arith.constant 0 : i32
    %c0_i32_1 = arith.constant 0 : i32
    return %c0_i32, %c0_i32_0 : i32, i32
  }
  func.func @transform_16(%arg0: i32) -> (i32, i32) {
    %c0_i32 = arith.constant 0 : i32
    %c0_i32_0 = arith.constant 0 : i32
    %c0_i32_1 = arith.constant 0 : i32
    return %c0_i32, %c0_i32_0 : i32, i32
  }
  func.func @transform_17(%arg0: i32) -> (i32, i32) {
    %c0_i32 = arith.constant 0 : i32
    %c0_i32_0 = arith.constant 0 : i32
    %c0_i32_1 = arith.constant 0 : i32
    return %c0_i32, %c0_i32_0 : i32, i32
  }
  func.func @transform_18(%arg0: i32) -> (i32, i32, i32) {
    %c0_i32 = arith.constant 0 : i32
    %c0_i32_0 = arith.constant 0 : i32
    %c0_i32_1 = arith.constant 0 : i32
    return %arg0, %c0_i32, %c0_i32_0 : i32, i32, i32
  }
}

</mosaic_0001>

<llo_original>
// kernel: tpu_custom_call.1
$region0: #{tpu_custom_call.1}
  #allocation0 [shape = 'u32[]', space=smem, size = 0x4, offset = 0x4, fixed_abs, tag = 'smem constant byte address 0x4 - core index']
  #allocation1 [shape = 'u32[144,128]{1,0:T(1,128)}', space=vmem, size = 0x12000, scoped, tag = 'internal scratch']
  #allocation2 [shape = 'f32[1,1]{1,0:T(1,128)S(6)}', space=smem, size = 0x200, scoped, tag = 'scoped memory for tpu_custom_call.1']
  %s0 = inlined_call_operand.hbm [shape: bf16[2,1,64,128], index: 0, kind: input, shape index: {}]
  %s1 = inlined_call_operand.hbm [shape: f32[2,1,1024], index: 1, kind: input, shape index: {}]
  %s2 = inlined_call_operand.hbm [shape: bf16[128,1024], index: 2, kind: input, shape index: {}]
  %s3 = inlined_call_operand.hbm [shape: f32[1,1024], index: 3, kind: input, shape index: {}]
  %s4 = inlined_call_operand.vmem [shape: f32[1,1024], index: 4, kind: input, shape index: {}]
  %s5 = inlined_call_operand.hbm [shape: f32[32,1024], index: 5, kind: input, shape index: {}]
  %s6 = inlined_call_operand.hbm [shape: bf16[1024,512], index: 6, kind: input, shape index: {}]
  %s7 = inlined_call_operand.vmem [shape: f32[1,512], index: 7, kind: input, shape index: {}]
  %s8 = inlined_call_operand.vmem [shape: f32[1,512], index: 8, kind: input, shape index: {}]
  %s9 = inlined_call_operand.hbm [shape: f32[1,512], index: 9, kind: input, shape index: {}]
  %s10 = inlined_call_operand.hbm [shape: f32[32,512], index: 10, kind: input, shape index: {}]
  %s11 = inlined_call_operand.hbm [shape: bf16[512,256], index: 11, kind: input, shape index: {}]
  %s12 = inlined_call_operand.vmem [shape: f32[1,256], index: 12, kind: input, shape index: {}]
  %s13 = inlined_call_operand.vmem [shape: f32[1,256], index: 13, kind: input, shape index: {}]
  %s14 = inlined_call_operand.vmem [shape: f32[1,256], index: 14, kind: input, shape index: {}]
  %s15 = inlined_call_operand.hbm [shape: f32[32,256], index: 15, kind: input, shape index: {}]
  %s16 = inlined_call_operand.vmem [shape: f32[1,256], index: 16, kind: input, shape index: {}]
  %s17 = inlined_call_operand.<no memory space> [shape: f32[1,1], index: 17, kind: input, shape index: {}]
  %s18 = inlined_call_operand.hbm [shape: f32[2,1,64], index: 18, kind: output, shape index: {}]
  %s19 = sld [smem:[#allocation0]]
  $region145: #{tpu_custom_call.1} parent=0
    _
  %s21 = ssub.s32 1, %s19
  %s22 = scalar_select 0, %s21, %s19
  %23 = sst [smem:[#allocation2]] %s17
  $region1: #{tpu_custom_call.1} parent=0
    #allocation3 [shape = 'u8[32768]{0}', space=vmem, size = 0x8000, scoped, tag = 'input window, operand 0']
    #allocation4 [shape = 's32[2]{0}', space=sflag, size = 0x8, scoped, tag = 'scoped memory for tpu_custom_call.1']
    #allocation5 [shape = 's32[2]{0}', space=sflag, size = 0x8, scoped, tag = 'scoped memory for tpu_custom_call.1']
    #allocation6 [shape = 'u8[8192]{0}', space=vmem, size = 0x2000, scoped, tag = 'input window, operand 1']
    #allocation7 [shape = 's32[2]{0}', space=sflag, size = 0x8, scoped, tag = 'scoped memory for tpu_custom_call.1']
    #allocation8 [shape = 'u8[262144]{0}', space=vmem, size = 0x40000, scoped, tag = 'input window, operand 2, single buffered']
    #allocation9 [shape = 'u8[4096]{0}', space=vmem, size = 0x1000, scoped, tag = 'input window, operand 3, single buffered']
    #allocation10 [shape = 's32[1]{0}', space=sflag, size = 0x4, scoped, tag = 'scoped memory for tpu_custom_call.1']
    #allocation11 [shape = 'u8[131072]{0}', space=vmem, size = 0x20000, scoped, tag = 'input window, operand 5, single buffered']
    #allocation12 [shape = 'u8[1048576]{0}', space=vmem, size = 0x100000, scoped, tag = 'input window, operand 6, single buffered']
    #allocation13 [shape = 's32[1]{0}', space=sflag, size = 0x4, scoped, tag = 'scoped memory for tpu_custom_call.1']
    #allocation14 [shape = 'u8[2048]{0}', space=vmem, size = 0x800, scoped, tag = 'input window, operand 9, single buffered']
    #allocation15 [shape = 'u8[65536]{0}', space=vmem, size = 0x10000, scoped, tag = 'input window, operand 10, single buffered']
    #allocation16 [shape = 's32[1]{0}', space=sflag, size = 0x4, scoped, tag = 'scoped memory for tpu_custom_call.1']
    #allocation17 [shape = 'u8[262144]{0}', space=vmem, size = 0x40000, scoped, tag = 'input window, operand 11, single buffered']
    #allocation18 [shape = 'u8[32768]{0}', space=vmem, size = 0x8000, scoped, tag = 'input window, operand 15, single buffered']
    #allocation19 [shape = 's32[1]{0}', space=sflag, size = 0x4, scoped, tag = 'scoped memory for tpu_custom_call.1']
    #allocation20 [shape = 'u8[1024]{0}', space=vmem, size = 0x400, scoped, tag = 'output window, operand 0']
    %24 = vsyncpa [#allocation4], 0
    %s25 = scalar_lea.sflag [#allocation4], 1
    %26 = vsyncpa %s25, 0
    %27 = vsyncpa [#allocation7], 0
    %s28 = scalar_lea.sflag [#allocation7], 1
    %29 = vsyncpa %s28, 0
    %30 = vsyncpa [#allocation10], 0
    %31 = vsyncpa [#allocation13], 0
    %32 = vsyncpa [#allocation16], 0
    %33 = vsyncpa [#allocation19], 0
    %34 = vsyncpa [#allocation5], 0
    %s35 = scalar_lea.sflag [#allocation5], 1
    %36 = vsyncpa %s35, 0
    loop: start=0, step=1, limit=4
    $region2: #{tpu_custom_call.1} parent=1 // loop_pre_header
      _
    $region3: #{tpu_custom_call.1} parent=1 // loop_header
      %s38 = sphi 0, %s42
      %p39 = scmp.ge.s32.totalorder %s38, 4
      %s48 = sphi 0, %s50
      %s51 = sphi 0, %s48
      %s52 = sphi 0, %s51
      %s68 = sphi 0, %s52
      %s74 = sphi 0, %s76
      %s77 = sphi 0, %s74
      %s78 = sphi 0, %s77
      %s94 = sphi 0, %s78
      %s98 = sphi 0, %s98
      %s100 = sphi 0, %s98
      %s101 = sphi 0, %s100
      %s115 = sphi 0, %s101
      %s119 = sphi 0, %s119
      %s121 = sphi 0, %s119
      %s122 = sphi 0, %s121
      %s136 = sphi 0, %s122
      %s140 = sphi 0, %s140
      %s142 = sphi 0, %s140
      %s143 = sphi 0, %s142
      %s157 = sphi 0, %s143
      %s161 = sphi 0, %s161
      %s163 = sphi 0, %s161
      %s164 = sphi 0, %s163
      %s178 = sphi 0, %s164
      %s182 = sphi 0, %s182
      %s184 = sphi 0, %s182
      %s185 = sphi 0, %s184
      %s199 = sphi 0, %s185
      %s203 = sphi 0, %s203
      %s205 = sphi 0, %s203
      %s206 = sphi 0, %s205
      %s220 = sphi 0, %s206
      %s224 = sphi 0, %s224
      %s226 = sphi 0, %s224
      %s227 = sphi 0, %s226
      %s241 = sphi 0, %s227
      %s245 = sphi 0, %s245
      %s247 = sphi 0, %s245
      %s248 = sphi 0, %s247
      %s262 = sphi 0, %s248
      %s266 = sphi 0, %s266
      %s268 = sphi 0, %s266
      %s269 = sphi 0, %s268
      %s283 = sphi 0, %s269
      %s287 = sphi 0, %s287
      %s289 = sphi 0, %s287
      %s290 = sphi 0, %s289
      %s304 = sphi 0, %s290
      %s308 = sphi 0, %s308
      %s310 = sphi 0, %s308
      %s311 = sphi 0, %s310
      %s325 = sphi 0, %s311
      %s329 = sphi 0, %s329
      %s331 = sphi 0, %s329
      %s332 = sphi 0, %s331
      %s346 = sphi 0, %s332
      %s350 = sphi 0, %s350
      %s352 = sphi 0, %s350
      %s353 = sphi 0, %s352
      %s367 = sphi 0, %s353
      %s371 = sphi 0, %s371
      %s373 = sphi 0, %s371
      %s374 = sphi 0, %s373
      %s388 = sphi 0, %s374
      %s392 = sphi 0, %s392
      %s394 = sphi 0, %s392
      %s395 = sphi 0, %s394
      %s409 = sphi 0, %s395
      %s413 = sphi 0, %s413
      %s415 = sphi 0, %s413
      %s416 = sphi 0, %s415
      %s430 = sphi 0, %s416
      %s436 = sphi 0, %s438
      %s439 = sphi 0, %s436
      %s440 = sphi 0, %s439
      %s456 = sphi 0, %s440
    $region4: #{tpu_custom_call.1} parent=1 // loop_header_branch
      %41 = sbr.rel (%p39) target = $region8
    $region5: #{tpu_custom_call.1} parent=1 // loop_body
      %s43 = ssub.s32 %s38, 1
      %s44 = ssub.s32 %s38, 2
      %s45 = sadd.s32 %s38, 1
      %s46 = ssub.s32 %s38, %s45
      %p47 = scmp.eq.s32.totalorder %s46, 0
      %s49 = sadd.s32 %s48, 1
      %s50 = scalar_select %p47, %s48, %s49
      %p53 = pneg %p47
      %p54 = scmp.eq.s32.totalorder %s38, 1
      %p55 = por %p53, %p54
      %p56 = scmp.ne.s32.totalorder %s48, %s51
      %p57 = scmp.eq.s32.totalorder %s38, 0
      %p58 = por %p56, %p57
      %p59 = scmp.ne.s32.totalorder %s48, %s51
      %p60 = scmp.eq.s32.totalorder %s43, 1
      %p61 = por %p59, %p60
      %p62 = scmp.ne.s32.totalorder %s51, %s52
      %p63 = scmp.eq.s32.totalorder %s43, 0
      %p64 = por %p62, %p63
      %p65 = scmp.ne.s32.totalorder %s51, %s52
      %p66 = scmp.eq.s32.totalorder %s44, 1
      %p67 = por %p65, %p66
      %p69 = scmp.ne.s32.totalorder %s52, %s68
      %p70 = scmp.eq.s32.totalorder %s44, 0
      %p71 = por %p69, %p70
      %s72 = ssub.s32 %s38, %s45
      %p73 = scmp.eq.s32.totalorder %s72, 0
      %s75 = sadd.s32 %s74, 1
      %s76 = scalar_select %p73, %s74, %s75
      %p79 = pneg %p73
      %p80 = scmp.eq.s32.totalorder %s38, 1
      %p81 = por %p79, %p80
      %p82 = scmp.ne.s32.totalorder %s74, %s77
      %p83 = scmp.eq.s32.totalorder %s38, 0
      %p84 = por %p82, %p83
      %p85 = scmp.ne.s32.totalorder %s74, %s77
      %p86 = scmp.eq.s32.totalorder %s43, 1
      %p87 = por %p85, %p86
      %p88 = scmp.ne.s32.totalorder %s77, %s78
      %p89 = scmp.eq.s32.totalorder %s43, 0
      %p90 = por %p88, %p89
      %p91 = scmp.ne.s32.totalorder %s77, %s78
      %p92 = scmp.eq.s32.totalorder %s44, 1
      %p93 = por %p91, %p92
      %p95 = scmp.ne.s32.totalorder %s78, %s94
      %p96 = scmp.eq.s32.totalorder %s44, 0
      %p97 = por %p95, %p96
      %s99 = sadd.s32 %s98, 1
      %p102 = scmp.eq.s32.totalorder %s38, 1
      %p103 = scmp.ne.s32.totalorder %s98, %s100
      %p104 = scmp.eq.s32.totalorder %s38, 0
      %p105 = por %p103, %p104
      %p106 = scmp.ne.s32.totalorder %s98, %s100
      %p107 = scmp.eq.s32.totalorder %s43, 1
      %p108 = por %p106, %p107
      %p109 = scmp.ne.s32.totalorder %s100, %s101
      %p110 = scmp.eq.s32.totalorder %s43, 0
      %p111 = por %p109, %p110
      %p112 = scmp.ne.s32.totalorder %s100, %s101
      %p113 = scmp.eq.s32.totalorder %s44, 1
      %p114 = por %p112, %p113
      %p116 = scmp.ne.s32.totalorder %s101, %s115
      %p117 = scmp.eq.s32.totalorder %s44, 0
      %p118 = por %p116, %p117
      %s120 = sadd.s32 %s119, 1
      %p123 = scmp.eq.s32.totalorder %s38, 1
      %p124 = scmp.ne.s32.totalorder %s119, %s121
      %p125 = scmp.eq.s32.totalorder %s38, 0
      %p126 = por %p124, %p125
      %p127 = scmp.ne.s32.totalorder %s119, %s121
      %p128 = scmp.eq.s32.totalorder %s43, 1
      %p129 = por %p127, %p128
      %p130 = scmp.ne.s32.totalorder %s121, %s122
      %p131 = scmp.eq.s32.totalorder %s43, 0
      %p132 = por %p130, %p131
      %p133 = scmp.ne.s32.totalorder %s121, %s122
      %p134 = scmp.eq.s32.totalorder %s44, 1
      %p135 = por %p133, %p134
      %p137 = scmp.ne.s32.totalorder %s122, %s136
      %p138 = scmp.eq.s32.totalorder %s44, 0
      %p139 = por %p137, %p138
      %s141 = sadd.s32 %s140, 1
      %p144 = scmp.eq.s32.totalorder %s38, 1
      %p145 = scmp.ne.s32.totalorder %s140, %s142
      %p146 = scmp.eq.s32.totalorder %s38, 0
      %p147 = por %p145, %p146
      %p148 = scmp.ne.s32.totalorder %s140, %s142
      %p149 = scmp.eq.s32.totalorder %s43, 1
      %p150 = por %p148, %p149
      %p151 = scmp.ne.s32.totalorder %s142, %s143
      %p152 = scmp.eq.s32.totalorder %s43, 0
      %p153 = por %p151, %p152
      %p154 = scmp.ne.s32.totalorder %s142, %s143
      %p155 = scmp.eq.s32.totalorder %s44, 1
      %p156 = por %p154, %p155
      %p158 = scmp.ne.s32.totalorder %s143, %s157
      %p159 = scmp.eq.s32.totalorder %s44, 0
      %p160 = por %p158, %p159
      %s162 = sadd.s32 %s161, 1
      %p165 = scmp.eq.s32.totalorder %s38, 1
      %p166 = scmp.ne.s32.totalorder %s161, %s163
      %p167 = scmp.eq.s32.totalorder %s38, 0
      %p168 = por %p166, %p167
      %p169 = scmp.ne.s32.totalorder %s161, %s163
      %p170 = scmp.eq.s32.totalorder %s43, 1
      %p171 = por %p169, %p170
      %p172 = scmp.ne.s32.totalorder %s163, %s164
      %p173 = scmp.eq.s32.totalorder %s43, 0
      %p174 = por %p172, %p173
      %p175 = scmp.ne.s32.totalorder %s163, %s164
      %p176 = scmp.eq.s32.totalorder %s44, 1
      %p177 = por %p175, %p176
      %p179 = scmp.ne.s32.totalorder %s164, %s178
      %p180 = scmp.eq.s32.totalorder %s44, 0
      %p181 = por %p179, %p180
      %s183 = sadd.s32 %s182, 1
      %p186 = scmp.eq.s32.totalorder %s38, 1
      %p187 = scmp.ne.s32.totalorder %s182, %s184
      %p188 = scmp.eq.s32.totalorder %s38, 0
      %p189 = por %p187, %p188
      %p190 = scmp.ne.s32.totalorder %s182, %s184
      %p191 = scmp.eq.s32.totalorder %s43, 1
      %p192 = por %p190, %p191
      %p193 = scmp.ne.s32.totalorder %s184, %s185
      %p194 = scmp.eq.s32.totalorder %s43, 0
      %p195 = por %p193, %p194
      %p196 = scmp.ne.s32.totalorder %s184, %s185
      %p197 = scmp.eq.s32.totalorder %s44, 1
      %p198 = por %p196, %p197
      %p200 = scmp.ne.s32.totalorder %s185, %s199
      %p201 = scmp.eq.s32.totalorder %s44, 0
      %p202 = por %p200, %p201
      %s204 = sadd.s32 %s203, 1
      %p207 = scmp.eq.s32.totalorder %s38, 1
      %p208 = scmp.ne.s32.totalorder %s203, %s205
      %p209 = scmp.eq.s32.totalorder %s38, 0
      %p210 = por %p208, %p209
      %p211 = scmp.ne.s32.totalorder %s203, %s205
      %p212 = scmp.eq.s32.totalorder %s43, 1
      %p213 = por %p211, %p212
      %p214 = scmp.ne.s32.totalorder %s205, %s206
      %p215 = scmp.eq.s32.totalorder %s43, 0
      %p216 = por %p214, %p215
      %p217 = scmp.ne.s32.totalorder %s205, %s206
      %p218 = scmp.eq.s32.totalorder %s44, 1
      %p219 = por %p217, %p218
      %p221 = scmp.ne.s32.totalorder %s206, %s220
      %p222 = scmp.eq.s32.totalorder %s44, 0
      %p223 = por %p221, %p222
      %s225 = sadd.s32 %s224, 1
      %p228 = scmp.eq.s32.totalorder %s38, 1
      %p229 = scmp.ne.s32.totalorder %s224, %s226
      %p230 = scmp.eq.s32.totalorder %s38, 0
      %p231 = por %p229, %p230
      %p232 = scmp.ne.s32.totalorder %s224, %s226
      %p233 = scmp.eq.s32.totalorder %s43, 1
      %p234 = por %p232, %p233
      %p235 = scmp.ne.s32.totalorder %s226, %s227
      %p236 = scmp.eq.s32.totalorder %s43, 0
      %p237 = por %p235, %p236
      %p238 = scmp.ne.s32.totalorder %s226, %s227
      %p239 = scmp.eq.s32.totalorder %s44, 1
      %p240 = por %p238, %p239
      %p242 = scmp.ne.s32.totalorder %s227, %s241
      %p243 = scmp.eq.s32.totalorder %s44, 0
      %p244 = por %p242, %p243
      %s246 = sadd.s32 %s245, 1
      %p249 = scmp.eq.s32.totalorder %s38, 1
      %p250 = scmp.ne.s32.totalorder %s245, %s247
      %p251 = scmp.eq.s32.totalorder %s38, 0
      %p252 = por %p250, %p251
      %p253 = scmp.ne.s32.totalorder %s245, %s247
      %p254 = scmp.eq.s32.totalorder %s43, 1
      %p255 = por %p253, %p254
      %p256 = scmp.ne.s32.totalorder %s247, %s248
      %p257 = scmp.eq.s32.totalorder %s43, 0
      %p258 = por %p256, %p257
      %p259 = scmp.ne.s32.totalorder %s247, %s248
      %p260 = scmp.eq.s32.totalorder %s44, 1
      %p261 = por %p259, %p260
      %p263 = scmp.ne.s32.totalorder %s248, %s262
      %p264 = scmp.eq.s32.totalorder %s44, 0
      %p265 = por %p263, %p264
      %s267 = sadd.s32 %s266, 1
      %p270 = scmp.eq.s32.totalorder %s38, 1
      %p271 = scmp.ne.s32.totalorder %s266, %s268
      %p272 = scmp.eq.s32.totalorder %s38, 0
      %p273 = por %p271, %p272
      %p274 = scmp.ne.s32.totalorder %s266, %s268
      %p275 = scmp.eq.s32.totalorder %s43, 1
      %p276 = por %p274, %p275
      %p277 = scmp.ne.s32.totalorder %s268, %s269
      %p278 = scmp.eq.s32.totalorder %s43, 0
      %p279 = por %p277, %p278
      %p280 = scmp.ne.s32.totalorder %s268, %s269
      %p281 = scmp.eq.s32.totalorder %s44, 1
      %p282 = por %p280, %p281
      %p284 = scmp.ne.s32.totalorder %s269, %s283
      %p285 = scmp.eq.s32.totalorder %s44, 0
      %p286 = por %p284, %p285
      %s288 = sadd.s32 %s287, 1
      %p291 = scmp.eq.s32.totalorder %s38, 1
      %p292 = scmp.ne.s32.totalorder %s287, %s289
      %p293 = scmp.eq.s32.totalorder %s38, 0
      %p294 = por %p292, %p293
      %p295 = scmp.ne.s32.totalorder %s287, %s289
      %p296 = scmp.eq.s32.totalorder %s43, 1
      %p297 = por %p295, %p296
      %p298 = scmp.ne.s32.totalorder %s289, %s290
      %p299 = scmp.eq.s32.totalorder %s43, 0
      %p300 = por %p298, %p299
      %p301 = scmp.ne.s32.totalorder %s289, %s290
      %p302 = scmp.eq.s32.totalorder %s44, 1
      %p303 = por %p301, %p302
      %p305 = scmp.ne.s32.totalorder %s290, %s304
      %p306 = scmp.eq.s32.totalorder %s44, 0
      %p307 = por %p305, %p306
      %s309 = sadd.s32 %s308, 1
      %p312 = scmp.eq.s32.totalorder %s38, 1
      %p313 = scmp.ne.s32.totalorder %s308, %s310
      %p314 = scmp.eq.s32.totalorder %s38, 0
      %p315 = por %p313, %p314
      %p316 = scmp.ne.s32.totalorder %s308, %s310
      %p317 = scmp.eq.s32.totalorder %s43, 1
      %p318 = por %p316, %p317
      %p319 = scmp.ne.s32.totalorder %s310, %s311
      %p320 = scmp.eq.s32.totalorder %s43, 0
      %p321 = por %p319, %p320
      %p322 = scmp.ne.s32.totalorder %s310, %s311
      %p323 = scmp.eq.s32.totalorder %s44, 1
      %p324 = por %p322, %p323
      %p326 = scmp.ne.s32.totalorder %s311, %s325
      %p327 = scmp.eq.s32.totalorder %s44, 0
      %p328 = por %p326, %p327
      %s330 = sadd.s32 %s329, 1
      %p333 = scmp.eq.s32.totalorder %s38, 1
      %p334 = scmp.ne.s32.totalorder %s329, %s331
      %p335 = scmp.eq.s32.totalorder %s38, 0
      %p336 = por %p334, %p335
      %p337 = scmp.ne.s32.totalorder %s329, %s331
      %p338 = scmp.eq.s32.totalorder %s43, 1
      %p339 = por %p337, %p338
      %p340 = scmp.ne.s32.totalorder %s331, %s332
      %p341 = scmp.eq.s32.totalorder %s43, 0
      %p342 = por %p340, %p341
      %p343 = scmp.ne.s32.totalorder %s331, %s332
      %p344 = scmp.eq.s32.totalorder %s44, 1
      %p345 = por %p343, %p344
      %p347 = scmp.ne.s32.totalorder %s332, %s346
      %p348 = scmp.eq.s32.totalorder %s44, 0
      %p349 = por %p347, %p348
      %s351 = sadd.s32 %s350, 1
      %p354 = scmp.eq.s32.totalorder %s38, 1
      %p355 = scmp.ne.s32.totalorder %s350, %s352
      %p356 = scmp.eq.s32.totalorder %s38, 0
      %p357 = por %p355, %p356
      %p358 = scmp.ne.s32.totalorder %s350, %s352
      %p359 = scmp.eq.s32.totalorder %s43, 1
      %p360 = por %p358, %p359
      %p361 = scmp.ne.s32.totalorder %s352, %s353
      %p362 = scmp.eq.s32.totalorder %s43, 0
      %p363 = por %p361, %p362
      %p364 = scmp.ne.s32.totalorder %s352, %s353
      %p365 = scmp.eq.s32.totalorder %s44, 1
      %p366 = por %p364, %p365
      %p368 = scmp.ne.s32.totalorder %s353, %s367
      %p369 = scmp.eq.s32.totalorder %s44, 0
      %p370 = por %p368, %p369
      %s372 = sadd.s32 %s371, 1
      %p375 = scmp.eq.s32.totalorder %s38, 1
      %p376 = scmp.ne.s32.totalorder %s371, %s373
      %p377 = scmp.eq.s32.totalorder %s38, 0
      %p378 = por %p376, %p377
      %p379 = scmp.ne.s32.totalorder %s371, %s373
      %p380 = scmp.eq.s32.totalorder %s43, 1
      %p381 = por %p379, %p380
      %p382 = scmp.ne.s32.totalorder %s373, %s374
      %p383 = scmp.eq.s32.totalorder %s43, 0
      %p384 = por %p382, %p383
      %p385 = scmp.ne.s32.totalorder %s373, %s374
      %p386 = scmp.eq.s32.totalorder %s44, 1
      %p387 = por %p385, %p386
      %p389 = scmp.ne.s32.totalorder %s374, %s388
      %p390 = scmp.eq.s32.totalorder %s44, 0
      %p391 = por %p389, %p390
      %s393 = sadd.s32 %s392, 1
      %p396 = scmp.eq.s32.totalorder %s38, 1
      %p397 = scmp.ne.s32.totalorder %s392, %s394
      %p398 = scmp.eq.s32.totalorder %s38, 0
      %p399 = por %p397, %p398
      %p400 = scmp.ne.s32.totalorder %s392, %s394
      %p401 = scmp.eq.s32.totalorder %s43, 1
      %p402 = por %p400, %p401
      %p403 = scmp.ne.s32.totalorder %s394, %s395
      %p404 = scmp.eq.s32.totalorder %s43, 0
      %p405 = por %p403, %p404
      %p406 = scmp.ne.s32.totalorder %s394, %s395
      %p407 = scmp.eq.s32.totalorder %s44, 1
      %p408 = por %p406, %p407
      %p410 = scmp.ne.s32.totalorder %s395, %s409
      %p411 = scmp.eq.s32.totalorder %s44, 0
      %p412 = por %p410, %p411
      %s414 = sadd.s32 %s413, 1
      %p417 = scmp.eq.s32.totalorder %s38, 1
      %p418 = scmp.ne.s32.totalorder %s413, %s415
      %p419 = scmp.eq.s32.totalorder %s38, 0
      %p420 = por %p418, %p419
      %p421 = scmp.ne.s32.totalorder %s413, %s415
      %p422 = scmp.eq.s32.totalorder %s43, 1
      %p423 = por %p421, %p422
      %p424 = scmp.ne.s32.totalorder %s415, %s416
      %p425 = scmp.eq.s32.totalorder %s43, 0
      %p426 = por %p424, %p425
      %p427 = scmp.ne.s32.totalorder %s415, %s416
      %p428 = scmp.eq.s32.totalorder %s44, 1
      %p429 = por %p427, %p428
      %p431 = scmp.ne.s32.totalorder %s416, %s430
      %p432 = scmp.eq.s32.totalorder %s44, 0
      %p433 = por %p431, %p432
      %s434 = ssub.s32 %s38, %s45
      %p435 = scmp.eq.s32.totalorder %s434, 0
      %s437 = sadd.s32 %s436, 1
      %s438 = scalar_select %p435, %s436, %s437
      %p441 = pneg %p435
      %p442 = scmp.eq.s32.totalorder %s38, 1
      %p443 = por %p441, %p442
      %p444 = scmp.ne.s32.totalorder %s436, %s439
      %p445 = scmp.eq.s32.totalorder %s38, 0
      %p446 = por %p444, %p445
      %p447 = scmp.ne.s32.totalorder %s436, %s439
      %p448 = scmp.eq.s32.totalorder %s43, 1
      %p449 = por %p447, %p448
      %p450 = scmp.ne.s32.totalorder %s439, %s440
      %p451 = scmp.eq.s32.totalorder %s43, 0
      %p452 = por %p450, %p451
      %p453 = scmp.ne.s32.totalorder %s439, %s440
      %p454 = scmp.eq.s32.totalorder %s44, 1
      %p455 = por %p453, %p454
      %p457 = scmp.ne.s32.totalorder %s440, %s456
      %p458 = scmp.eq.s32.totalorder %s44, 0
      %p459 = por %p457, %p458
      %p460 = scmp.le.s32.totalorder 1, %s38
      %p461 = scmp.lt.s32.totalorder %s38, 3
      %p462 = pnand %p460, %p461
      %p463 = pneg %p462
      // Predicated region
      $region9: #{tpu_custom_call.1} parent=5 // pred_check
        _
      $region10: #{tpu_custom_call.1} parent=5 // pred_check_branch
        %465 = sbr.rel (%p462) target = $region12
      $region11: #{tpu_custom_call.1} parent=5 // pred_region
        %s466 = ssub.s32 %s38, 1
        // Predicated region
        $region13: #{tpu_custom_call.1} parent=11 // pred_check
          %p467 = pneg %p111
        $region14: #{tpu_custom_call.1} parent=11 // pred_check_branch
          %469 = sbr.rel (%p467) target = $region16
        $region15: #{tpu_custom_call.1} parent=11 // pred_region
          %s471 = ssub.s32 8192, 8192
          %472 = vsyncadd [#allocation7], %s471
          %s473 = sshll.u32 [#allocation8], 4
          %s474 = int_to_ptr.vmem [resolvable:$true] %s473
          %479 = dma.hbm_to_vmem [thread:$0]  %s2, 8192, %s474, [#allocation7], 512, 512, 32
        $region16: #{tpu_custom_call.1} parent=11 // pred_fallthru
          _
        // Predicated region
        $region17: #{tpu_custom_call.1} parent=11 // pred_check
          %p480 = pneg %p132
        $region18: #{tpu_custom_call.1} parent=11 // pred_check_branch
          %482 = sbr.rel (%p480) target = $region20
        $region19: #{tpu_custom_call.1} parent=11 // pred_region
          %s484 = ssub.s32 128, 128
          %485 = vsyncadd [#allocation10], %s484
          %s487 = sshll.u32 [#allocation9], 4
          %s488 = int_to_ptr.vmem [resolvable:$true] %s487
          %490 = dma.hbm_to_vmem [thread:$0]  %s3, 128, %s488, [#allocation10]
        $region20: #{tpu_custom_call.1} parent=11 // pred_fallthru
          _
        // Predicated region
        $region21: #{tpu_custom_call.1} parent=11 // pred_check
          %p491 = pneg %p153
        $region22: #{tpu_custom_call.1} parent=11 // pred_check_branch
          %493 = sbr.rel (%p491) target = $region24
        $region23: #{tpu_custom_call.1} parent=11 // pred_region
          _
        $region24: #{tpu_custom_call.1} parent=11 // pred_fallthru
          _
        // Predicated region
        $region25: #{tpu_custom_call.1} parent=11 // pred_check
          %p494 = pneg %p174
        $region26: #{tpu_custom_call.1} parent=11 // pred_check_branch
          %496 = sbr.rel (%p494) target = $region28
        $region27: #{tpu_custom_call.1} parent=11 // pred_region
          %s498 = ssub.s32 4096, 4096
          %499 = vsyncadd [#allocation10], %s498
          %s500 = sshll.u32 [#allocation11], 4
          %s501 = int_to_ptr.vmem [resolvable:$true] %s500
          %506 = dma.hbm_to_vmem [thread:$0]  %s5, 4096, %s501, [#allocation10], 1024, 1024, 64
        $region28: #{tpu_custom_call.1} parent=11 // pred_fallthru
          _
        // Predicated region
        $region29: #{tpu_custom_call.1} parent=11 // pred_check
          %p507 = pneg %p195
        $region30: #{tpu_custom_call.1} parent=11 // pred_check_branch
          %509 = sbr.rel (%p507) target = $region32
        $region31: #{tpu_custom_call.1} parent=11 // pred_region
          %s511 = ssub.s32 32768, 32768
          %512 = vsyncadd [#allocation13], %s511
          %s513 = sshll.u32 [#allocation12], 4
          %s514 = int_to_ptr.vmem [resolvable:$true] %s513
          %519 = dma.hbm_to_vmem [thread:$0]  %s6, 32768, %s514, [#allocation13], 256, 256, 16
        $region32: #{tpu_custom_call.1} parent=11 // pred_fallthru
          _
        // Predicated region
        $region33: #{tpu_custom_call.1} parent=11 // pred_check
          %p520 = pneg %p216
        $region34: #{tpu_custom_call.1} parent=11 // pred_check_branch
          %522 = sbr.rel (%p520) target = $region36
        $region35: #{tpu_custom_call.1} parent=11 // pred_region
          _
        $region36: #{tpu_custom_call.1} parent=11 // pred_fallthru
          _
        // Predicated region
        $region37: #{tpu_custom_call.1} parent=11 // pred_check
          %p523 = pneg %p237
        $region38: #{tpu_custom_call.1} parent=11 // pred_check_branch
          %525 = sbr.rel (%p523) target = $region40
        $region39: #{tpu_custom_call.1} parent=11 // pred_region
          _
        $region40: #{tpu_custom_call.1} parent=11 // pred_fallthru
          _
        // Predicated region
        $region41: #{tpu_custom_call.1} parent=11 // pred_check
          %p526 = pneg %p258
        $region42: #{tpu_custom_call.1} parent=11 // pred_check_branch
          %528 = sbr.rel (%p526) target = $region44
        $region43: #{tpu_custom_call.1} parent=11 // pred_region
          %s530 = ssub.s32 64, 64
          %531 = vsyncadd [#allocation13], %s530
          %s533 = sshll.u32 [#allocation14], 4
          %s534 = int_to_ptr.vmem [resolvable:$true] %s533
          %536 = dma.hbm_to_vmem [thread:$0]  %s9, 64, %s534, [#allocation13]
        $region44: #{tpu_custom_call.1} parent=11 // pred_fallthru
          _
        // Predicated region
        $region45: #{tpu_custom_call.1} parent=11 // pred_check
          %p537 = pneg %p279
        $region46: #{tpu_custom_call.1} parent=11 // pred_check_branch
          %539 = sbr.rel (%p537) target = $region48
        $region47: #{tpu_custom_call.1} parent=11 // pred_region
          %s541 = ssub.s32 2048, 2048
          %542 = vsyncadd [#allocation16], %s541
          %s543 = sshll.u32 [#allocation15], 4
          %s544 = int_to_ptr.vmem [resolvable:$true] %s543
          %549 = dma.hbm_to_vmem [thread:$0]  %s10, 2048, %s544, [#allocation16], 512, 512, 32
        $region48: #{tpu_custom_call.1} parent=11 // pred_fallthru
          _
        // Predicated region
        $region49: #{tpu_custom_call.1} parent=11 // pred_check
          %p550 = pneg %p300
        $region50: #{tpu_custom_call.1} parent=11 // pred_check_branch
          %552 = sbr.rel (%p550) target = $region52
        $region51: #{tpu_custom_call.1} parent=11 // pred_region
          %s554 = ssub.s32 8192, 8192
          %555 = vsyncadd [#allocation16], %s554
          %s556 = sshll.u32 [#allocation17], 4
          %s557 = int_to_ptr.vmem [resolvable:$true] %s556
          %562 = dma.hbm_to_vmem [thread:$0]  %s11, 8192, %s557, [#allocation16], 128, 128, 8
        $region52: #{tpu_custom_call.1} parent=11 // pred_fallthru
          _
        // Predicated region
        $region53: #{tpu_custom_call.1} parent=11 // pred_check
          %p563 = pneg %p321
        $region54: #{tpu_custom_call.1} parent=11 // pred_check_branch
          %565 = sbr.rel (%p563) target = $region56
        $region55: #{tpu_custom_call.1} parent=11 // pred_region
          _
        $region56: #{tpu_custom_call.1} parent=11 // pred_fallthru
          _
        // Predicated region
        $region57: #{tpu_custom_call.1} parent=11 // pred_check
          %p566 = pneg %p342
        $region58: #{tpu_custom_call.1} parent=11 // pred_check_branch
          %568 = sbr.rel (%p566) target = $region60
        $region59: #{tpu_custom_call.1} parent=11 // pred_region
          _
        $region60: #{tpu_custom_call.1} parent=11 // pred_fallthru
          _
        // Predicated region
        $region61: #{tpu_custom_call.1} parent=11 // pred_check
          %p569 = pneg %p363
        $region62: #{tpu_custom_call.1} parent=11 // pred_check_branch
          %571 = sbr.rel (%p569) target = $region64
        $region63: #{tpu_custom_call.1} parent=11 // pred_region
          _
        $region64: #{tpu_custom_call.1} parent=11 // pred_fallthru
          _
        // Predicated region
        $region65: #{tpu_custom_call.1} parent=11 // pred_check
          %p572 = pneg %p384
        $region66: #{tpu_custom_call.1} parent=11 // pred_check_branch
          %574 = sbr.rel (%p572) target = $region68
        $region67: #{tpu_custom_call.1} parent=11 // pred_region
          %s576 = ssub.s32 1024, 1024
          %577 = vsyncadd [#allocation19], %s576
          %s578 = sshll.u32 [#allocation18], 4
          %s579 = int_to_ptr.vmem [resolvable:$true] %s578
          %584 = dma.hbm_to_vmem [thread:$0]  %s15, 1024, %s579, [#allocation19], 256, 256, 16
        $region68: #{tpu_custom_call.1} parent=11 // pred_fallthru
          _
        // Predicated region
        $region69: #{tpu_custom_call.1} parent=11 // pred_check
          %p585 = pneg %p405
        $region70: #{tpu_custom_call.1} parent=11 // pred_check_branch
          %587 = sbr.rel (%p585) target = $region72
        $region71: #{tpu_custom_call.1} parent=11 // pred_region
          _
        $region72: #{tpu_custom_call.1} parent=11 // pred_fallthru
          _
        // Predicated region
        $region73: #{tpu_custom_call.1} parent=11 // pred_check
          %p588 = pneg %p426
        $region74: #{tpu_custom_call.1} parent=11 // pred_check_branch
          %590 = sbr.rel (%p588) target = $region76
        $region75: #{tpu_custom_call.1} parent=11 // pred_region
          _
        $region76: #{tpu_custom_call.1} parent=11 // pred_fallthru
          _
      $region12: #{tpu_custom_call.1} parent=5 // pred_fallthru
        _
      %p591 = scmp.lt.s32.totalorder %s38, 2
      // Predicated region
      $region77: #{tpu_custom_call.1} parent=5 // pred_check
        %p592 = pneg %p591
      $region78: #{tpu_custom_call.1} parent=5 // pred_check_branch
        %594 = sbr.rel (%p592) target = $region80
      $region79: #{tpu_custom_call.1} parent=5 // pred_region
        // Predicated region
        $region81: #{tpu_custom_call.1} parent=79 // pred_check
          %p595 = pneg %p58
        $region82: #{tpu_custom_call.1} parent=79 // pred_check_branch
          %597 = sbr.rel (%p595) target = $region84
        $region83: #{tpu_custom_call.1} parent=79 // pred_region
          %s598 = sand.u32 %s48, 1
          %s599 = scalar_lea.sflag [#allocation4], %s598
          %s600 = sand.u32 %s48, 1
          %s601 = smul.addr %s600, 32
          %s602 = scalar_lea.vmem [#allocation3], %s601
          %s604 = ssub.s32 512, 512
          %605 = vsyncadd %s599, %s604
          %s606 = smul.addr %s38, 8
          %s607 = smul.addr %s606, 64
          %s608 = scalar_lea.hbm %s0, %s607
          %s609 = sshll.u32 %s602, 4
          %s610 = int_to_ptr.vmem [resolvable:$true] %s609
          %615 = dma.hbm_to_vmem [thread:$0]  %s608, 512, %s610, %s599, 64, 64, 4
        $region84: #{tpu_custom_call.1} parent=79 // pred_fallthru
          _
        // Predicated region
        $region85: #{tpu_custom_call.1} parent=79 // pred_check
          %p616 = pneg %p84
        $region86: #{tpu_custom_call.1} parent=79 // pred_check_branch
          %618 = sbr.rel (%p616) target = $region88
        $region87: #{tpu_custom_call.1} parent=79 // pred_region
          %s619 = sand.u32 %s38, 1
          %s620 = scalar_lea.sflag [#allocation7], %s619
          %s621 = sand.u32 %s74, 1
          %s622 = smul.addr %s621, 8
          %s623 = scalar_lea.vmem [#allocation6], %s622
          %s625 = ssub.s32 128, 128
          %626 = vsyncadd %s620, %s625
          %s627 = smul.addr %s38, 8
          %s628 = smul.addr %s627, 16
          %s629 = scalar_lea.hbm %s1, %s628
          %s631 = sshll.u32 %s623, 4
          %s632 = int_to_ptr.vmem [resolvable:$true] %s631
          %634 = dma.hbm_to_vmem [thread:$0]  %s629, 128, %s632, %s620
        $region88: #{tpu_custom_call.1} parent=79 // pred_fallthru
          _
      $region80: #{tpu_custom_call.1} parent=5 // pred_fallthru
        _
      %p635 = scmp.le.s32.totalorder 1, %s38
      %p636 = scmp.lt.s32.totalorder %s38, 3
      %p637 = pnand %p635, %p636
      %p638 = pneg %p637
      // Predicated region
      $region89: #{tpu_custom_call.1} parent=5 // pred_check
        _
      $region90: #{tpu_custom_call.1} parent=5 // pred_check_branch
        %640 = sbr.rel (%p637) target = $region92
      $region91: #{tpu_custom_call.1} parent=5 // pred_region
        %s641 = ssub.s32 %s38, 1
        %s642 = sand.u32 %s51, 1
        %s643 = scalar_lea.sflag [#allocation4], %s642
        %s644 = sand.u32 %s51, 1
        %s645 = smul.addr %s644, 32
        %s646 = scalar_lea.vmem [#allocation3], %s645
        // Predicated region
        $region93: #{tpu_custom_call.1} parent=91 // pred_check
          %p647 = pneg %p64
        $region94: #{tpu_custom_call.1} parent=91 // pred_check_branch
          %649 = sbr.rel (%p647) target = $region96
        $region95: #{tpu_custom_call.1} parent=91 // pred_region
          %650 = dma.done %s643, 512
        $region96: #{tpu_custom_call.1} parent=91 // pred_fallthru
          _
        %s651 = sand.u32 %s43, 1
        %s652 = scalar_lea.sflag [#allocation7], %s651
        %s653 = sand.u32 %s77, 1
        %s654 = smul.addr %s653, 8
        %s655 = scalar_lea.vmem [#allocation6], %s654
        // Predicated region
        $region97: #{tpu_custom_call.1} parent=91 // pred_check
          %p656 = pneg %p90
        $region98: #{tpu_custom_call.1} parent=91 // pred_check_branch
          %658 = sbr.rel (%p656) target = $region100
        $region99: #{tpu_custom_call.1} parent=91 // pred_region
          %659 = dma.done %s652, 128
        $region100: #{tpu_custom_call.1} parent=91 // pred_fallthru
          _
        // Predicated region
        $region101: #{tpu_custom_call.1} parent=91 // pred_check
          %p660 = pneg %p111
        $region102: #{tpu_custom_call.1} parent=91 // pred_check_branch
          %662 = sbr.rel (%p660) target = $region104
        $region103: #{tpu_custom_call.1} parent=91 // pred_region
          %663 = dma.done [#allocation7], 8192
        $region104: #{tpu_custom_call.1} parent=91 // pred_fallthru
          _
        // Predicated region
        $region105: #{tpu_custom_call.1} parent=91 // pred_check
          %p664 = pneg %p132
        $region106: #{tpu_custom_call.1} parent=91 // pred_check_branch
          %666 = sbr.rel (%p664) target = $region108
        $region107: #{tpu_custom_call.1} parent=91 // pred_region
          %667 = dma.done [#allocation10], 128
        $region108: #{tpu_custom_call.1} parent=91 // pred_fallthru
          _
        // Predicated region
        $region109: #{tpu_custom_call.1} parent=91 // pred_check
          %p668 = pneg %p174
        $region110: #{tpu_custom_call.1} parent=91 // pred_check_branch
          %670 = sbr.rel (%p668) target = $region112
        $region111: #{tpu_custom_call.1} parent=91 // pred_region
          %671 = dma.done [#allocation10], 4096
        $region112: #{tpu_custom_call.1} parent=91 // pred_fallthru
          _
        // Predicated region
        $region113: #{tpu_custom_call.1} parent=91 // pred_check
          %p672 = pneg %p195
        $region114: #{tpu_custom_call.1} parent=91 // pred_check_branch
          %674 = sbr.rel (%p672) target = $region116
        $region115: #{tpu_custom_call.1} parent=91 // pred_region
          %675 = dma.done [#allocation13], 32768
        $region116: #{tpu_custom_call.1} parent=91 // pred_fallthru
          _
        // Predicated region
        $region117: #{tpu_custom_call.1} parent=91 // pred_check
          %p676 = pneg %p258
        $region118: #{tpu_custom_call.1} parent=91 // pred_check_branch
          %678 = sbr.rel (%p676) target = $region120
        $region119: #{tpu_custom_call.1} parent=91 // pred_region
          %679 = dma.done [#allocation13], 64
        $region120: #{tpu_custom_call.1} parent=91 // pred_fallthru
          _
        // Predicated region
        $region121: #{tpu_custom_call.1} parent=91 // pred_check
          %p680 = pneg %p279
        $region122: #{tpu_custom_call.1} parent=91 // pred_check_branch
          %682 = sbr.rel (%p680) target = $region124
        $region123: #{tpu_custom_call.1} parent=91 // pred_region
          %683 = dma.done [#allocation16], 2048
        $region124: #{tpu_custom_call.1} parent=91 // pred_fallthru
          _
        // Predicated region
        $region125: #{tpu_custom_call.1} parent=91 // pred_check
          %p684 = pneg %p300
        $region126: #{tpu_custom_call.1} parent=91 // pred_check_branch
          %686 = sbr.rel (%p684) target = $region128
        $region127: #{tpu_custom_call.1} parent=91 // pred_region
          %687 = dma.done [#allocation16], 8192
        $region128: #{tpu_custom_call.1} parent=91 // pred_fallthru
          _
        // Predicated region
        $region129: #{tpu_custom_call.1} parent=91 // pred_check
          %p688 = pneg %p384
        $region130: #{tpu_custom_call.1} parent=91 // pred_check_branch
          %690 = sbr.rel (%p688) target = $region132
        $region131: #{tpu_custom_call.1} parent=91 // pred_region
          %691 = dma.done [#allocation19], 1024
        $region132: #{tpu_custom_call.1} parent=91 // pred_fallthru
          _
        %s692 = sand.u32 %s51, 1
        %s693 = scalar_lea.sflag [#allocation4], %s692
        %s694 = sand.u32 %s51, 1
        %s695 = smul.addr %s694, 32
        %s696 = scalar_lea.vmem [#allocation3], %s695
        %p697 = pneg %p64
        %p698 = pneg %p61
        %s699 = sand.u32 %s43, 1
        %s700 = scalar_lea.sflag [#allocation7], %s699
        %s701 = sand.u32 %s77, 1
        %s702 = smul.addr %s701, 8
        %s703 = scalar_lea.vmem [#allocation6], %s702
        %p704 = pneg %p90
        %p705 = pneg %p87
        %p706 = pneg %p111
        %p707 = pneg %p108
        %p708 = pneg %p132
        %p709 = pneg %p129
        %p710 = pneg %p153
        %p711 = pneg %p150
        %p712 = pneg %p174
        %p713 = pneg %p171
        %p714 = pneg %p195
        %p715 = pneg %p192
        %p716 = pneg %p216
        %p717 = pneg %p213
        %p718 = pneg %p237
        %p719 = pneg %p234
        %p720 = pneg %p258
        %p721 = pneg %p255
        %p722 = pneg %p279
        %p723 = pneg %p276
        %p724 = pneg %p300
        %p725 = pneg %p297
        %p726 = pneg %p321
        %p727 = pneg %p318
        %p728 = pneg %p342
        %p729 = pneg %p339
        %p730 = pneg %p363
        %p731 = pneg %p360
        %p732 = pneg %p384
        %p733 = pneg %p381
        %p734 = pneg %p405
        %p735 = pneg %p402
        %p736 = pneg %p426
        %p737 = pneg %p423
        %p738 = pneg %p452
        %p739 = pneg %p449
        %s740 = sand.u32 %s439, 1
        %s741 = scalar_lea.sflag [#allocation5], %s740
        %s742 = sand.u32 %s439, 1
        %s743 = scalar_lea.vmem [#allocation20], %s742
        %v745 = vld [vmem:[%s646] sm:$0xf]
        %v746 = vld [vmem:[%s646 + $0x4] sm:$0xf]
        %v747 = vld [vmem:[%s646 + $0x8] sm:$0xf]
        %v748 = vld [vmem:[%s646 + $0xc] sm:$0xf]
        %v749 = vld [vmem:[%s646 + $0x10] sm:$0xf]
        %v750 = vld [vmem:[%s646 + $0x14] sm:$0xf]
        %v751 = vld [vmem:[%s646 + $0x18] sm:$0xf]
        %v752 = vld [vmem:[%s646 + $0x1c] sm:$0xf]
        %v753 = vld [vmem:[#allocation8] sm:$0xff]
        %v754 = vld [vmem:[#allocation8 + $0x8] sm:$0xff]
        %v755 = vld [vmem:[#allocation8 + $0x10] sm:$0xff]
        %v756 = vld [vmem:[#allocation8 + $0x18] sm:$0xff]
        %v757 = vld [vmem:[#allocation8 + $0x20] sm:$0xff]
        %v758 = vld [vmem:[#allocation8 + $0x28] sm:$0xff]
        %v759 = vld [vmem:[#allocation8 + $0x30] sm:$0xff]
        %v760 = vld [vmem:[#allocation8 + $0x38] sm:$0xff]
        %v761 = vld [vmem:[#allocation8 + $0x40] sm:$0xff]
        %v762 = vld [vmem:[#allocation8 + $0x48] sm:$0xff]
        %v763 = vld [vmem:[#allocation8 + $0x50] sm:$0xff]
        %v764 = vld [vmem:[#allocation8 + $0x58] sm:$0xff]
        %v765 = vld [vmem:[#allocation8 + $0x60] sm:$0xff]
        %v766 = vld [vmem:[#allocation8 + $0x68] sm:$0xff]
        %v767 = vld [vmem:[#allocation8 + $0x70] sm:$0xff]
        %v768 = vld [vmem:[#allocation8 + $0x78] sm:$0xff]
        %v769 = vld [vmem:[#allocation8 + $0x80] sm:$0xff]
        %v770 = vld [vmem:[#allocation8 + $0x88] sm:$0xff]
        %v771 = vld [vmem:[#allocation8 + $0x90] sm:$0xff]
        %v772 = vld [vmem:[#allocation8 + $0x98] sm:$0xff]
        %v773 = vld [vmem:[#allocation8 + $0xa0] sm:$0xff]
        %v774 = vld [vmem:[#allocation8 + $0xa8] sm:$0xff]
        %v775 = vld [vmem:[#allocation8 + $0xb0] sm:$0xff]
        %v776 = vld [vmem:[#allocation8 + $0xb8] sm:$0xff]
        %v777 = vld [vmem:[#allocation8 + $0xc0] sm:$0xff]
        %v778 = vld [vmem:[#allocation8 + $0xc8] sm:$0xff]
        %v779 = vld [vmem:[#allocation8 + $0xd0] sm:$0xff]
        %v780 = vld [vmem:[#allocation8 + $0xd8] sm:$0xff]
        %v781 = vld [vmem:[#allocation8 + $0xe0] sm:$0xff]
        %v782 = vld [vmem:[#allocation8 + $0xe8] sm:$0xff]
        %v783 = vld [vmem:[#allocation8 + $0xf0] sm:$0xff]
        %v784 = vld [vmem:[#allocation8 + $0xf8] sm:$0xff]
        %v785 = vld [vmem:[#allocation8 + $0x100] sm:$0xff]
        %v786 = vld [vmem:[#allocation8 + $0x108] sm:$0xff]
        %v787 = vld [vmem:[#allocation8 + $0x110] sm:$0xff]
        %v788 = vld [vmem:[#allocation8 + $0x118] sm:$0xff]
        %v789 = vld [vmem:[#allocation8 + $0x120] sm:$0xff]
        %v790 = vld [vmem:[#allocation8 + $0x128] sm:$0xff]
        %v791 = vld [vmem:[#allocation8 + $0x130] sm:$0xff]
        %v792 = vld [vmem:[#allocation8 + $0x138] sm:$0xff]
        %v793 = vld [vmem:[#allocation8 + $0x140] sm:$0xff]
        %v794 = vld [vmem:[#allocation8 + $0x148] sm:$0xff]
        %v795 = vld [vmem:[#allocation8 + $0x150] sm:$0xff]
        %v796 = vld [vmem:[#allocation8 + $0x158] sm:$0xff]
        %v797 = vld [vmem:[#allocation8 + $0x160] sm:$0xff]
        %v798 = vld [vmem:[#allocation8 + $0x168] sm:$0xff]
        %v799 = vld [vmem:[#allocation8 + $0x170] sm:$0xff]
        %v800 = vld [vmem:[#allocation8 + $0x178] sm:$0xff]
        %v801 = vld [vmem:[#allocation8 + $0x180] sm:$0xff]
        %v802 = vld [vmem:[#allocation8 + $0x188] sm:$0xff]
        %v803 = vld [vmem:[#allocation8 + $0x190] sm:$0xff]
        %v804 = vld [vmem:[#allocation8 + $0x198] sm:$0xff]
        %v805 = vld [vmem:[#allocation8 + $0x1a0] sm:$0xff]
        %v806 = vld [vmem:[#allocation8 + $0x1a8] sm:$0xff]
        %v807 = vld [vmem:[#allocation8 + $0x1b0] sm:$0xff]
        %v808 = vld [vmem:[#allocation8 + $0x1b8] sm:$0xff]
        %v809 = vld [vmem:[#allocation8 + $0x1c0] sm:$0xff]
        %v810 = vld [vmem:[#allocation8 + $0x1c8] sm:$0xff]
        %v811 = vld [vmem:[#allocation8 + $0x1d0] sm:$0xff]
        %v812 = vld [vmem:[#allocation8 + $0x1d8] sm:$0xff]
        %v813 = vld [vmem:[#allocation8 + $0x1e0] sm:$0xff]
        %v814 = vld [vmem:[#allocation8 + $0x1e8] sm:$0xff]
        %v815 = vld [vmem:[#allocation8 + $0x1f0] sm:$0xff]
        %v816 = vld [vmem:[#allocation8 + $0x1f8] sm:$0xff]
        %v825 = vunpack.c.l.b16 %v745
        %v826 = vunpack.c.l.b16 %v746
        %v827 = vunpack.c.l.b16 %v747
        %v828 = vunpack.c.l.b16 %v748
        %v829 = vunpack.c.l.b16 %v749
        %v830 = vunpack.c.l.b16 %v750
        %v831 = vunpack.c.l.b16 %v751
        %v832 = vunpack.c.l.b16 %v752
        %v833 = vpack.c.b16 %v826, %v825
        %v834 = vpack.c.b16 %v828, %v827
        %v835 = vpack.c.b16 %v830, %v829
        %v836 = vpack.c.b16 %v832, %v831
        %v905 = vunpack.c.l.b16 %v753
        %v906 = vunpack.c.h.b16 %v753
        %v907 = vunpack.c.l.b16 %v754
        %v908 = vunpack.c.h.b16 %v754
        %v909 = vunpack.c.l.b16 %v755
        %v910 = vunpack.c.h.b16 %v755
        %v911 = vunpack.c.l.b16 %v756
        %v912 = vunpack.c.h.b16 %v756
        %v913 = vunpack.c.l.b16 %v757
        %v914 = vunpack.c.h.b16 %v757
        %v915 = vunpack.c.l.b16 %v758
        %v916 = vunpack.c.h.b16 %v758
        %v917 = vunpack.c.l.b16 %v759
        %v918 = vunpack.c.h.b16 %v759
        %v919 = vunpack.c.l.b16 %v760
        %v920 = vunpack.c.h.b16 %v760
        %v921 = vunpack.c.l.b16 %v761
        %v922 = vunpack.c.h.b16 %v761
        %v923 = vunpack.c.l.b16 %v762
        %v924 = vunpack.c.h.b16 %v762
        %v925 = vunpack.c.l.b16 %v763
        %v926 = vunpack.c.h.b16 %v763
        %v927 = vunpack.c.l.b16 %v764
        %v928 = vunpack.c.h.b16 %v764
        %v929 = vunpack.c.l.b16 %v765
        %v930 = vunpack.c.h.b16 %v765
        %v931 = vunpack.c.l.b16 %v766
        %v932 = vunpack.c.h.b16 %v766
        %v933 = vunpack.c.l.b16 %v767
        %v934 = vunpack.c.h.b16 %v767
        %v935 = vunpack.c.l.b16 %v768
        %v936 = vunpack.c.h.b16 %v768
        %v937 = vunpack.c.l.b16 %v769
        %v938 = vunpack.c.h.b16 %v769
        %v939 = vunpack.c.l.b16 %v770
        %v940 = vunpack.c.h.b16 %v770
        %v941 = vunpack.c.l.b16 %v771
        %v942 = vunpack.c.h.b16 %v771
        %v943 = vunpack.c.l.b16 %v772
        %v944 = vunpack.c.h.b16 %v772
        %v945 = vunpack.c.l.b16 %v773
        %v946 = vunpack.c.h.b16 %v773
        %v947 = vunpack.c.l.b16 %v774
        %v948 = vunpack.c.h.b16 %v774
        %v949 = vunpack.c.l.b16 %v775
        %v950 = vunpack.c.h.b16 %v775
        %v951 = vunpack.c.l.b16 %v776
        %v952 = vunpack.c.h.b16 %v776
        %v953 = vunpack.c.l.b16 %v777
        %v954 = vunpack.c.h.b16 %v777
        %v955 = vunpack.c.l.b16 %v778
        %v956 = vunpack.c.h.b16 %v778
        %v957 = vunpack.c.l.b16 %v779
        %v958 = vunpack.c.h.b16 %v779
        %v959 = vunpack.c.l.b16 %v780
        %v960 = vunpack.c.h.b16 %v780
        %v961 = vunpack.c.l.b16 %v781
        %v962 = vunpack.c.h.b16 %v781
        %v963 = vunpack.c.l.b16 %v782
        %v964 = vunpack.c.h.b16 %v782
        %v965 = vunpack.c.l.b16 %v783
        %v966 = vunpack.c.h.b16 %v783
        %v967 = vunpack.c.l.b16 %v784
        %v968 = vunpack.c.h.b16 %v784
        %v969 = vunpack.c.l.b16 %v785
        %v970 = vunpack.c.h.b16 %v785
        %v971 = vunpack.c.l.b16 %v786
        %v972 = vunpack.c.h.b16 %v786
        %v973 = vunpack.c.l.b16 %v787
        %v974 = vunpack.c.h.b16 %v787
        %v975 = vunpack.c.l.b16 %v788
        %v976 = vunpack.c.h.b16 %v788
        %v977 = vunpack.c.l.b16 %v789
        %v978 = vunpack.c.h.b16 %v789
        %v979 = vunpack.c.l.b16 %v790
        %v980 = vunpack.c.h.b16 %v790
        %v981 = vunpack.c.l.b16 %v791
        %v982 = vunpack.c.h.b16 %v791
        %v983 = vunpack.c.l.b16 %v792
        %v984 = vunpack.c.h.b16 %v792
        %v985 = vunpack.c.l.b16 %v793
        %v986 = vunpack.c.h.b16 %v793
        %v987 = vunpack.c.l.b16 %v794
        %v988 = vunpack.c.h.b16 %v794
        %v989 = vunpack.c.l.b16 %v795
        %v990 = vunpack.c.h.b16 %v795
        %v991 = vunpack.c.l.b16 %v796
        %v992 = vunpack.c.h.b16 %v796
        %v993 = vunpack.c.l.b16 %v797
        %v994 = vunpack.c.h.b16 %v797
        %v995 = vunpack.c.l.b16 %v798
        %v996 = vunpack.c.h.b16 %v798
        %v997 = vunpack.c.l.b16 %v799
        %v998 = vunpack.c.h.b16 %v799
        %v999 = vunpack.c.l.b16 %v800
        %v1000 = vunpack.c.h.b16 %v800
        %v1001 = vunpack.c.l.b16 %v801
        %v1002 = vunpack.c.h.b16 %v801
        %v1003 = vunpack.c.l.b16 %v802
        %v1004 = vunpack.c.h.b16 %v802
        %v1005 = vunpack.c.l.b16 %v803
        %v1006 = vunpack.c.h.b16 %v803
        %v1007 = vunpack.c.l.b16 %v804
        %v1008 = vunpack.c.h.b16 %v804
        %v1009 = vunpack.c.l.b16 %v805
        %v1010 = vunpack.c.h.b16 %v805
        %v1011 = vunpack.c.l.b16 %v806
        %v1012 = vunpack.c.h.b16 %v806
        %v1013 = vunpack.c.l.b16 %v807
        %v1014 = vunpack.c.h.b16 %v807
        %v1015 = vunpack.c.l.b16 %v808
        %v1016 = vunpack.c.h.b16 %v808
        %v1017 = vunpack.c.l.b16 %v809
        %v1018 = vunpack.c.h.b16 %v809
        %v1019 = vunpack.c.l.b16 %v810
        %v1020 = vunpack.c.h.b16 %v810
        %v1021 = vunpack.c.l.b16 %v811
        %v1022 = vunpack.c.h.b16 %v811
        %v1023 = vunpack.c.l.b16 %v812
        %v1024 = vunpack.c.h.b16 %v812
        %v1025 = vunpack.c.l.b16 %v813
        %v1026 = vunpack.c.h.b16 %v813
        %v1027 = vunpack.c.l.b16 %v814
        %v1028 = vunpack.c.h.b16 %v814
        %v1029 = vunpack.c.l.b16 %v815
        %v1030 = vunpack.c.h.b16 %v815
        %v1031 = vunpack.c.l.b16 %v816
        %v1032 = vunpack.c.h.b16 %v816
        %v1033 = vpack.c.b16 %v913, %v905
        %v1034 = vpack.c.b16 %v914, %v906
        %v1035 = vpack.c.b16 %v915, %v907
        %v1036 = vpack.c.b16 %v916, %v908
        %v1037 = vpack.c.b16 %v917, %v909
        %v1038 = vpack.c.b16 %v918, %v910
        %v1039 = vpack.c.b16 %v919, %v911
        %v1040 = vpack.c.b16 %v920, %v912
        %v1041 = vpack.c.b16 %v929, %v921
        %v1042 = vpack.c.b16 %v930, %v922
        %v1043 = vpack.c.b16 %v931, %v923
        %v1044 = vpack.c.b16 %v932, %v924
        %v1045 = vpack.c.b16 %v933, %v925
        %v1046 = vpack.c.b16 %v934, %v926
        %v1047 = vpack.c.b16 %v935, %v927
        %v1048 = vpack.c.b16 %v936, %v928
        %v1049 = vpack.c.b16 %v945, %v937
        %v1050 = vpack.c.b16 %v946, %v938
        %v1051 = vpack.c.b16 %v947, %v939
        %v1052 = vpack.c.b16 %v948, %v940
        %v1053 = vpack.c.b16 %v949, %v941
        %v1054 = vpack.c.b16 %v950, %v942
        %v1055 = vpack.c.b16 %v951, %v943
        %v1056 = vpack.c.b16 %v952, %v944
        %v1057 = vpack.c.b16 %v961, %v953
        %v1058 = vpack.c.b16 %v962, %v954
        %v1059 = vpack.c.b16 %v963, %v955
        %v1060 = vpack.c.b16 %v964, %v956
        %v1061 = vpack.c.b16 %v965, %v957
        %v1062 = vpack.c.b16 %v966, %v958
        %v1063 = vpack.c.b16 %v967, %v959
        %v1064 = vpack.c.b16 %v968, %v960
        %v1065 = vpack.c.b16 %v977, %v969
        %v1066 = vpack.c.b16 %v978, %v970
        %v1067 = vpack.c.b16 %v979, %v971
        %v1068 = vpack.c.b16 %v980, %v972
        %v1069 = vpack.c.b16 %v981, %v973
        %v1070 = vpack.c.b16 %v982, %v974
        %v1071 = vpack.c.b16 %v983, %v975
        %v1072 = vpack.c.b16 %v984, %v976
        %v1073 = vpack.c.b16 %v993, %v985
        %v1074 = vpack.c.b16 %v994, %v986
        %v1075 = vpack.c.b16 %v995, %v987
        %v1076 = vpack.c.b16 %v996, %v988
        %v1077 = vpack.c.b16 %v997, %v989
        %v1078 = vpack.c.b16 %v998, %v990
        %v1079 = vpack.c.b16 %v999, %v991
        %v1080 = vpack.c.b16 %v1000, %v992
        %v1081 = vpack.c.b16 %v1009, %v1001
        %v1082 = vpack.c.b16 %v1010, %v1002
        %v1083 = vpack.c.b16 %v1011, %v1003
        %v1084 = vpack.c.b16 %v1012, %v1004
        %v1085 = vpack.c.b16 %v1013, %v1005
        %v1086 = vpack.c.b16 %v1014, %v1006
        %v1087 = vpack.c.b16 %v1015, %v1007
        %v1088 = vpack.c.b16 %v1016, %v1008
        %v1089 = vpack.c.b16 %v1025, %v1017
        %v1090 = vpack.c.b16 %v1026, %v1018
        %v1091 = vpack.c.b16 %v1027, %v1019
        %v1092 = vpack.c.b16 %v1028, %v1020
        %v1093 = vpack.c.b16 %v1029, %v1021
        %v1094 = vpack.c.b16 %v1030, %v1022
        %v1095 = vpack.c.b16 %v1031, %v1023
        %v1096 = vpack.c.b16 %v1032, %v1024
        %1161 = vmatprep.subr.bf16.mxu0 %v1090
        %1162 = vmatpush1.bf16.msra.mxu0 %v1089
        %1163 = vmatprep.subr.bf16.mxu0 %v1082
        %1164 = vmatpush1.bf16.msra.mxu0 %v1081
        %1165 = vmatprep.subr.bf16.mxu0 %v1074
        %1166 = vmatpush1.bf16.msra.mxu0 %v1073
        %1167 = vmatprep.subr.bf16.mxu0 %v1066
        %1168 = vmatpush1.bf16.msra.mxu0 %v1065
        %1169 = vmatprep.subr.bf16.mxu0 %v1058
        %1170 = vmatpush1.bf16.msra.mxu0 %v1057
        %1171 = vmatprep.subr.bf16.mxu0 %v1050
        %1172 = vmatpush1.bf16.msra.mxu0 %v1049
        %1173 = vmatprep.subr.bf16.mxu0 %v1042
        %1174 = vmatpush1.bf16.msra.mxu0 %v1041
        %1175 = vmatprep.subr.bf16.mxu0 %v1034
        %1176 = vmatpush1.bf16.msra.mxu0 %v1033
        %1177 = vmatprep.subr.bf16.mxu0 0
        %1178 = vmatpush2.bf16.msra.mxu0 0
        %1179 = vmatprep.subr.bf16.mxu0 0
        %1180 = vmatpush2.bf16.msra.mxu0 0
        %1181 = vmatprep.subr.bf16.mxu0 0
        %1182 = vmatpush2.bf16.msra.mxu0 0
        %1183 = vmatprep.subr.bf16.mxu0 0
        %1184 = vmatpush2.bf16.msra.mxu0 0
        %1185 = vmatprep.subr.bf16.mxu0 0
        %1186 = vmatpush2.bf16.msra.mxu0 0
        %1187 = vmatprep.subr.bf16.mxu0 0
        %1188 = vmatpush2.bf16.msra.mxu0 0
        %1189 = vmatprep.subr.bf16.mxu0 0
        %1190 = vmatpush2.bf16.msra.mxu0 0
        %1191 = vmatprep.subr.bf16.mxu0 0
        %1192 = vmatpush2.bf16.msra.mxu0 0
        %1193 = vmatprep.mubr.bf16.mxu0 0
        %1194 = vmatmul.mubr.bf16.gmra.mxu0 %v833
        %v1195 = vpop.f32.mrf.mxu0
        %v1196 = vadd.f32 0.0, %v1195
        %v1197 = vpop.f32.mrf.mxu0
        %v1198 = vadd.f32 0.0, %v1197
        %v1199 = vpop.f32.mrf.mxu0
        %v1200 = vadd.f32 0.0, %v1199
        %v1201 = vpop.f32.mrf.mxu0
        %v1202 = vadd.f32 0.0, %v1201
        %1203 = vmatprep.mubr.bf16.mxu0 0
        %1204 = vmatmul.mubr.bf16.gmra.mxu0 %v834
        %v1205 = vpop.f32.mrf.mxu0
        %v1206 = vadd.f32 0.0, %v1205
        %v1207 = vpop.f32.mrf.mxu0
        %v1208 = vadd.f32 0.0, %v1207
        %v1209 = vpop.f32.mrf.mxu0
        %v1210 = vadd.f32 0.0, %v1209
        %v1211 = vpop.f32.mrf.mxu0
        %v1212 = vadd.f32 0.0, %v1211
        %1213 = vmatprep.mubr.bf16.mxu0 0
        %1214 = vmatmul.mubr.bf16.gmra.mxu0 %v835
        %v1215 = vpop.f32.mrf.mxu0
        %v1216 = vadd.f32 0.0, %v1215
        %v1217 = vpop.f32.mrf.mxu0
        %v1218 = vadd.f32 0.0, %v1217
        %v1219 = vpop.f32.mrf.mxu0
        %v1220 = vadd.f32 0.0, %v1219
        %v1221 = vpop.f32.mrf.mxu0
        %v1222 = vadd.f32 0.0, %v1221
        %1223 = vmatprep.mubr.bf16.mxu0 0
        %1224 = vmatmul.mubr.bf16.gmra.mxu0 %v836
        %v1225 = vpop.f32.mrf.mxu0
        %v1226 = vadd.f32 0.0, %v1225
        %v1227 = vpop.f32.mrf.mxu0
        %v1228 = vadd.f32 0.0, %v1227
        %v1229 = vpop.f32.mrf.mxu0
        %v1230 = vadd.f32 0.0, %v1229
        %v1231 = vpop.f32.mrf.mxu0
        %v1232 = vadd.f32 0.0, %v1231
        %1233 = vdwg.mxu0
        %1234 = vmatprep.subr.bf16.mxu0 %v1092
        %1235 = vmatpush1.bf16.msra.mxu0 %v1091
        %1236 = vmatprep.subr.bf16.mxu0 %v1084
        %1237 = vmatpush1.bf16.msra.mxu0 %v1083
        %1238 = vmatprep.subr.bf16.mxu0 %v1076
        %1239 = vmatpush1.bf16.msra.mxu0 %v1075
        %1240 = vmatprep.subr.bf16.mxu0 %v1068
        %1241 = vmatpush1.bf16.msra.mxu0 %v1067
        %1242 = vmatprep.subr.bf16.mxu0 %v1060
        %1243 = vmatpush1.bf16.msra.mxu0 %v1059
        %1244 = vmatprep.subr.bf16.mxu0 %v1052
        %1245 = vmatpush1.bf16.msra.mxu0 %v1051
        %1246 = vmatprep.subr.bf16.mxu0 %v1044
        %1247 = vmatpush1.bf16.msra.mxu0 %v1043
        %1248 = vmatprep.subr.bf16.mxu0 %v1036
        %1249 = vmatpush1.bf16.msra.mxu0 %v1035
        %1250 = vmatprep.subr.bf16.mxu0 0
        %1251 = vmatpush2.bf16.msra.mxu0 0
        %1252 = vmatprep.subr.bf16.mxu0 0
        %1253 = vmatpush2.bf16.msra.mxu0 0
        %1254 = vmatprep.subr.bf16.mxu0 0
        %1255 = vmatpush2.bf16.msra.mxu0 0
        %1256 = vmatprep.subr.bf16.mxu0 0
        %1257 = vmatpush2.bf16.msra.mxu0 0
        %1258 = vmatprep.subr.bf16.mxu0 0
        %1259 = vmatpush2.bf16.msra.mxu0 0
        %1260 = vmatprep.subr.bf16.mxu0 0
        %1261 = vmatpush2.bf16.msra.mxu0 0
        %1262 = vmatprep.subr.bf16.mxu0 0
        %1263 = vmatpush2.bf16.msra.mxu0 0
        %1264 = vmatprep.subr.bf16.mxu0 0
        %1265 = vmatpush2.bf16.msra.mxu0 0
        %1266 = vmatprep.mubr.bf16.mxu0 0
        %1267 = vmatmul.mubr.bf16.gmra.mxu0 %v833
        %v1268 = vpop.f32.mrf.mxu0
        %v1269 = vadd.f32 0.0, %v1268
        %v1270 = vpop.f32.mrf.mxu0
        %v1271 = vadd.f32 0.0, %v1270
        %v1272 = vpop.f32.mrf.mxu0
        %v1273 = vadd.f32 0.0, %v1272
        %v1274 = vpop.f32.mrf.mxu0
        %v1275 = vadd.f32 0.0, %v1274
        %1276 = vmatprep.mubr.bf16.mxu0 0
        %1277 = vmatmul.mubr.bf16.gmra.mxu0 %v834
        %v1278 = vpop.f32.mrf.mxu0
        %v1279 = vadd.f32 0.0, %v1278
        %v1280 = vpop.f32.mrf.mxu0
        %v1281 = vadd.f32 0.0, %v1280
        %v1282 = vpop.f32.mrf.mxu0
        %v1283 = vadd.f32 0.0, %v1282
        %v1284 = vpop.f32.mrf.mxu0
        %v1285 = vadd.f32 0.0, %v1284
        %1286 = vmatprep.mubr.bf16.mxu0 0
        %1287 = vmatmul.mubr.bf16.gmra.mxu0 %v835
        %v1288 = vpop.f32.mrf.mxu0
        %v1289 = vadd.f32 0.0, %v1288
        %v1290 = vpop.f32.mrf.mxu0
        %v1291 = vadd.f32 0.0, %v1290
        %v1292 = vpop.f32.mrf.mxu0
        %v1293 = vadd.f32 0.0, %v1292
        %v1294 = vpop.f32.mrf.mxu0
        %v1295 = vadd.f32 0.0, %v1294
        %1296 = vmatprep.mubr.bf16.mxu0 0
        %1297 = vmatmul.mubr.bf16.gmra.mxu0 %v836
        %v1298 = vpop.f32.mrf.mxu0
        %v1299 = vadd.f32 0.0, %v1298
        %v1300 = vpop.f32.mrf.mxu0
        %v1301 = vadd.f32 0.0, %v1300
        %v1302 = vpop.f32.mrf.mxu0
        %v1303 = vadd.f32 0.0, %v1302
        %v1304 = vpop.f32.mrf.mxu0
        %v1305 = vadd.f32 0.0, %v1304
        %1306 = vdwg.mxu0
        %1307 = vmatprep.subr.bf16.mxu0 %v1094
        %1308 = vmatpush1.bf16.msra.mxu0 %v1093
        %1309 = vmatprep.subr.bf16.mxu0 %v1086
        %1310 = vmatpush1.bf16.msra.mxu0 %v1085
        %1311 = vmatprep.subr.bf16.mxu0 %v1078
        %1312 = vmatpush1.bf16.msra.mxu0 %v1077
        %1313 = vmatprep.subr.bf16.mxu0 %v1070
        %1314 = vmatpush1.bf16.msra.mxu0 %v1069
        %1315 = vmatprep.subr.bf16.mxu0 %v1062
        %1316 = vmatpush1.bf16.msra.mxu0 %v1061
        %1317 = vmatprep.subr.bf16.mxu0 %v1054
        %1318 = vmatpush1.bf16.msra.mxu0 %v1053
        %1319 = vmatprep.subr.bf16.mxu0 %v1046
        %1320 = vmatpush1.bf16.msra.mxu0 %v1045
        %1321 = vmatprep.subr.bf16.mxu0 %v1038
        %1322 = vmatpush1.bf16.msra.mxu0 %v1037
        %1323 = vmatprep.subr.bf16.mxu0 0
        %1324 = vmatpush2.bf16.msra.mxu0 0
        %1325 = vmatprep.subr.bf16.mxu0 0
        %1326 = vmatpush2.bf16.msra.mxu0 0
        %1327 = vmatprep.subr.bf16.mxu0 0
        %1328 = vmatpush2.bf16.msra.mxu0 0
        %1329 = vmatprep.subr.bf16.mxu0 0
        %1330 = vmatpush2.bf16.msra.mxu0 0
        %1331 = vmatprep.subr.bf16.mxu0 0
        %1332 = vmatpush2.bf16.msra.mxu0 0
        %1333 = vmatprep.subr.bf16.mxu0 0
        %1334 = vmatpush2.bf16.msra.mxu0 0
        %1335 = vmatprep.subr.bf16.mxu0 0
        %1336 = vmatpush2.bf16.msra.mxu0 0
        %1337 = vmatprep.subr.bf16.mxu0 0
        %1338 = vmatpush2.bf16.msra.mxu0 0
        %1339 = vmatprep.mubr.bf16.mxu0 0
        %1340 = vmatmul.mubr.bf16.gmra.mxu0 %v833
        %v1341 = vpop.f32.mrf.mxu0
        %v1342 = vadd.f32 0.0, %v1341
        %v1343 = vpop.f32.mrf.mxu0
        %v1344 = vadd.f32 0.0, %v1343
        %v1345 = vpop.f32.mrf.mxu0
        %v1346 = vadd.f32 0.0, %v1345
        %v1347 = vpop.f32.mrf.mxu0
        %v1348 = vadd.f32 0.0, %v1347
        %1349 = vmatprep.mubr.bf16.mxu0 0
        %1350 = vmatmul.mubr.bf16.gmra.mxu0 %v834
        %v1351 = vpop.f32.mrf.mxu0
        %v1352 = vadd.f32 0.0, %v1351
        %v1353 = vpop.f32.mrf.mxu0
        %v1354 = vadd.f32 0.0, %v1353
        %v1355 = vpop.f32.mrf.mxu0
        %v1356 = vadd.f32 0.0, %v1355
        %v1357 = vpop.f32.mrf.mxu0
        %v1358 = vadd.f32 0.0, %v1357
        %1359 = vmatprep.mubr.bf16.mxu0 0
        %1360 = vmatmul.mubr.bf16.gmra.mxu0 %v835
        %v1361 = vpop.f32.mrf.mxu0
        %v1362 = vadd.f32 0.0, %v1361
        %v1363 = vpop.f32.mrf.mxu0
        %v1364 = vadd.f32 0.0, %v1363
        %v1365 = vpop.f32.mrf.mxu0
        %v1366 = vadd.f32 0.0, %v1365
        %v1367 = vpop.f32.mrf.mxu0
        %v1368 = vadd.f32 0.0, %v1367
        %1369 = vmatprep.mubr.bf16.mxu0 0
        %1370 = vmatmul.mubr.bf16.gmra.mxu0 %v836
        %v1371 = vpop.f32.mrf.mxu0
        %v1372 = vadd.f32 0.0, %v1371
        %v1373 = vpop.f32.mrf.mxu0
        %v1374 = vadd.f32 0.0, %v1373
        %v1375 = vpop.f32.mrf.mxu0
        %v1376 = vadd.f32 0.0, %v1375
        %v1377 = vpop.f32.mrf.mxu0
        %v1378 = vadd.f32 0.0, %v1377
        %1379 = vdwg.mxu0
        %1380 = vmatprep.subr.bf16.mxu0 %v1096
        %1381 = vmatpush1.bf16.msra.mxu0 %v1095
        %1382 = vmatprep.subr.bf16.mxu0 %v1088
        %1383 = vmatpush1.bf16.msra.mxu0 %v1087
        %1384 = vmatprep.subr.bf16.mxu0 %v1080
        %1385 = vmatpush1.bf16.msra.mxu0 %v1079
        %1386 = vmatprep.subr.bf16.mxu0 %v1072
        %1387 = vmatpush1.bf16.msra.mxu0 %v1071
        %1388 = vmatprep.subr.bf16.mxu0 %v1064
        %1389 = vmatpush1.bf16.msra.mxu0 %v1063
        %1390 = vmatprep.subr.bf16.mxu0 %v1056
        %1391 = vmatpush1.bf16.msra.mxu0 %v1055
        %1392 = vmatprep.subr.bf16.mxu0 %v1048
        %1393 = vmatpush1.bf16.msra.mxu0 %v1047
        %1394 = vmatprep.subr.bf16.mxu0 %v1040
        %1395 = vmatpush1.bf16.msra.mxu0 %v1039
        %1396 = vmatprep.subr.bf16.mxu0 0
        %1397 = vmatpush2.bf16.msra.mxu0 0
        %1398 = vmatprep.subr.bf16.mxu0 0
        %1399 = vmatpush2.bf16.msra.mxu0 0
        %1400 = vmatprep.subr.bf16.mxu0 0
        %1401 = vmatpush2.bf16.msra.mxu0 0
        %1402 = vmatprep.subr.bf16.mxu0 0
        %1403 = vmatpush2.bf16.msra.mxu0 0
        %1404 = vmatprep.subr.bf16.mxu0 0
        %1405 = vmatpush2.bf16.msra.mxu0 0
        %1406 = vmatprep.subr.bf16.mxu0 0
        %1407 = vmatpush2.bf16.msra.mxu0 0
        %1408 = vmatprep.subr.bf16.mxu0 0
        %1409 = vmatpush2.bf16.msra.mxu0 0
        %1410 = vmatprep.subr.bf16.mxu0 0
        %1411 = vmatpush2.bf16.msra.mxu0 0
        %1412 = vmatprep.mubr.bf16.mxu0 0
        %1413 = vmatmul.mubr.bf16.gmra.mxu0 %v833
        %v1414 = vpop.f32.mrf.mxu0
        %v1415 = vadd.f32 0.0, %v1414
        %v1416 = vpop.f32.mrf.mxu0
        %v1417 = vadd.f32 0.0, %v1416
        %v1418 = vpop.f32.mrf.mxu0
        %v1419 = vadd.f32 0.0, %v1418
        %v1420 = vpop.f32.mrf.mxu0
        %v1421 = vadd.f32 0.0, %v1420
        %1422 = vmatprep.mubr.bf16.mxu0 0
        %1423 = vmatmul.mubr.bf16.gmra.mxu0 %v834
        %v1424 = vpop.f32.mrf.mxu0
        %v1425 = vadd.f32 0.0, %v1424
        %v1426 = vpop.f32.mrf.mxu0
        %v1427 = vadd.f32 0.0, %v1426
        %v1428 = vpop.f32.mrf.mxu0
        %v1429 = vadd.f32 0.0, %v1428
        %v1430 = vpop.f32.mrf.mxu0
        %v1431 = vadd.f32 0.0, %v1430
        %1432 = vmatprep.mubr.bf16.mxu0 0
        %1433 = vmatmul.mubr.bf16.gmra.mxu0 %v835
        %v1434 = vpop.f32.mrf.mxu0
        %v1435 = vadd.f32 0.0, %v1434
        %v1436 = vpop.f32.mrf.mxu0
        %v1437 = vadd.f32 0.0, %v1436
        %v1438 = vpop.f32.mrf.mxu0
        %v1439 = vadd.f32 0.0, %v1438
        %v1440 = vpop.f32.mrf.mxu0
        %v1441 = vadd.f32 0.0, %v1440
        %1442 = vmatprep.mubr.bf16.mxu0 0
        %1443 = vmatmul.mubr.bf16.gmra.mxu0 %v836
        %v1444 = vpop.f32.mrf.mxu0
        %v1445 = vadd.f32 0.0, %v1444
        %v1446 = vpop.f32.mrf.mxu0
        %v1447 = vadd.f32 0.0, %v1446
        %v1448 = vpop.f32.mrf.mxu0
        %v1449 = vadd.f32 0.0, %v1448
        %v1450 = vpop.f32.mrf.mxu0
        %v1451 = vadd.f32 0.0, %v1450
        %1452 = vdwg.mxu0
        %v1453 = vld [vmem:[%s655] sm:$0xff]
        %v1454 = vld [vmem:[#allocation9] sm:$0xff]
        %v1455 = vld [vmem:[%s4] sm:$0xff]
        %v1456 = vld [vmem:[#allocation11] sm:$0xff]
        %v1457 = vld [vmem:[#allocation11 + $0x8] sm:$0xff]
        %v1458 = vld [vmem:[#allocation11 + $0x10] sm:$0xff]
        %v1459 = vld [vmem:[#allocation11 + $0x18] sm:$0xff]
        %v1460 = vld [vmem:[#allocation11 + $0x20] sm:$0xff]
        %v1461 = vld [vmem:[#allocation11 + $0x28] sm:$0xff]
        %v1462 = vld [vmem:[#allocation11 + $0x30] sm:$0xff]
        %v1463 = vld [vmem:[#allocation11 + $0x38] sm:$0xff]
        %v1464 = vld [vmem:[#allocation11 + $0x40] sm:$0xff]
        %v1465 = vld [vmem:[#allocation11 + $0x48] sm:$0xff]
        %v1466 = vld [vmem:[#allocation11 + $0x50] sm:$0xff]
        %v1467 = vld [vmem:[#allocation11 + $0x58] sm:$0xff]
        %v1468 = vld [vmem:[#allocation11 + $0x60] sm:$0xff]
        %v1469 = vld [vmem:[#allocation11 + $0x68] sm:$0xff]
        %v1470 = vld [vmem:[#allocation11 + $0x70] sm:$0xff]
        %v1471 = vld [vmem:[#allocation11 + $0x78] sm:$0xff]
        %v1472 = vld [vmem:[#allocation11 + $0x80] sm:$0xff]
        %v1473 = vld [vmem:[#allocation11 + $0x88] sm:$0xff]
        %v1474 = vld [vmem:[#allocation11 + $0x90] sm:$0xff]
        %v1475 = vld [vmem:[#allocation11 + $0x98] sm:$0xff]
        %v1476 = vld [vmem:[#allocation11 + $0xa0] sm:$0xff]
        %v1477 = vld [vmem:[#allocation11 + $0xa8] sm:$0xff]
        %v1478 = vld [vmem:[#allocation11 + $0xb0] sm:$0xff]
        %v1479 = vld [vmem:[#allocation11 + $0xb8] sm:$0xff]
        %v1480 = vld [vmem:[#allocation11 + $0xc0] sm:$0xff]
        %v1481 = vld [vmem:[#allocation11 + $0xc8] sm:$0xff]
        %v1482 = vld [vmem:[#allocation11 + $0xd0] sm:$0xff]
        %v1483 = vld [vmem:[#allocation11 + $0xd8] sm:$0xff]
        %v1484 = vld [vmem:[#allocation11 + $0xe0] sm:$0xff]
        %v1485 = vld [vmem:[#allocation11 + $0xe8] sm:$0xff]
        %v1486 = vld [vmem:[#allocation11 + $0xf0] sm:$0xff]
        %v1487 = vld [vmem:[#allocation11 + $0xf8] sm:$0xff]
        %v1488 = vadd.f32 %v1196, %v1200
        %v1489 = vadd.f32 %v1488, %v1206
        %v1490 = vadd.f32 %v1489, %v1210
        %v1491 = vadd.f32 %v1490, %v1216
        %v1492 = vadd.f32 %v1491, %v1220
        %v1493 = vadd.f32 %v1492, %v1226
        %v1494 = vadd.f32 %v1493, %v1230
        %v1495 = vrot.slane %v1494, 4
        %v1496 = vadd.f32 %v1494, %v1495
        %v1497 = vrot.slane %v1496, 2
        %v1498 = vadd.f32 %v1496, %v1497
        %v1499 = vrot.slane %v1498, 1
        %v1500 = vadd.f32 %v1498, %v1499
        %v1501 = vadd.f32 %v1198, %v1202
        %v1502 = vadd.f32 %v1501, %v1208
        %v1503 = vadd.f32 %v1502, %v1212
        %v1504 = vadd.f32 %v1503, %v1218
        %v1505 = vadd.f32 %v1504, %v1222
        %v1506 = vadd.f32 %v1505, %v1228
        %v1507 = vadd.f32 %v1506, %v1232
        %v1508 = vrot.slane %v1507, 4
        %v1509 = vadd.f32 %v1507, %v1508
        %v1510 = vrot.slane %v1509, 2
        %v1511 = vadd.f32 %v1509, %v1510
        %v1512 = vrot.slane %v1511, 1
        %v1513 = vadd.f32 %v1511, %v1512
        %v1514 = vadd.f32 %v1269, %v1273
        %v1515 = vadd.f32 %v1514, %v1279
        %v1516 = vadd.f32 %v1515, %v1283
        %v1517 = vadd.f32 %v1516, %v1289
        %v1518 = vadd.f32 %v1517, %v1293
        %v1519 = vadd.f32 %v1518, %v1299
        %v1520 = vadd.f32 %v1519, %v1303
        %v1521 = vrot.slane %v1520, 4
        %v1522 = vadd.f32 %v1520, %v1521
        %v1523 = vrot.slane %v1522, 2
        %v1524 = vadd.f32 %v1522, %v1523
        %v1525 = vrot.slane %v1524, 1
        %v1526 = vadd.f32 %v1524, %v1525
        %v1527 = vadd.f32 %v1271, %v1275
        %v1528 = vadd.f32 %v1527, %v1281
        %v1529 = vadd.f32 %v1528, %v1285
        %v1530 = vadd.f32 %v1529, %v1291
        %v1531 = vadd.f32 %v1530, %v1295
        %v1532 = vadd.f32 %v1531, %v1301
        %v1533 = vadd.f32 %v1532, %v1305
        %v1534 = vrot.slane %v1533, 4
        %v1535 = vadd.f32 %v1533, %v1534
        %v1536 = vrot.slane %v1535, 2
        %v1537 = vadd.f32 %v1535, %v1536
        %v1538 = vrot.slane %v1537, 1
        %v1539 = vadd.f32 %v1537, %v1538
        %v1540 = vadd.f32 %v1342, %v1346
        %v1541 = vadd.f32 %v1540, %v1352
        %v1542 = vadd.f32 %v1541, %v1356
        %v1543 = vadd.f32 %v1542, %v1362
        %v1544 = vadd.f32 %v1543, %v1366
        %v1545 = vadd.f32 %v1544, %v1372
        %v1546 = vadd.f32 %v1545, %v1376
        %v1547 = vrot.slane %v1546, 4
        %v1548 = vadd.f32 %v1546, %v1547
        %v1549 = vrot.slane %v1548, 2
        %v1550 = vadd.f32 %v1548, %v1549
        %v1551 = vrot.slane %v1550, 1
        %v1552 = vadd.f32 %v1550, %v1551
        %v1553 = vadd.f32 %v1344, %v1348
        %v1554 = vadd.f32 %v1553, %v1354
        %v1555 = vadd.f32 %v1554, %v1358
        %v1556 = vadd.f32 %v1555, %v1364
        %v1557 = vadd.f32 %v1556, %v1368
        %v1558 = vadd.f32 %v1557, %v1374
        %v1559 = vadd.f32 %v1558, %v1378
        %v1560 = vrot.slane %v1559, 4
        %v1561 = vadd.f32 %v1559, %v1560
        %v1562 = vrot.slane %v1561, 2
        %v1563 = vadd.f32 %v1561, %v1562
        %v1564 = vrot.slane %v1563, 1
        %v1565 = vadd.f32 %v1563, %v1564
        %v1566 = vadd.f32 %v1415, %v1419
        %v1567 = vadd.f32 %v1566, %v1425
        %v1568 = vadd.f32 %v1567, %v1429
        %v1569 = vadd.f32 %v1568, %v1435
        %v1570 = vadd.f32 %v1569, %v1439
        %v1571 = vadd.f32 %v1570, %v1445
        %v1572 = vadd.f32 %v1571, %v1449
        %v1573 = vrot.slane %v1572, 4
        %v1574 = vadd.f32 %v1572, %v1573
        %v1575 = vrot.slane %v1574, 2
        %v1576 = vadd.f32 %v1574, %v1575
        %v1577 = vrot.slane %v1576, 1
        %v1578 = vadd.f32 %v1576, %v1577
        %v1579 = vadd.f32 %v1417, %v1421
        %v1580 = vadd.f32 %v1579, %v1427
        %v1581 = vadd.f32 %v1580, %v1431
        %v1582 = vadd.f32 %v1581, %v1437
        %v1583 = vadd.f32 %v1582, %v1441
        %v1584 = vadd.f32 %v1583, %v1447
        %v1585 = vadd.f32 %v1584, %v1451
        %v1586 = vrot.slane %v1585, 4
        %v1587 = vadd.f32 %v1585, %v1586
        %v1588 = vrot.slane %v1587, 2
        %v1589 = vadd.f32 %v1587, %v1588
        %v1590 = vrot.slane %v1589, 1
        %v1591 = vadd.f32 %v1589, %v1590
        %v1592 = vmul.f32 %v1196, %v1196
        %v1593 = vmul.f32 %v1198, %v1198
        %v1594 = vmul.f32 %v1269, %v1269
        %v1595 = vmul.f32 %v1271, %v1271
        %v1596 = vmul.f32 %v1342, %v1342
        %v1597 = vmul.f32 %v1344, %v1344
        %v1598 = vmul.f32 %v1415, %v1415
        %v1599 = vmul.f32 %v1417, %v1417
        %v1600 = vmul.f32 %v1200, %v1200
        %v1601 = vmul.f32 %v1202, %v1202
        %v1602 = vmul.f32 %v1273, %v1273
        %v1603 = vmul.f32 %v1275, %v1275
        %v1604 = vmul.f32 %v1346, %v1346
        %v1605 = vmul.f32 %v1348, %v1348
        %v1606 = vmul.f32 %v1419, %v1419
        %v1607 = vmul.f32 %v1421, %v1421
        %v1608 = vmul.f32 %v1206, %v1206
        %v1609 = vmul.f32 %v1208, %v1208
        %v1610 = vmul.f32 %v1279, %v1279
        %v1611 = vmul.f32 %v1281, %v1281
        %v1612 = vmul.f32 %v1352, %v1352
        %v1613 = vmul.f32 %v1354, %v1354
        %v1614 = vmul.f32 %v1425, %v1425
        %v1615 = vmul.f32 %v1427, %v1427
        %v1616 = vmul.f32 %v1210, %v1210
        %v1617 = vmul.f32 %v1212, %v1212
        %v1618 = vmul.f32 %v1283, %v1283
        %v1619 = vmul.f32 %v1285, %v1285
        %v1620 = vmul.f32 %v1356, %v1356
        %v1621 = vmul.f32 %v1358, %v1358
        %v1622 = vmul.f32 %v1429, %v1429
        %v1623 = vmul.f32 %v1431, %v1431
        %v1624 = vmul.f32 %v1216, %v1216
        %v1625 = vmul.f32 %v1218, %v1218
        %v1626 = vmul.f32 %v1289, %v1289
        %v1627 = vmul.f32 %v1291, %v1291
        %v1628 = vmul.f32 %v1362, %v1362
        %v1629 = vmul.f32 %v1364, %v1364
        %v1630 = vmul.f32 %v1435, %v1435
        %v1631 = vmul.f32 %v1437, %v1437
        %v1632 = vmul.f32 %v1220, %v1220
        %v1633 = vmul.f32 %v1222, %v1222
        %v1634 = vmul.f32 %v1293, %v1293
        %v1635 = vmul.f32 %v1295, %v1295
        %v1636 = vmul.f32 %v1366, %v1366
        %v1637 = vmul.f32 %v1368, %v1368
        %v1638 = vmul.f32 %v1439, %v1439
        %v1639 = vmul.f32 %v1441, %v1441
        %v1640 = vmul.f32 %v1226, %v1226
        %v1641 = vmul.f32 %v1228, %v1228
        %v1642 = vmul.f32 %v1299, %v1299
        %v1643 = vmul.f32 %v1301, %v1301
        %v1644 = vmul.f32 %v1372, %v1372
        %v1645 = vmul.f32 %v1374, %v1374
        %v1646 = vmul.f32 %v1445, %v1445
        %v1647 = vmul.f32 %v1447, %v1447
        %v1648 = vmul.f32 %v1230, %v1230
        %v1649 = vmul.f32 %v1232, %v1232
        %v1650 = vmul.f32 %v1303, %v1303
        %v1651 = vmul.f32 %v1305, %v1305
        %v1652 = vmul.f32 %v1376, %v1376
        %v1653 = vmul.f32 %v1378, %v1378
        %v1654 = vmul.f32 %v1449, %v1449
        %v1655 = vmul.f32 %v1451, %v1451
        %v1656 = vadd.f32 %v1592, %v1600
        %v1657 = vadd.f32 %v1656, %v1608
        %v1658 = vadd.f32 %v1657, %v1616
        %v1659 = vadd.f32 %v1658, %v1624
        %v1660 = vadd.f32 %v1659, %v1632
        %v1661 = vadd.f32 %v1660, %v1640
        %v1662 = vadd.f32 %v1661, %v1648
        %v1663 = vrot.slane %v1662, 4
        %v1664 = vadd.f32 %v1662, %v1663
        %v1665 = vrot.slane %v1664, 2
        %v1666 = vadd.f32 %v1664, %v1665
        %v1667 = vrot.slane %v1666, 1
        %v1668 = vadd.f32 %v1666, %v1667
        %v1669 = vadd.f32 %v1593, %v1601
        %v1670 = vadd.f32 %v1669, %v1609
        %v1671 = vadd.f32 %v1670, %v1617
        %v1672 = vadd.f32 %v1671, %v1625
        %v1673 = vadd.f32 %v1672, %v1633
        %v1674 = vadd.f32 %v1673, %v1641
        %v1675 = vadd.f32 %v1674, %v1649
        %v1676 = vrot.slane %v1675, 4
        %v1677 = vadd.f32 %v1675, %v1676
        %v1678 = vrot.slane %v1677, 2
        %v1679 = vadd.f32 %v1677, %v1678
        %v1680 = vrot.slane %v1679, 1
        %v1681 = vadd.f32 %v1679, %v1680
        %v1682 = vadd.f32 %v1594, %v1602
        %v1683 = vadd.f32 %v1682, %v1610
        %v1684 = vadd.f32 %v1683, %v1618
        %v1685 = vadd.f32 %v1684, %v1626
        %v1686 = vadd.f32 %v1685, %v1634
        %v1687 = vadd.f32 %v1686, %v1642
        %v1688 = vadd.f32 %v1687, %v1650
        %v1689 = vrot.slane %v1688, 4
        %v1690 = vadd.f32 %v1688, %v1689
        %v1691 = vrot.slane %v1690, 2
        %v1692 = vadd.f32 %v1690, %v1691
        %v1693 = vrot.slane %v1692, 1
        %v1694 = vadd.f32 %v1692, %v1693
        %v1695 = vadd.f32 %v1595, %v1603
        %v1696 = vadd.f32 %v1695, %v1611
        %v1697 = vadd.f32 %v1696, %v1619
        %v1698 = vadd.f32 %v1697, %v1627
        %v1699 = vadd.f32 %v1698, %v1635
        %v1700 = vadd.f32 %v1699, %v1643
        %v1701 = vadd.f32 %v1700, %v1651
        %v1702 = vrot.slane %v1701, 4
        %v1703 = vadd.f32 %v1701, %v1702
        %v1704 = vrot.slane %v1703, 2
        %v1705 = vadd.f32 %v1703, %v1704
        %v1706 = vrot.slane %v1705, 1
        %v1707 = vadd.f32 %v1705, %v1706
        %v1708 = vadd.f32 %v1596, %v1604
        %v1709 = vadd.f32 %v1708, %v1612
        %v1710 = vadd.f32 %v1709, %v1620
        %v1711 = vadd.f32 %v1710, %v1628
        %v1712 = vadd.f32 %v1711, %v1636
        %v1713 = vadd.f32 %v1712, %v1644
        %v1714 = vadd.f32 %v1713, %v1652
        %v1715 = vrot.slane %v1714, 4
        %v1716 = vadd.f32 %v1714, %v1715
        %v1717 = vrot.slane %v1716, 2
        %v1718 = vadd.f32 %v1716, %v1717
        %v1719 = vrot.slane %v1718, 1
        %v1720 = vadd.f32 %v1718, %v1719
        %v1721 = vadd.f32 %v1597, %v1605
        %v1722 = vadd.f32 %v1721, %v1613
        %v1723 = vadd.f32 %v1722, %v1621
        %v1724 = vadd.f32 %v1723, %v1629
        %v1725 = vadd.f32 %v1724, %v1637
        %v1726 = vadd.f32 %v1725, %v1645
        %v1727 = vadd.f32 %v1726, %v1653
        %v1728 = vrot.slane %v1727, 4
        %v1729 = vadd.f32 %v1727, %v1728
        %v1730 = vrot.slane %v1729, 2
        %v1731 = vadd.f32 %v1729, %v1730
        %v1732 = vrot.slane %v1731, 1
        %v1733 = vadd.f32 %v1731, %v1732
        %v1734 = vadd.f32 %v1598, %v1606
        %v1735 = vadd.f32 %v1734, %v1614
        %v1736 = vadd.f32 %v1735, %v1622
        %v1737 = vadd.f32 %v1736, %v1630
        %v1738 = vadd.f32 %v1737, %v1638
        %v1739 = vadd.f32 %v1738, %v1646
        %v1740 = vadd.f32 %v1739, %v1654
        %v1741 = vrot.slane %v1740, 4
        %v1742 = vadd.f32 %v1740, %v1741
        %v1743 = vrot.slane %v1742, 2
        %v1744 = vadd.f32 %v1742, %v1743
        %v1745 = vrot.slane %v1744, 1
        %v1746 = vadd.f32 %v1744, %v1745
        %v1747 = vadd.f32 %v1599, %v1607
        %v1748 = vadd.f32 %v1747, %v1615
        %v1749 = vadd.f32 %v1748, %v1623
        %v1750 = vadd.f32 %v1749, %v1631
        %v1751 = vadd.f32 %v1750, %v1639
        %v1752 = vadd.f32 %v1751, %v1647
        %v1753 = vadd.f32 %v1752, %v1655
        %v1754 = vrot.slane %v1753, 4
        %v1755 = vadd.f32 %v1753, %v1754
        %v1756 = vrot.slane %v1755, 2
        %v1757 = vadd.f32 %v1755, %v1756
        %v1758 = vrot.slane %v1757, 1
        %v1759 = vadd.f32 %v1757, %v1758
        %v1760 = vmul.f32 %v1453, 64.0
        %v1762 = vlaneseq
        %v1763 = vshrl.u32 %v1762, 7
        %v1764 = vsub.s32 0, %v1763
        %v1765 = vrot.slane %v1760, %v1764
        %v1766 = vlaneseq
        %v1767 = vshrl.u32 %v1766, 7
        %v1768 = vsub.s32 1, %v1767
        %v1769 = vrot.slane %v1760, %v1768
        %v1770 = vlaneseq
        %v1771 = vshrl.u32 %v1770, 7
        %v1772 = vsub.s32 2, %v1771
        %v1773 = vrot.slane %v1760, %v1772
        %v1774 = vlaneseq
        %v1775 = vshrl.u32 %v1774, 7
        %v1776 = vsub.s32 3, %v1775
        %v1777 = vrot.slane %v1760, %v1776
        %v1778 = vlaneseq
        %v1779 = vshrl.u32 %v1778, 7
        %v1780 = vsub.s32 4, %v1779
        %v1781 = vrot.slane %v1760, %v1780
        %v1782 = vlaneseq
        %v1783 = vshrl.u32 %v1782, 7
        %v1784 = vsub.s32 5, %v1783
        %v1785 = vrot.slane %v1760, %v1784
        %v1786 = vlaneseq
        %v1787 = vshrl.u32 %v1786, 7
        %v1788 = vsub.s32 6, %v1787
        %v1789 = vrot.slane %v1760, %v1788
        %v1790 = vlaneseq
        %v1791 = vshrl.u32 %v1790, 7
        %v1792 = vsub.s32 7, %v1791
        %v1793 = vrot.slane %v1760, %v1792
        %v1802 = vadd.f32 %v1500, %v1765
        %v1803 = vadd.f32 %v1513, %v1769
        %v1804 = vadd.f32 %v1526, %v1773
        %v1805 = vadd.f32 %v1539, %v1777
        %v1806 = vadd.f32 %v1552, %v1781
        %v1807 = vadd.f32 %v1565, %v1785
        %v1808 = vadd.f32 %v1578, %v1789
        %v1809 = vadd.f32 %v1591, %v1793
        %v1810 = vmul.f32 %v1453, 2.0
        %v1819 = vcombine.low %v1500, %v1513
        %v1820 = vcombine.low %v1526, %v1539
        %v1821 = vcombine.low %v1552, %v1565
        %v1822 = vcombine.low %v1578, %v1591
        %v1824 = vunpack.c.l.s4 1966171168
        %v1825 = vunpack.c.0.s8 %v1824
        %v1826 = vlaneseq
        %v1827 = vshrl.u32 %v1826, 7
        %v1828 = vsub.s32 %v1825, %v1827
        %v1829 = vrot.slane %v1819, %v1828
        %v1831 = vunpack.c.l.s4 1966171168
        %v1832 = vunpack.c.0.s8 %v1831
        %v1833 = vlaneseq
        %v1834 = vshrl.u32 %v1833, 7
        %v1835 = vsub.s32 %v1832, %v1834
        %v1836 = vrot.slane %v1820, %v1835
        %v1838 = vunpack.c.l.s4 1966171168
        %v1839 = vunpack.c.0.s8 %v1838
        %v1840 = vlaneseq
        %v1841 = vshrl.u32 %v1840, 7
        %v1842 = vsub.s32 %v1839, %v1841
        %v1843 = vrot.slane %v1821, %v1842
        %v1845 = vunpack.c.l.s4 1966171168
        %v1846 = vunpack.c.0.s8 %v1845
        %v1847 = vlaneseq
        %v1848 = vshrl.u32 %v1847, 7
        %v1849 = vsub.s32 %v1846, %v1848
        %v1850 = vrot.slane %v1822, %v1849
        %v1851 = vcombine.low %v1829, %v1836
        %v1852 = vcombine.low %v1843, %v1850
        %v1854 = vunpack.c.l.s4 1966171168
        %v1855 = vunpack.c.0.s8 %v1854
        %v1856 = vlaneseq
        %v1857 = vshrl.u32 %v1856, 7
        %v1858 = vsub.s32 %v1855, %v1857
        %v1859 = vrot.slane %v1851, %v1858
        %v1861 = vunpack.c.l.s4 1966171168
        %v1862 = vunpack.c.0.s8 %v1861
        %v1863 = vlaneseq
        %v1864 = vshrl.u32 %v1863, 7
        %v1865 = vsub.s32 %v1862, %v1864
        %v1866 = vrot.slane %v1852, %v1865
        %v1867 = vcombine.low %v1859, %v1866
        %v1869 = vmul.f32 %v1810, %v1867
        %v1871 = vlaneseq
        %v1872 = vshrl.u32 %v1871, 7
        %v1873 = vsub.s32 0, %v1872
        %v1874 = vrot.slane %v1869, %v1873
        %v1875 = vlaneseq
        %v1876 = vshrl.u32 %v1875, 7
        %v1877 = vsub.s32 1, %v1876
        %v1878 = vrot.slane %v1869, %v1877
        %v1879 = vlaneseq
        %v1880 = vshrl.u32 %v1879, 7
        %v1881 = vsub.s32 2, %v1880
        %v1882 = vrot.slane %v1869, %v1881
        %v1883 = vlaneseq
        %v1884 = vshrl.u32 %v1883, 7
        %v1885 = vsub.s32 3, %v1884
        %v1886 = vrot.slane %v1869, %v1885
        %v1887 = vlaneseq
        %v1888 = vshrl.u32 %v1887, 7
        %v1889 = vsub.s32 4, %v1888
        %v1890 = vrot.slane %v1869, %v1889
        %v1891 = vlaneseq
        %v1892 = vshrl.u32 %v1891, 7
        %v1893 = vsub.s32 5, %v1892
        %v1894 = vrot.slane %v1869, %v1893
        %v1895 = vlaneseq
        %v1896 = vshrl.u32 %v1895, 7
        %v1897 = vsub.s32 6, %v1896
        %v1898 = vrot.slane %v1869, %v1897
        %v1899 = vlaneseq
        %v1900 = vshrl.u32 %v1899, 7
        %v1901 = vsub.s32 7, %v1900
        %v1902 = vrot.slane %v1869, %v1901
        %v1911 = vadd.f32 %v1668, %v1874
        %v1912 = vadd.f32 %v1681, %v1878
        %v1913 = vadd.f32 %v1694, %v1882
        %v1914 = vadd.f32 %v1707, %v1886
        %v1915 = vadd.f32 %v1720, %v1890
        %v1916 = vadd.f32 %v1733, %v1894
        %v1917 = vadd.f32 %v1746, %v1898
        %v1918 = vadd.f32 %v1759, %v1902
        %v1919 = vmul.f32 %v1453, %v1453
        %v1920 = vmul.f32 %v1919, 64.0
        %v1922 = vlaneseq
        %v1923 = vshrl.u32 %v1922, 7
        %v1924 = vsub.s32 0, %v1923
        %v1925 = vrot.slane %v1920, %v1924
        %v1926 = vlaneseq
        %v1927 = vshrl.u32 %v1926, 7
        %v1928 = vsub.s32 1, %v1927
        %v1929 = vrot.slane %v1920, %v1928
        %v1930 = vlaneseq
        %v1931 = vshrl.u32 %v1930, 7
        %v1932 = vsub.s32 2, %v1931
        %v1933 = vrot.slane %v1920, %v1932
        %v1934 = vlaneseq
        %v1935 = vshrl.u32 %v1934, 7
        %v1936 = vsub.s32 3, %v1935
        %v1937 = vrot.slane %v1920, %v1936
        %v1938 = vlaneseq
        %v1939 = vshrl.u32 %v1938, 7
        %v1940 = vsub.s32 4, %v1939
        %v1941 = vrot.slane %v1920, %v1940
        %v1942 = vlaneseq
        %v1943 = vshrl.u32 %v1942, 7
        %v1944 = vsub.s32 5, %v1943
        %v1945 = vrot.slane %v1920, %v1944
        %v1946 = vlaneseq
        %v1947 = vshrl.u32 %v1946, 7
        %v1948 = vsub.s32 6, %v1947
        %v1949 = vrot.slane %v1920, %v1948
        %v1950 = vlaneseq
        %v1951 = vshrl.u32 %v1950, 7
        %v1952 = vsub.s32 7, %v1951
        %v1953 = vrot.slane %v1920, %v1952
        %v1962 = vadd.f32 %v1911, %v1925
        %v1963 = vadd.f32 %v1912, %v1929
        %v1964 = vadd.f32 %v1913, %v1933
        %v1965 = vadd.f32 %v1914, %v1937
        %v1966 = vadd.f32 %v1915, %v1941
        %v1967 = vadd.f32 %v1916, %v1945
        %v1968 = vadd.f32 %v1917, %v1949
        %v1969 = vadd.f32 %v1918, %v1953
        %1970 = vmatprep.subr.mxu0 0.0
        %1971 = vmatpush1.xpose.msra.mxu0 0.0
        %1972 = vmatprep.subr.mxu0 0.0
        %1973 = vmatpush1.xpose.msra.mxu0 0.0
        %1974 = vmatprep.subr.mxu0 0.0
        %1975 = vmatpush1.xpose.msra.mxu0 0.0
        %1976 = vmatprep.subr.mxu0 0.0
        %1977 = vmatpush1.xpose.msra.mxu0 0.0
        %1978 = vmatprep.subr.mxu0 0.0
        %1979 = vmatpush1.xpose.msra.mxu0 0.0
        %1980 = vmatprep.subr.mxu0 0.0
        %1981 = vmatpush1.xpose.msra.mxu0 0.0
        %1982 = vmatprep.subr.mxu0 0.0
        %1983 = vmatpush1.xpose.msra.mxu0 0.0
        %1984 = vmatprep.subr.mxu0 0.0
        %1985 = vmatpush1.xpose.msra.mxu0 0.0
        %1986 = vmatprep.subr.mxu0 0.0
        %1987 = vmatpush1.xpose.msra.mxu0 0.0
        %1988 = vmatprep.subr.mxu0 0.0
        %1989 = vmatpush1.xpose.msra.mxu0 0.0
        %1990 = vmatprep.subr.mxu0 0.0
        %1991 = vmatpush1.xpose.msra.mxu0 0.0
        %1992 = vmatprep.subr.mxu0 0.0
        %1993 = vmatpush1.xpose.msra.mxu0 0.0
        %1994 = vmatprep.subr.mxu0 %v1481
        %1995 = vmatpush1.xpose.msra.mxu0 %v1480
        %1996 = vmatprep.subr.mxu0 %v1473
        %1997 = vmatpush1.xpose.msra.mxu0 %v1472
        %1998 = vmatprep.subr.mxu0 %v1465
        %1999 = vmatpush1.xpose.msra.mxu0 %v1464
        %2000 = vmatprep.subr.mxu0 %v1457
        %2001 = vmatpush1.xpose.msra.mxu0 %v1456
        %2002 = vmatprep.subr.mxu0 0.0
        %2003 = vmatpush2.xpose.msra.mxu0 0.0
        %2004 = vmatprep.subr.mxu0 0.0
        %2005 = vmatpush2.xpose.msra.mxu0 0.0
        %2006 = vmatprep.subr.mxu0 0.0
        %2007 = vmatpush2.xpose.msra.mxu0 0.0
        %2008 = vmatprep.subr.mxu0 0.0
        %2009 = vmatpush2.xpose.msra.mxu0 0.0
        %2010 = vmatprep.subr.mxu0 0.0
        %2011 = vmatpush2.xpose.msra.mxu0 0.0
        %2012 = vmatprep.subr.mxu0 0.0
        %2013 = vmatpush2.xpose.msra.mxu0 0.0
        %2014 = vmatprep.subr.mxu0 0.0
        %2015 = vmatpush2.xpose.msra.mxu0 0.0
        %2016 = vmatprep.subr.mxu0 0.0
        %2017 = vmatpush2.xpose.msra.mxu0 0.0
        %2018 = vmatprep.subr.mxu0 0.0
        %2019 = vmatpush2.xpose.msra.mxu0 0.0
        %2020 = vmatprep.subr.mxu0 0.0
        %2021 = vmatpush2.xpose.msra.mxu0 0.0
        %2022 = vmatprep.subr.mxu0 0.0
        %2023 = vmatpush2.xpose.msra.mxu0 0.0
        %2024 = vmatprep.subr.mxu0 0.0
        %2025 = vmatpush2.xpose.msra.mxu0 0.0
        %2026 = vmatprep.subr.mxu0 0.0
        %2027 = vmatpush2.xpose.msra.mxu0 0.0
        %2028 = vmatprep.subr.mxu0 0.0
        %2029 = vmatpush2.xpose.msra.mxu0 0.0
        %2030 = vmatprep.subr.mxu0 0.0
        %2031 = vmatpush2.xpose.msra.mxu0 0.0
        %2032 = vmatprep.subr.mxu0 0.0
        %2033 = vmatpush2.xpose.msra.mxu0 0.0
        %2034 = vmatprep.mubr.f32.mxu0 %v1803
        %2035 = vmatmul.mubr.f32.gmra.mxu0 %v1802
        %v2036 = vpop.f32.mrf.mxu0
        %v2037 = vadd.f32 0.0, %v2036
        %v2038 = vpop.f32.mrf.mxu0
        %2039 = vdwg.mxu0
        %2040 = vmatprep.subr.mxu0 0.0
        %2041 = vmatpush1.xpose.msra.mxu0 0.0
        %2042 = vmatprep.subr.mxu0 0.0
        %2043 = vmatpush1.xpose.msra.mxu0 0.0
        %2044 = vmatprep.subr.mxu0 0.0
        %2045 = vmatpush1.xpose.msra.mxu0 0.0
        %2046 = vmatprep.subr.mxu0 0.0
        %2047 = vmatpush1.xpose.msra.mxu0 0.0
        %2048 = vmatprep.subr.mxu0 0.0
        %2049 = vmatpush1.xpose.msra.mxu0 0.0
        %2050 = vmatprep.subr.mxu0 0.0
        %2051 = vmatpush1.xpose.msra.mxu0 0.0
        %2052 = vmatprep.subr.mxu0 0.0
        %2053 = vmatpush1.xpose.msra.mxu0 0.0
        %2054 = vmatprep.subr.mxu0 0.0
        %2055 = vmatpush1.xpose.msra.mxu0 0.0
        %2056 = vmatprep.subr.mxu0 0.0
        %2057 = vmatpush1.xpose.msra.mxu0 0.0
        %2058 = vmatprep.subr.mxu0 0.0
        %2059 = vmatpush1.xpose.msra.mxu0 0.0
        %2060 = vmatprep.subr.mxu0 0.0
        %2061 = vmatpush1.xpose.msra.mxu0 0.0
        %2062 = vmatprep.subr.mxu0 0.0
        %2063 = vmatpush1.xpose.msra.mxu0 0.0
        %2064 = vmatprep.subr.mxu0 %v1483
        %2065 = vmatpush1.xpose.msra.mxu0 %v1482
        %2066 = vmatprep.subr.mxu0 %v1475
        %2067 = vmatpush1.xpose.msra.mxu0 %v1474
        %2068 = vmatprep.subr.mxu0 %v1467
        %2069 = vmatpush1.xpose.msra.mxu0 %v1466
        %2070 = vmatprep.subr.mxu0 %v1459
        %2071 = vmatpush1.xpose.msra.mxu0 %v1458
        %2072 = vmatprep.subr.mxu0 0.0
        %2073 = vmatpush2.xpose.msra.mxu0 0.0
        %2074 = vmatprep.subr.mxu0 0.0
        %2075 = vmatpush2.xpose.msra.mxu0 0.0
        %2076 = vmatprep.subr.mxu0 0.0
        %2077 = vmatpush2.xpose.msra.mxu0 0.0
        %2078 = vmatprep.subr.mxu0 0.0
        %2079 = vmatpush2.xpose.msra.mxu0 0.0
        %2080 = vmatprep.subr.mxu0 0.0
        %2081 = vmatpush2.xpose.msra.mxu0 0.0
        %2082 = vmatprep.subr.mxu0 0.0
        %2083 = vmatpush2.xpose.msra.mxu0 0.0
        %2084 = vmatprep.subr.mxu0 0.0
        %2085 = vmatpush2.xpose.msra.mxu0 0.0
        %2086 = vmatprep.subr.mxu0 0.0
        %2087 = vmatpush2.xpose.msra.mxu0 0.0
        %2088 = vmatprep.subr.mxu0 0.0
        %2089 = vmatpush2.xpose.msra.mxu0 0.0
        %2090 = vmatprep.subr.mxu0 0.0
        %2091 = vmatpush2.xpose.msra.mxu0 0.0
        %2092 = vmatprep.subr.mxu0 0.0
        %2093 = vmatpush2.xpose.msra.mxu0 0.0
        %2094 = vmatprep.subr.mxu0 0.0
        %2095 = vmatpush2.xpose.msra.mxu0 0.0
        %2096 = vmatprep.subr.mxu0 0.0
        %2097 = vmatpush2.xpose.msra.mxu0 0.0
        %2098 = vmatprep.subr.mxu0 0.0
        %2099 = vmatpush2.xpose.msra.mxu0 0.0
        %2100 = vmatprep.subr.mxu0 0.0
        %2101 = vmatpush2.xpose.msra.mxu0 0.0
        %2102 = vmatprep.subr.mxu0 0.0
        %2103 = vmatpush2.xpose.msra.mxu0 0.0
        %2104 = vmatprep.mubr.f32.mxu0 %v1805
        %2105 = vmatmul.mubr.f32.gmra.mxu0 %v1804
        %v2106 = vpop.f32.mrf.mxu0
        %v2107 = vadd.f32 %v2037, %v2106
        %v2108 = vpop.f32.mrf.mxu0
        %2109 = vdwg.mxu0
        %2110 = vmatprep.subr.mxu0 0.0
        %2111 = vmatpush1.xpose.msra.mxu0 0.0
        %2112 = vmatprep.subr.mxu0 0.0
        %2113 = vmatpush1.xpose.msra.mxu0 0.0
        %2114 = vmatprep.subr.mxu0 0.0
        %2115 = vmatpush1.xpose.msra.mxu0 0.0
        %2116 = vmatprep.subr.mxu0 0.0
        %2117 = vmatpush1.xpose.msra.mxu0 0.0
        %2118 = vmatprep.subr.mxu0 0.0
        %2119 = vmatpush1.xpose.msra.mxu0 0.0
        %2120 = vmatprep.subr.mxu0 0.0
        %2121 = vmatpush1.xpose.msra.mxu0 0.0
        %2122 = vmatprep.subr.mxu0 0.0
        %2123 = vmatpush1.xpose.msra.mxu0 0.0
        %2124 = vmatprep.subr.mxu0 0.0
        %2125 = vmatpush1.xpose.msra.mxu0 0.0
        %2126 = vmatprep.subr.mxu0 0.0
        %2127 = vmatpush1.xpose.msra.mxu0 0.0
        %2128 = vmatprep.subr.mxu0 0.0
        %2129 = vmatpush1.xpose.msra.mxu0 0.0
        %2130 = vmatprep.subr.mxu0 0.0
        %2131 = vmatpush1.xpose.msra.mxu0 0.0
        %2132 = vmatprep.subr.mxu0 0.0
        %2133 = vmatpush1.xpose.msra.mxu0 0.0
        %2134 = vmatprep.subr.mxu0 %v1485
        %2135 = vmatpush1.xpose.msra.mxu0 %v1484
        %2136 = vmatprep.subr.mxu0 %v1477
        %2137 = vmatpush1.xpose.msra.mxu0 %v1476
        %2138 = vmatprep.subr.mxu0 %v1469
        %2139 = vmatpush1.xpose.msra.mxu0 %v1468
        %2140 = vmatprep.subr.mxu0 %v1461
        %2141 = vmatpush1.xpose.msra.mxu0 %v1460
        %2142 = vmatprep.subr.mxu0 0.0
        %2143 = vmatpush2.xpose.msra.mxu0 0.0
        %2144 = vmatprep.subr.mxu0 0.0
        %2145 = vmatpush2.xpose.msra.mxu0 0.0
        %2146 = vmatprep.subr.mxu0 0.0
        %2147 = vmatpush2.xpose.msra.mxu0 0.0
        %2148 = vmatprep.subr.mxu0 0.0
        %2149 = vmatpush2.xpose.msra.mxu0 0.0
        %2150 = vmatprep.subr.mxu0 0.0
        %2151 = vmatpush2.xpose.msra.mxu0 0.0
        %2152 = vmatprep.subr.mxu0 0.0
        %2153 = vmatpush2.xpose.msra.mxu0 0.0
        %2154 = vmatprep.subr.mxu0 0.0
        %2155 = vmatpush2.xpose.msra.mxu0 0.0
        %2156 = vmatprep.subr.mxu0 0.0
        %2157 = vmatpush2.xpose.msra.mxu0 0.0
        %2158 = vmatprep.subr.mxu0 0.0
        %2159 = vmatpush2.xpose.msra.mxu0 0.0
        %2160 = vmatprep.subr.mxu0 0.0
        %2161 = vmatpush2.xpose.msra.mxu0 0.0
        %2162 = vmatprep.subr.mxu0 0.0
        %2163 = vmatpush2.xpose.msra.mxu0 0.0
        %2164 = vmatprep.subr.mxu0 0.0
        %2165 = vmatpush2.xpose.msra.mxu0 0.0
        %2166 = vmatprep.subr.mxu0 0.0
        %2167 = vmatpush2.xpose.msra.mxu0 0.0
        %2168 = vmatprep.subr.mxu0 0.0
        %2169 = vmatpush2.xpose.msra.mxu0 0.0
        %2170 = vmatprep.subr.mxu0 0.0
        %2171 = vmatpush2.xpose.msra.mxu0 0.0
        %2172 = vmatprep.subr.mxu0 0.0
        %2173 = vmatpush2.xpose.msra.mxu0 0.0
        %2174 = vmatprep.mubr.f32.mxu0 %v1807
        %2175 = vmatmul.mubr.f32.gmra.mxu0 %v1806
        %v2176 = vpop.f32.mrf.mxu0
        %v2177 = vadd.f32 %v2107, %v2176
        %v2178 = vpop.f32.mrf.mxu0
        %2179 = vdwg.mxu0
        %2180 = vmatprep.subr.mxu0 0.0
        %2181 = vmatpush1.xpose.msra.mxu0 0.0
        %2182 = vmatprep.subr.mxu0 0.0
        %2183 = vmatpush1.xpose.msra.mxu0 0.0
        %2184 = vmatprep.subr.mxu0 0.0
        %2185 = vmatpush1.xpose.msra.mxu0 0.0
        %2186 = vmatprep.subr.mxu0 0.0
        %2187 = vmatpush1.xpose.msra.mxu0 0.0
        %2188 = vmatprep.subr.mxu0 0.0
        %2189 = vmatpush1.xpose.msra.mxu0 0.0
        %2190 = vmatprep.subr.mxu0 0.0
        %2191 = vmatpush1.xpose.msra.mxu0 0.0
        %2192 = vmatprep.subr.mxu0 0.0
        %2193 = vmatpush1.xpose.msra.mxu0 0.0
        %2194 = vmatprep.subr.mxu0 0.0
        %2195 = vmatpush1.xpose.msra.mxu0 0.0
        %2196 = vmatprep.subr.mxu0 0.0
        %2197 = vmatpush1.xpose.msra.mxu0 0.0
        %2198 = vmatprep.subr.mxu0 0.0
        %2199 = vmatpush1.xpose.msra.mxu0 0.0
        %2200 = vmatprep.subr.mxu0 0.0
        %2201 = vmatpush1.xpose.msra.mxu0 0.0
        %2202 = vmatprep.subr.mxu0 0.0
        %2203 = vmatpush1.xpose.msra.mxu0 0.0
        %2204 = vmatprep.subr.mxu0 %v1487
        %2205 = vmatpush1.xpose.msra.mxu0 %v1486
        %2206 = vmatprep.subr.mxu0 %v1479
        %2207 = vmatpush1.xpose.msra.mxu0 %v1478
        %2208 = vmatprep.subr.mxu0 %v1471
        %2209 = vmatpush1.xpose.msra.mxu0 %v1470
        %2210 = vmatprep.subr.mxu0 %v1463
        %2211 = vmatpush1.xpose.msra.mxu0 %v1462
        %2212 = vmatprep.subr.mxu0 0.0
        %2213 = vmatpush2.xpose.msra.mxu0 0.0
        %2214 = vmatprep.subr.mxu0 0.0
        %2215 = vmatpush2.xpose.msra.mxu0 0.0
        %2216 = vmatprep.subr.mxu0 0.0
        %2217 = vmatpush2.xpose.msra.mxu0 0.0
        %2218 = vmatprep.subr.mxu0 0.0
        %2219 = vmatpush2.xpose.msra.mxu0 0.0
        %2220 = vmatprep.subr.mxu0 0.0
        %2221 = vmatpush2.xpose.msra.mxu0 0.0
        %2222 = vmatprep.subr.mxu0 0.0
        %2223 = vmatpush2.xpose.msra.mxu0 0.0
        %2224 = vmatprep.subr.mxu0 0.0
        %2225 = vmatpush2.xpose.msra.mxu0 0.0
        %2226 = vmatprep.subr.mxu0 0.0
        %2227 = vmatpush2.xpose.msra.mxu0 0.0
        %2228 = vmatprep.subr.mxu0 0.0
        %2229 = vmatpush2.xpose.msra.mxu0 0.0
        %2230 = vmatprep.subr.mxu0 0.0
        %2231 = vmatpush2.xpose.msra.mxu0 0.0
        %2232 = vmatprep.subr.mxu0 0.0
        %2233 = vmatpush2.xpose.msra.mxu0 0.0
        %2234 = vmatprep.subr.mxu0 0.0
        %2235 = vmatpush2.xpose.msra.mxu0 0.0
        %2236 = vmatprep.subr.mxu0 0.0
        %2237 = vmatpush2.xpose.msra.mxu0 0.0
        %2238 = vmatprep.subr.mxu0 0.0
        %2239 = vmatpush2.xpose.msra.mxu0 0.0
        %2240 = vmatprep.subr.mxu0 0.0
        %2241 = vmatpush2.xpose.msra.mxu0 0.0
        %2242 = vmatprep.subr.mxu0 0.0
        %2243 = vmatpush2.xpose.msra.mxu0 0.0
        %2244 = vmatprep.mubr.f32.mxu0 %v1809
        %2245 = vmatmul.mubr.f32.gmra.mxu0 %v1808
        %v2246 = vpop.f32.mrf.mxu0
        %v2247 = vadd.f32 %v2177, %v2246
        %v2248 = vpop.f32.mrf.mxu0
        %2249 = vdwg.mxu0
        %2250 = vmatprep.subr.mxu0 0.0
        %2251 = vmatpush1.xpose.msra.mxu0 0.0
        %2252 = vmatprep.subr.mxu0 0.0
        %2253 = vmatpush1.xpose.msra.mxu0 0.0
        %2254 = vmatprep.subr.mxu0 0.0
        %2255 = vmatpush1.xpose.msra.mxu0 0.0
        %2256 = vmatprep.subr.mxu0 0.0
        %2257 = vmatpush1.xpose.msra.mxu0 0.0
        %2258 = vmatprep.subr.mxu0 0.0
        %2259 = vmatpush1.xpose.msra.mxu0 0.0
        %2260 = vmatprep.subr.mxu0 0.0
        %2261 = vmatpush1.xpose.msra.mxu0 0.0
        %2262 = vmatprep.subr.mxu0 0.0
        %2263 = vmatpush1.xpose.msra.mxu0 0.0
        %2264 = vmatprep.subr.mxu0 0.0
        %2265 = vmatpush1.xpose.msra.mxu0 0.0
        %2266 = vmatprep.subr.mxu0 0.0
        %2267 = vmatpush1.xpose.msra.mxu0 0.0
        %2268 = vmatprep.subr.mxu0 0.0
        %2269 = vmatpush1.xpose.msra.mxu0 0.0
        %2270 = vmatprep.subr.mxu0 0.0
        %2271 = vmatpush1.xpose.msra.mxu0 0.0
        %2272 = vmatprep.subr.mxu0 0.0
        %2273 = vmatpush1.xpose.msra.mxu0 0.0
        %2274 = vmatprep.subr.mxu0 %v1481
        %2275 = vmatpush1.xpose.msra.mxu0 %v1480
        %2276 = vmatprep.subr.mxu0 %v1473
        %2277 = vmatpush1.xpose.msra.mxu0 %v1472
        %2278 = vmatprep.subr.mxu0 %v1465
        %2279 = vmatpush1.xpose.msra.mxu0 %v1464
        %2280 = vmatprep.subr.mxu0 %v1457
        %2281 = vmatpush1.xpose.msra.mxu0 %v1456
        %2282 = vmatprep.subr.mxu0 0.0
        %2283 = vmatpush2.xpose.msra.mxu0 0.0
        %2284 = vmatprep.subr.mxu0 0.0
        %2285 = vmatpush2.xpose.msra.mxu0 0.0
        %2286 = vmatprep.subr.mxu0 0.0
        %2287 = vmatpush2.xpose.msra.mxu0 0.0
        %2288 = vmatprep.subr.mxu0 0.0
        %2289 = vmatpush2.xpose.msra.mxu0 0.0
        %2290 = vmatprep.subr.mxu0 0.0
        %2291 = vmatpush2.xpose.msra.mxu0 0.0
        %2292 = vmatprep.subr.mxu0 0.0
        %2293 = vmatpush2.xpose.msra.mxu0 0.0
        %2294 = vmatprep.subr.mxu0 0.0
        %2295 = vmatpush2.xpose.msra.mxu0 0.0
        %2296 = vmatprep.subr.mxu0 0.0
        %2297 = vmatpush2.xpose.msra.mxu0 0.0
        %2298 = vmatprep.subr.mxu0 0.0
        %2299 = vmatpush2.xpose.msra.mxu0 0.0
        %2300 = vmatprep.subr.mxu0 0.0
        %2301 = vmatpush2.xpose.msra.mxu0 0.0
        %2302 = vmatprep.subr.mxu0 0.0
        %2303 = vmatpush2.xpose.msra.mxu0 0.0
        %2304 = vmatprep.subr.mxu0 0.0
        %2305 = vmatpush2.xpose.msra.mxu0 0.0
        %2306 = vmatprep.subr.mxu0 0.0
        %2307 = vmatpush2.xpose.msra.mxu0 0.0
        %2308 = vmatprep.subr.mxu0 0.0
        %2309 = vmatpush2.xpose.msra.mxu0 0.0
        %2310 = vmatprep.subr.mxu0 0.0
        %2311 = vmatpush2.xpose.msra.mxu0 0.0
        %2312 = vmatprep.subr.mxu0 0.0
        %2313 = vmatpush2.xpose.msra.mxu0 0.0
        %2314 = vmatprep.mubr.f32.mxu0 %v1963
        %2315 = vmatmul.mubr.f32.gmra.mxu0 %v1962
        %v2316 = vpop.f32.mrf.mxu0
        %v2317 = vadd.f32 0.0, %v2316
        %v2318 = vpop.f32.mrf.mxu0
        %2319 = vdwg.mxu0
        %2320 = vmatprep.subr.mxu0 0.0
        %2321 = vmatpush1.xpose.msra.mxu0 0.0
        %2322 = vmatprep.subr.mxu0 0.0
        %2323 = vmatpush1.xpose.msra.mxu0 0.0
        %2324 = vmatprep.subr.mxu0 0.0
        %2325 = vmatpush1.xpose.msra.mxu0 0.0
        %2326 = vmatprep.subr.mxu0 0.0
        %2327 = vmatpush1.xpose.msra.mxu0 0.0
        %2328 = vmatprep.subr.mxu0 0.0
        %2329 = vmatpush1.xpose.msra.mxu0 0.0
        %2330 = vmatprep.subr.mxu0 0.0
        %2331 = vmatpush1.xpose.msra.mxu0 0.0
        %2332 = vmatprep.subr.mxu0 0.0
        %2333 = vmatpush1.xpose.msra.mxu0 0.0
        %2334 = vmatprep.subr.mxu0 0.0
        %2335 = vmatpush1.xpose.msra.mxu0 0.0
        %2336 = vmatprep.subr.mxu0 0.0
        %2337 = vmatpush1.xpose.msra.mxu0 0.0
        %2338 = vmatprep.subr.mxu0 0.0
        %2339 = vmatpush1.xpose.msra.mxu0 0.0
        %2340 = vmatprep.subr.mxu0 0.0
        %2341 = vmatpush1.xpose.msra.mxu0 0.0
        %2342 = vmatprep.subr.mxu0 0.0
        %2343 = vmatpush1.xpose.msra.mxu0 0.0
        %2344 = vmatprep.subr.mxu0 %v1483
        %2345 = vmatpush1.xpose.msra.mxu0 %v1482
        %2346 = vmatprep.subr.mxu0 %v1475
        %2347 = vmatpush1.xpose.msra.mxu0 %v1474
        %2348 = vmatprep.subr.mxu0 %v1467
        %2349 = vmatpush1.xpose.msra.mxu0 %v1466
        %2350 = vmatprep.subr.mxu0 %v1459
        %2351 = vmatpush1.xpose.msra.mxu0 %v1458
        %2352 = vmatprep.subr.mxu0 0.0
        %2353 = vmatpush2.xpose.msra.mxu0 0.0
        %2354 = vmatprep.subr.mxu0 0.0
        %2355 = vmatpush2.xpose.msra.mxu0 0.0
        %2356 = vmatprep.subr.mxu0 0.0
        %2357 = vmatpush2.xpose.msra.mxu0 0.0
        %2358 = vmatprep.subr.mxu0 0.0
        %2359 = vmatpush2.xpose.msra.mxu0 0.0
        %2360 = vmatprep.subr.mxu0 0.0
        %2361 = vmatpush2.xpose.msra.mxu0 0.0
        %2362 = vmatprep.subr.mxu0 0.0
        %2363 = vmatpush2.xpose.msra.mxu0 0.0
        %2364 = vmatprep.subr.mxu0 0.0
        %2365 = vmatpush2.xpose.msra.mxu0 0.0
        %2366 = vmatprep.subr.mxu0 0.0
        %2367 = vmatpush2.xpose.msra.mxu0 0.0
        %2368 = vmatprep.subr.mxu0 0.0
        %2369 = vmatpush2.xpose.msra.mxu0 0.0
        %2370 = vmatprep.subr.mxu0 0.0
        %2371 = vmatpush2.xpose.msra.mxu0 0.0
        %2372 = vmatprep.subr.mxu0 0.0
        %2373 = vmatpush2.xpose.msra.mxu0 0.0
        %2374 = vmatprep.subr.mxu0 0.0
        %2375 = vmatpush2.xpose.msra.mxu0 0.0
        %2376 = vmatprep.subr.mxu0 0.0
        %2377 = vmatpush2.xpose.msra.mxu0 0.0
        %2378 = vmatprep.subr.mxu0 0.0
        %2379 = vmatpush2.xpose.msra.mxu0 0.0
        %2380 = vmatprep.subr.mxu0 0.0
        %2381 = vmatpush2.xpose.msra.mxu0 0.0
        %2382 = vmatprep.subr.mxu0 0.0
        %2383 = vmatpush2.xpose.msra.mxu0 0.0
        %2384 = vmatprep.mubr.f32.mxu0 %v1965
        %2385 = vmatmul.mubr.f32.gmra.mxu0 %v1964
        %v2386 = vpop.f32.mrf.mxu0
        %v2387 = vadd.f32 %v2317, %v2386
        %v2388 = vpop.f32.mrf.mxu0
        %2389 = vdwg.mxu0
        %2390 = vmatprep.subr.mxu0 0.0
        %2391 = vmatpush1.xpose.msra.mxu0 0.0
        %2392 = vmatprep.subr.mxu0 0.0
        %2393 = vmatpush1.xpose.msra.mxu0 0.0
        %2394 = vmatprep.subr.mxu0 0.0
        %2395 = vmatpush1.xpose.msra.mxu0 0.0
        %2396 = vmatprep.subr.mxu0 0.0
        %2397 = vmatpush1.xpose.msra.mxu0 0.0
        %2398 = vmatprep.subr.mxu0 0.0
        %2399 = vmatpush1.xpose.msra.mxu0 0.0
        %2400 = vmatprep.subr.mxu0 0.0
        %2401 = vmatpush1.xpose.msra.mxu0 0.0
        %2402 = vmatprep.subr.mxu0 0.0
        %2403 = vmatpush1.xpose.msra.mxu0 0.0
        %2404 = vmatprep.subr.mxu0 0.0
        %2405 = vmatpush1.xpose.msra.mxu0 0.0
        %2406 = vmatprep.subr.mxu0 0.0
        %2407 = vmatpush1.xpose.msra.mxu0 0.0
        %2408 = vmatprep.subr.mxu0 0.0
        %2409 = vmatpush1.xpose.msra.mxu0 0.0
        %2410 = vmatprep.subr.mxu0 0.0
        %2411 = vmatpush1.xpose.msra.mxu0 0.0
        %2412 = vmatprep.subr.mxu0 0.0
        %2413 = vmatpush1.xpose.msra.mxu0 0.0
        %2414 = vmatprep.subr.mxu0 %v1485
        %2415 = vmatpush1.xpose.msra.mxu0 %v1484
        %2416 = vmatprep.subr.mxu0 %v1477
        %2417 = vmatpush1.xpose.msra.mxu0 %v1476
        %2418 = vmatprep.subr.mxu0 %v1469
        %2419 = vmatpush1.xpose.msra.mxu0 %v1468
        %2420 = vmatprep.subr.mxu0 %v1461
        %2421 = vmatpush1.xpose.msra.mxu0 %v1460
        %2422 = vmatprep.subr.mxu0 0.0
        %2423 = vmatpush2.xpose.msra.mxu0 0.0
        %2424 = vmatprep.subr.mxu0 0.0
        %2425 = vmatpush2.xpose.msra.mxu0 0.0
        %2426 = vmatprep.subr.mxu0 0.0
        %2427 = vmatpush2.xpose.msra.mxu0 0.0
        %2428 = vmatprep.subr.mxu0 0.0
        %2429 = vmatpush2.xpose.msra.mxu0 0.0
        %2430 = vmatprep.subr.mxu0 0.0
        %2431 = vmatpush2.xpose.msra.mxu0 0.0
        %2432 = vmatprep.subr.mxu0 0.0
        %2433 = vmatpush2.xpose.msra.mxu0 0.0
        %2434 = vmatprep.subr.mxu0 0.0
        %2435 = vmatpush2.xpose.msra.mxu0 0.0
        %2436 = vmatprep.subr.mxu0 0.0
        %2437 = vmatpush2.xpose.msra.mxu0 0.0
        %2438 = vmatprep.subr.mxu0 0.0
        %2439 = vmatpush2.xpose.msra.mxu0 0.0
        %2440 = vmatprep.subr.mxu0 0.0
        %2441 = vmatpush2.xpose.msra.mxu0 0.0
        %2442 = vmatprep.subr.mxu0 0.0
        %2443 = vmatpush2.xpose.msra.mxu0 0.0
        %2444 = vmatprep.subr.mxu0 0.0
        %2445 = vmatpush2.xpose.msra.mxu0 0.0
        %2446 = vmatprep.subr.mxu0 0.0
        %2447 = vmatpush2.xpose.msra.mxu0 0.0
        %2448 = vmatprep.subr.mxu0 0.0
        %2449 = vmatpush2.xpose.msra.mxu0 0.0
        %2450 = vmatprep.subr.mxu0 0.0
        %2451 = vmatpush2.xpose.msra.mxu0 0.0
        %2452 = vmatprep.subr.mxu0 0.0
        %2453 = vmatpush2.xpose.msra.mxu0 0.0
        %2454 = vmatprep.mubr.f32.mxu0 %v1967
        %2455 = vmatmul.mubr.f32.gmra.mxu0 %v1966
        %v2456 = vpop.f32.mrf.mxu0
        %v2457 = vadd.f32 %v2387, %v2456
        %v2458 = vpop.f32.mrf.mxu0
        %2459 = vdwg.mxu0
        %2460 = vmatprep.subr.mxu0 0.0
        %2461 = vmatpush1.xpose.msra.mxu0 0.0
        %2462 = vmatprep.subr.mxu0 0.0
        %2463 = vmatpush1.xpose.msra.mxu0 0.0
        %2464 = vmatprep.subr.mxu0 0.0
        %2465 = vmatpush1.xpose.msra.mxu0 0.0
        %2466 = vmatprep.subr.mxu0 0.0
        %2467 = vmatpush1.xpose.msra.mxu0 0.0
        %2468 = vmatprep.subr.mxu0 0.0
        %2469 = vmatpush1.xpose.msra.mxu0 0.0
        %2470 = vmatprep.subr.mxu0 0.0
        %2471 = vmatpush1.xpose.msra.mxu0 0.0
        %2472 = vmatprep.subr.mxu0 0.0
        %2473 = vmatpush1.xpose.msra.mxu0 0.0
        %2474 = vmatprep.subr.mxu0 0.0
        %2475 = vmatpush1.xpose.msra.mxu0 0.0
        %2476 = vmatprep.subr.mxu0 0.0
        %2477 = vmatpush1.xpose.msra.mxu0 0.0
        %2478 = vmatprep.subr.mxu0 0.0
        %2479 = vmatpush1.xpose.msra.mxu0 0.0
        %2480 = vmatprep.subr.mxu0 0.0
        %2481 = vmatpush1.xpose.msra.mxu0 0.0
        %2482 = vmatprep.subr.mxu0 0.0
        %2483 = vmatpush1.xpose.msra.mxu0 0.0
        %2484 = vmatprep.subr.mxu0 %v1487
        %2485 = vmatpush1.xpose.msra.mxu0 %v1486
        %2486 = vmatprep.subr.mxu0 %v1479
        %2487 = vmatpush1.xpose.msra.mxu0 %v1478
        %2488 = vmatprep.subr.mxu0 %v1471
        %2489 = vmatpush1.xpose.msra.mxu0 %v1470
        %2490 = vmatprep.subr.mxu0 %v1463
        %2491 = vmatpush1.xpose.msra.mxu0 %v1462
        %2492 = vmatprep.subr.mxu0 0.0
        %2493 = vmatpush2.xpose.msra.mxu0 0.0
        %2494 = vmatprep.subr.mxu0 0.0
        %2495 = vmatpush2.xpose.msra.mxu0 0.0
        %2496 = vmatprep.subr.mxu0 0.0
        %2497 = vmatpush2.xpose.msra.mxu0 0.0
        %2498 = vmatprep.subr.mxu0 0.0
        %2499 = vmatpush2.xpose.msra.mxu0 0.0
        %2500 = vmatprep.subr.mxu0 0.0
        %2501 = vmatpush2.xpose.msra.mxu0 0.0
        %2502 = vmatprep.subr.mxu0 0.0
        %2503 = vmatpush2.xpose.msra.mxu0 0.0
        %2504 = vmatprep.subr.mxu0 0.0
        %2505 = vmatpush2.xpose.msra.mxu0 0.0
        %2506 = vmatprep.subr.mxu0 0.0
        %2507 = vmatpush2.xpose.msra.mxu0 0.0
        %2508 = vmatprep.subr.mxu0 0.0
        %2509 = vmatpush2.xpose.msra.mxu0 0.0
        %2510 = vmatprep.subr.mxu0 0.0
        %2511 = vmatpush2.xpose.msra.mxu0 0.0
        %2512 = vmatprep.subr.mxu0 0.0
        %2513 = vmatpush2.xpose.msra.mxu0 0.0
        %2514 = vmatprep.subr.mxu0 0.0
        %2515 = vmatpush2.xpose.msra.mxu0 0.0
        %2516 = vmatprep.subr.mxu0 0.0
        %2517 = vmatpush2.xpose.msra.mxu0 0.0
        %2518 = vmatprep.subr.mxu0 0.0
        %2519 = vmatpush2.xpose.msra.mxu0 0.0
        %2520 = vmatprep.subr.mxu0 0.0
        %2521 = vmatpush2.xpose.msra.mxu0 0.0
        %2522 = vmatprep.subr.mxu0 0.0
        %2523 = vmatpush2.xpose.msra.mxu0 0.0
        %2524 = vmatprep.mubr.f32.mxu0 %v1969
        %2525 = vmatmul.mubr.f32.gmra.mxu0 %v1968
        %v2526 = vpop.f32.mrf.mxu0
        %v2527 = vadd.f32 %v2457, %v2526
        %v2528 = vpop.f32.mrf.mxu0
        %2529 = vdwg.mxu0
        %v2530 = vrcp.pop 2048.0
        %v2531 = vmul.f32 %v2247, %v2530
        %v2532 = vmul.f32 %v2527, %v2530
        %v2533 = vmul.f32 %v2531, %v2531
        %v2534 = vsub.f32 %v2532, %v2533
        %v2535 = vadd.f32 %v2534, 1e-05
        %v2536 = vrsqrt.pop %v2535
        %vm2537 = vcmask 261120
        %v2539 = vsel %vm2537, %v2531, 0
        %2541 = vmatprep.subr.mxu0 0.0
        %2542 = vmatpush1.msra.mxu0 0.0
        %2543 = vmatprep.subr.mxu0 0.0
        %2544 = vmatpush1.msra.mxu0 0.0
        %2545 = vmatprep.subr.mxu0 0.0
        %2546 = vmatpush1.msra.mxu0 0.0
        %2547 = vmatprep.subr.mxu0 0.0
        %2548 = vmatpush1.msra.mxu0 0.0
        %2549 = vmatprep.subr.mxu0 0.0
        %2550 = vmatpush1.msra.mxu0 0.0
        %2551 = vmatprep.subr.mxu0 0.0
        %2552 = vmatpush1.msra.mxu0 0.0
        %2553 = vmatprep.subr.mxu0 0.0
        %2554 = vmatpush1.msra.mxu0 0.0
        %2555 = vmatprep.subr.mxu0 0.0
        %2556 = vmatpush1.msra.mxu0 0.0
        %2557 = vmatprep.subr.mxu0 0.0
        %2558 = vmatpush1.msra.mxu0 0.0
        %2559 = vmatprep.subr.mxu0 0.0
        %2560 = vmatpush1.msra.mxu0 0.0
        %2561 = vmatprep.subr.mxu0 0.0
        %2562 = vmatpush1.msra.mxu0 0.0
        %2563 = vmatprep.subr.mxu0 0.0
        %2564 = vmatpush1.msra.mxu0 0.0
        %2565 = vmatprep.subr.mxu0 %v1481
        %2566 = vmatpush1.msra.mxu0 %v1480
        %2567 = vmatprep.subr.mxu0 %v1473
        %2568 = vmatpush1.msra.mxu0 %v1472
        %2569 = vmatprep.subr.mxu0 %v1465
        %2570 = vmatpush1.msra.mxu0 %v1464
        %2571 = vmatprep.subr.mxu0 %v1457
        %2572 = vmatpush1.msra.mxu0 %v1456
        %2573 = vmatprep.subr.mxu0 0.0
        %2574 = vmatpush2.msra.mxu0 0.0
        %2575 = vmatprep.subr.mxu0 0.0
        %2576 = vmatpush2.msra.mxu0 0.0
        %2577 = vmatprep.subr.mxu0 0.0
        %2578 = vmatpush2.msra.mxu0 0.0
        %2579 = vmatprep.subr.mxu0 0.0
        %2580 = vmatpush2.msra.mxu0 0.0
        %2581 = vmatprep.subr.mxu0 0.0
        %2582 = vmatpush2.msra.mxu0 0.0
        %2583 = vmatprep.subr.mxu0 0.0
        %2584 = vmatpush2.msra.mxu0 0.0
        %2585 = vmatprep.subr.mxu0 0.0
        %2586 = vmatpush2.msra.mxu0 0.0
        %2587 = vmatprep.subr.mxu0 0.0
        %2588 = vmatpush2.msra.mxu0 0.0
        %2589 = vmatprep.subr.mxu0 0.0
        %2590 = vmatpush2.msra.mxu0 0.0
        %2591 = vmatprep.subr.mxu0 0.0
        %2592 = vmatpush2.msra.mxu0 0.0
        %2593 = vmatprep.subr.mxu0 0.0
        %2594 = vmatpush2.msra.mxu0 0.0
        %2595 = vmatprep.subr.mxu0 0.0
        %2596 = vmatpush2.msra.mxu0 0.0
        %2597 = vmatprep.subr.mxu0 0.0
        %2598 = vmatpush2.msra.mxu0 0.0
        %2599 = vmatprep.subr.mxu0 0.0
        %2600 = vmatpush2.msra.mxu0 0.0
        %2601 = vmatprep.subr.mxu0 0.0
        %2602 = vmatpush2.msra.mxu0 0.0
        %2603 = vmatprep.subr.mxu0 0.0
        %2604 = vmatpush2.msra.mxu0 0.0
        %2605 = vmatprep.mubr.f32.mxu0 0.0
        %2606 = vmatmul.mubr.f32.gmra.mxu0 %v2539
        %v2607 = vpop.f32.mrf.mxu0
        %v2608 = vadd.f32 0.0, %v2607
        %v2609 = vpop.f32.mrf.mxu0
        %v2610 = vadd.f32 0.0, %v2609
        %2611 = vdwg.mxu0
        %2612 = vmatprep.subr.mxu0 0.0
        %2613 = vmatpush1.msra.mxu0 0.0
        %2614 = vmatprep.subr.mxu0 0.0
        %2615 = vmatpush1.msra.mxu0 0.0
        %2616 = vmatprep.subr.mxu0 0.0
        %2617 = vmatpush1.msra.mxu0 0.0
        %2618 = vmatprep.subr.mxu0 0.0
        %2619 = vmatpush1.msra.mxu0 0.0
        %2620 = vmatprep.subr.mxu0 0.0
        %2621 = vmatpush1.msra.mxu0 0.0
        %2622 = vmatprep.subr.mxu0 0.0
        %2623 = vmatpush1.msra.mxu0 0.0
        %2624 = vmatprep.subr.mxu0 0.0
        %2625 = vmatpush1.msra.mxu0 0.0
        %2626 = vmatprep.subr.mxu0 0.0
        %2627 = vmatpush1.msra.mxu0 0.0
        %2628 = vmatprep.subr.mxu0 0.0
        %2629 = vmatpush1.msra.mxu0 0.0
        %2630 = vmatprep.subr.mxu0 0.0
        %2631 = vmatpush1.msra.mxu0 0.0
        %2632 = vmatprep.subr.mxu0 0.0
        %2633 = vmatpush1.msra.mxu0 0.0
        %2634 = vmatprep.subr.mxu0 0.0
        %2635 = vmatpush1.msra.mxu0 0.0
        %2636 = vmatprep.subr.mxu0 %v1483
        %2637 = vmatpush1.msra.mxu0 %v1482
        %2638 = vmatprep.subr.mxu0 %v1475
        %2639 = vmatpush1.msra.mxu0 %v1474
        %2640 = vmatprep.subr.mxu0 %v1467
        %2641 = vmatpush1.msra.mxu0 %v1466
        %2642 = vmatprep.subr.mxu0 %v1459
        %2643 = vmatpush1.msra.mxu0 %v1458
        %2644 = vmatprep.subr.mxu0 0.0
        %2645 = vmatpush2.msra.mxu0 0.0
        %2646 = vmatprep.subr.mxu0 0.0
        %2647 = vmatpush2.msra.mxu0 0.0
        %2648 = vmatprep.subr.mxu0 0.0
        %2649 = vmatpush2.msra.mxu0 0.0
        %2650 = vmatprep.subr.mxu0 0.0
        %2651 = vmatpush2.msra.mxu0 0.0
        %2652 = vmatprep.subr.mxu0 0.0
        %2653 = vmatpush2.msra.mxu0 0.0
        %2654 = vmatprep.subr.mxu0 0.0
        %2655 = vmatpush2.msra.mxu0 0.0
        %2656 = vmatprep.subr.mxu0 0.0
        %2657 = vmatpush2.msra.mxu0 0.0
        %2658 = vmatprep.subr.mxu0 0.0
        %2659 = vmatpush2.msra.mxu0 0.0
        %2660 = vmatprep.subr.mxu0 0.0
        %2661 = vmatpush2.msra.mxu0 0.0
        %2662 = vmatprep.subr.mxu0 0.0
        %2663 = vmatpush2.msra.mxu0 0.0
        %2664 = vmatprep.subr.mxu0 0.0
        %2665 = vmatpush2.msra.mxu0 0.0
        %2666 = vmatprep.subr.mxu0 0.0
        %2667 = vmatpush2.msra.mxu0 0.0
        %2668 = vmatprep.subr.mxu0 0.0
        %2669 = vmatpush2.msra.mxu0 0.0
        %2670 = vmatprep.subr.mxu0 0.0
        %2671 = vmatpush2.msra.mxu0 0.0
        %2672 = vmatprep.subr.mxu0 0.0
        %2673 = vmatpush2.msra.mxu0 0.0
        %2674 = vmatprep.subr.mxu0 0.0
        %2675 = vmatpush2.msra.mxu0 0.0
        %2676 = vmatprep.mubr.f32.mxu0 0.0
        %2677 = vmatmul.mubr.f32.gmra.mxu0 %v2539
        %v2678 = vpop.f32.mrf.mxu0
        %v2679 = vadd.f32 0.0, %v2678
        %v2680 = vpop.f32.mrf.mxu0
        %v2681 = vadd.f32 0.0, %v2680
        %2682 = vdwg.mxu0
        %2683 = vmatprep.subr.mxu0 0.0
        %2684 = vmatpush1.msra.mxu0 0.0
        %2685 = vmatprep.subr.mxu0 0.0
        %2686 = vmatpush1.msra.mxu0 0.0
        %2687 = vmatprep.subr.mxu0 0.0
        %2688 = vmatpush1.msra.mxu0 0.0
        %2689 = vmatprep.subr.mxu0 0.0
        %2690 = vmatpush1.msra.mxu0 0.0
        %2691 = vmatprep.subr.mxu0 0.0
        %2692 = vmatpush1.msra.mxu0 0.0
        %2693 = vmatprep.subr.mxu0 0.0
        %2694 = vmatpush1.msra.mxu0 0.0
        %2695 = vmatprep.subr.mxu0 0.0
        %2696 = vmatpush1.msra.mxu0 0.0
        %2697 = vmatprep.subr.mxu0 0.0
        %2698 = vmatpush1.msra.mxu0 0.0
        %2699 = vmatprep.subr.mxu0 0.0
        %2700 = vmatpush1.msra.mxu0 0.0
        %2701 = vmatprep.subr.mxu0 0.0
        %2702 = vmatpush1.msra.mxu0 0.0
        %2703 = vmatprep.subr.mxu0 0.0
        %2704 = vmatpush1.msra.mxu0 0.0
        %2705 = vmatprep.subr.mxu0 0.0
        %2706 = vmatpush1.msra.mxu0 0.0
        %2707 = vmatprep.subr.mxu0 %v1485
        %2708 = vmatpush1.msra.mxu0 %v1484
        %2709 = vmatprep.subr.mxu0 %v1477
        %2710 = vmatpush1.msra.mxu0 %v1476
        %2711 = vmatprep.subr.mxu0 %v1469
        %2712 = vmatpush1.msra.mxu0 %v1468
        %2713 = vmatprep.subr.mxu0 %v1461
        %2714 = vmatpush1.msra.mxu0 %v1460
        %2715 = vmatprep.subr.mxu0 0.0
        %2716 = vmatpush2.msra.mxu0 0.0
        %2717 = vmatprep.subr.mxu0 0.0
        %2718 = vmatpush2.msra.mxu0 0.0
        %2719 = vmatprep.subr.mxu0 0.0
        %2720 = vmatpush2.msra.mxu0 0.0
        %2721 = vmatprep.subr.mxu0 0.0
        %2722 = vmatpush2.msra.mxu0 0.0
        %2723 = vmatprep.subr.mxu0 0.0
        %2724 = vmatpush2.msra.mxu0 0.0
        %2725 = vmatprep.subr.mxu0 0.0
        %2726 = vmatpush2.msra.mxu0 0.0
        %2727 = vmatprep.subr.mxu0 0.0
        %2728 = vmatpush2.msra.mxu0 0.0
        %2729 = vmatprep.subr.mxu0 0.0
        %2730 = vmatpush2.msra.mxu0 0.0
        %2731 = vmatprep.subr.mxu0 0.0
        %2732 = vmatpush2.msra.mxu0 0.0
        %2733 = vmatprep.subr.mxu0 0.0
        %2734 = vmatpush2.msra.mxu0 0.0
        %2735 = vmatprep.subr.mxu0 0.0
        %2736 = vmatpush2.msra.mxu0 0.0
        %2737 = vmatprep.subr.mxu0 0.0
        %2738 = vmatpush2.msra.mxu0 0.0
        %2739 = vmatprep.subr.mxu0 0.0
        %2740 = vmatpush2.msra.mxu0 0.0
        %2741 = vmatprep.subr.mxu0 0.0
        %2742 = vmatpush2.msra.mxu0 0.0
        %2743 = vmatprep.subr.mxu0 0.0
        %2744 = vmatpush2.msra.mxu0 0.0
        %2745 = vmatprep.subr.mxu0 0.0
        %2746 = vmatpush2.msra.mxu0 0.0
        %2747 = vmatprep.mubr.f32.mxu0 0.0
        %2748 = vmatmul.mubr.f32.gmra.mxu0 %v2539
        %v2749 = vpop.f32.mrf.mxu0
        %v2750 = vadd.f32 0.0, %v2749
        %v2751 = vpop.f32.mrf.mxu0
        %v2752 = vadd.f32 0.0, %v2751
        %2753 = vdwg.mxu0
        %2754 = vmatprep.subr.mxu0 0.0
        %2755 = vmatpush1.msra.mxu0 0.0
        %2756 = vmatprep.subr.mxu0 0.0
        %2757 = vmatpush1.msra.mxu0 0.0
        %2758 = vmatprep.subr.mxu0 0.0
        %2759 = vmatpush1.msra.mxu0 0.0
        %2760 = vmatprep.subr.mxu0 0.0
        %2761 = vmatpush1.msra.mxu0 0.0
        %2762 = vmatprep.subr.mxu0 0.0
        %2763 = vmatpush1.msra.mxu0 0.0
        %2764 = vmatprep.subr.mxu0 0.0
        %2765 = vmatpush1.msra.mxu0 0.0
        %2766 = vmatprep.subr.mxu0 0.0
        %2767 = vmatpush1.msra.mxu0 0.0
        %2768 = vmatprep.subr.mxu0 0.0
        %2769 = vmatpush1.msra.mxu0 0.0
        %2770 = vmatprep.subr.mxu0 0.0
        %2771 = vmatpush1.msra.mxu0 0.0
        %2772 = vmatprep.subr.mxu0 0.0
        %2773 = vmatpush1.msra.mxu0 0.0
        %2774 = vmatprep.subr.mxu0 0.0
        %2775 = vmatpush1.msra.mxu0 0.0
        %2776 = vmatprep.subr.mxu0 0.0
        %2777 = vmatpush1.msra.mxu0 0.0
        %2778 = vmatprep.subr.mxu0 %v1487
        %2779 = vmatpush1.msra.mxu0 %v1486
        %2780 = vmatprep.subr.mxu0 %v1479
        %2781 = vmatpush1.msra.mxu0 %v1478
        %2782 = vmatprep.subr.mxu0 %v1471
        %2783 = vmatpush1.msra.mxu0 %v1470
        %2784 = vmatprep.subr.mxu0 %v1463
        %2785 = vmatpush1.msra.mxu0 %v1462
        %2786 = vmatprep.subr.mxu0 0.0
        %2787 = vmatpush2.msra.mxu0 0.0
        %2788 = vmatprep.subr.mxu0 0.0
        %2789 = vmatpush2.msra.mxu0 0.0
        %2790 = vmatprep.subr.mxu0 0.0
        %2791 = vmatpush2.msra.mxu0 0.0
        %2792 = vmatprep.subr.mxu0 0.0
        %2793 = vmatpush2.msra.mxu0 0.0
        %2794 = vmatprep.subr.mxu0 0.0
        %2795 = vmatpush2.msra.mxu0 0.0
        %2796 = vmatprep.subr.mxu0 0.0
        %2797 = vmatpush2.msra.mxu0 0.0
        %2798 = vmatprep.subr.mxu0 0.0
        %2799 = vmatpush2.msra.mxu0 0.0
        %2800 = vmatprep.subr.mxu0 0.0
        %2801 = vmatpush2.msra.mxu0 0.0
        %2802 = vmatprep.subr.mxu0 0.0
        %2803 = vmatpush2.msra.mxu0 0.0
        %2804 = vmatprep.subr.mxu0 0.0
        %2805 = vmatpush2.msra.mxu0 0.0
        %2806 = vmatprep.subr.mxu0 0.0
        %2807 = vmatpush2.msra.mxu0 0.0
        %2808 = vmatprep.subr.mxu0 0.0
        %2809 = vmatpush2.msra.mxu0 0.0
        %2810 = vmatprep.subr.mxu0 0.0
        %2811 = vmatpush2.msra.mxu0 0.0
        %2812 = vmatprep.subr.mxu0 0.0
        %2813 = vmatpush2.msra.mxu0 0.0
        %2814 = vmatprep.subr.mxu0 0.0
        %2815 = vmatpush2.msra.mxu0 0.0
        %2816 = vmatprep.subr.mxu0 0.0
        %2817 = vmatpush2.msra.mxu0 0.0
        %2818 = vmatprep.mubr.f32.mxu0 0.0
        %2819 = vmatmul.mubr.f32.gmra.mxu0 %v2539
        %v2820 = vpop.f32.mrf.mxu0
        %v2821 = vadd.f32 0.0, %v2820
        %v2822 = vpop.f32.mrf.mxu0
        %v2823 = vadd.f32 0.0, %v2822
        %2824 = vdwg.mxu0
        %v2826 = vsel %vm2537, %v2536, 0
        %2828 = vmatprep.subr.mxu0 0.0
        %2829 = vmatpush1.msra.mxu0 0.0
        %2830 = vmatprep.subr.mxu0 0.0
        %2831 = vmatpush1.msra.mxu0 0.0
        %2832 = vmatprep.subr.mxu0 0.0
        %2833 = vmatpush1.msra.mxu0 0.0
        %2834 = vmatprep.subr.mxu0 0.0
        %2835 = vmatpush1.msra.mxu0 0.0
        %2836 = vmatprep.subr.mxu0 0.0
        %2837 = vmatpush1.msra.mxu0 0.0
        %2838 = vmatprep.subr.mxu0 0.0
        %2839 = vmatpush1.msra.mxu0 0.0
        %2840 = vmatprep.subr.mxu0 0.0
        %2841 = vmatpush1.msra.mxu0 0.0
        %2842 = vmatprep.subr.mxu0 0.0
        %2843 = vmatpush1.msra.mxu0 0.0
        %2844 = vmatprep.subr.mxu0 0.0
        %2845 = vmatpush1.msra.mxu0 0.0
        %2846 = vmatprep.subr.mxu0 0.0
        %2847 = vmatpush1.msra.mxu0 0.0
        %2848 = vmatprep.subr.mxu0 0.0
        %2849 = vmatpush1.msra.mxu0 0.0
        %2850 = vmatprep.subr.mxu0 0.0
        %2851 = vmatpush1.msra.mxu0 0.0
        %2852 = vmatprep.subr.mxu0 %v1481
        %2853 = vmatpush1.msra.mxu0 %v1480
        %2854 = vmatprep.subr.mxu0 %v1473
        %2855 = vmatpush1.msra.mxu0 %v1472
        %2856 = vmatprep.subr.mxu0 %v1465
        %2857 = vmatpush1.msra.mxu0 %v1464
        %2858 = vmatprep.subr.mxu0 %v1457
        %2859 = vmatpush1.msra.mxu0 %v1456
        %2860 = vmatprep.subr.mxu0 0.0
        %2861 = vmatpush2.msra.mxu0 0.0
        %2862 = vmatprep.subr.mxu0 0.0
        %2863 = vmatpush2.msra.mxu0 0.0
        %2864 = vmatprep.subr.mxu0 0.0
        %2865 = vmatpush2.msra.mxu0 0.0
        %2866 = vmatprep.subr.mxu0 0.0
        %2867 = vmatpush2.msra.mxu0 0.0
        %2868 = vmatprep.subr.mxu0 0.0
        %2869 = vmatpush2.msra.mxu0 0.0
        %2870 = vmatprep.subr.mxu0 0.0
        %2871 = vmatpush2.msra.mxu0 0.0
        %2872 = vmatprep.subr.mxu0 0.0
        %2873 = vmatpush2.msra.mxu0 0.0
        %2874 = vmatprep.subr.mxu0 0.0
        %2875 = vmatpush2.msra.mxu0 0.0
        %2876 = vmatprep.subr.mxu0 0.0
        %2877 = vmatpush2.msra.mxu0 0.0
        %2878 = vmatprep.subr.mxu0 0.0
        %2879 = vmatpush2.msra.mxu0 0.0
        %2880 = vmatprep.subr.mxu0 0.0
        %2881 = vmatpush2.msra.mxu0 0.0
        %2882 = vmatprep.subr.mxu0 0.0
        %2883 = vmatpush2.msra.mxu0 0.0
        %2884 = vmatprep.subr.mxu0 0.0
        %2885 = vmatpush2.msra.mxu0 0.0
        %2886 = vmatprep.subr.mxu0 0.0
        %2887 = vmatpush2.msra.mxu0 0.0
        %2888 = vmatprep.subr.mxu0 0.0
        %2889 = vmatpush2.msra.mxu0 0.0
        %2890 = vmatprep.subr.mxu0 0.0
        %2891 = vmatpush2.msra.mxu0 0.0
        %2892 = vmatprep.mubr.f32.mxu0 0.0
        %2893 = vmatmul.mubr.f32.gmra.mxu0 %v2826
        %v2894 = vpop.f32.mrf.mxu0
        %v2895 = vadd.f32 0.0, %v2894
        %v2896 = vpop.f32.mrf.mxu0
        %v2897 = vadd.f32 0.0, %v2896
        %2898 = vdwg.mxu0
        %2899 = vmatprep.subr.mxu0 0.0
        %2900 = vmatpush1.msra.mxu0 0.0
        %2901 = vmatprep.subr.mxu0 0.0
        %2902 = vmatpush1.msra.mxu0 0.0
        %2903 = vmatprep.subr.mxu0 0.0
        %2904 = vmatpush1.msra.mxu0 0.0
        %2905 = vmatprep.subr.mxu0 0.0
        %2906 = vmatpush1.msra.mxu0 0.0
        %2907 = vmatprep.subr.mxu0 0.0
        %2908 = vmatpush1.msra.mxu0 0.0
        %2909 = vmatprep.subr.mxu0 0.0
        %2910 = vmatpush1.msra.mxu0 0.0
        %2911 = vmatprep.subr.mxu0 0.0
        %2912 = vmatpush1.msra.mxu0 0.0
        %2913 = vmatprep.subr.mxu0 0.0
        %2914 = vmatpush1.msra.mxu0 0.0
        %2915 = vmatprep.subr.mxu0 0.0
        %2916 = vmatpush1.msra.mxu0 0.0
        %2917 = vmatprep.subr.mxu0 0.0
        %2918 = vmatpush1.msra.mxu0 0.0
        %2919 = vmatprep.subr.mxu0 0.0
        %2920 = vmatpush1.msra.mxu0 0.0
        %2921 = vmatprep.subr.mxu0 0.0
        %2922 = vmatpush1.msra.mxu0 0.0
        %2923 = vmatprep.subr.mxu0 %v1483
        %2924 = vmatpush1.msra.mxu0 %v1482
        %2925 = vmatprep.subr.mxu0 %v1475
        %2926 = vmatpush1.msra.mxu0 %v1474
        %2927 = vmatprep.subr.mxu0 %v1467
        %2928 = vmatpush1.msra.mxu0 %v1466
        %2929 = vmatprep.subr.mxu0 %v1459
        %2930 = vmatpush1.msra.mxu0 %v1458
        %2931 = vmatprep.subr.mxu0 0.0
        %2932 = vmatpush2.msra.mxu0 0.0
        %2933 = vmatprep.subr.mxu0 0.0
        %2934 = vmatpush2.msra.mxu0 0.0
        %2935 = vmatprep.subr.mxu0 0.0
        %2936 = vmatpush2.msra.mxu0 0.0
        %2937 = vmatprep.subr.mxu0 0.0
        %2938 = vmatpush2.msra.mxu0 0.0
        %2939 = vmatprep.subr.mxu0 0.0
        %2940 = vmatpush2.msra.mxu0 0.0
        %2941 = vmatprep.subr.mxu0 0.0
        %2942 = vmatpush2.msra.mxu0 0.0
        %2943 = vmatprep.subr.mxu0 0.0
        %2944 = vmatpush2.msra.mxu0 0.0
        %2945 = vmatprep.subr.mxu0 0.0
        %2946 = vmatpush2.msra.mxu0 0.0
        %2947 = vmatprep.subr.mxu0 0.0
        %2948 = vmatpush2.msra.mxu0 0.0
        %2949 = vmatprep.subr.mxu0 0.0
        %2950 = vmatpush2.msra.mxu0 0.0
        %2951 = vmatprep.subr.mxu0 0.0
        %2952 = vmatpush2.msra.mxu0 0.0
        %2953 = vmatprep.subr.mxu0 0.0
        %2954 = vmatpush2.msra.mxu0 0.0
        %2955 = vmatprep.subr.mxu0 0.0
        %2956 = vmatpush2.msra.mxu0 0.0
        %2957 = vmatprep.subr.mxu0 0.0
        %2958 = vmatpush2.msra.mxu0 0.0
        %2959 = vmatprep.subr.mxu0 0.0
        %2960 = vmatpush2.msra.mxu0 0.0
        %2961 = vmatprep.subr.mxu0 0.0
        %2962 = vmatpush2.msra.mxu0 0.0
        %2963 = vmatprep.mubr.f32.mxu0 0.0
        %2964 = vmatmul.mubr.f32.gmra.mxu0 %v2826
        %v2965 = vpop.f32.mrf.mxu0
        %v2966 = vadd.f32 0.0, %v2965
        %v2967 = vpop.f32.mrf.mxu0
        %v2968 = vadd.f32 0.0, %v2967
        %2969 = vdwg.mxu0
        %2970 = vmatprep.subr.mxu0 0.0
        %2971 = vmatpush1.msra.mxu0 0.0
        %2972 = vmatprep.subr.mxu0 0.0
        %2973 = vmatpush1.msra.mxu0 0.0
        %2974 = vmatprep.subr.mxu0 0.0
        %2975 = vmatpush1.msra.mxu0 0.0
        %2976 = vmatprep.subr.mxu0 0.0
        %2977 = vmatpush1.msra.mxu0 0.0
        %2978 = vmatprep.subr.mxu0 0.0
        %2979 = vmatpush1.msra.mxu0 0.0
        %2980 = vmatprep.subr.mxu0 0.0
        %2981 = vmatpush1.msra.mxu0 0.0
        %2982 = vmatprep.subr.mxu0 0.0
        %2983 = vmatpush1.msra.mxu0 0.0
        %2984 = vmatprep.subr.mxu0 0.0
        %2985 = vmatpush1.msra.mxu0 0.0
        %2986 = vmatprep.subr.mxu0 0.0
        %2987 = vmatpush1.msra.mxu0 0.0
        %2988 = vmatprep.subr.mxu0 0.0
        %2989 = vmatpush1.msra.mxu0 0.0
        %2990 = vmatprep.subr.mxu0 0.0
        %2991 = vmatpush1.msra.mxu0 0.0
        %2992 = vmatprep.subr.mxu0 0.0
        %2993 = vmatpush1.msra.mxu0 0.0
        %2994 = vmatprep.subr.mxu0 %v1485
        %2995 = vmatpush1.msra.mxu0 %v1484
        %2996 = vmatprep.subr.mxu0 %v1477
        %2997 = vmatpush1.msra.mxu0 %v1476
        %2998 = vmatprep.subr.mxu0 %v1469
        %2999 = vmatpush1.msra.mxu0 %v1468
        %3000 = vmatprep.subr.mxu0 %v1461
        %3001 = vmatpush1.msra.mxu0 %v1460
        %3002 = vmatprep.subr.mxu0 0.0
        %3003 = vmatpush2.msra.mxu0 0.0
        %3004 = vmatprep.subr.mxu0 0.0
        %3005 = vmatpush2.msra.mxu0 0.0
        %3006 = vmatprep.subr.mxu0 0.0
        %3007 = vmatpush2.msra.mxu0 0.0
        %3008 = vmatprep.subr.mxu0 0.0
        %3009 = vmatpush2.msra.mxu0 0.0
        %3010 = vmatprep.subr.mxu0 0.0
        %3011 = vmatpush2.msra.mxu0 0.0
        %3012 = vmatprep.subr.mxu0 0.0
        %3013 = vmatpush2.msra.mxu0 0.0
        %3014 = vmatprep.subr.mxu0 0.0
        %3015 = vmatpush2.msra.mxu0 0.0
        %3016 = vmatprep.subr.mxu0 0.0
        %3017 = vmatpush2.msra.mxu0 0.0
        %3018 = vmatprep.subr.mxu0 0.0
        %3019 = vmatpush2.msra.mxu0 0.0
        %3020 = vmatprep.subr.mxu0 0.0
        %3021 = vmatpush2.msra.mxu0 0.0
        %3022 = vmatprep.subr.mxu0 0.0
        %3023 = vmatpush2.msra.mxu0 0.0
        %3024 = vmatprep.subr.mxu0 0.0
        %3025 = vmatpush2.msra.mxu0 0.0
        %3026 = vmatprep.subr.mxu0 0.0
        %3027 = vmatpush2.msra.mxu0 0.0
        %3028 = vmatprep.subr.mxu0 0.0
        %3029 = vmatpush2.msra.mxu0 0.0
        %3030 = vmatprep.subr.mxu0 0.0
        %3031 = vmatpush2.msra.mxu0 0.0
        %3032 = vmatprep.subr.mxu0 0.0
        %3033 = vmatpush2.msra.mxu0 0.0
        %3034 = vmatprep.mubr.f32.mxu0 0.0
        %3035 = vmatmul.mubr.f32.gmra.mxu0 %v2826
        %v3036 = vpop.f32.mrf.mxu0
        %v3037 = vadd.f32 0.0, %v3036
        %v3038 = vpop.f32.mrf.mxu0
        %v3039 = vadd.f32 0.0, %v3038
        %3040 = vdwg.mxu0
        %3041 = vmatprep.subr.mxu0 0.0
        %3042 = vmatpush1.msra.mxu0 0.0
        %3043 = vmatprep.subr.mxu0 0.0
        %3044 = vmatpush1.msra.mxu0 0.0
        %3045 = vmatprep.subr.mxu0 0.0
        %3046 = vmatpush1.msra.mxu0 0.0
        %3047 = vmatprep.subr.mxu0 0.0
        %3048 = vmatpush1.msra.mxu0 0.0
        %3049 = vmatprep.subr.mxu0 0.0
        %3050 = vmatpush1.msra.mxu0 0.0
        %3051 = vmatprep.subr.mxu0 0.0
        %3052 = vmatpush1.msra.mxu0 0.0
        %3053 = vmatprep.subr.mxu0 0.0
        %3054 = vmatpush1.msra.mxu0 0.0
        %3055 = vmatprep.subr.mxu0 0.0
        %3056 = vmatpush1.msra.mxu0 0.0
        %3057 = vmatprep.subr.mxu0 0.0
        %3058 = vmatpush1.msra.mxu0 0.0
        %3059 = vmatprep.subr.mxu0 0.0
        %3060 = vmatpush1.msra.mxu0 0.0
        %3061 = vmatprep.subr.mxu0 0.0
        %3062 = vmatpush1.msra.mxu0 0.0
        %3063 = vmatprep.subr.mxu0 0.0
        %3064 = vmatpush1.msra.mxu0 0.0
        %3065 = vmatprep.subr.mxu0 %v1487
        %3066 = vmatpush1.msra.mxu0 %v1486
        %3067 = vmatprep.subr.mxu0 %v1479
        %3068 = vmatpush1.msra.mxu0 %v1478
        %3069 = vmatprep.subr.mxu0 %v1471
        %3070 = vmatpush1.msra.mxu0 %v1470
        %3071 = vmatprep.subr.mxu0 %v1463
        %3072 = vmatpush1.msra.mxu0 %v1462
        %3073 = vmatprep.subr.mxu0 0.0
        %3074 = vmatpush2.msra.mxu0 0.0
        %3075 = vmatprep.subr.mxu0 0.0
        %3076 = vmatpush2.msra.mxu0 0.0
        %3077 = vmatprep.subr.mxu0 0.0
        %3078 = vmatpush2.msra.mxu0 0.0
        %3079 = vmatprep.subr.mxu0 0.0
        %3080 = vmatpush2.msra.mxu0 0.0
        %3081 = vmatprep.subr.mxu0 0.0
        %3082 = vmatpush2.msra.mxu0 0.0
        %3083 = vmatprep.subr.mxu0 0.0
        %3084 = vmatpush2.msra.mxu0 0.0
        %3085 = vmatprep.subr.mxu0 0.0
        %3086 = vmatpush2.msra.mxu0 0.0
        %3087 = vmatprep.subr.mxu0 0.0
        %3088 = vmatpush2.msra.mxu0 0.0
        %3089 = vmatprep.subr.mxu0 0.0
        %3090 = vmatpush2.msra.mxu0 0.0
        %3091 = vmatprep.subr.mxu0 0.0
        %3092 = vmatpush2.msra.mxu0 0.0
        %3093 = vmatprep.subr.mxu0 0.0
        %3094 = vmatpush2.msra.mxu0 0.0
        %3095 = vmatprep.subr.mxu0 0.0
        %3096 = vmatpush2.msra.mxu0 0.0
        %3097 = vmatprep.subr.mxu0 0.0
        %3098 = vmatpush2.msra.mxu0 0.0
        %3099 = vmatprep.subr.mxu0 0.0
        %3100 = vmatpush2.msra.mxu0 0.0
        %3101 = vmatprep.subr.mxu0 0.0
        %3102 = vmatpush2.msra.mxu0 0.0
        %3103 = vmatprep.subr.mxu0 0.0
        %3104 = vmatpush2.msra.mxu0 0.0
        %3105 = vmatprep.mubr.f32.mxu0 0.0
        %3106 = vmatmul.mubr.f32.gmra.mxu0 %v2826
        %v3107 = vpop.f32.mrf.mxu0
        %v3108 = vadd.f32 0.0, %v3107
        %v3109 = vpop.f32.mrf.mxu0
        %v3110 = vadd.f32 0.0, %v3109
        %3111 = vdwg.mxu0
        %v3120 = vcombine.low %v2895, %v2897
        %v3121 = vcombine.low %v2966, %v2968
        %v3122 = vcombine.low %v3037, %v3039
        %v3123 = vcombine.low %v3108, %v3110
        %v3125 = vunpack.c.l.s4 1966171168
        %v3126 = vunpack.c.0.s8 %v3125
        %v3127 = vlaneseq
        %v3128 = vshrl.u32 %v3127, 7
        %v3129 = vsub.s32 %v3126, %v3128
        %v3130 = vrot.slane %v3120, %v3129
        %v3132 = vunpack.c.l.s4 1966171168
        %v3133 = vunpack.c.0.s8 %v3132
        %v3134 = vlaneseq
        %v3135 = vshrl.u32 %v3134, 7
        %v3136 = vsub.s32 %v3133, %v3135
        %v3137 = vrot.slane %v3121, %v3136
        %v3139 = vunpack.c.l.s4 1966171168
        %v3140 = vunpack.c.0.s8 %v3139
        %v3141 = vlaneseq
        %v3142 = vshrl.u32 %v3141, 7
        %v3143 = vsub.s32 %v3140, %v3142
        %v3144 = vrot.slane %v3122, %v3143
        %v3146 = vunpack.c.l.s4 1966171168
        %v3147 = vunpack.c.0.s8 %v3146
        %v3148 = vlaneseq
        %v3149 = vshrl.u32 %v3148, 7
        %v3150 = vsub.s32 %v3147, %v3149
        %v3151 = vrot.slane %v3123, %v3150
        %v3152 = vcombine.low %v3130, %v3137
        %v3153 = vcombine.low %v3144, %v3151
        %v3155 = vunpack.c.l.s4 1966171168
        %v3156 = vunpack.c.0.s8 %v3155
        %v3157 = vlaneseq
        %v3158 = vshrl.u32 %v3157, 7
        %v3159 = vsub.s32 %v3156, %v3158
        %v3160 = vrot.slane %v3152, %v3159
        %v3162 = vunpack.c.l.s4 1966171168
        %v3163 = vunpack.c.0.s8 %v3162
        %v3164 = vlaneseq
        %v3165 = vshrl.u32 %v3164, 7
        %v3166 = vsub.s32 %v3163, %v3165
        %v3167 = vrot.slane %v3153, %v3166
        %v3168 = vcombine.low %v3160, %v3167
        %v3170 = vmul.f32 %v1454, %v3168
        %v3179 = vcombine.low %v2608, %v2610
        %v3180 = vcombine.low %v2679, %v2681
        %v3181 = vcombine.low %v2750, %v2752
        %v3182 = vcombine.low %v2821, %v2823
        %v3184 = vunpack.c.l.s4 1966171168
        %v3185 = vunpack.c.0.s8 %v3184
        %v3186 = vlaneseq
        %v3187 = vshrl.u32 %v3186, 7
        %v3188 = vsub.s32 %v3185, %v3187
        %v3189 = vrot.slane %v3179, %v3188
        %v3191 = vunpack.c.l.s4 1966171168
        %v3192 = vunpack.c.0.s8 %v3191
        %v3193 = vlaneseq
        %v3194 = vshrl.u32 %v3193, 7
        %v3195 = vsub.s32 %v3192, %v3194
        %v3196 = vrot.slane %v3180, %v3195
        %v3198 = vunpack.c.l.s4 1966171168
        %v3199 = vunpack.c.0.s8 %v3198
        %v3200 = vlaneseq
        %v3201 = vshrl.u32 %v3200, 7
        %v3202 = vsub.s32 %v3199, %v3201
        %v3203 = vrot.slane %v3181, %v3202
        %v3205 = vunpack.c.l.s4 1966171168
        %v3206 = vunpack.c.0.s8 %v3205
        %v3207 = vlaneseq
        %v3208 = vshrl.u32 %v3207, 7
        %v3209 = vsub.s32 %v3206, %v3208
        %v3210 = vrot.slane %v3182, %v3209
        %v3211 = vcombine.low %v3189, %v3196
        %v3212 = vcombine.low %v3203, %v3210
        %v3214 = vunpack.c.l.s4 1966171168
        %v3215 = vunpack.c.0.s8 %v3214
        %v3216 = vlaneseq
        %v3217 = vshrl.u32 %v3216, 7
        %v3218 = vsub.s32 %v3215, %v3217
        %v3219 = vrot.slane %v3211, %v3218
        %v3221 = vunpack.c.l.s4 1966171168
        %v3222 = vunpack.c.0.s8 %v3221
        %v3223 = vlaneseq
        %v3224 = vshrl.u32 %v3223, 7
        %v3225 = vsub.s32 %v3222, %v3224
        %v3226 = vrot.slane %v3212, %v3225
        %v3227 = vcombine.low %v3219, %v3226
        %v3229 = vsub.f32 %v1453, %v3227
        %v3230 = vmul.f32 %v3229, %v3170
        %v3231 = vadd.f32 %v1455, %v3230
        %v3233 = vlaneseq
        %v3234 = vshrl.u32 %v3233, 7
        %v3235 = vsub.s32 0, %v3234
        %v3236 = vrot.slane %v3170, %v3235
        %v3237 = vlaneseq
        %v3238 = vshrl.u32 %v3237, 7
        %v3239 = vsub.s32 1, %v3238
        %v3240 = vrot.slane %v3170, %v3239
        %v3241 = vlaneseq
        %v3242 = vshrl.u32 %v3241, 7
        %v3243 = vsub.s32 2, %v3242
        %v3244 = vrot.slane %v3170, %v3243
        %v3245 = vlaneseq
        %v3246 = vshrl.u32 %v3245, 7
        %v3247 = vsub.s32 3, %v3246
        %v3248 = vrot.slane %v3170, %v3247
        %v3249 = vlaneseq
        %v3250 = vshrl.u32 %v3249, 7
        %v3251 = vsub.s32 4, %v3250
        %v3252 = vrot.slane %v3170, %v3251
        %v3253 = vlaneseq
        %v3254 = vshrl.u32 %v3253, 7
        %v3255 = vsub.s32 5, %v3254
        %v3256 = vrot.slane %v3170, %v3255
        %v3257 = vlaneseq
        %v3258 = vshrl.u32 %v3257, 7
        %v3259 = vsub.s32 6, %v3258
        %v3260 = vrot.slane %v3170, %v3259
        %v3261 = vlaneseq
        %v3262 = vshrl.u32 %v3261, 7
        %v3263 = vsub.s32 7, %v3262
        %v3264 = vrot.slane %v3170, %v3263
        %v3273 = vmul.f32 %v1196, %v3236
        %v3274 = vmul.f32 %v1198, %v3240
        %v3275 = vmul.f32 %v1269, %v3244
        %v3276 = vmul.f32 %v1271, %v3248
        %v3277 = vmul.f32 %v1342, %v3252
        %v3278 = vmul.f32 %v1344, %v3256
        %v3279 = vmul.f32 %v1415, %v3260
        %v3280 = vmul.f32 %v1417, %v3264
        %v3281 = vmul.f32 %v1200, %v3236
        %v3282 = vmul.f32 %v1202, %v3240
        %v3283 = vmul.f32 %v1273, %v3244
        %v3284 = vmul.f32 %v1275, %v3248
        %v3285 = vmul.f32 %v1346, %v3252
        %v3286 = vmul.f32 %v1348, %v3256
        %v3287 = vmul.f32 %v1419, %v3260
        %v3288 = vmul.f32 %v1421, %v3264
        %v3289 = vmul.f32 %v1206, %v3236
        %v3290 = vmul.f32 %v1208, %v3240
        %v3291 = vmul.f32 %v1279, %v3244
        %v3292 = vmul.f32 %v1281, %v3248
        %v3293 = vmul.f32 %v1352, %v3252
        %v3294 = vmul.f32 %v1354, %v3256
        %v3295 = vmul.f32 %v1425, %v3260
        %v3296 = vmul.f32 %v1427, %v3264
        %v3297 = vmul.f32 %v1210, %v3236
        %v3298 = vmul.f32 %v1212, %v3240
        %v3299 = vmul.f32 %v1283, %v3244
        %v3300 = vmul.f32 %v1285, %v3248
        %v3301 = vmul.f32 %v1356, %v3252
        %v3302 = vmul.f32 %v1358, %v3256
        %v3303 = vmul.f32 %v1429, %v3260
        %v3304 = vmul.f32 %v1431, %v3264
        %v3305 = vmul.f32 %v1216, %v3236
        %v3306 = vmul.f32 %v1218, %v3240
        %v3307 = vmul.f32 %v1289, %v3244
        %v3308 = vmul.f32 %v1291, %v3248
        %v3309 = vmul.f32 %v1362, %v3252
        %v3310 = vmul.f32 %v1364, %v3256
        %v3311 = vmul.f32 %v1435, %v3260
        %v3312 = vmul.f32 %v1437, %v3264
        %v3313 = vmul.f32 %v1220, %v3236
        %v3314 = vmul.f32 %v1222, %v3240
        %v3315 = vmul.f32 %v1293, %v3244
        %v3316 = vmul.f32 %v1295, %v3248
        %v3317 = vmul.f32 %v1366, %v3252
        %v3318 = vmul.f32 %v1368, %v3256
        %v3319 = vmul.f32 %v1439, %v3260
        %v3320 = vmul.f32 %v1441, %v3264
        %v3321 = vmul.f32 %v1226, %v3236
        %v3322 = vmul.f32 %v1228, %v3240
        %v3323 = vmul.f32 %v1299, %v3244
        %v3324 = vmul.f32 %v1301, %v3248
        %v3325 = vmul.f32 %v1372, %v3252
        %v3326 = vmul.f32 %v1374, %v3256
        %v3327 = vmul.f32 %v1445, %v3260
        %v3328 = vmul.f32 %v1447, %v3264
        %v3329 = vmul.f32 %v1230, %v3236
        %v3330 = vmul.f32 %v1232, %v3240
        %v3331 = vmul.f32 %v1303, %v3244
        %v3332 = vmul.f32 %v1305, %v3248
        %v3333 = vmul.f32 %v1376, %v3252
        %v3334 = vmul.f32 %v1378, %v3256
        %v3335 = vmul.f32 %v1449, %v3260
        %v3336 = vmul.f32 %v1451, %v3264
        %v3338 = vlaneseq
        %v3339 = vshrl.u32 %v3338, 7
        %v3340 = vsub.s32 0, %v3339
        %v3341 = vrot.slane %v3231, %v3340
        %v3342 = vlaneseq
        %v3343 = vshrl.u32 %v3342, 7
        %v3344 = vsub.s32 1, %v3343
        %v3345 = vrot.slane %v3231, %v3344
        %v3346 = vlaneseq
        %v3347 = vshrl.u32 %v3346, 7
        %v3348 = vsub.s32 2, %v3347
        %v3349 = vrot.slane %v3231, %v3348
        %v3350 = vlaneseq
        %v3351 = vshrl.u32 %v3350, 7
        %v3352 = vsub.s32 3, %v3351
        %v3353 = vrot.slane %v3231, %v3352
        %v3354 = vlaneseq
        %v3355 = vshrl.u32 %v3354, 7
        %v3356 = vsub.s32 4, %v3355
        %v3357 = vrot.slane %v3231, %v3356
        %v3358 = vlaneseq
        %v3359 = vshrl.u32 %v3358, 7
        %v3360 = vsub.s32 5, %v3359
        %v3361 = vrot.slane %v3231, %v3360
        %v3362 = vlaneseq
        %v3363 = vshrl.u32 %v3362, 7
        %v3364 = vsub.s32 6, %v3363
        %v3365 = vrot.slane %v3231, %v3364
        %v3366 = vlaneseq
        %v3367 = vshrl.u32 %v3366, 7
        %v3368 = vsub.s32 7, %v3367
        %v3369 = vrot.slane %v3231, %v3368
        %v3378 = vadd.f32 %v3273, %v3341
        %v3379 = vadd.f32 %v3274, %v3345
        %v3380 = vadd.f32 %v3275, %v3349
        %v3381 = vadd.f32 %v3276, %v3353
        %v3382 = vadd.f32 %v3277, %v3357
        %v3383 = vadd.f32 %v3278, %v3361
        %v3384 = vadd.f32 %v3279, %v3365
        %v3385 = vadd.f32 %v3280, %v3369
        %v3386 = vadd.f32 %v3281, %v3341
        %v3387 = vadd.f32 %v3282, %v3345
        %v3388 = vadd.f32 %v3283, %v3349
        %v3389 = vadd.f32 %v3284, %v3353
        %v3390 = vadd.f32 %v3285, %v3357
        %v3391 = vadd.f32 %v3286, %v3361
        %v3392 = vadd.f32 %v3287, %v3365
        %v3393 = vadd.f32 %v3288, %v3369
        %v3394 = vadd.f32 %v3289, %v3341
        %v3395 = vadd.f32 %v3290, %v3345
        %v3396 = vadd.f32 %v3291, %v3349
        %v3397 = vadd.f32 %v3292, %v3353
        %v3398 = vadd.f32 %v3293, %v3357
        %v3399 = vadd.f32 %v3294, %v3361
        %v3400 = vadd.f32 %v3295, %v3365
        %v3401 = vadd.f32 %v3296, %v3369
        %v3402 = vadd.f32 %v3297, %v3341
        %v3403 = vadd.f32 %v3298, %v3345
        %v3404 = vadd.f32 %v3299, %v3349
        %v3405 = vadd.f32 %v3300, %v3353
        %v3406 = vadd.f32 %v3301, %v3357
        %v3407 = vadd.f32 %v3302, %v3361
        %v3408 = vadd.f32 %v3303, %v3365
        %v3409 = vadd.f32 %v3304, %v3369
        %v3410 = vadd.f32 %v3305, %v3341
        %v3411 = vadd.f32 %v3306, %v3345
        %v3412 = vadd.f32 %v3307, %v3349
        %v3413 = vadd.f32 %v3308, %v3353
        %v3414 = vadd.f32 %v3309, %v3357
        %v3415 = vadd.f32 %v3310, %v3361
        %v3416 = vadd.f32 %v3311, %v3365
        %v3417 = vadd.f32 %v3312, %v3369
        %v3418 = vadd.f32 %v3313, %v3341
        %v3419 = vadd.f32 %v3314, %v3345
        %v3420 = vadd.f32 %v3315, %v3349
        %v3421 = vadd.f32 %v3316, %v3353
        %v3422 = vadd.f32 %v3317, %v3357
        %v3423 = vadd.f32 %v3318, %v3361
        %v3424 = vadd.f32 %v3319, %v3365
        %v3425 = vadd.f32 %v3320, %v3369
        %v3426 = vadd.f32 %v3321, %v3341
        %v3427 = vadd.f32 %v3322, %v3345
        %v3428 = vadd.f32 %v3323, %v3349
        %v3429 = vadd.f32 %v3324, %v3353
        %v3430 = vadd.f32 %v3325, %v3357
        %v3431 = vadd.f32 %v3326, %v3361
        %v3432 = vadd.f32 %v3327, %v3365
        %v3433 = vadd.f32 %v3328, %v3369
        %v3434 = vadd.f32 %v3329, %v3341
        %v3435 = vadd.f32 %v3330, %v3345
        %v3436 = vadd.f32 %v3331, %v3349
        %v3437 = vadd.f32 %v3332, %v3353
        %v3438 = vadd.f32 %v3333, %v3357
        %v3439 = vadd.f32 %v3334, %v3361
        %v3440 = vadd.f32 %v3335, %v3365
        %v3441 = vadd.f32 %v3336, %v3369
        %vm3442 = vcmp.ge.f32.partialorder %v3378, 0.0
        %vm3443 = vcmp.ge.f32.partialorder %v3379, 0.0
        %vm3444 = vcmp.ge.f32.partialorder %v3380, 0.0
        %vm3445 = vcmp.ge.f32.partialorder %v3381, 0.0
        %vm3446 = vcmp.ge.f32.partialorder %v3382, 0.0
        %vm3447 = vcmp.ge.f32.partialorder %v3383, 0.0
        %vm3448 = vcmp.ge.f32.partialorder %v3384, 0.0
        %vm3449 = vcmp.ge.f32.partialorder %v3385, 0.0
        %vm3450 = vcmp.ge.f32.partialorder %v3386, 0.0
        %vm3451 = vcmp.ge.f32.partialorder %v3387, 0.0
        %vm3452 = vcmp.ge.f32.partialorder %v3388, 0.0
        %vm3453 = vcmp.ge.f32.partialorder %v3389, 0.0
        %vm3454 = vcmp.ge.f32.partialorder %v3390, 0.0
        %vm3455 = vcmp.ge.f32.partialorder %v3391, 0.0
        %vm3456 = vcmp.ge.f32.partialorder %v3392, 0.0
        %vm3457 = vcmp.ge.f32.partialorder %v3393, 0.0
        %vm3458 = vcmp.ge.f32.partialorder %v3394, 0.0
        %vm3459 = vcmp.ge.f32.partialorder %v3395, 0.0
        %vm3460 = vcmp.ge.f32.partialorder %v3396, 0.0
        %vm3461 = vcmp.ge.f32.partialorder %v3397, 0.0
        %vm3462 = vcmp.ge.f32.partialorder %v3398, 0.0
        %vm3463 = vcmp.ge.f32.partialorder %v3399, 0.0
        %vm3464 = vcmp.ge.f32.partialorder %v3400, 0.0
        %vm3465 = vcmp.ge.f32.partialorder %v3401, 0.0
        %vm3466 = vcmp.ge.f32.partialorder %v3402, 0.0
        %vm3467 = vcmp.ge.f32.partialorder %v3403, 0.0
        %vm3468 = vcmp.ge.f32.partialorder %v3404, 0.0
        %vm3469 = vcmp.ge.f32.partialorder %v3405, 0.0
        %vm3470 = vcmp.ge.f32.partialorder %v3406, 0.0
        %vm3471 = vcmp.ge.f32.partialorder %v3407, 0.0
        %vm3472 = vcmp.ge.f32.partialorder %v3408, 0.0
        %vm3473 = vcmp.ge.f32.partialorder %v3409, 0.0
        %vm3474 = vcmp.ge.f32.partialorder %v3410, 0.0
        %vm3475 = vcmp.ge.f32.partialorder %v3411, 0.0
        %vm3476 = vcmp.ge.f32.partialorder %v3412, 0.0
        %vm3477 = vcmp.ge.f32.partialorder %v3413, 0.0
        %vm3478 = vcmp.ge.f32.partialorder %v3414, 0.0
        %vm3479 = vcmp.ge.f32.partialorder %v3415, 0.0
        %vm3480 = vcmp.ge.f32.partialorder %v3416, 0.0
        %vm3481 = vcmp.ge.f32.partialorder %v3417, 0.0
        %vm3482 = vcmp.ge.f32.partialorder %v3418, 0.0
        %vm3483 = vcmp.ge.f32.partialorder %v3419, 0.0
        %vm3484 = vcmp.ge.f32.partialorder %v3420, 0.0
        %vm3485 = vcmp.ge.f32.partialorder %v3421, 0.0
        %vm3486 = vcmp.ge.f32.partialorder %v3422, 0.0
        %vm3487 = vcmp.ge.f32.partialorder %v3423, 0.0
        %vm3488 = vcmp.ge.f32.partialorder %v3424, 0.0
        %vm3489 = vcmp.ge.f32.partialorder %v3425, 0.0
        %vm3490 = vcmp.ge.f32.partialorder %v3426, 0.0
        %vm3491 = vcmp.ge.f32.partialorder %v3427, 0.0
        %vm3492 = vcmp.ge.f32.partialorder %v3428, 0.0
        %vm3493 = vcmp.ge.f32.partialorder %v3429, 0.0
        %vm3494 = vcmp.ge.f32.partialorder %v3430, 0.0
        %vm3495 = vcmp.ge.f32.partialorder %v3431, 0.0
        %vm3496 = vcmp.ge.f32.partialorder %v3432, 0.0
        %vm3497 = vcmp.ge.f32.partialorder %v3433, 0.0
        %vm3498 = vcmp.ge.f32.partialorder %v3434, 0.0
        %vm3499 = vcmp.ge.f32.partialorder %v3435, 0.0
        %vm3500 = vcmp.ge.f32.partialorder %v3436, 0.0
        %vm3501 = vcmp.ge.f32.partialorder %v3437, 0.0
        %vm3502 = vcmp.ge.f32.partialorder %v3438, 0.0
        %vm3503 = vcmp.ge.f32.partialorder %v3439, 0.0
        %vm3504 = vcmp.ge.f32.partialorder %v3440, 0.0
        %vm3505 = vcmp.ge.f32.partialorder %v3441, 0.0
        %v3506 = vmul.f32 %v3378, 0.01
        %v3507 = vmul.f32 %v3379, 0.01
        %v3508 = vmul.f32 %v3380, 0.01
        %v3509 = vmul.f32 %v3381, 0.01
        %v3510 = vmul.f32 %v3382, 0.01
        %v3511 = vmul.f32 %v3383, 0.01
        %v3512 = vmul.f32 %v3384, 0.01
        %v3513 = vmul.f32 %v3385, 0.01
        %v3514 = vmul.f32 %v3386, 0.01
        %v3515 = vmul.f32 %v3387, 0.01
        %v3516 = vmul.f32 %v3388, 0.01
        %v3517 = vmul.f32 %v3389, 0.01
        %v3518 = vmul.f32 %v3390, 0.01
        %v3519 = vmul.f32 %v3391, 0.01
        %v3520 = vmul.f32 %v3392, 0.01
        %v3521 = vmul.f32 %v3393, 0.01
        %v3522 = vmul.f32 %v3394, 0.01
        %v3523 = vmul.f32 %v3395, 0.01
        %v3524 = vmul.f32 %v3396, 0.01
        %v3525 = vmul.f32 %v3397, 0.01
        %v3526 = vmul.f32 %v3398, 0.01
        %v3527 = vmul.f32 %v3399, 0.01
        %v3528 = vmul.f32 %v3400, 0.01
        %v3529 = vmul.f32 %v3401, 0.01
        %v3530 = vmul.f32 %v3402, 0.01
        %v3531 = vmul.f32 %v3403, 0.01
        %v3532 = vmul.f32 %v3404, 0.01
        %v3533 = vmul.f32 %v3405, 0.01
        %v3534 = vmul.f32 %v3406, 0.01
        %v3535 = vmul.f32 %v3407, 0.01
        %v3536 = vmul.f32 %v3408, 0.01
        %v3537 = vmul.f32 %v3409, 0.01
        %v3538 = vmul.f32 %v3410, 0.01
        %v3539 = vmul.f32 %v3411, 0.01
        %v3540 = vmul.f32 %v3412, 0.01
        %v3541 = vmul.f32 %v3413, 0.01
        %v3542 = vmul.f32 %v3414, 0.01
        %v3543 = vmul.f32 %v3415, 0.01
        %v3544 = vmul.f32 %v3416, 0.01
        %v3545 = vmul.f32 %v3417, 0.01
        %v3546 = vmul.f32 %v3418, 0.01
        %v3547 = vmul.f32 %v3419, 0.01
        %v3548 = vmul.f32 %v3420, 0.01
        %v3549 = vmul.f32 %v3421, 0.01
        %v3550 = vmul.f32 %v3422, 0.01
        %v3551 = vmul.f32 %v3423, 0.01
        %v3552 = vmul.f32 %v3424, 0.01
        %v3553 = vmul.f32 %v3425, 0.01
        %v3554 = vmul.f32 %v3426, 0.01
        %v3555 = vmul.f32 %v3427, 0.01
        %v3556 = vmul.f32 %v3428, 0.01
        %v3557 = vmul.f32 %v3429, 0.01
        %v3558 = vmul.f32 %v3430, 0.01
        %v3559 = vmul.f32 %v3431, 0.01
        %v3560 = vmul.f32 %v3432, 0.01
        %v3561 = vmul.f32 %v3433, 0.01
        %v3562 = vmul.f32 %v3434, 0.01
        %v3563 = vmul.f32 %v3435, 0.01
        %v3564 = vmul.f32 %v3436, 0.01
        %v3565 = vmul.f32 %v3437, 0.01
        %v3566 = vmul.f32 %v3438, 0.01
        %v3567 = vmul.f32 %v3439, 0.01
        %v3568 = vmul.f32 %v3440, 0.01
        %v3569 = vmul.f32 %v3441, 0.01
        %v3570 = vsel %vm3442, %v3378, %v3506
        %v3571 = vsel %vm3443, %v3379, %v3507
        %v3572 = vsel %vm3444, %v3380, %v3508
        %v3573 = vsel %vm3445, %v3381, %v3509
        %v3574 = vsel %vm3446, %v3382, %v3510
        %v3575 = vsel %vm3447, %v3383, %v3511
        %v3576 = vsel %vm3448, %v3384, %v3512
        %v3577 = vsel %vm3449, %v3385, %v3513
        %v3578 = vsel %vm3450, %v3386, %v3514
        %v3579 = vsel %vm3451, %v3387, %v3515
        %v3580 = vsel %vm3452, %v3388, %v3516
        %v3581 = vsel %vm3453, %v3389, %v3517
        %v3582 = vsel %vm3454, %v3390, %v3518
        %v3583 = vsel %vm3455, %v3391, %v3519
        %v3584 = vsel %vm3456, %v3392, %v3520
        %v3585 = vsel %vm3457, %v3393, %v3521
        %v3586 = vsel %vm3458, %v3394, %v3522
        %v3587 = vsel %vm3459, %v3395, %v3523
        %v3588 = vsel %vm3460, %v3396, %v3524
        %v3589 = vsel %vm3461, %v3397, %v3525
        %v3590 = vsel %vm3462, %v3398, %v3526
        %v3591 = vsel %vm3463, %v3399, %v3527
        %v3592 = vsel %vm3464, %v3400, %v3528
        %v3593 = vsel %vm3465, %v3401, %v3529
        %v3594 = vsel %vm3466, %v3402, %v3530
        %v3595 = vsel %vm3467, %v3403, %v3531
        %v3596 = vsel %vm3468, %v3404, %v3532
        %v3597 = vsel %vm3469, %v3405, %v3533
        %v3598 = vsel %vm3470, %v3406, %v3534
        %v3599 = vsel %vm3471, %v3407, %v3535
        %v3600 = vsel %vm3472, %v3408, %v3536
        %v3601 = vsel %vm3473, %v3409, %v3537
        %v3602 = vsel %vm3474, %v3410, %v3538
        %v3603 = vsel %vm3475, %v3411, %v3539
        %v3604 = vsel %vm3476, %v3412, %v3540
        %v3605 = vsel %vm3477, %v3413, %v3541
        %v3606 = vsel %vm3478, %v3414, %v3542
        %v3607 = vsel %vm3479, %v3415, %v3543
        %v3608 = vsel %vm3480, %v3416, %v3544
        %v3609 = vsel %vm3481, %v3417, %v3545
        %v3610 = vsel %vm3482, %v3418, %v3546
        %v3611 = vsel %vm3483, %v3419, %v3547
        %v3612 = vsel %vm3484, %v3420, %v3548
        %v3613 = vsel %vm3485, %v3421, %v3549
        %v3614 = vsel %vm3486, %v3422, %v3550
        %v3615 = vsel %vm3487, %v3423, %v3551
        %v3616 = vsel %vm3488, %v3424, %v3552
        %v3617 = vsel %vm3489, %v3425, %v3553
        %v3618 = vsel %vm3490, %v3426, %v3554
        %v3619 = vsel %vm3491, %v3427, %v3555
        %v3620 = vsel %vm3492, %v3428, %v3556
        %v3621 = vsel %vm3493, %v3429, %v3557
        %v3622 = vsel %vm3494, %v3430, %v3558
        %v3623 = vsel %vm3495, %v3431, %v3559
        %v3624 = vsel %vm3496, %v3432, %v3560
        %v3625 = vsel %vm3497, %v3433, %v3561
        %v3626 = vsel %vm3498, %v3434, %v3562
        %v3627 = vsel %vm3499, %v3435, %v3563
        %v3628 = vsel %vm3500, %v3436, %v3564
        %v3629 = vsel %vm3501, %v3437, %v3565
        %v3630 = vsel %vm3502, %v3438, %v3566
        %v3631 = vsel %vm3503, %v3439, %v3567
        %v3632 = vsel %vm3504, %v3440, %v3568
        %v3633 = vsel %vm3505, %v3441, %v3569
        %v3634 = vpack.c.bf16 %v3578, %v3570
        %v3635 = vpack.c.bf16 %v3579, %v3571
        %v3636 = vpack.c.bf16 %v3580, %v3572
        %v3637 = vpack.c.bf16 %v3581, %v3573
        %v3638 = vpack.c.bf16 %v3582, %v3574
        %v3639 = vpack.c.bf16 %v3583, %v3575
        %v3640 = vpack.c.bf16 %v3584, %v3576
        %v3641 = vpack.c.bf16 %v3585, %v3577
        %v3642 = vpack.c.bf16 %v3594, %v3586
        %v3643 = vpack.c.bf16 %v3595, %v3587
        %v3644 = vpack.c.bf16 %v3596, %v3588
        %v3645 = vpack.c.bf16 %v3597, %v3589
        %v3646 = vpack.c.bf16 %v3598, %v3590
        %v3647 = vpack.c.bf16 %v3599, %v3591
        %v3648 = vpack.c.bf16 %v3600, %v3592
        %v3649 = vpack.c.bf16 %v3601, %v3593
        %v3650 = vpack.c.bf16 %v3610, %v3602
        %v3651 = vpack.c.bf16 %v3611, %v3603
        %v3652 = vpack.c.bf16 %v3612, %v3604
        %v3653 = vpack.c.bf16 %v3613, %v3605
        %v3654 = vpack.c.bf16 %v3614, %v3606
        %v3655 = vpack.c.bf16 %v3615, %v3607
        %v3656 = vpack.c.bf16 %v3616, %v3608
        %v3657 = vpack.c.bf16 %v3617, %v3609
        %v3658 = vpack.c.bf16 %v3626, %v3618
        %v3659 = vpack.c.bf16 %v3627, %v3619
        %v3660 = vpack.c.bf16 %v3628, %v3620
        %v3661 = vpack.c.bf16 %v3629, %v3621
        %v3662 = vpack.c.bf16 %v3630, %v3622
        %v3663 = vpack.c.bf16 %v3631, %v3623
        %v3664 = vpack.c.bf16 %v3632, %v3624
        %v3665 = vpack.c.bf16 %v3633, %v3625
        %v3666 = vld [vmem:[#allocation12] sm:$0xff]
        %v3667 = vld [vmem:[#allocation12 + $0x8] sm:$0xff]
        %v3668 = vld [vmem:[#allocation12 + $0x10] sm:$0xff]
        %v3669 = vld [vmem:[#allocation12 + $0x18] sm:$0xff]
        %v3670 = vld [vmem:[#allocation12 + $0x20] sm:$0xff]
        %v3671 = vld [vmem:[#allocation12 + $0x28] sm:$0xff]
        %v3672 = vld [vmem:[#allocation12 + $0x30] sm:$0xff]
        %v3673 = vld [vmem:[#allocation12 + $0x38] sm:$0xff]
        %v3674 = vld [vmem:[#allocation12 + $0x40] sm:$0xff]
        %v3675 = vld [vmem:[#allocation12 + $0x48] sm:$0xff]
        %v3676 = vld [vmem:[#allocation12 + $0x50] sm:$0xff]
        %v3677 = vld [vmem:[#allocation12 + $0x58] sm:$0xff]
        %v3678 = vld [vmem:[#allocation12 + $0x60] sm:$0xff]
        %v3679 = vld [vmem:[#allocation12 + $0x68] sm:$0xff]
        %v3680 = vld [vmem:[#allocation12 + $0x70] sm:$0xff]
        %v3681 = vld [vmem:[#allocation12 + $0x78] sm:$0xff]
        %v3682 = vld [vmem:[#allocation12 + $0x80] sm:$0xff]
        %v3683 = vld [vmem:[#allocation12 + $0x88] sm:$0xff]
        %v3684 = vld [vmem:[#allocation12 + $0x90] sm:$0xff]
        %v3685 = vld [vmem:[#allocation12 + $0x98] sm:$0xff]
        %v3686 = vld [vmem:[#allocation12 + $0xa0] sm:$0xff]
        %v3687 = vld [vmem:[#allocation12 + $0xa8] sm:$0xff]
        %v3688 = vld [vmem:[#allocation12 + $0xb0] sm:$0xff]
        %v3689 = vld [vmem:[#allocation12 + $0xb8] sm:$0xff]
        %v3690 = vld [vmem:[#allocation12 + $0xc0] sm:$0xff]
        %v3691 = vld [vmem:[#allocation12 + $0xc8] sm:$0xff]
        %v3692 = vld [vmem:[#allocation12 + $0xd0] sm:$0xff]
        %v3693 = vld [vmem:[#allocation12 + $0xd8] sm:$0xff]
        %v3694 = vld [vmem:[#allocation12 + $0xe0] sm:$0xff]
        %v3695 = vld [vmem:[#allocation12 + $0xe8] sm:$0xff]
        %v3696 = vld [vmem:[#allocation12 + $0xf0] sm:$0xff]
        %v3697 = vld [vmem:[#allocation12 + $0xf8] sm:$0xff]
        %v3698 = vld [vmem:[#allocation12 + $0x100] sm:$0xff]
        %v3699 = vld [vmem:[#allocation12 + $0x108] sm:$0xff]
        %v3700 = vld [vmem:[#allocation12 + $0x110] sm:$0xff]
        %v3701 = vld [vmem:[#allocation12 + $0x118] sm:$0xff]
        %v3702 = vld [vmem:[#allocation12 + $0x120] sm:$0xff]
        %v3703 = vld [vmem:[#allocation12 + $0x128] sm:$0xff]
        %v3704 = vld [vmem:[#allocation12 + $0x130] sm:$0xff]
        %v3705 = vld [vmem:[#allocation12 + $0x138] sm:$0xff]
        %v3706 = vld [vmem:[#allocation12 + $0x140] sm:$0xff]
        %v3707 = vld [vmem:[#allocation12 + $0x148] sm:$0xff]
        %v3708 = vld [vmem:[#allocation12 + $0x150] sm:$0xff]
        %v3709 = vld [vmem:[#allocation12 + $0x158] sm:$0xff]
        %v3710 = vld [vmem:[#allocation12 + $0x160] sm:$0xff]
        %v3711 = vld [vmem:[#allocation12 + $0x168] sm:$0xff]
        %v3712 = vld [vmem:[#allocation12 + $0x170] sm:$0xff]
        %v3713 = vld [vmem:[#allocation12 + $0x178] sm:$0xff]
        %v3714 = vld [vmem:[#allocation12 + $0x180] sm:$0xff]
        %v3715 = vld [vmem:[#allocation12 + $0x188] sm:$0xff]
        %v3716 = vld [vmem:[#allocation12 + $0x190] sm:$0xff]
        %v3717 = vld [vmem:[#allocation12 + $0x198] sm:$0xff]
        %v3718 = vld [vmem:[#allocation12 + $0x1a0] sm:$0xff]
        %v3719 = vld [vmem:[#allocation12 + $0x1a8] sm:$0xff]
        %v3720 = vld [vmem:[#allocation12 + $0x1b0] sm:$0xff]
        %v3721 = vld [vmem:[#allocation12 + $0x1b8] sm:$0xff]
        %v3722 = vld [vmem:[#allocation12 + $0x1c0] sm:$0xff]
        %v3723 = vld [vmem:[#allocation12 + $0x1c8] sm:$0xff]
        %v3724 = vld [vmem:[#allocation12 + $0x1d0] sm:$0xff]
        %v3725 = vld [vmem:[#allocation12 + $0x1d8] sm:$0xff]
        %v3726 = vld [vmem:[#allocation12 + $0x1e0] sm:$0xff]
        %v3727 = vld [vmem:[#allocation12 + $0x1e8] sm:$0xff]
        %v3728 = vld [vmem:[#allocation12 + $0x1f0] sm:$0xff]
        %v3729 = vld [vmem:[#allocation12 + $0x1f8] sm:$0xff]
        %v3730 = vld [vmem:[#allocation12 + $0x200] sm:$0xff]
        %v3731 = vld [vmem:[#allocation12 + $0x208] sm:$0xff]
        %v3732 = vld [vmem:[#allocation12 + $0x210] sm:$0xff]
        %v3733 = vld [vmem:[#allocation12 + $0x218] sm:$0xff]
        %v3734 = vld [vmem:[#allocation12 + $0x220] sm:$0xff]
        %v3735 = vld [vmem:[#allocation12 + $0x228] sm:$0xff]
        %v3736 = vld [vmem:[#allocation12 + $0x230] sm:$0xff]
        %v3737 = vld [vmem:[#allocation12 + $0x238] sm:$0xff]
        %v3738 = vld [vmem:[#allocation12 + $0x240] sm:$0xff]
        %v3739 = vld [vmem:[#allocation12 + $0x248] sm:$0xff]
        %v3740 = vld [vmem:[#allocation12 + $0x250] sm:$0xff]
        %v3741 = vld [vmem:[#allocation12 + $0x258] sm:$0xff]
        %v3742 = vld [vmem:[#allocation12 + $0x260] sm:$0xff]
        %v3743 = vld [vmem:[#allocation12 + $0x268] sm:$0xff]
        %v3744 = vld [vmem:[#allocation12 + $0x270] sm:$0xff]
        %v3745 = vld [vmem:[#allocation12 + $0x278] sm:$0xff]
        %v3746 = vld [vmem:[#allocation12 + $0x280] sm:$0xff]
        %v3747 = vld [vmem:[#allocation12 + $0x288] sm:$0xff]
        %v3748 = vld [vmem:[#allocation12 + $0x290] sm:$0xff]
        %v3749 = vld [vmem:[#allocation12 + $0x298] sm:$0xff]
        %v3750 = vld [vmem:[#allocation12 + $0x2a0] sm:$0xff]
        %v3751 = vld [vmem:[#allocation12 + $0x2a8] sm:$0xff]
        %v3752 = vld [vmem:[#allocation12 + $0x2b0] sm:$0xff]
        %v3753 = vld [vmem:[#allocation12 + $0x2b8] sm:$0xff]
        %v3754 = vld [vmem:[#allocation12 + $0x2c0] sm:$0xff]
        %v3755 = vld [vmem:[#allocation12 + $0x2c8] sm:$0xff]
        %v3756 = vld [vmem:[#allocation12 + $0x2d0] sm:$0xff]
        %v3757 = vld [vmem:[#allocation12 + $0x2d8] sm:$0xff]
        %v3758 = vld [vmem:[#allocation12 + $0x2e0] sm:$0xff]
        %v3759 = vld [vmem:[#allocation12 + $0x2e8] sm:$0xff]
        %v3760 = vld [vmem:[#allocation12 + $0x2f0] sm:$0xff]
        %v3761 = vld [vmem:[#allocation12 + $0x2f8] sm:$0xff]
        %v3762 = vld [vmem:[#allocation12 + $0x300] sm:$0xff]
        %v3763 = vld [vmem:[#allocation12 + $0x308] sm:$0xff]
        %v3764 = vld [vmem:[#allocation12 + $0x310] sm:$0xff]
        %v3765 = vld [vmem:[#allocation12 + $0x318] sm:$0xff]
        %v3766 = vld [vmem:[#allocation12 + $0x320] sm:$0xff]
        %v3767 = vld [vmem:[#allocation12 + $0x328] sm:$0xff]
        %v3768 = vld [vmem:[#allocation12 + $0x330] sm:$0xff]
        %v3769 = vld [vmem:[#allocation12 + $0x338] sm:$0xff]
        %v3770 = vld [vmem:[#allocation12 + $0x340] sm:$0xff]
        %v3771 = vld [vmem:[#allocation12 + $0x348] sm:$0xff]
        %v3772 = vld [vmem:[#allocation12 + $0x350] sm:$0xff]
        %v3773 = vld [vmem:[#allocation12 + $0x358] sm:$0xff]
        %v3774 = vld [vmem:[#allocation12 + $0x360] sm:$0xff]
        %v3775 = vld [vmem:[#allocation12 + $0x368] sm:$0xff]
        %v3776 = vld [vmem:[#allocation12 + $0x370] sm:$0xff]
        %v3777 = vld [vmem:[#allocation12 + $0x378] sm:$0xff]
        %v3778 = vld [vmem:[#allocation12 + $0x380] sm:$0xff]
        %v3779 = vld [vmem:[#allocation12 + $0x388] sm:$0xff]
        %v3780 = vld [vmem:[#allocation12 + $0x390] sm:$0xff]
        %v3781 = vld [vmem:[#allocation12 + $0x398] sm:$0xff]
        %v3782 = vld [vmem:[#allocation12 + $0x3a0] sm:$0xff]
        %v3783 = vld [vmem:[#allocation12 + $0x3a8] sm:$0xff]
        %v3784 = vld [vmem:[#allocation12 + $0x3b0] sm:$0xff]
        %v3785 = vld [vmem:[#allocation12 + $0x3b8] sm:$0xff]
        %v3786 = vld [vmem:[#allocation12 + $0x3c0] sm:$0xff]
        %v3787 = vld [vmem:[#allocation12 + $0x3c8] sm:$0xff]
        %v3788 = vld [vmem:[#allocation12 + $0x3d0] sm:$0xff]
        %v3789 = vld [vmem:[#allocation12 + $0x3d8] sm:$0xff]
        %v3790 = vld [vmem:[#allocation12 + $0x3e0] sm:$0xff]
        %v3791 = vld [vmem:[#allocation12 + $0x3e8] sm:$0xff]
        %v3792 = vld [vmem:[#allocation12 + $0x3f0] sm:$0xff]
        %v3793 = vld [vmem:[#allocation12 + $0x3f8] sm:$0xff]
        %v3794 = vld [vmem:[#allocation12 + $0x400] sm:$0xff]
        %v3795 = vld [vmem:[#allocation12 + $0x408] sm:$0xff]
        %v3796 = vld [vmem:[#allocation12 + $0x410] sm:$0xff]
        %v3797 = vld [vmem:[#allocation12 + $0x418] sm:$0xff]
        %v3798 = vld [vmem:[#allocation12 + $0x420] sm:$0xff]
        %v3799 = vld [vmem:[#allocation12 + $0x428] sm:$0xff]
        %v3800 = vld [vmem:[#allocation12 + $0x430] sm:$0xff]
        %v3801 = vld [vmem:[#allocation12 + $0x438] sm:$0xff]
        %v3802 = vld [vmem:[#allocation12 + $0x440] sm:$0xff]
        %v3803 = vld [vmem:[#allocation12 + $0x448] sm:$0xff]
        %v3804 = vld [vmem:[#allocation12 + $0x450] sm:$0xff]
        %v3805 = vld [vmem:[#allocation12 + $0x458] sm:$0xff]
        %v3806 = vld [vmem:[#allocation12 + $0x460] sm:$0xff]
        %v3807 = vld [vmem:[#allocation12 + $0x468] sm:$0xff]
        %v3808 = vld [vmem:[#allocation12 + $0x470] sm:$0xff]
        %v3809 = vld [vmem:[#allocation12 + $0x478] sm:$0xff]
        %v3810 = vld [vmem:[#allocation12 + $0x480] sm:$0xff]
        %v3811 = vld [vmem:[#allocation12 + $0x488] sm:$0xff]
        %v3812 = vld [vmem:[#allocation12 + $0x490] sm:$0xff]
        %v3813 = vld [vmem:[#allocation12 + $0x498] sm:$0xff]
        %v3814 = vld [vmem:[#allocation12 + $0x4a0] sm:$0xff]
        %v3815 = vld [vmem:[#allocation12 + $0x4a8] sm:$0xff]
        %v3816 = vld [vmem:[#allocation12 + $0x4b0] sm:$0xff]
        %v3817 = vld [vmem:[#allocation12 + $0x4b8] sm:$0xff]
        %v3818 = vld [vmem:[#allocation12 + $0x4c0] sm:$0xff]
        %v3819 = vld [vmem:[#allocation12 + $0x4c8] sm:$0xff]
        %v3820 = vld [vmem:[#allocation12 + $0x4d0] sm:$0xff]
        %v3821 = vld [vmem:[#allocation12 + $0x4d8] sm:$0xff]
        %v3822 = vld [vmem:[#allocation12 + $0x4e0] sm:$0xff]
        %v3823 = vld [vmem:[#allocation12 + $0x4e8] sm:$0xff]
        %v3824 = vld [vmem:[#allocation12 + $0x4f0] sm:$0xff]
        %v3825 = vld [vmem:[#allocation12 + $0x4f8] sm:$0xff]
        %v3826 = vld [vmem:[#allocation12 + $0x500] sm:$0xff]
        %v3827 = vld [vmem:[#allocation12 + $0x508] sm:$0xff]
        %v3828 = vld [vmem:[#allocation12 + $0x510] sm:$0xff]
        %v3829 = vld [vmem:[#allocation12 + $0x518] sm:$0xff]
        %v3830 = vld [vmem:[#allocation12 + $0x520] sm:$0xff]
        %v3831 = vld [vmem:[#allocation12 + $0x528] sm:$0xff]
        %v3832 = vld [vmem:[#allocation12 + $0x530] sm:$0xff]
        %v3833 = vld [vmem:[#allocation12 + $0x538] sm:$0xff]
        %v3834 = vld [vmem:[#allocation12 + $0x540] sm:$0xff]
        %v3835 = vld [vmem:[#allocation12 + $0x548] sm:$0xff]
        %v3836 = vld [vmem:[#allocation12 + $0x550] sm:$0xff]
        %v3837 = vld [vmem:[#allocation12 + $0x558] sm:$0xff]
        %v3838 = vld [vmem:[#allocation12 + $0x560] sm:$0xff]
        %v3839 = vld [vmem:[#allocation12 + $0x568] sm:$0xff]
        %v3840 = vld [vmem:[#allocation12 + $0x570] sm:$0xff]
        %v3841 = vld [vmem:[#allocation12 + $0x578] sm:$0xff]
        %v3842 = vld [vmem:[#allocation12 + $0x580] sm:$0xff]
        %v3843 = vld [vmem:[#allocation12 + $0x588] sm:$0xff]
        %v3844 = vld [vmem:[#allocation12 + $0x590] sm:$0xff]
        %v3845 = vld [vmem:[#allocation12 + $0x598] sm:$0xff]
        %v3846 = vld [vmem:[#allocation12 + $0x5a0] sm:$0xff]
        %v3847 = vld [vmem:[#allocation12 + $0x5a8] sm:$0xff]
        %v3848 = vld [vmem:[#allocation12 + $0x5b0] sm:$0xff]
        %v3849 = vld [vmem:[#allocation12 + $0x5b8] sm:$0xff]
        %v3850 = vld [vmem:[#allocation12 + $0x5c0] sm:$0xff]
        %v3851 = vld [vmem:[#allocation12 + $0x5c8] sm:$0xff]
        %v3852 = vld [vmem:[#allocation12 + $0x5d0] sm:$0xff]
        %v3853 = vld [vmem:[#allocation12 + $0x5d8] sm:$0xff]
        %v3854 = vld [vmem:[#allocation12 + $0x5e0] sm:$0xff]
        %v3855 = vld [vmem:[#allocation12 + $0x5e8] sm:$0xff]
        %v3856 = vld [vmem:[#allocation12 + $0x5f0] sm:$0xff]
        %v3857 = vld [vmem:[#allocation12 + $0x5f8] sm:$0xff]
        %v3858 = vld [vmem:[#allocation12 + $0x600] sm:$0xff]
        %v3859 = vld [vmem:[#allocation12 + $0x608] sm:$0xff]
        %v3860 = vld [vmem:[#allocation12 + $0x610] sm:$0xff]
        %v3861 = vld [vmem:[#allocation12 + $0x618] sm:$0xff]
        %v3862 = vld [vmem:[#allocation12 + $0x620] sm:$0xff]
        %v3863 = vld [vmem:[#allocation12 + $0x628] sm:$0xff]
        %v3864 = vld [vmem:[#allocation12 + $0x630] sm:$0xff]
        %v3865 = vld [vmem:[#allocation12 + $0x638] sm:$0xff]
        %v3866 = vld [vmem:[#allocation12 + $0x640] sm:$0xff]
        %v3867 = vld [vmem:[#allocation12 + $0x648] sm:$0xff]
        %v3868 = vld [vmem:[#allocation12 + $0x650] sm:$0xff]
        %v3869 = vld [vmem:[#allocation12 + $0x658] sm:$0xff]
        %v3870 = vld [vmem:[#allocation12 + $0x660] sm:$0xff]
        %v3871 = vld [vmem:[#allocation12 + $0x668] sm:$0xff]
        %v3872 = vld [vmem:[#allocation12 + $0x670] sm:$0xff]
        %v3873 = vld [vmem:[#allocation12 + $0x678] sm:$0xff]
        %v3874 = vld [vmem:[#allocation12 + $0x680] sm:$0xff]
        %v3875 = vld [vmem:[#allocation12 + $0x688] sm:$0xff]
        %v3876 = vld [vmem:[#allocation12 + $0x690] sm:$0xff]
        %v3877 = vld [vmem:[#allocation12 + $0x698] sm:$0xff]
        %v3878 = vld [vmem:[#allocation12 + $0x6a0] sm:$0xff]
        %v3879 = vld [vmem:[#allocation12 + $0x6a8] sm:$0xff]
        %v3880 = vld [vmem:[#allocation12 + $0x6b0] sm:$0xff]
        %v3881 = vld [vmem:[#allocation12 + $0x6b8] sm:$0xff]
        %v3882 = vld [vmem:[#allocation12 + $0x6c0] sm:$0xff]
        %v3883 = vld [vmem:[#allocation12 + $0x6c8] sm:$0xff]
        %v3884 = vld [vmem:[#allocation12 + $0x6d0] sm:$0xff]
        %v3885 = vld [vmem:[#allocation12 + $0x6d8] sm:$0xff]
        %v3886 = vld [vmem:[#allocation12 + $0x6e0] sm:$0xff]
        %v3887 = vld [vmem:[#allocation12 + $0x6e8] sm:$0xff]
        %v3888 = vld [vmem:[#allocation12 + $0x6f0] sm:$0xff]
        %v3889 = vld [vmem:[#allocation12 + $0x6f8] sm:$0xff]
        %v3890 = vld [vmem:[#allocation12 + $0x700] sm:$0xff]
        %v3891 = vld [vmem:[#allocation12 + $0x708] sm:$0xff]
        %v3892 = vld [vmem:[#allocation12 + $0x710] sm:$0xff]
        %v3893 = vld [vmem:[#allocation12 + $0x718] sm:$0xff]
        %v3894 = vld [vmem:[#allocation12 + $0x720] sm:$0xff]
        %v3895 = vld [vmem:[#allocation12 + $0x728] sm:$0xff]
        %v3896 = vld [vmem:[#allocation12 + $0x730] sm:$0xff]
        %v3897 = vld [vmem:[#allocation12 + $0x738] sm:$0xff]
        %v3898 = vld [vmem:[#allocation12 + $0x740] sm:$0xff]
        %v3899 = vld [vmem:[#allocation12 + $0x748] sm:$0xff]
        %v3900 = vld [vmem:[#allocation12 + $0x750] sm:$0xff]
        %v3901 = vld [vmem:[#allocation12 + $0x758] sm:$0xff]
        %v3902 = vld [vmem:[#allocation12 + $0x760] sm:$0xff]
        %v3903 = vld [vmem:[#allocation12 + $0x768] sm:$0xff]
        %v3904 = vld [vmem:[#allocation12 + $0x770] sm:$0xff]
        %v3905 = vld [vmem:[#allocation12 + $0x778] sm:$0xff]
        %v3906 = vld [vmem:[#allocation12 + $0x780] sm:$0xff]
        %v3907 = vld [vmem:[#allocation12 + $0x788] sm:$0xff]
        %v3908 = vld [vmem:[#allocation12 + $0x790] sm:$0xff]
        %v3909 = vld [vmem:[#allocation12 + $0x798] sm:$0xff]
        %v3910 = vld [vmem:[#allocation12 + $0x7a0] sm:$0xff]
        %v3911 = vld [vmem:[#allocation12 + $0x7a8] sm:$0xff]
        %v3912 = vld [vmem:[#allocation12 + $0x7b0] sm:$0xff]
        %v3913 = vld [vmem:[#allocation12 + $0x7b8] sm:$0xff]
        %v3914 = vld [vmem:[#allocation12 + $0x7c0] sm:$0xff]
        %v3915 = vld [vmem:[#allocation12 + $0x7c8] sm:$0xff]
        %v3916 = vld [vmem:[#allocation12 + $0x7d0] sm:$0xff]
        %v3917 = vld [vmem:[#allocation12 + $0x7d8] sm:$0xff]
        %v3918 = vld [vmem:[#allocation12 + $0x7e0] sm:$0xff]
        %v3919 = vld [vmem:[#allocation12 + $0x7e8] sm:$0xff]
        %v3920 = vld [vmem:[#allocation12 + $0x7f0] sm:$0xff]
        %v3921 = vld [vmem:[#allocation12 + $0x7f8] sm:$0xff]
        %v4178 = vunpack.c.l.b16 %v3666
        %v4179 = vunpack.c.h.b16 %v3666
        %v4180 = vunpack.c.l.b16 %v3667
        %v4181 = vunpack.c.h.b16 %v3667
        %v4182 = vunpack.c.l.b16 %v3668
        %v4183 = vunpack.c.h.b16 %v3668
        %v4184 = vunpack.c.l.b16 %v3669
        %v4185 = vunpack.c.h.b16 %v3669
        %v4186 = vunpack.c.l.b16 %v3670
        %v4187 = vunpack.c.h.b16 %v3670
        %v4188 = vunpack.c.l.b16 %v3671
        %v4189 = vunpack.c.h.b16 %v3671
        %v4190 = vunpack.c.l.b16 %v3672
        %v4191 = vunpack.c.h.b16 %v3672
        %v4192 = vunpack.c.l.b16 %v3673
        %v4193 = vunpack.c.h.b16 %v3673
        %v4194 = vunpack.c.l.b16 %v3674
        %v4195 = vunpack.c.h.b16 %v3674
        %v4196 = vunpack.c.l.b16 %v3675
        %v4197 = vunpack.c.h.b16 %v3675
        %v4198 = vunpack.c.l.b16 %v3676
        %v4199 = vunpack.c.h.b16 %v3676
        %v4200 = vunpack.c.l.b16 %v3677
        %v4201 = vunpack.c.h.b16 %v3677
        %v4202 = vunpack.c.l.b16 %v3678
        %v4203 = vunpack.c.h.b16 %v3678
        %v4204 = vunpack.c.l.b16 %v3679
        %v4205 = vunpack.c.h.b16 %v3679
        %v4206 = vunpack.c.l.b16 %v3680
        %v4207 = vunpack.c.h.b16 %v3680
        %v4208 = vunpack.c.l.b16 %v3681
        %v4209 = vunpack.c.h.b16 %v3681
        %v4210 = vunpack.c.l.b16 %v3682
        %v4211 = vunpack.c.h.b16 %v3682
        %v4212 = vunpack.c.l.b16 %v3683
        %v4213 = vunpack.c.h.b16 %v3683
        %v4214 = vunpack.c.l.b16 %v3684
        %v4215 = vunpack.c.h.b16 %v3684
        %v4216 = vunpack.c.l.b16 %v3685
        %v4217 = vunpack.c.h.b16 %v3685
        %v4218 = vunpack.c.l.b16 %v3686
        %v4219 = vunpack.c.h.b16 %v3686
        %v4220 = vunpack.c.l.b16 %v3687
        %v4221 = vunpack.c.h.b16 %v3687
        %v4222 = vunpack.c.l.b16 %v3688
        %v4223 = vunpack.c.h.b16 %v3688
        %v4224 = vunpack.c.l.b16 %v3689
        %v4225 = vunpack.c.h.b16 %v3689
        %v4226 = vunpack.c.l.b16 %v3690
        %v4227 = vunpack.c.h.b16 %v3690
        %v4228 = vunpack.c.l.b16 %v3691
        %v4229 = vunpack.c.h.b16 %v3691
        %v4230 = vunpack.c.l.b16 %v3692
        %v4231 = vunpack.c.h.b16 %v3692
        %v4232 = vunpack.c.l.b16 %v3693
        %v4233 = vunpack.c.h.b16 %v3693
        %v4234 = vunpack.c.l.b16 %v3694
        %v4235 = vunpack.c.h.b16 %v3694
        %v4236 = vunpack.c.l.b16 %v3695
        %v4237 = vunpack.c.h.b16 %v3695
        %v4238 = vunpack.c.l.b16 %v3696
        %v4239 = vunpack.c.h.b16 %v3696
        %v4240 = vunpack.c.l.b16 %v3697
        %v4241 = vunpack.c.h.b16 %v3697
        %v4242 = vunpack.c.l.b16 %v3698
        %v4243 = vunpack.c.h.b16 %v3698
        %v4244 = vunpack.c.l.b16 %v3699
        %v4245 = vunpack.c.h.b16 %v3699
        %v4246 = vunpack.c.l.b16 %v3700
        %v4247 = vunpack.c.h.b16 %v3700
        %v4248 = vunpack.c.l.b16 %v3701
        %v4249 = vunpack.c.h.b16 %v3701
        %v4250 = vunpack.c.l.b16 %v3702
        %v4251 = vunpack.c.h.b16 %v3702
        %v4252 = vunpack.c.l.b16 %v3703
        %v4253 = vunpack.c.h.b16 %v3703
        %v4254 = vunpack.c.l.b16 %v3704
        %v4255 = vunpack.c.h.b16 %v3704
        %v4256 = vunpack.c.l.b16 %v3705
        %v4257 = vunpack.c.h.b16 %v3705
        %v4258 = vunpack.c.l.b16 %v3706
        %v4259 = vunpack.c.h.b16 %v3706
        %v4260 = vunpack.c.l.b16 %v3707
        %v4261 = vunpack.c.h.b16 %v3707
        %v4262 = vunpack.c.l.b16 %v3708
        %v4263 = vunpack.c.h.b16 %v3708
        %v4264 = vunpack.c.l.b16 %v3709
        %v4265 = vunpack.c.h.b16 %v3709
        %v4266 = vunpack.c.l.b16 %v3710
        %v4267 = vunpack.c.h.b16 %v3710
        %v4268 = vunpack.c.l.b16 %v3711
        %v4269 = vunpack.c.h.b16 %v3711
        %v4270 = vunpack.c.l.b16 %v3712
        %v4271 = vunpack.c.h.b16 %v3712
        %v4272 = vunpack.c.l.b16 %v3713
        %v4273 = vunpack.c.h.b16 %v3713
        %v4274 = vunpack.c.l.b16 %v3714
        %v4275 = vunpack.c.h.b16 %v3714
        %v4276 = vunpack.c.l.b16 %v3715
        %v4277 = vunpack.c.h.b16 %v3715
        %v4278 = vunpack.c.l.b16 %v3716
        %v4279 = vunpack.c.h.b16 %v3716
        %v4280 = vunpack.c.l.b16 %v3717
        %v4281 = vunpack.c.h.b16 %v3717
        %v4282 = vunpack.c.l.b16 %v3718
        %v4283 = vunpack.c.h.b16 %v3718
        %v4284 = vunpack.c.l.b16 %v3719
        %v4285 = vunpack.c.h.b16 %v3719
        %v4286 = vunpack.c.l.b16 %v3720
        %v4287 = vunpack.c.h.b16 %v3720
        %v4288 = vunpack.c.l.b16 %v3721
        %v4289 = vunpack.c.h.b16 %v3721
        %v4290 = vunpack.c.l.b16 %v3722
        %v4291 = vunpack.c.h.b16 %v3722
        %v4292 = vunpack.c.l.b16 %v3723
        %v4293 = vunpack.c.h.b16 %v3723
        %v4294 = vunpack.c.l.b16 %v3724
        %v4295 = vunpack.c.h.b16 %v3724
        %v4296 = vunpack.c.l.b16 %v3725
        %v4297 = vunpack.c.h.b16 %v3725
        %v4298 = vunpack.c.l.b16 %v3726
        %v4299 = vunpack.c.h.b16 %v3726
        %v4300 = vunpack.c.l.b16 %v3727
        %v4301 = vunpack.c.h.b16 %v3727
        %v4302 = vunpack.c.l.b16 %v3728
        %v4303 = vunpack.c.h.b16 %v3728
        %v4304 = vunpack.c.l.b16 %v3729
        %v4305 = vunpack.c.h.b16 %v3729
        %v4306 = vunpack.c.l.b16 %v3730
        %v4307 = vunpack.c.h.b16 %v3730
        %v4308 = vunpack.c.l.b16 %v3731
        %v4309 = vunpack.c.h.b16 %v3731
        %v4310 = vunpack.c.l.b16 %v3732
        %v4311 = vunpack.c.h.b16 %v3732
        %v4312 = vunpack.c.l.b16 %v3733
        %v4313 = vunpack.c.h.b16 %v3733
        %v4314 = vunpack.c.l.b16 %v3734
        %v4315 = vunpack.c.h.b16 %v3734
        %v4316 = vunpack.c.l.b16 %v3735
        %v4317 = vunpack.c.h.b16 %v3735
        %v4318 = vunpack.c.l.b16 %v3736
        %v4319 = vunpack.c.h.b16 %v3736
        %v4320 = vunpack.c.l.b16 %v3737
        %v4321 = vunpack.c.h.b16 %v3737
        %v4322 = vunpack.c.l.b16 %v3738
        %v4323 = vunpack.c.h.b16 %v3738
        %v4324 = vunpack.c.l.b16 %v3739
        %v4325 = vunpack.c.h.b16 %v3739
        %v4326 = vunpack.c.l.b16 %v3740
        %v4327 = vunpack.c.h.b16 %v3740
        %v4328 = vunpack.c.l.b16 %v3741
        %v4329 = vunpack.c.h.b16 %v3741
        %v4330 = vunpack.c.l.b16 %v3742
        %v4331 = vunpack.c.h.b16 %v3742
        %v4332 = vunpack.c.l.b16 %v3743
        %v4333 = vunpack.c.h.b16 %v3743
        %v4334 = vunpack.c.l.b16 %v3744
        %v4335 = vunpack.c.h.b16 %v3744
        %v4336 = vunpack.c.l.b16 %v3745
        %v4337 = vunpack.c.h.b16 %v3745
        %v4338 = vunpack.c.l.b16 %v3746
        %v4339 = vunpack.c.h.b16 %v3746
        %v4340 = vunpack.c.l.b16 %v3747
        %v4341 = vunpack.c.h.b16 %v3747
        %v4342 = vunpack.c.l.b16 %v3748
        %v4343 = vunpack.c.h.b16 %v3748
        %v4344 = vunpack.c.l.b16 %v3749
        %v4345 = vunpack.c.h.b16 %v3749
        %v4346 = vunpack.c.l.b16 %v3750
        %v4347 = vunpack.c.h.b16 %v3750
        %v4348 = vunpack.c.l.b16 %v3751
        %v4349 = vunpack.c.h.b16 %v3751
        %v4350 = vunpack.c.l.b16 %v3752
        %v4351 = vunpack.c.h.b16 %v3752
        %v4352 = vunpack.c.l.b16 %v3753
        %v4353 = vunpack.c.h.b16 %v3753
        %v4354 = vunpack.c.l.b16 %v3754
        %v4355 = vunpack.c.h.b16 %v3754
        %v4356 = vunpack.c.l.b16 %v3755
        %v4357 = vunpack.c.h.b16 %v3755
        %v4358 = vunpack.c.l.b16 %v3756
        %v4359 = vunpack.c.h.b16 %v3756
        %v4360 = vunpack.c.l.b16 %v3757
        %v4361 = vunpack.c.h.b16 %v3757
        %v4362 = vunpack.c.l.b16 %v3758
        %v4363 = vunpack.c.h.b16 %v3758
        %v4364 = vunpack.c.l.b16 %v3759
        %v4365 = vunpack.c.h.b16 %v3759
        %v4366 = vunpack.c.l.b16 %v3760
        %v4367 = vunpack.c.h.b16 %v3760
        %v4368 = vunpack.c.l.b16 %v3761
        %v4369 = vunpack.c.h.b16 %v3761
        %v4370 = vunpack.c.l.b16 %v3762
        %v4371 = vunpack.c.h.b16 %v3762
        %v4372 = vunpack.c.l.b16 %v3763
        %v4373 = vunpack.c.h.b16 %v3763
        %v4374 = vunpack.c.l.b16 %v3764
        %v4375 = vunpack.c.h.b16 %v3764
        %v4376 = vunpack.c.l.b16 %v3765
        %v4377 = vunpack.c.h.b16 %v3765
        %v4378 = vunpack.c.l.b16 %v3766
        %v4379 = vunpack.c.h.b16 %v3766
        %v4380 = vunpack.c.l.b16 %v3767
        %v4381 = vunpack.c.h.b16 %v3767
        %v4382 = vunpack.c.l.b16 %v3768
        %v4383 = vunpack.c.h.b16 %v3768
        %v4384 = vunpack.c.l.b16 %v3769
        %v4385 = vunpack.c.h.b16 %v3769
        %v4386 = vunpack.c.l.b16 %v3770
        %v4387 = vunpack.c.h.b16 %v3770
        %v4388 = vunpack.c.l.b16 %v3771
        %v4389 = vunpack.c.h.b16 %v3771
        %v4390 = vunpack.c.l.b16 %v3772
        %v4391 = vunpack.c.h.b16 %v3772
        %v4392 = vunpack.c.l.b16 %v3773
        %v4393 = vunpack.c.h.b16 %v3773
        %v4394 = vunpack.c.l.b16 %v3774
        %v4395 = vunpack.c.h.b16 %v3774
        %v4396 = vunpack.c.l.b16 %v3775
        %v4397 = vunpack.c.h.b16 %v3775
        %v4398 = vunpack.c.l.b16 %v3776
        %v4399 = vunpack.c.h.b16 %v3776
        %v4400 = vunpack.c.l.b16 %v3777
        %v4401 = vunpack.c.h.b16 %v3777
        %v4402 = vunpack.c.l.b16 %v3778
        %v4403 = vunpack.c.h.b16 %v3778
        %v4404 = vunpack.c.l.b16 %v3779
        %v4405 = vunpack.c.h.b16 %v3779
        %v4406 = vunpack.c.l.b16 %v3780
        %v4407 = vunpack.c.h.b16 %v3780
        %v4408 = vunpack.c.l.b16 %v3781
        %v4409 = vunpack.c.h.b16 %v3781
        %v4410 = vunpack.c.l.b16 %v3782
        %v4411 = vunpack.c.h.b16 %v3782
        %v4412 = vunpack.c.l.b16 %v3783
        %v4413 = vunpack.c.h.b16 %v3783
        %v4414 = vunpack.c.l.b16 %v3784
        %v4415 = vunpack.c.h.b16 %v3784
        %v4416 = vunpack.c.l.b16 %v3785
        %v4417 = vunpack.c.h.b16 %v3785
        %v4418 = vunpack.c.l.b16 %v3786
        %v4419 = vunpack.c.h.b16 %v3786
        %v4420 = vunpack.c.l.b16 %v3787
        %v4421 = vunpack.c.h.b16 %v3787
        %v4422 = vunpack.c.l.b16 %v3788
        %v4423 = vunpack.c.h.b16 %v3788
        %v4424 = vunpack.c.l.b16 %v3789
        %v4425 = vunpack.c.h.b16 %v3789
        %v4426 = vunpack.c.l.b16 %v3790
        %v4427 = vunpack.c.h.b16 %v3790
        %v4428 = vunpack.c.l.b16 %v3791
        %v4429 = vunpack.c.h.b16 %v3791
        %v4430 = vunpack.c.l.b16 %v3792
        %v4431 = vunpack.c.h.b16 %v3792
        %v4432 = vunpack.c.l.b16 %v3793
        %v4433 = vunpack.c.h.b16 %v3793
        %v4434 = vunpack.c.l.b16 %v3794
        %v4435 = vunpack.c.h.b16 %v3794
        %v4436 = vunpack.c.l.b16 %v3795
        %v4437 = vunpack.c.h.b16 %v3795
        %v4438 = vunpack.c.l.b16 %v3796
        %v4439 = vunpack.c.h.b16 %v3796
        %v4440 = vunpack.c.l.b16 %v3797
        %v4441 = vunpack.c.h.b16 %v3797
        %v4442 = vunpack.c.l.b16 %v3798
        %v4443 = vunpack.c.h.b16 %v3798
        %v4444 = vunpack.c.l.b16 %v3799
        %v4445 = vunpack.c.h.b16 %v3799
        %v4446 = vunpack.c.l.b16 %v3800
        %v4447 = vunpack.c.h.b16 %v3800
        %v4448 = vunpack.c.l.b16 %v3801
        %v4449 = vunpack.c.h.b16 %v3801
        %v4450 = vunpack.c.l.b16 %v3802
        %v4451 = vunpack.c.h.b16 %v3802
        %v4452 = vunpack.c.l.b16 %v3803
        %v4453 = vunpack.c.h.b16 %v3803
        %v4454 = vunpack.c.l.b16 %v3804
        %v4455 = vunpack.c.h.b16 %v3804
        %v4456 = vunpack.c.l.b16 %v3805
        %v4457 = vunpack.c.h.b16 %v3805
        %v4458 = vunpack.c.l.b16 %v3806
        %v4459 = vunpack.c.h.b16 %v3806
        %v4460 = vunpack.c.l.b16 %v3807
        %v4461 = vunpack.c.h.b16 %v3807
        %v4462 = vunpack.c.l.b16 %v3808
        %v4463 = vunpack.c.h.b16 %v3808
        %v4464 = vunpack.c.l.b16 %v3809
        %v4465 = vunpack.c.h.b16 %v3809
        %v4466 = vunpack.c.l.b16 %v3810
        %v4467 = vunpack.c.h.b16 %v3810
        %v4468 = vunpack.c.l.b16 %v3811
        %v4469 = vunpack.c.h.b16 %v3811
        %v4470 = vunpack.c.l.b16 %v3812
        %v4471 = vunpack.c.h.b16 %v3812
        %v4472 = vunpack.c.l.b16 %v3813
        %v4473 = vunpack.c.h.b16 %v3813
        %v4474 = vunpack.c.l.b16 %v3814
        %v4475 = vunpack.c.h.b16 %v3814
        %v4476 = vunpack.c.l.b16 %v3815
        %v4477 = vunpack.c.h.b16 %v3815
        %v4478 = vunpack.c.l.b16 %v3816
        %v4479 = vunpack.c.h.b16 %v3816
        %v4480 = vunpack.c.l.b16 %v3817
        %v4481 = vunpack.c.h.b16 %v3817
        %v4482 = vunpack.c.l.b16 %v3818
        %v4483 = vunpack.c.h.b16 %v3818
        %v4484 = vunpack.c.l.b16 %v3819
        %v4485 = vunpack.c.h.b16 %v3819
        %v4486 = vunpack.c.l.b16 %v3820
        %v4487 = vunpack.c.h.b16 %v3820
        %v4488 = vunpack.c.l.b16 %v3821
        %v4489 = vunpack.c.h.b16 %v3821
        %v4490 = vunpack.c.l.b16 %v3822
        %v4491 = vunpack.c.h.b16 %v3822
        %v4492 = vunpack.c.l.b16 %v3823
        %v4493 = vunpack.c.h.b16 %v3823
        %v4494 = vunpack.c.l.b16 %v3824
        %v4495 = vunpack.c.h.b16 %v3824
        %v4496 = vunpack.c.l.b16 %v3825
        %v4497 = vunpack.c.h.b16 %v3825
        %v4498 = vunpack.c.l.b16 %v3826
        %v4499 = vunpack.c.h.b16 %v3826
        %v4500 = vunpack.c.l.b16 %v3827
        %v4501 = vunpack.c.h.b16 %v3827
        %v4502 = vunpack.c.l.b16 %v3828
        %v4503 = vunpack.c.h.b16 %v3828
        %v4504 = vunpack.c.l.b16 %v3829
        %v4505 = vunpack.c.h.b16 %v3829
        %v4506 = vunpack.c.l.b16 %v3830
        %v4507 = vunpack.c.h.b16 %v3830
        %v4508 = vunpack.c.l.b16 %v3831
        %v4509 = vunpack.c.h.b16 %v3831
        %v4510 = vunpack.c.l.b16 %v3832
        %v4511 = vunpack.c.h.b16 %v3832
        %v4512 = vunpack.c.l.b16 %v3833
        %v4513 = vunpack.c.h.b16 %v3833
        %v4514 = vunpack.c.l.b16 %v3834
        %v4515 = vunpack.c.h.b16 %v3834
        %v4516 = vunpack.c.l.b16 %v3835
        %v4517 = vunpack.c.h.b16 %v3835
        %v4518 = vunpack.c.l.b16 %v3836
        %v4519 = vunpack.c.h.b16 %v3836
        %v4520 = vunpack.c.l.b16 %v3837
        %v4521 = vunpack.c.h.b16 %v3837
        %v4522 = vunpack.c.l.b16 %v3838
        %v4523 = vunpack.c.h.b16 %v3838
        %v4524 = vunpack.c.l.b16 %v3839
        %v4525 = vunpack.c.h.b16 %v3839
        %v4526 = vunpack.c.l.b16 %v3840
        %v4527 = vunpack.c.h.b16 %v3840
        %v4528 = vunpack.c.l.b16 %v3841
        %v4529 = vunpack.c.h.b16 %v3841
        %v4530 = vunpack.c.l.b16 %v3842
        %v4531 = vunpack.c.h.b16 %v3842
        %v4532 = vunpack.c.l.b16 %v3843
        %v4533 = vunpack.c.h.b16 %v3843
        %v4534 = vunpack.c.l.b16 %v3844
        %v4535 = vunpack.c.h.b16 %v3844
        %v4536 = vunpack.c.l.b16 %v3845
        %v4537 = vunpack.c.h.b16 %v3845
        %v4538 = vunpack.c.l.b16 %v3846
        %v4539 = vunpack.c.h.b16 %v3846
        %v4540 = vunpack.c.l.b16 %v3847
        %v4541 = vunpack.c.h.b16 %v3847
        %v4542 = vunpack.c.l.b16 %v3848
        %v4543 = vunpack.c.h.b16 %v3848
        %v4544 = vunpack.c.l.b16 %v3849
        %v4545 = vunpack.c.h.b16 %v3849
        %v4546 = vunpack.c.l.b16 %v3850
        %v4547 = vunpack.c.h.b16 %v3850
        %v4548 = vunpack.c.l.b16 %v3851
        %v4549 = vunpack.c.h.b16 %v3851
        %v4550 = vunpack.c.l.b16 %v3852
        %v4551 = vunpack.c.h.b16 %v3852
        %v4552 = vunpack.c.l.b16 %v3853
        %v4553 = vunpack.c.h.b16 %v3853
        %v4554 = vunpack.c.l.b16 %v3854
        %v4555 = vunpack.c.h.b16 %v3854
        %v4556 = vunpack.c.l.b16 %v3855
        %v4557 = vunpack.c.h.b16 %v3855
        %v4558 = vunpack.c.l.b16 %v3856
        %v4559 = vunpack.c.h.b16 %v3856
        %v4560 = vunpack.c.l.b16 %v3857
        %v4561 = vunpack.c.h.b16 %v3857
        %v4562 = vunpack.c.l.b16 %v3858
        %v4563 = vunpack.c.h.b16 %v3858
        %v4564 = vunpack.c.l.b16 %v3859
        %v4565 = vunpack.c.h.b16 %v3859
        %v4566 = vunpack.c.l.b16 %v3860
        %v4567 = vunpack.c.h.b16 %v3860
        %v4568 = vunpack.c.l.b16 %v3861
        %v4569 = vunpack.c.h.b16 %v3861
        %v4570 = vunpack.c.l.b16 %v3862
        %v4571 = vunpack.c.h.b16 %v3862
        %v4572 = vunpack.c.l.b16 %v3863
        %v4573 = vunpack.c.h.b16 %v3863
        %v4574 = vunpack.c.l.b16 %v3864
        %v4575 = vunpack.c.h.b16 %v3864
        %v4576 = vunpack.c.l.b16 %v3865
        %v4577 = vunpack.c.h.b16 %v3865
        %v4578 = vunpack.c.l.b16 %v3866
        %v4579 = vunpack.c.h.b16 %v3866
        %v4580 = vunpack.c.l.b16 %v3867
        %v4581 = vunpack.c.h.b16 %v3867
        %v4582 = vunpack.c.l.b16 %v3868
        %v4583 = vunpack.c.h.b16 %v3868
        %v4584 = vunpack.c.l.b16 %v3869
        %v4585 = vunpack.c.h.b16 %v3869
        %v4586 = vunpack.c.l.b16 %v3870
        %v4587 = vunpack.c.h.b16 %v3870
        %v4588 = vunpack.c.l.b16 %v3871
        %v4589 = vunpack.c.h.b16 %v3871
        %v4590 = vunpack.c.l.b16 %v3872
        %v4591 = vunpack.c.h.b16 %v3872
        %v4592 = vunpack.c.l.b16 %v3873
        %v4593 = vunpack.c.h.b16 %v3873
        %v4594 = vunpack.c.l.b16 %v3874
        %v4595 = vunpack.c.h.b16 %v3874
        %v4596 = vunpack.c.l.b16 %v3875
        %v4597 = vunpack.c.h.b16 %v3875
        %v4598 = vunpack.c.l.b16 %v3876
        %v4599 = vunpack.c.h.b16 %v3876
        %v4600 = vunpack.c.l.b16 %v3877
        %v4601 = vunpack.c.h.b16 %v3877
        %v4602 = vunpack.c.l.b16 %v3878
        %v4603 = vunpack.c.h.b16 %v3878
        %v4604 = vunpack.c.l.b16 %v3879
        %v4605 = vunpack.c.h.b16 %v3879
        %v4606 = vunpack.c.l.b16 %v3880
        %v4607 = vunpack.c.h.b16 %v3880
        %v4608 = vunpack.c.l.b16 %v3881
        %v4609 = vunpack.c.h.b16 %v3881
        %v4610 = vunpack.c.l.b16 %v3882
        %v4611 = vunpack.c.h.b16 %v3882
        %v4612 = vunpack.c.l.b16 %v3883
        %v4613 = vunpack.c.h.b16 %v3883
        %v4614 = vunpack.c.l.b16 %v3884
        %v4615 = vunpack.c.h.b16 %v3884
        %v4616 = vunpack.c.l.b16 %v3885
        %v4617 = vunpack.c.h.b16 %v3885
        %v4618 = vunpack.c.l.b16 %v3886
        %v4619 = vunpack.c.h.b16 %v3886
        %v4620 = vunpack.c.l.b16 %v3887
        %v4621 = vunpack.c.h.b16 %v3887
        %v4622 = vunpack.c.l.b16 %v3888
        %v4623 = vunpack.c.h.b16 %v3888
        %v4624 = vunpack.c.l.b16 %v3889
        %v4625 = vunpack.c.h.b16 %v3889
        %v4626 = vunpack.c.l.b16 %v3890
        %v4627 = vunpack.c.h.b16 %v3890
        %v4628 = vunpack.c.l.b16 %v3891
        %v4629 = vunpack.c.h.b16 %v3891
        %v4630 = vunpack.c.l.b16 %v3892
        %v4631 = vunpack.c.h.b16 %v3892
        %v4632 = vunpack.c.l.b16 %v3893
        %v4633 = vunpack.c.h.b16 %v3893
        %v4634 = vunpack.c.l.b16 %v3894
        %v4635 = vunpack.c.h.b16 %v3894
        %v4636 = vunpack.c.l.b16 %v3895
        %v4637 = vunpack.c.h.b16 %v3895
        %v4638 = vunpack.c.l.b16 %v3896
        %v4639 = vunpack.c.h.b16 %v3896
        %v4640 = vunpack.c.l.b16 %v3897
        %v4641 = vunpack.c.h.b16 %v3897
        %v4642 = vunpack.c.l.b16 %v3898
        %v4643 = vunpack.c.h.b16 %v3898
        %v4644 = vunpack.c.l.b16 %v3899
        %v4645 = vunpack.c.h.b16 %v3899
        %v4646 = vunpack.c.l.b16 %v3900
        %v4647 = vunpack.c.h.b16 %v3900
        %v4648 = vunpack.c.l.b16 %v3901
        %v4649 = vunpack.c.h.b16 %v3901
        %v4650 = vunpack.c.l.b16 %v3902
        %v4651 = vunpack.c.h.b16 %v3902
        %v4652 = vunpack.c.l.b16 %v3903
        %v4653 = vunpack.c.h.b16 %v3903
        %v4654 = vunpack.c.l.b16 %v3904
        %v4655 = vunpack.c.h.b16 %v3904
        %v4656 = vunpack.c.l.b16 %v3905
        %v4657 = vunpack.c.h.b16 %v3905
        %v4658 = vunpack.c.l.b16 %v3906
        %v4659 = vunpack.c.h.b16 %v3906
        %v4660 = vunpack.c.l.b16 %v3907
        %v4661 = vunpack.c.h.b16 %v3907
        %v4662 = vunpack.c.l.b16 %v3908
        %v4663 = vunpack.c.h.b16 %v3908
        %v4664 = vunpack.c.l.b16 %v3909
        %v4665 = vunpack.c.h.b16 %v3909
        %v4666 = vunpack.c.l.b16 %v3910
        %v4667 = vunpack.c.h.b16 %v3910
        %v4668 = vunpack.c.l.b16 %v3911
        %v4669 = vunpack.c.h.b16 %v3911
        %v4670 = vunpack.c.l.b16 %v3912
        %v4671 = vunpack.c.h.b16 %v3912
        %v4672 = vunpack.c.l.b16 %v3913
        %v4673 = vunpack.c.h.b16 %v3913
        %v4674 = vunpack.c.l.b16 %v3914
        %v4675 = vunpack.c.h.b16 %v3914
        %v4676 = vunpack.c.l.b16 %v3915
        %v4677 = vunpack.c.h.b16 %v3915
        %v4678 = vunpack.c.l.b16 %v3916
        %v4679 = vunpack.c.h.b16 %v3916
        %v4680 = vunpack.c.l.b16 %v3917
        %v4681 = vunpack.c.h.b16 %v3917
        %v4682 = vunpack.c.l.b16 %v3918
        %v4683 = vunpack.c.h.b16 %v3918
        %v4684 = vunpack.c.l.b16 %v3919
        %v4685 = vunpack.c.h.b16 %v3919
        %v4686 = vunpack.c.l.b16 %v3920
        %v4687 = vunpack.c.h.b16 %v3920
        %v4688 = vunpack.c.l.b16 %v3921
        %v4689 = vunpack.c.h.b16 %v3921
        %v4690 = vpack.c.b16 %v4182, %v4178
        %v4691 = vpack.c.b16 %v4183, %v4179
        %v4692 = vpack.c.b16 %v4184, %v4180
        %v4693 = vpack.c.b16 %v4185, %v4181
        %v4694 = vpack.c.b16 %v4190, %v4186
        %v4695 = vpack.c.b16 %v4191, %v4187
        %v4696 = vpack.c.b16 %v4192, %v4188
        %v4697 = vpack.c.b16 %v4193, %v4189
        %v4698 = vpack.c.b16 %v4198, %v4194
        %v4699 = vpack.c.b16 %v4199, %v4195
        %v4700 = vpack.c.b16 %v4200, %v4196
        %v4701 = vpack.c.b16 %v4201, %v4197
        %v4702 = vpack.c.b16 %v4206, %v4202
        %v4703 = vpack.c.b16 %v4207, %v4203
        %v4704 = vpack.c.b16 %v4208, %v4204
        %v4705 = vpack.c.b16 %v4209, %v4205
        %v4706 = vpack.c.b16 %v4214, %v4210
        %v4707 = vpack.c.b16 %v4215, %v4211
        %v4708 = vpack.c.b16 %v4216, %v4212
        %v4709 = vpack.c.b16 %v4217, %v4213
        %v4710 = vpack.c.b16 %v4222, %v4218
        %v4711 = vpack.c.b16 %v4223, %v4219
        %v4712 = vpack.c.b16 %v4224, %v4220
        %v4713 = vpack.c.b16 %v4225, %v4221
        %v4714 = vpack.c.b16 %v4230, %v4226
        %v4715 = vpack.c.b16 %v4231, %v4227
        %v4716 = vpack.c.b16 %v4232, %v4228
        %v4717 = vpack.c.b16 %v4233, %v4229
        %v4718 = vpack.c.b16 %v4238, %v4234
        %v4719 = vpack.c.b16 %v4239, %v4235
        %v4720 = vpack.c.b16 %v4240, %v4236
        %v4721 = vpack.c.b16 %v4241, %v4237
        %v4722 = vpack.c.b16 %v4246, %v4242
        %v4723 = vpack.c.b16 %v4247, %v4243
        %v4724 = vpack.c.b16 %v4248, %v4244
        %v4725 = vpack.c.b16 %v4249, %v4245
        %v4726 = vpack.c.b16 %v4254, %v4250
        %v4727 = vpack.c.b16 %v4255, %v4251
        %v4728 = vpack.c.b16 %v4256, %v4252
        %v4729 = vpack.c.b16 %v4257, %v4253
        %v4730 = vpack.c.b16 %v4262, %v4258
        %v4731 = vpack.c.b16 %v4263, %v4259
        %v4732 = vpack.c.b16 %v4264, %v4260
        %v4733 = vpack.c.b16 %v4265, %v4261
        %v4734 = vpack.c.b16 %v4270, %v4266
        %v4735 = vpack.c.b16 %v4271, %v4267
        %v4736 = vpack.c.b16 %v4272, %v4268
        %v4737 = vpack.c.b16 %v4273, %v4269
        %v4738 = vpack.c.b16 %v4278, %v4274
        %v4739 = vpack.c.b16 %v4279, %v4275
        %v4740 = vpack.c.b16 %v4280, %v4276
        %v4741 = vpack.c.b16 %v4281, %v4277
        %v4742 = vpack.c.b16 %v4286, %v4282
        %v4743 = vpack.c.b16 %v4287, %v4283
        %v4744 = vpack.c.b16 %v4288, %v4284
        %v4745 = vpack.c.b16 %v4289, %v4285
        %v4746 = vpack.c.b16 %v4294, %v4290
        %v4747 = vpack.c.b16 %v4295, %v4291
        %v4748 = vpack.c.b16 %v4296, %v4292
        %v4749 = vpack.c.b16 %v4297, %v4293
        %v4750 = vpack.c.b16 %v4302, %v4298
        %v4751 = vpack.c.b16 %v4303, %v4299
        %v4752 = vpack.c.b16 %v4304, %v4300
        %v4753 = vpack.c.b16 %v4305, %v4301
        %v4754 = vpack.c.b16 %v4310, %v4306
        %v4755 = vpack.c.b16 %v4311, %v4307
        %v4756 = vpack.c.b16 %v4312, %v4308
        %v4757 = vpack.c.b16 %v4313, %v4309
        %v4758 = vpack.c.b16 %v4318, %v4314
        %v4759 = vpack.c.b16 %v4319, %v4315
        %v4760 = vpack.c.b16 %v4320, %v4316
        %v4761 = vpack.c.b16 %v4321, %v4317
        %v4762 = vpack.c.b16 %v4326, %v4322
        %v4763 = vpack.c.b16 %v4327, %v4323
        %v4764 = vpack.c.b16 %v4328, %v4324
        %v4765 = vpack.c.b16 %v4329, %v4325
        %v4766 = vpack.c.b16 %v4334, %v4330
        %v4767 = vpack.c.b16 %v4335, %v4331
        %v4768 = vpack.c.b16 %v4336, %v4332
        %v4769 = vpack.c.b16 %v4337, %v4333
        %v4770 = vpack.c.b16 %v4342, %v4338
        %v4771 = vpack.c.b16 %v4343, %v4339
        %v4772 = vpack.c.b16 %v4344, %v4340
        %v4773 = vpack.c.b16 %v4345, %v4341
        %v4774 = vpack.c.b16 %v4350, %v4346
        %v4775 = vpack.c.b16 %v4351, %v4347
        %v4776 = vpack.c.b16 %v4352, %v4348
        %v4777 = vpack.c.b16 %v4353, %v4349
        %v4778 = vpack.c.b16 %v4358, %v4354
        %v4779 = vpack.c.b16 %v4359, %v4355
        %v4780 = vpack.c.b16 %v4360, %v4356
        %v4781 = vpack.c.b16 %v4361, %v4357
        %v4782 = vpack.c.b16 %v4366, %v4362
        %v4783 = vpack.c.b16 %v4367, %v4363
        %v4784 = vpack.c.b16 %v4368, %v4364
        %v4785 = vpack.c.b16 %v4369, %v4365
        %v4786 = vpack.c.b16 %v4374, %v4370
        %v4787 = vpack.c.b16 %v4375, %v4371
        %v4788 = vpack.c.b16 %v4376, %v4372
        %v4789 = vpack.c.b16 %v4377, %v4373
        %v4790 = vpack.c.b16 %v4382, %v4378
        %v4791 = vpack.c.b16 %v4383, %v4379
        %v4792 = vpack.c.b16 %v4384, %v4380
        %v4793 = vpack.c.b16 %v4385, %v4381
        %v4794 = vpack.c.b16 %v4390, %v4386
        %v4795 = vpack.c.b16 %v4391, %v4387
        %v4796 = vpack.c.b16 %v4392, %v4388
        %v4797 = vpack.c.b16 %v4393, %v4389
        %v4798 = vpack.c.b16 %v4398, %v4394
        %v4799 = vpack.c.b16 %v4399, %v4395
        %v4800 = vpack.c.b16 %v4400, %v4396
        %v4801 = vpack.c.b16 %v4401, %v4397
        %v4802 = vpack.c.b16 %v4406, %v4402
        %v4803 = vpack.c.b16 %v4407, %v4403
        %v4804 = vpack.c.b16 %v4408, %v4404
        %v4805 = vpack.c.b16 %v4409, %v4405
        %v4806 = vpack.c.b16 %v4414, %v4410
        %v4807 = vpack.c.b16 %v4415, %v4411
        %v4808 = vpack.c.b16 %v4416, %v4412
        %v4809 = vpack.c.b16 %v4417, %v4413
        %v4810 = vpack.c.b16 %v4422, %v4418
        %v4811 = vpack.c.b16 %v4423, %v4419
        %v4812 = vpack.c.b16 %v4424, %v4420
        %v4813 = vpack.c.b16 %v4425, %v4421
        %v4814 = vpack.c.b16 %v4430, %v4426
        %v4815 = vpack.c.b16 %v4431, %v4427
        %v4816 = vpack.c.b16 %v4432, %v4428
        %v4817 = vpack.c.b16 %v4433, %v4429
        %v4818 = vpack.c.b16 %v4438, %v4434
        %v4819 = vpack.c.b16 %v4439, %v4435
        %v4820 = vpack.c.b16 %v4440, %v4436
        %v4821 = vpack.c.b16 %v4441, %v4437
        %v4822 = vpack.c.b16 %v4446, %v4442
        %v4823 = vpack.c.b16 %v4447, %v4443
        %v4824 = vpack.c.b16 %v4448, %v4444
        %v4825 = vpack.c.b16 %v4449, %v4445
        %v4826 = vpack.c.b16 %v4454, %v4450
        %v4827 = vpack.c.b16 %v4455, %v4451
        %v4828 = vpack.c.b16 %v4456, %v4452
        %v4829 = vpack.c.b16 %v4457, %v4453
        %v4830 = vpack.c.b16 %v4462, %v4458
        %v4831 = vpack.c.b16 %v4463, %v4459
        %v4832 = vpack.c.b16 %v4464, %v4460
        %v4833 = vpack.c.b16 %v4465, %v4461
        %v4834 = vpack.c.b16 %v4470, %v4466
        %v4835 = vpack.c.b16 %v4471, %v4467
        %v4836 = vpack.c.b16 %v4472, %v4468
        %v4837 = vpack.c.b16 %v4473, %v4469
        %v4838 = vpack.c.b16 %v4478, %v4474
        %v4839 = vpack.c.b16 %v4479, %v4475
        %v4840 = vpack.c.b16 %v4480, %v4476
        %v4841 = vpack.c.b16 %v4481, %v4477
        %v4842 = vpack.c.b16 %v4486, %v4482
        %v4843 = vpack.c.b16 %v4487, %v4483
        %v4844 = vpack.c.b16 %v4488, %v4484
        %v4845 = vpack.c.b16 %v4489, %v4485
        %v4846 = vpack.c.b16 %v4494, %v4490
        %v4847 = vpack.c.b16 %v4495, %v4491
        %v4848 = vpack.c.b16 %v4496, %v4492
        %v4849 = vpack.c.b16 %v4497, %v4493
        %v4850 = vpack.c.b16 %v4502, %v4498
        %v4851 = vpack.c.b16 %v4503, %v4499
        %v4852 = vpack.c.b16 %v4504, %v4500
        %v4853 = vpack.c.b16 %v4505, %v4501
        %v4854 = vpack.c.b16 %v4510, %v4506
        %v4855 = vpack.c.b16 %v4511, %v4507
        %v4856 = vpack.c.b16 %v4512, %v4508
        %v4857 = vpack.c.b16 %v4513, %v4509
        %v4858 = vpack.c.b16 %v4518, %v4514
        %v4859 = vpack.c.b16 %v4519, %v4515
        %v4860 = vpack.c.b16 %v4520, %v4516
        %v4861 = vpack.c.b16 %v4521, %v4517
        %v4862 = vpack.c.b16 %v4526, %v4522
        %v4863 = vpack.c.b16 %v4527, %v4523
        %v4864 = vpack.c.b16 %v4528, %v4524
        %v4865 = vpack.c.b16 %v4529, %v4525
        %v4866 = vpack.c.b16 %v4534, %v4530
        %v4867 = vpack.c.b16 %v4535, %v4531
        %v4868 = vpack.c.b16 %v4536, %v4532
        %v4869 = vpack.c.b16 %v4537, %v4533
        %v4870 = vpack.c.b16 %v4542, %v4538
        %v4871 = vpack.c.b16 %v4543, %v4539
        %v4872 = vpack.c.b16 %v4544, %v4540
        %v4873 = vpack.c.b16 %v4545, %v4541
        %v4874 = vpack.c.b16 %v4550, %v4546
        %v4875 = vpack.c.b16 %v4551, %v4547
        %v4876 = vpack.c.b16 %v4552, %v4548
        %v4877 = vpack.c.b16 %v4553, %v4549
        %v4878 = vpack.c.b16 %v4558, %v4554
        %v4879 = vpack.c.b16 %v4559, %v4555
        %v4880 = vpack.c.b16 %v4560, %v4556
        %v4881 = vpack.c.b16 %v4561, %v4557
        %v4882 = vpack.c.b16 %v4566, %v4562
        %v4883 = vpack.c.b16 %v4567, %v4563
        %v4884 = vpack.c.b16 %v4568, %v4564
        %v4885 = vpack.c.b16 %v4569, %v4565
        %v4886 = vpack.c.b16 %v4574, %v4570
        %v4887 = vpack.c.b16 %v4575, %v4571
        %v4888 = vpack.c.b16 %v4576, %v4572
        %v4889 = vpack.c.b16 %v4577, %v4573
        %v4890 = vpack.c.b16 %v4582, %v4578
        %v4891 = vpack.c.b16 %v4583, %v4579
        %v4892 = vpack.c.b16 %v4584, %v4580
        %v4893 = vpack.c.b16 %v4585, %v4581
        %v4894 = vpack.c.b16 %v4590, %v4586
        %v4895 = vpack.c.b16 %v4591, %v4587
        %v4896 = vpack.c.b16 %v4592, %v4588
        %v4897 = vpack.c.b16 %v4593, %v4589
        %v4898 = vpack.c.b16 %v4598, %v4594
        %v4899 = vpack.c.b16 %v4599, %v4595
        %v4900 = vpack.c.b16 %v4600, %v4596
        %v4901 = vpack.c.b16 %v4601, %v4597
        %v4902 = vpack.c.b16 %v4606, %v4602
        %v4903 = vpack.c.b16 %v4607, %v4603
        %v4904 = vpack.c.b16 %v4608, %v4604
        %v4905 = vpack.c.b16 %v4609, %v4605
        %v4906 = vpack.c.b16 %v4614, %v4610
        %v4907 = vpack.c.b16 %v4615, %v4611
        %v4908 = vpack.c.b16 %v4616, %v4612
        %v4909 = vpack.c.b16 %v4617, %v4613
        %v4910 = vpack.c.b16 %v4622, %v4618
        %v4911 = vpack.c.b16 %v4623, %v4619
        %v4912 = vpack.c.b16 %v4624, %v4620
        %v4913 = vpack.c.b16 %v4625, %v4621
        %v4914 = vpack.c.b16 %v4630, %v4626
        %v4915 = vpack.c.b16 %v4631, %v4627
        %v4916 = vpack.c.b16 %v4632, %v4628
        %v4917 = vpack.c.b16 %v4633, %v4629
        %v4918 = vpack.c.b16 %v4638, %v4634
        %v4919 = vpack.c.b16 %v4639, %v4635
        %v4920 = vpack.c.b16 %v4640, %v4636
        %v4921 = vpack.c.b16 %v4641, %v4637
        %v4922 = vpack.c.b16 %v4646, %v4642
        %v4923 = vpack.c.b16 %v4647, %v4643
        %v4924 = vpack.c.b16 %v4648, %v4644
        %v4925 = vpack.c.b16 %v4649, %v4645
        %v4926 = vpack.c.b16 %v4654, %v4650
        %v4927 = vpack.c.b16 %v4655, %v4651
        %v4928 = vpack.c.b16 %v4656, %v4652
        %v4929 = vpack.c.b16 %v4657, %v4653
        %v4930 = vpack.c.b16 %v4662, %v4658
        %v4931 = vpack.c.b16 %v4663, %v4659
        %v4932 = vpack.c.b16 %v4664, %v4660
        %v4933 = vpack.c.b16 %v4665, %v4661
        %v4934 = vpack.c.b16 %v4670, %v4666
        %v4935 = vpack.c.b16 %v4671, %v4667
        %v4936 = vpack.c.b16 %v4672, %v4668
        %v4937 = vpack.c.b16 %v4673, %v4669
        %v4938 = vpack.c.b16 %v4678, %v4674
        %v4939 = vpack.c.b16 %v4679, %v4675
        %v4940 = vpack.c.b16 %v4680, %v4676
        %v4941 = vpack.c.b16 %v4681, %v4677
        %v4942 = vpack.c.b16 %v4686, %v4682
        %v4943 = vpack.c.b16 %v4687, %v4683
        %v4944 = vpack.c.b16 %v4688, %v4684
        %v4945 = vpack.c.b16 %v4689, %v4685
        %5202 = vmatprep.subr.bf16.mxu0 %v4719
        %5203 = vmatpush1.bf16.msra.mxu0 %v4718
        %5204 = vmatprep.subr.bf16.mxu0 %v4715
        %5205 = vmatpush1.bf16.msra.mxu0 %v4714
        %5206 = vmatprep.subr.bf16.mxu0 %v4711
        %5207 = vmatpush1.bf16.msra.mxu0 %v4710
        %5208 = vmatprep.subr.bf16.mxu0 %v4707
        %5209 = vmatpush1.bf16.msra.mxu0 %v4706
        %5210 = vmatprep.subr.bf16.mxu0 %v4703
        %5211 = vmatpush1.bf16.msra.mxu0 %v4702
        %5212 = vmatprep.subr.bf16.mxu0 %v4699
        %5213 = vmatpush1.bf16.msra.mxu0 %v4698
        %5214 = vmatprep.subr.bf16.mxu0 %v4695
        %5215 = vmatpush1.bf16.msra.mxu0 %v4694
        %5216 = vmatprep.subr.bf16.mxu0 %v4691
        %5217 = vmatpush1.bf16.msra.mxu0 %v4690
        %5218 = vmatprep.subr.bf16.mxu0 %v4751
        %5219 = vmatpush2.bf16.msra.mxu0 %v4750
        %5220 = vmatprep.subr.bf16.mxu0 %v4747
        %5221 = vmatpush2.bf16.msra.mxu0 %v4746
        %5222 = vmatprep.subr.bf16.mxu0 %v4743
        %5223 = vmatpush2.bf16.msra.mxu0 %v4742
        %5224 = vmatprep.subr.bf16.mxu0 %v4739
        %5225 = vmatpush2.bf16.msra.mxu0 %v4738
        %5226 = vmatprep.subr.bf16.mxu0 %v4735
        %5227 = vmatpush2.bf16.msra.mxu0 %v4734
        %5228 = vmatprep.subr.bf16.mxu0 %v4731
        %5229 = vmatpush2.bf16.msra.mxu0 %v4730
        %5230 = vmatprep.subr.bf16.mxu0 %v4727
        %5231 = vmatpush2.bf16.msra.mxu0 %v4726
        %5232 = vmatprep.subr.bf16.mxu0 %v4723
        %5233 = vmatpush2.bf16.msra.mxu0 %v4722
        %5234 = vmatprep.mubr.bf16.mxu0 %v3635
        %5235 = vmatmul.mubr.bf16.gmra.mxu0 %v3634
        %v5236 = vpop.f32.mrf.mxu0
        %v5237 = vadd.f32 0.0, %v5236
        %v5238 = vpop.f32.mrf.mxu0
        %v5239 = vadd.f32 0.0, %v5238
        %v5240 = vpop.f32.mrf.mxu0
        %v5241 = vadd.f32 0.0, %v5240
        %v5242 = vpop.f32.mrf.mxu0
        %v5243 = vadd.f32 0.0, %v5242
        %5244 = vmatprep.mubr.bf16.mxu0 %v3643
        %5245 = vmatmul.mubr.bf16.gmra.mxu0 %v3642
        %v5246 = vpop.f32.mrf.mxu0
        %v5247 = vadd.f32 0.0, %v5246
        %v5248 = vpop.f32.mrf.mxu0
        %v5249 = vadd.f32 0.0, %v5248
        %v5250 = vpop.f32.mrf.mxu0
        %v5251 = vadd.f32 0.0, %v5250
        %v5252 = vpop.f32.mrf.mxu0
        %v5253 = vadd.f32 0.0, %v5252
        %5254 = vmatprep.mubr.bf16.mxu0 %v3651
        %5255 = vmatmul.mubr.bf16.gmra.mxu0 %v3650
        %v5256 = vpop.f32.mrf.mxu0
        %v5257 = vadd.f32 0.0, %v5256
        %v5258 = vpop.f32.mrf.mxu0
        %v5259 = vadd.f32 0.0, %v5258
        %v5260 = vpop.f32.mrf.mxu0
        %v5261 = vadd.f32 0.0, %v5260
        %v5262 = vpop.f32.mrf.mxu0
        %v5263 = vadd.f32 0.0, %v5262
        %5264 = vmatprep.mubr.bf16.mxu0 %v3659
        %5265 = vmatmul.mubr.bf16.gmra.mxu0 %v3658
        %v5266 = vpop.f32.mrf.mxu0
        %v5267 = vadd.f32 0.0, %v5266
        %v5268 = vpop.f32.mrf.mxu0
        %v5269 = vadd.f32 0.0, %v5268
        %v5270 = vpop.f32.mrf.mxu0
        %v5271 = vadd.f32 0.0, %v5270
        %v5272 = vpop.f32.mrf.mxu0
        %v5273 = vadd.f32 0.0, %v5272
        %5274 = vdwg.mxu0
        %5275 = vmatprep.subr.bf16.mxu0 %v4783
        %5276 = vmatpush1.bf16.msra.mxu0 %v4782
        %5277 = vmatprep.subr.bf16.mxu0 %v4779
        %5278 = vmatpush1.bf16.msra.mxu0 %v4778
        %5279 = vmatprep.subr.bf16.mxu0 %v4775
        %5280 = vmatpush1.bf16.msra.mxu0 %v4774
        %5281 = vmatprep.subr.bf16.mxu0 %v4771
        %5282 = vmatpush1.bf16.msra.mxu0 %v4770
        %5283 = vmatprep.subr.bf16.mxu0 %v4767
        %5284 = vmatpush1.bf16.msra.mxu0 %v4766
        %5285 = vmatprep.subr.bf16.mxu0 %v4763
        %5286 = vmatpush1.bf16.msra.mxu0 %v4762
        %5287 = vmatprep.subr.bf16.mxu0 %v4759
        %5288 = vmatpush1.bf16.msra.mxu0 %v4758
        %5289 = vmatprep.subr.bf16.mxu0 %v4755
        %5290 = vmatpush1.bf16.msra.mxu0 %v4754
        %5291 = vmatprep.subr.bf16.mxu0 %v4815
        %5292 = vmatpush2.bf16.msra.mxu0 %v4814
        %5293 = vmatprep.subr.bf16.mxu0 %v4811
        %5294 = vmatpush2.bf16.msra.mxu0 %v4810
        %5295 = vmatprep.subr.bf16.mxu0 %v4807
        %5296 = vmatpush2.bf16.msra.mxu0 %v4806
        %5297 = vmatprep.subr.bf16.mxu0 %v4803
        %5298 = vmatpush2.bf16.msra.mxu0 %v4802
        %5299 = vmatprep.subr.bf16.mxu0 %v4799
        %5300 = vmatpush2.bf16.msra.mxu0 %v4798
        %5301 = vmatprep.subr.bf16.mxu0 %v4795
        %5302 = vmatpush2.bf16.msra.mxu0 %v4794
        %5303 = vmatprep.subr.bf16.mxu0 %v4791
        %5304 = vmatpush2.bf16.msra.mxu0 %v4790
        %5305 = vmatprep.subr.bf16.mxu0 %v4787
        %5306 = vmatpush2.bf16.msra.mxu0 %v4786
        %5307 = vmatprep.mubr.bf16.mxu0 %v3637
        %5308 = vmatmul.mubr.bf16.gmra.mxu0 %v3636
        %v5309 = vpop.f32.mrf.mxu0
        %v5310 = vadd.f32 %v5237, %v5309
        %v5311 = vpop.f32.mrf.mxu0
        %v5312 = vadd.f32 %v5239, %v5311
        %v5313 = vpop.f32.mrf.mxu0
        %v5314 = vadd.f32 %v5241, %v5313
        %v5315 = vpop.f32.mrf.mxu0
        %v5316 = vadd.f32 %v5243, %v5315
        %5317 = vmatprep.mubr.bf16.mxu0 %v3645
        %5318 = vmatmul.mubr.bf16.gmra.mxu0 %v3644
        %v5319 = vpop.f32.mrf.mxu0
        %v5320 = vadd.f32 %v5247, %v5319
        %v5321 = vpop.f32.mrf.mxu0
        %v5322 = vadd.f32 %v5249, %v5321
        %v5323 = vpop.f32.mrf.mxu0
        %v5324 = vadd.f32 %v5251, %v5323
        %v5325 = vpop.f32.mrf.mxu0
        %v5326 = vadd.f32 %v5253, %v5325
        %5327 = vmatprep.mubr.bf16.mxu0 %v3653
        %5328 = vmatmul.mubr.bf16.gmra.mxu0 %v3652
        %v5329 = vpop.f32.mrf.mxu0
        %v5330 = vadd.f32 %v5257, %v5329
        %v5331 = vpop.f32.mrf.mxu0
        %v5332 = vadd.f32 %v5259, %v5331
        %v5333 = vpop.f32.mrf.mxu0
        %v5334 = vadd.f32 %v5261, %v5333
        %v5335 = vpop.f32.mrf.mxu0
        %v5336 = vadd.f32 %v5263, %v5335
        %5337 = vmatprep.mubr.bf16.mxu0 %v3661
        %5338 = vmatmul.mubr.bf16.gmra.mxu0 %v3660
        %v5339 = vpop.f32.mrf.mxu0
        %v5340 = vadd.f32 %v5267, %v5339
        %v5341 = vpop.f32.mrf.mxu0
        %v5342 = vadd.f32 %v5269, %v5341
        %v5343 = vpop.f32.mrf.mxu0
        %v5344 = vadd.f32 %v5271, %v5343
        %v5345 = vpop.f32.mrf.mxu0
        %v5346 = vadd.f32 %v5273, %v5345
        %5347 = vdwg.mxu0
        %5348 = vmatprep.subr.bf16.mxu0 %v4847
        %5349 = vmatpush1.bf16.msra.mxu0 %v4846
        %5350 = vmatprep.subr.bf16.mxu0 %v4843
        %5351 = vmatpush1.bf16.msra.mxu0 %v4842
        %5352 = vmatprep.subr.bf16.mxu0 %v4839
        %5353 = vmatpush1.bf16.msra.mxu0 %v4838
        %5354 = vmatprep.subr.bf16.mxu0 %v4835
        %5355 = vmatpush1.bf16.msra.mxu0 %v4834
        %5356 = vmatprep.subr.bf16.mxu0 %v4831
        %5357 = vmatpush1.bf16.msra.mxu0 %v4830
        %5358 = vmatprep.subr.bf16.mxu0 %v4827
        %5359 = vmatpush1.bf16.msra.mxu0 %v4826
        %5360 = vmatprep.subr.bf16.mxu0 %v4823
        %5361 = vmatpush1.bf16.msra.mxu0 %v4822
        %5362 = vmatprep.subr.bf16.mxu0 %v4819
        %5363 = vmatpush1.bf16.msra.mxu0 %v4818
        %5364 = vmatprep.subr.bf16.mxu0 %v4879
        %5365 = vmatpush2.bf16.msra.mxu0 %v4878
        %5366 = vmatprep.subr.bf16.mxu0 %v4875
        %5367 = vmatpush2.bf16.msra.mxu0 %v4874
        %5368 = vmatprep.subr.bf16.mxu0 %v4871
        %5369 = vmatpush2.bf16.msra.mxu0 %v4870
        %5370 = vmatprep.subr.bf16.mxu0 %v4867
        %5371 = vmatpush2.bf16.msra.mxu0 %v4866
        %5372 = vmatprep.subr.bf16.mxu0 %v4863
        %5373 = vmatpush2.bf16.msra.mxu0 %v4862
        %5374 = vmatprep.subr.bf16.mxu0 %v4859
        %5375 = vmatpush2.bf16.msra.mxu0 %v4858
        %5376 = vmatprep.subr.bf16.mxu0 %v4855
        %5377 = vmatpush2.bf16.msra.mxu0 %v4854
        %5378 = vmatprep.subr.bf16.mxu0 %v4851
        %5379 = vmatpush2.bf16.msra.mxu0 %v4850
        %5380 = vmatprep.mubr.bf16.mxu0 %v3639
        %5381 = vmatmul.mubr.bf16.gmra.mxu0 %v3638
        %v5382 = vpop.f32.mrf.mxu0
        %v5383 = vadd.f32 %v5310, %v5382
        %v5384 = vpop.f32.mrf.mxu0
        %v5385 = vadd.f32 %v5312, %v5384
        %v5386 = vpop.f32.mrf.mxu0
        %v5387 = vadd.f32 %v5314, %v5386
        %v5388 = vpop.f32.mrf.mxu0
        %v5389 = vadd.f32 %v5316, %v5388
        %5390 = vmatprep.mubr.bf16.mxu0 %v3647
        %5391 = vmatmul.mubr.bf16.gmra.mxu0 %v3646
        %v5392 = vpop.f32.mrf.mxu0
        %v5393 = vadd.f32 %v5320, %v5392
        %v5394 = vpop.f32.mrf.mxu0
        %v5395 = vadd.f32 %v5322, %v5394
        %v5396 = vpop.f32.mrf.mxu0
        %v5397 = vadd.f32 %v5324, %v5396
        %v5398 = vpop.f32.mrf.mxu0
        %v5399 = vadd.f32 %v5326, %v5398
        %5400 = vmatprep.mubr.bf16.mxu0 %v3655
        %5401 = vmatmul.mubr.bf16.gmra.mxu0 %v3654
        %v5402 = vpop.f32.mrf.mxu0
        %v5403 = vadd.f32 %v5330, %v5402
        %v5404 = vpop.f32.mrf.mxu0
        %v5405 = vadd.f32 %v5332, %v5404
        %v5406 = vpop.f32.mrf.mxu0
        %v5407 = vadd.f32 %v5334, %v5406
        %v5408 = vpop.f32.mrf.mxu0
        %v5409 = vadd.f32 %v5336, %v5408
        %5410 = vmatprep.mubr.bf16.mxu0 %v3663
        %5411 = vmatmul.mubr.bf16.gmra.mxu0 %v3662
        %v5412 = vpop.f32.mrf.mxu0
        %v5413 = vadd.f32 %v5340, %v5412
        %v5414 = vpop.f32.mrf.mxu0
        %v5415 = vadd.f32 %v5342, %v5414
        %v5416 = vpop.f32.mrf.mxu0
        %v5417 = vadd.f32 %v5344, %v5416
        %v5418 = vpop.f32.mrf.mxu0
        %v5419 = vadd.f32 %v5346, %v5418
        %5420 = vdwg.mxu0
        %5421 = vmatprep.subr.bf16.mxu0 %v4911
        %5422 = vmatpush1.bf16.msra.mxu0 %v4910
        %5423 = vmatprep.subr.bf16.mxu0 %v4907
        %5424 = vmatpush1.bf16.msra.mxu0 %v4906
        %5425 = vmatprep.subr.bf16.mxu0 %v4903
        %5426 = vmatpush1.bf16.msra.mxu0 %v4902
        %5427 = vmatprep.subr.bf16.mxu0 %v4899
        %5428 = vmatpush1.bf16.msra.mxu0 %v4898
        %5429 = vmatprep.subr.bf16.mxu0 %v4895
        %5430 = vmatpush1.bf16.msra.mxu0 %v4894
        %5431 = vmatprep.subr.bf16.mxu0 %v4891
        %5432 = vmatpush1.bf16.msra.mxu0 %v4890
        %5433 = vmatprep.subr.bf16.mxu0 %v4887
        %5434 = vmatpush1.bf16.msra.mxu0 %v4886
        %5435 = vmatprep.subr.bf16.mxu0 %v4883
        %5436 = vmatpush1.bf16.msra.mxu0 %v4882
        %5437 = vmatprep.subr.bf16.mxu0 %v4943
        %5438 = vmatpush2.bf16.msra.mxu0 %v4942
        %5439 = vmatprep.subr.bf16.mxu0 %v4939
        %5440 = vmatpush2.bf16.msra.mxu0 %v4938
        %5441 = vmatprep.subr.bf16.mxu0 %v4935
        %5442 = vmatpush2.bf16.msra.mxu0 %v4934
        %5443 = vmatprep.subr.bf16.mxu0 %v4931
        %5444 = vmatpush2.bf16.msra.mxu0 %v4930
        %5445 = vmatprep.subr.bf16.mxu0 %v4927
        %5446 = vmatpush2.bf16.msra.mxu0 %v4926
        %5447 = vmatprep.subr.bf16.mxu0 %v4923
        %5448 = vmatpush2.bf16.msra.mxu0 %v4922
        %5449 = vmatprep.subr.bf16.mxu0 %v4919
        %5450 = vmatpush2.bf16.msra.mxu0 %v4918
        %5451 = vmatprep.subr.bf16.mxu0 %v4915
        %5452 = vmatpush2.bf16.msra.mxu0 %v4914
        %5453 = vmatprep.mubr.bf16.mxu0 %v3641
        %5454 = vmatmul.mubr.bf16.gmra.mxu0 %v3640
        %v5455 = vpop.f32.mrf.mxu0
        %v5456 = vadd.f32 %v5383, %v5455
        %v5457 = vpop.f32.mrf.mxu0
        %v5458 = vadd.f32 %v5385, %v5457
        %v5459 = vpop.f32.mrf.mxu0
        %v5460 = vadd.f32 %v5387, %v5459
        %v5461 = vpop.f32.mrf.mxu0
        %v5462 = vadd.f32 %v5389, %v5461
        %5463 = vmatprep.mubr.bf16.mxu0 %v3649
        %5464 = vmatmul.mubr.bf16.gmra.mxu0 %v3648
        %v5465 = vpop.f32.mrf.mxu0
        %v5466 = vadd.f32 %v5393, %v5465
        %v5467 = vpop.f32.mrf.mxu0
        %v5468 = vadd.f32 %v5395, %v5467
        %v5469 = vpop.f32.mrf.mxu0
        %v5470 = vadd.f32 %v5397, %v5469
        %v5471 = vpop.f32.mrf.mxu0
        %v5472 = vadd.f32 %v5399, %v5471
        %5473 = vmatprep.mubr.bf16.mxu0 %v3657
        %5474 = vmatmul.mubr.bf16.gmra.mxu0 %v3656
        %v5475 = vpop.f32.mrf.mxu0
        %v5476 = vadd.f32 %v5403, %v5475
        %v5477 = vpop.f32.mrf.mxu0
        %v5478 = vadd.f32 %v5405, %v5477
        %v5479 = vpop.f32.mrf.mxu0
        %v5480 = vadd.f32 %v5407, %v5479
        %v5481 = vpop.f32.mrf.mxu0
        %v5482 = vadd.f32 %v5409, %v5481
        %5483 = vmatprep.mubr.bf16.mxu0 %v3665
        %5484 = vmatmul.mubr.bf16.gmra.mxu0 %v3664
        %v5485 = vpop.f32.mrf.mxu0
        %v5486 = vadd.f32 %v5413, %v5485
        %v5487 = vpop.f32.mrf.mxu0
        %v5488 = vadd.f32 %v5415, %v5487
        %v5489 = vpop.f32.mrf.mxu0
        %v5490 = vadd.f32 %v5417, %v5489
        %v5491 = vpop.f32.mrf.mxu0
        %v5492 = vadd.f32 %v5419, %v5491
        %5493 = vdwg.mxu0
        %5494 = vmatprep.subr.bf16.mxu0 %v4721
        %5495 = vmatpush1.bf16.msra.mxu0 %v4720
        %5496 = vmatprep.subr.bf16.mxu0 %v4717
        %5497 = vmatpush1.bf16.msra.mxu0 %v4716
        %5498 = vmatprep.subr.bf16.mxu0 %v4713
        %5499 = vmatpush1.bf16.msra.mxu0 %v4712
        %5500 = vmatprep.subr.bf16.mxu0 %v4709
        %5501 = vmatpush1.bf16.msra.mxu0 %v4708
        %5502 = vmatprep.subr.bf16.mxu0 %v4705
        %5503 = vmatpush1.bf16.msra.mxu0 %v4704
        %5504 = vmatprep.subr.bf16.mxu0 %v4701
        %5505 = vmatpush1.bf16.msra.mxu0 %v4700
        %5506 = vmatprep.subr.bf16.mxu0 %v4697
        %5507 = vmatpush1.bf16.msra.mxu0 %v4696
        %5508 = vmatprep.subr.bf16.mxu0 %v4693
        %5509 = vmatpush1.bf16.msra.mxu0 %v4692
        %5510 = vmatprep.subr.bf16.mxu0 %v4753
        %5511 = vmatpush2.bf16.msra.mxu0 %v4752
        %5512 = vmatprep.subr.bf16.mxu0 %v4749
        %5513 = vmatpush2.bf16.msra.mxu0 %v4748
        %5514 = vmatprep.subr.bf16.mxu0 %v4745
        %5515 = vmatpush2.bf16.msra.mxu0 %v4744
        %5516 = vmatprep.subr.bf16.mxu0 %v4741
        %5517 = vmatpush2.bf16.msra.mxu0 %v4740
        %5518 = vmatprep.subr.bf16.mxu0 %v4737
        %5519 = vmatpush2.bf16.msra.mxu0 %v4736
        %5520 = vmatprep.subr.bf16.mxu0 %v4733
        %5521 = vmatpush2.bf16.msra.mxu0 %v4732
        %5522 = vmatprep.subr.bf16.mxu0 %v4729
        %5523 = vmatpush2.bf16.msra.mxu0 %v4728
        %5524 = vmatprep.subr.bf16.mxu0 %v4725
        %5525 = vmatpush2.bf16.msra.mxu0 %v4724
        %5526 = vmatprep.mubr.bf16.mxu0 %v3635
        %5527 = vmatmul.mubr.bf16.gmra.mxu0 %v3634
        %v5528 = vpop.f32.mrf.mxu0
        %v5529 = vadd.f32 0.0, %v5528
        %v5530 = vpop.f32.mrf.mxu0
        %v5531 = vadd.f32 0.0, %v5530
        %v5532 = vpop.f32.mrf.mxu0
        %v5533 = vadd.f32 0.0, %v5532
        %v5534 = vpop.f32.mrf.mxu0
        %v5535 = vadd.f32 0.0, %v5534
        %5536 = vmatprep.mubr.bf16.mxu0 %v3643
        %5537 = vmatmul.mubr.bf16.gmra.mxu0 %v3642
        %v5538 = vpop.f32.mrf.mxu0
        %v5539 = vadd.f32 0.0, %v5538
        %v5540 = vpop.f32.mrf.mxu0
        %v5541 = vadd.f32 0.0, %v5540
        %v5542 = vpop.f32.mrf.mxu0
        %v5543 = vadd.f32 0.0, %v5542
        %v5544 = vpop.f32.mrf.mxu0
        %v5545 = vadd.f32 0.0, %v5544
        %5546 = vmatprep.mubr.bf16.mxu0 %v3651
        %5547 = vmatmul.mubr.bf16.gmra.mxu0 %v3650
        %v5548 = vpop.f32.mrf.mxu0
        %v5549 = vadd.f32 0.0, %v5548
        %v5550 = vpop.f32.mrf.mxu0
        %v5551 = vadd.f32 0.0, %v5550
        %v5552 = vpop.f32.mrf.mxu0
        %v5553 = vadd.f32 0.0, %v5552
        %v5554 = vpop.f32.mrf.mxu0
        %v5555 = vadd.f32 0.0, %v5554
        %5556 = vmatprep.mubr.bf16.mxu0 %v3659
        %5557 = vmatmul.mubr.bf16.gmra.mxu0 %v3658
        %v5558 = vpop.f32.mrf.mxu0
        %v5559 = vadd.f32 0.0, %v5558
        %v5560 = vpop.f32.mrf.mxu0
        %v5561 = vadd.f32 0.0, %v5560
        %v5562 = vpop.f32.mrf.mxu0
        %v5563 = vadd.f32 0.0, %v5562
        %v5564 = vpop.f32.mrf.mxu0
        %v5565 = vadd.f32 0.0, %v5564
        %5566 = vdwg.mxu0
        %5567 = vmatprep.subr.bf16.mxu0 %v4785
        %5568 = vmatpush1.bf16.msra.mxu0 %v4784
        %5569 = vmatprep.subr.bf16.mxu0 %v4781
        %5570 = vmatpush1.bf16.msra.mxu0 %v4780
        %5571 = vmatprep.subr.bf16.mxu0 %v4777
        %5572 = vmatpush1.bf16.msra.mxu0 %v4776
        %5573 = vmatprep.subr.bf16.mxu0 %v4773
        %5574 = vmatpush1.bf16.msra.mxu0 %v4772
        %5575 = vmatprep.subr.bf16.mxu0 %v4769
        %5576 = vmatpush1.bf16.msra.mxu0 %v4768
        %5577 = vmatprep.subr.bf16.mxu0 %v4765
        %5578 = vmatpush1.bf16.msra.mxu0 %v4764
        %5579 = vmatprep.subr.bf16.mxu0 %v4761
        %5580 = vmatpush1.bf16.msra.mxu0 %v4760
        %5581 = vmatprep.subr.bf16.mxu0 %v4757
        %5582 = vmatpush1.bf16.msra.mxu0 %v4756
        %5583 = vmatprep.subr.bf16.mxu0 %v4817
        %5584 = vmatpush2.bf16.msra.mxu0 %v4816
        %5585 = vmatprep.subr.bf16.mxu0 %v4813
        %5586 = vmatpush2.bf16.msra.mxu0 %v4812
        %5587 = vmatprep.subr.bf16.mxu0 %v4809
        %5588 = vmatpush2.bf16.msra.mxu0 %v4808
        %5589 = vmatprep.subr.bf16.mxu0 %v4805
        %5590 = vmatpush2.bf16.msra.mxu0 %v4804
        %5591 = vmatprep.subr.bf16.mxu0 %v4801
        %5592 = vmatpush2.bf16.msra.mxu0 %v4800
        %5593 = vmatprep.subr.bf16.mxu0 %v4797
        %5594 = vmatpush2.bf16.msra.mxu0 %v4796
        %5595 = vmatprep.subr.bf16.mxu0 %v4793
        %5596 = vmatpush2.bf16.msra.mxu0 %v4792
        %5597 = vmatprep.subr.bf16.mxu0 %v4789
        %5598 = vmatpush2.bf16.msra.mxu0 %v4788
        %5599 = vmatprep.mubr.bf16.mxu0 %v3637
        %5600 = vmatmul.mubr.bf16.gmra.mxu0 %v3636
        %v5601 = vpop.f32.mrf.mxu0
        %v5602 = vadd.f32 %v5529, %v5601
        %v5603 = vpop.f32.mrf.mxu0
        %v5604 = vadd.f32 %v5531, %v5603
        %v5605 = vpop.f32.mrf.mxu0
        %v5606 = vadd.f32 %v5533, %v5605
        %v5607 = vpop.f32.mrf.mxu0
        %v5608 = vadd.f32 %v5535, %v5607
        %5609 = vmatprep.mubr.bf16.mxu0 %v3645
        %5610 = vmatmul.mubr.bf16.gmra.mxu0 %v3644
        %v5611 = vpop.f32.mrf.mxu0
        %v5612 = vadd.f32 %v5539, %v5611
        %v5613 = vpop.f32.mrf.mxu0
        %v5614 = vadd.f32 %v5541, %v5613
        %v5615 = vpop.f32.mrf.mxu0
        %v5616 = vadd.f32 %v5543, %v5615
        %v5617 = vpop.f32.mrf.mxu0
        %v5618 = vadd.f32 %v5545, %v5617
        %5619 = vmatprep.mubr.bf16.mxu0 %v3653
        %5620 = vmatmul.mubr.bf16.gmra.mxu0 %v3652
        %v5621 = vpop.f32.mrf.mxu0
        %v5622 = vadd.f32 %v5549, %v5621
        %v5623 = vpop.f32.mrf.mxu0
        %v5624 = vadd.f32 %v5551, %v5623
        %v5625 = vpop.f32.mrf.mxu0
        %v5626 = vadd.f32 %v5553, %v5625
        %v5627 = vpop.f32.mrf.mxu0
        %v5628 = vadd.f32 %v5555, %v5627
        %5629 = vmatprep.mubr.bf16.mxu0 %v3661
        %5630 = vmatmul.mubr.bf16.gmra.mxu0 %v3660
        %v5631 = vpop.f32.mrf.mxu0
        %v5632 = vadd.f32 %v5559, %v5631
        %v5633 = vpop.f32.mrf.mxu0
        %v5634 = vadd.f32 %v5561, %v5633
        %v5635 = vpop.f32.mrf.mxu0
        %v5636 = vadd.f32 %v5563, %v5635
        %v5637 = vpop.f32.mrf.mxu0
        %v5638 = vadd.f32 %v5565, %v5637
        %5639 = vdwg.mxu0
        %5640 = vmatprep.subr.bf16.mxu0 %v4849
        %5641 = vmatpush1.bf16.msra.mxu0 %v4848
        %5642 = vmatprep.subr.bf16.mxu0 %v4845
        %5643 = vmatpush1.bf16.msra.mxu0 %v4844
        %5644 = vmatprep.subr.bf16.mxu0 %v4841
        %5645 = vmatpush1.bf16.msra.mxu0 %v4840
        %5646 = vmatprep.subr.bf16.mxu0 %v4837
        %5647 = vmatpush1.bf16.msra.mxu0 %v4836
        %5648 = vmatprep.subr.bf16.mxu0 %v4833
        %5649 = vmatpush1.bf16.msra.mxu0 %v4832
        %5650 = vmatprep.subr.bf16.mxu0 %v4829
        %5651 = vmatpush1.bf16.msra.mxu0 %v4828
        %5652 = vmatprep.subr.bf16.mxu0 %v4825
        %5653 = vmatpush1.bf16.msra.mxu0 %v4824
        %5654 = vmatprep.subr.bf16.mxu0 %v4821
        %5655 = vmatpush1.bf16.msra.mxu0 %v4820
        %5656 = vmatprep.subr.bf16.mxu0 %v4881
        %5657 = vmatpush2.bf16.msra.mxu0 %v4880
        %5658 = vmatprep.subr.bf16.mxu0 %v4877
        %5659 = vmatpush2.bf16.msra.mxu0 %v4876
        %5660 = vmatprep.subr.bf16.mxu0 %v4873
        %5661 = vmatpush2.bf16.msra.mxu0 %v4872
        %5662 = vmatprep.subr.bf16.mxu0 %v4869
        %5663 = vmatpush2.bf16.msra.mxu0 %v4868
        %5664 = vmatprep.subr.bf16.mxu0 %v4865
        %5665 = vmatpush2.bf16.msra.mxu0 %v4864
        %5666 = vmatprep.subr.bf16.mxu0 %v4861
        %5667 = vmatpush2.bf16.msra.mxu0 %v4860
        %5668 = vmatprep.subr.bf16.mxu0 %v4857
        %5669 = vmatpush2.bf16.msra.mxu0 %v4856
        %5670 = vmatprep.subr.bf16.mxu0 %v4853
        %5671 = vmatpush2.bf16.msra.mxu0 %v4852
        %5672 = vmatprep.mubr.bf16.mxu0 %v3639
        %5673 = vmatmul.mubr.bf16.gmra.mxu0 %v3638
        %v5674 = vpop.f32.mrf.mxu0
        %v5675 = vadd.f32 %v5602, %v5674
        %v5676 = vpop.f32.mrf.mxu0
        %v5677 = vadd.f32 %v5604, %v5676
        %v5678 = vpop.f32.mrf.mxu0
        %v5679 = vadd.f32 %v5606, %v5678
        %v5680 = vpop.f32.mrf.mxu0
        %v5681 = vadd.f32 %v5608, %v5680
        %5682 = vmatprep.mubr.bf16.mxu0 %v3647
        %5683 = vmatmul.mubr.bf16.gmra.mxu0 %v3646
        %v5684 = vpop.f32.mrf.mxu0
        %v5685 = vadd.f32 %v5612, %v5684
        %v5686 = vpop.f32.mrf.mxu0
        %v5687 = vadd.f32 %v5614, %v5686
        %v5688 = vpop.f32.mrf.mxu0
        %v5689 = vadd.f32 %v5616, %v5688
        %v5690 = vpop.f32.mrf.mxu0
        %v5691 = vadd.f32 %v5618, %v5690
        %5692 = vmatprep.mubr.bf16.mxu0 %v3655
        %5693 = vmatmul.mubr.bf16.gmra.mxu0 %v3654
        %v5694 = vpop.f32.mrf.mxu0
        %v5695 = vadd.f32 %v5622, %v5694
        %v5696 = vpop.f32.mrf.mxu0
        %v5697 = vadd.f32 %v5624, %v5696
        %v5698 = vpop.f32.mrf.mxu0
        %v5699 = vadd.f32 %v5626, %v5698
        %v5700 = vpop.f32.mrf.mxu0
        %v5701 = vadd.f32 %v5628, %v5700
        %5702 = vmatprep.mubr.bf16.mxu0 %v3663
        %5703 = vmatmul.mubr.bf16.gmra.mxu0 %v3662
        %v5704 = vpop.f32.mrf.mxu0
        %v5705 = vadd.f32 %v5632, %v5704
        %v5706 = vpop.f32.mrf.mxu0
        %v5707 = vadd.f32 %v5634, %v5706
        %v5708 = vpop.f32.mrf.mxu0
        %v5709 = vadd.f32 %v5636, %v5708
        %v5710 = vpop.f32.mrf.mxu0
        %v5711 = vadd.f32 %v5638, %v5710
        %5712 = vdwg.mxu0
        %5713 = vmatprep.subr.bf16.mxu0 %v4913
        %5714 = vmatpush1.bf16.msra.mxu0 %v4912
        %5715 = vmatprep.subr.bf16.mxu0 %v4909
        %5716 = vmatpush1.bf16.msra.mxu0 %v4908
        %5717 = vmatprep.subr.bf16.mxu0 %v4905
        %5718 = vmatpush1.bf16.msra.mxu0 %v4904
        %5719 = vmatprep.subr.bf16.mxu0 %v4901
        %5720 = vmatpush1.bf16.msra.mxu0 %v4900
        %5721 = vmatprep.subr.bf16.mxu0 %v4897
        %5722 = vmatpush1.bf16.msra.mxu0 %v4896
        %5723 = vmatprep.subr.bf16.mxu0 %v4893
        %5724 = vmatpush1.bf16.msra.mxu0 %v4892
        %5725 = vmatprep.subr.bf16.mxu0 %v4889
        %5726 = vmatpush1.bf16.msra.mxu0 %v4888
        %5727 = vmatprep.subr.bf16.mxu0 %v4885
        %5728 = vmatpush1.bf16.msra.mxu0 %v4884
        %5729 = vmatprep.subr.bf16.mxu0 %v4945
        %5730 = vmatpush2.bf16.msra.mxu0 %v4944
        %5731 = vmatprep.subr.bf16.mxu0 %v4941
        %5732 = vmatpush2.bf16.msra.mxu0 %v4940
        %5733 = vmatprep.subr.bf16.mxu0 %v4937
        %5734 = vmatpush2.bf16.msra.mxu0 %v4936
        %5735 = vmatprep.subr.bf16.mxu0 %v4933
        %5736 = vmatpush2.bf16.msra.mxu0 %v4932
        %5737 = vmatprep.subr.bf16.mxu0 %v4929
        %5738 = vmatpush2.bf16.msra.mxu0 %v4928
        %5739 = vmatprep.subr.bf16.mxu0 %v4925
        %5740 = vmatpush2.bf16.msra.mxu0 %v4924
        %5741 = vmatprep.subr.bf16.mxu0 %v4921
        %5742 = vmatpush2.bf16.msra.mxu0 %v4920
        %5743 = vmatprep.subr.bf16.mxu0 %v4917
        %5744 = vmatpush2.bf16.msra.mxu0 %v4916
        %5745 = vmatprep.mubr.bf16.mxu0 %v3641
        %5746 = vmatmul.mubr.bf16.gmra.mxu0 %v3640
        %v5747 = vpop.f32.mrf.mxu0
        %v5748 = vadd.f32 %v5675, %v5747
        %v5749 = vpop.f32.mrf.mxu0
        %v5750 = vadd.f32 %v5677, %v5749
        %v5751 = vpop.f32.mrf.mxu0
        %v5752 = vadd.f32 %v5679, %v5751
        %v5753 = vpop.f32.mrf.mxu0
        %v5754 = vadd.f32 %v5681, %v5753
        %5755 = vmatprep.mubr.bf16.mxu0 %v3649
        %5756 = vmatmul.mubr.bf16.gmra.mxu0 %v3648
        %v5757 = vpop.f32.mrf.mxu0
        %v5758 = vadd.f32 %v5685, %v5757
        %v5759 = vpop.f32.mrf.mxu0
        %v5760 = vadd.f32 %v5687, %v5759
        %v5761 = vpop.f32.mrf.mxu0
        %v5762 = vadd.f32 %v5689, %v5761
        %v5763 = vpop.f32.mrf.mxu0
        %v5764 = vadd.f32 %v5691, %v5763
        %5765 = vmatprep.mubr.bf16.mxu0 %v3657
        %5766 = vmatmul.mubr.bf16.gmra.mxu0 %v3656
        %v5767 = vpop.f32.mrf.mxu0
        %v5768 = vadd.f32 %v5695, %v5767
        %v5769 = vpop.f32.mrf.mxu0
        %v5770 = vadd.f32 %v5697, %v5769
        %v5771 = vpop.f32.mrf.mxu0
        %v5772 = vadd.f32 %v5699, %v5771
        %v5773 = vpop.f32.mrf.mxu0
        %v5774 = vadd.f32 %v5701, %v5773
        %5775 = vmatprep.mubr.bf16.mxu0 %v3665
        %5776 = vmatmul.mubr.bf16.gmra.mxu0 %v3664
        %v5777 = vpop.f32.mrf.mxu0
        %v5778 = vadd.f32 %v5705, %v5777
        %v5779 = vpop.f32.mrf.mxu0
        %v5780 = vadd.f32 %v5707, %v5779
        %v5781 = vpop.f32.mrf.mxu0
        %v5782 = vadd.f32 %v5709, %v5781
        %v5783 = vpop.f32.mrf.mxu0
        %v5784 = vadd.f32 %v5711, %v5783
        %5785 = vdwg.mxu0
        %v5786 = vld [vmem:[%s7] sm:$0xf]
        %v5787 = vld [vmem:[%s8] sm:$0xf]
        %v5788 = vld [vmem:[#allocation14] sm:$0xf]
        %v5789 = vld [vmem:[#allocation15] sm:$0xff]
        %v5790 = vld [vmem:[#allocation15 + $0x8] sm:$0xff]
        %v5791 = vld [vmem:[#allocation15 + $0x10] sm:$0xff]
        %v5792 = vld [vmem:[#allocation15 + $0x18] sm:$0xff]
        %v5793 = vld [vmem:[#allocation15 + $0x20] sm:$0xff]
        %v5794 = vld [vmem:[#allocation15 + $0x28] sm:$0xff]
        %v5795 = vld [vmem:[#allocation15 + $0x30] sm:$0xff]
        %v5796 = vld [vmem:[#allocation15 + $0x38] sm:$0xff]
        %v5797 = vld [vmem:[#allocation15 + $0x40] sm:$0xff]
        %v5798 = vld [vmem:[#allocation15 + $0x48] sm:$0xff]
        %v5799 = vld [vmem:[#allocation15 + $0x50] sm:$0xff]
        %v5800 = vld [vmem:[#allocation15 + $0x58] sm:$0xff]
        %v5801 = vld [vmem:[#allocation15 + $0x60] sm:$0xff]
        %v5802 = vld [vmem:[#allocation15 + $0x68] sm:$0xff]
        %v5803 = vld [vmem:[#allocation15 + $0x70] sm:$0xff]
        %v5804 = vld [vmem:[#allocation15 + $0x78] sm:$0xff]
        %v5805 = vadd.f32 %v5456, %v5460
        %v5806 = vadd.f32 %v5805, %v5466
        %v5807 = vadd.f32 %v5806, %v5470
        %v5808 = vadd.f32 %v5807, %v5476
        %v5809 = vadd.f32 %v5808, %v5480
        %v5810 = vadd.f32 %v5809, %v5486
        %v5811 = vadd.f32 %v5810, %v5490
        %v5812 = vrot.slane %v5811, 4
        %v5813 = vadd.f32 %v5811, %v5812
        %v5814 = vrot.slane %v5813, 2
        %v5815 = vadd.f32 %v5813, %v5814
        %v5816 = vrot.slane %v5815, 1
        %v5817 = vadd.f32 %v5815, %v5816
        %v5818 = vadd.f32 %v5458, %v5462
        %v5819 = vadd.f32 %v5818, %v5468
        %v5820 = vadd.f32 %v5819, %v5472
        %v5821 = vadd.f32 %v5820, %v5478
        %v5822 = vadd.f32 %v5821, %v5482
        %v5823 = vadd.f32 %v5822, %v5488
        %v5824 = vadd.f32 %v5823, %v5492
        %v5825 = vrot.slane %v5824, 4
        %v5826 = vadd.f32 %v5824, %v5825
        %v5827 = vrot.slane %v5826, 2
        %v5828 = vadd.f32 %v5826, %v5827
        %v5829 = vrot.slane %v5828, 1
        %v5830 = vadd.f32 %v5828, %v5829
        %v5831 = vadd.f32 %v5748, %v5752
        %v5832 = vadd.f32 %v5831, %v5758
        %v5833 = vadd.f32 %v5832, %v5762
        %v5834 = vadd.f32 %v5833, %v5768
        %v5835 = vadd.f32 %v5834, %v5772
        %v5836 = vadd.f32 %v5835, %v5778
        %v5837 = vadd.f32 %v5836, %v5782
        %v5838 = vrot.slane %v5837, 4
        %v5839 = vadd.f32 %v5837, %v5838
        %v5840 = vrot.slane %v5839, 2
        %v5841 = vadd.f32 %v5839, %v5840
        %v5842 = vrot.slane %v5841, 1
        %v5843 = vadd.f32 %v5841, %v5842
        %v5844 = vadd.f32 %v5750, %v5754
        %v5845 = vadd.f32 %v5844, %v5760
        %v5846 = vadd.f32 %v5845, %v5764
        %v5847 = vadd.f32 %v5846, %v5770
        %v5848 = vadd.f32 %v5847, %v5774
        %v5849 = vadd.f32 %v5848, %v5780
        %v5850 = vadd.f32 %v5849, %v5784
        %v5851 = vrot.slane %v5850, 4
        %v5852 = vadd.f32 %v5850, %v5851
        %v5853 = vrot.slane %v5852, 2
        %v5854 = vadd.f32 %v5852, %v5853
        %v5855 = vrot.slane %v5854, 1
        %v5856 = vadd.f32 %v5854, %v5855
        %v5857 = vmul.f32 %v5456, %v5456
        %v5858 = vmul.f32 %v5458, %v5458
        %v5859 = vmul.f32 %v5748, %v5748
        %v5860 = vmul.f32 %v5750, %v5750
        %v5861 = vmul.f32 %v5460, %v5460
        %v5862 = vmul.f32 %v5462, %v5462
        %v5863 = vmul.f32 %v5752, %v5752
        %v5864 = vmul.f32 %v5754, %v5754
        %v5865 = vmul.f32 %v5466, %v5466
        %v5866 = vmul.f32 %v5468, %v5468
        %v5867 = vmul.f32 %v5758, %v5758
        %v5868 = vmul.f32 %v5760, %v5760
        %v5869 = vmul.f32 %v5470, %v5470
        %v5870 = vmul.f32 %v5472, %v5472
        %v5871 = vmul.f32 %v5762, %v5762
        %v5872 = vmul.f32 %v5764, %v5764
        %v5873 = vmul.f32 %v5476, %v5476
        %v5874 = vmul.f32 %v5478, %v5478
        %v5875 = vmul.f32 %v5768, %v5768
        %v5876 = vmul.f32 %v5770, %v5770
        %v5877 = vmul.f32 %v5480, %v5480
        %v5878 = vmul.f32 %v5482, %v5482
        %v5879 = vmul.f32 %v5772, %v5772
        %v5880 = vmul.f32 %v5774, %v5774
        %v5881 = vmul.f32 %v5486, %v5486
        %v5882 = vmul.f32 %v5488, %v5488
        %v5883 = vmul.f32 %v5778, %v5778
        %v5884 = vmul.f32 %v5780, %v5780
        %v5885 = vmul.f32 %v5490, %v5490
        %v5886 = vmul.f32 %v5492, %v5492
        %v5887 = vmul.f32 %v5782, %v5782
        %v5888 = vmul.f32 %v5784, %v5784
        %v5889 = vadd.f32 %v5857, %v5861
        %v5890 = vadd.f32 %v5889, %v5865
        %v5891 = vadd.f32 %v5890, %v5869
        %v5892 = vadd.f32 %v5891, %v5873
        %v5893 = vadd.f32 %v5892, %v5877
        %v5894 = vadd.f32 %v5893, %v5881
        %v5895 = vadd.f32 %v5894, %v5885
        %v5896 = vrot.slane %v5895, 4
        %v5897 = vadd.f32 %v5895, %v5896
        %v5898 = vrot.slane %v5897, 2
        %v5899 = vadd.f32 %v5897, %v5898
        %v5900 = vrot.slane %v5899, 1
        %v5901 = vadd.f32 %v5899, %v5900
        %v5902 = vadd.f32 %v5858, %v5862
        %v5903 = vadd.f32 %v5902, %v5866
        %v5904 = vadd.f32 %v5903, %v5870
        %v5905 = vadd.f32 %v5904, %v5874
        %v5906 = vadd.f32 %v5905, %v5878
        %v5907 = vadd.f32 %v5906, %v5882
        %v5908 = vadd.f32 %v5907, %v5886
        %v5909 = vrot.slane %v5908, 4
        %v5910 = vadd.f32 %v5908, %v5909
        %v5911 = vrot.slane %v5910, 2
        %v5912 = vadd.f32 %v5910, %v5911
        %v5913 = vrot.slane %v5912, 1
        %v5914 = vadd.f32 %v5912, %v5913
        %v5915 = vadd.f32 %v5859, %v5863
        %v5916 = vadd.f32 %v5915, %v5867
        %v5917 = vadd.f32 %v5916, %v5871
        %v5918 = vadd.f32 %v5917, %v5875
        %v5919 = vadd.f32 %v5918, %v5879
        %v5920 = vadd.f32 %v5919, %v5883
        %v5921 = vadd.f32 %v5920, %v5887
        %v5922 = vrot.slane %v5921, 4
        %v5923 = vadd.f32 %v5921, %v5922
        %v5924 = vrot.slane %v5923, 2
        %v5925 = vadd.f32 %v5923, %v5924
        %v5926 = vrot.slane %v5925, 1
        %v5927 = vadd.f32 %v5925, %v5926
        %v5928 = vadd.f32 %v5860, %v5864
        %v5929 = vadd.f32 %v5928, %v5868
        %v5930 = vadd.f32 %v5929, %v5872
        %v5931 = vadd.f32 %v5930, %v5876
        %v5932 = vadd.f32 %v5931, %v5880
        %v5933 = vadd.f32 %v5932, %v5884
        %v5934 = vadd.f32 %v5933, %v5888
        %v5935 = vrot.slane %v5934, 4
        %v5936 = vadd.f32 %v5934, %v5935
        %v5937 = vrot.slane %v5936, 2
        %v5938 = vadd.f32 %v5936, %v5937
        %v5939 = vrot.slane %v5938, 1
        %v5940 = vadd.f32 %v5938, %v5939
        %v5941 = vmul.f32 %v5786, 64.0
        %v5943 = vlaneseq
        %v5944 = vshrl.u32 %v5943, 7
        %v5945 = vsub.s32 0, %v5944
        %v5946 = vrot.slane %v5941, %v5945
        %v5947 = vlaneseq
        %v5948 = vshrl.u32 %v5947, 7
        %v5949 = vsub.s32 1, %v5948
        %v5950 = vrot.slane %v5941, %v5949
        %v5951 = vlaneseq
        %v5952 = vshrl.u32 %v5951, 7
        %v5953 = vsub.s32 2, %v5952
        %v5954 = vrot.slane %v5941, %v5953
        %v5955 = vlaneseq
        %v5956 = vshrl.u32 %v5955, 7
        %v5957 = vsub.s32 3, %v5956
        %v5958 = vrot.slane %v5941, %v5957
        %v5963 = vadd.f32 %v5817, %v5946
        %v5964 = vadd.f32 %v5830, %v5950
        %v5965 = vadd.f32 %v5843, %v5954
        %v5966 = vadd.f32 %v5856, %v5958
        %v5967 = vmul.f32 %v5786, 2.0
        %v5972 = vcombine.low %v5817, %v5830
        %v5973 = vcombine.low %v5843, %v5856
        %v5975 = vunpack.c.l.s4 1966171168
        %v5976 = vunpack.c.0.s8 %v5975
        %v5977 = vlaneseq
        %v5978 = vshrl.u32 %v5977, 7
        %v5979 = vsub.s32 %v5976, %v5978
        %v5980 = vrot.slane %v5972, %v5979
        %v5982 = vunpack.c.l.s4 1966171168
        %v5983 = vunpack.c.0.s8 %v5982
        %v5984 = vlaneseq
        %v5985 = vshrl.u32 %v5984, 7
        %v5986 = vsub.s32 %v5983, %v5985
        %v5987 = vrot.slane %v5973, %v5986
        %v5988 = vcombine.low %v5980, %v5987
        %v5990 = vunpack.c.l.s4 1966171168
        %v5991 = vunpack.c.0.s8 %v5990
        %v5992 = vlaneseq
        %v5993 = vshrl.u32 %v5992, 7
        %v5994 = vsub.s32 %v5991, %v5993
        %v5995 = vrot.slane %v5988, %v5994
        %v5997 = vmul.f32 %v5967, %v5995
        %v5999 = vlaneseq
        %v6000 = vshrl.u32 %v5999, 7
        %v6001 = vsub.s32 0, %v6000
        %v6002 = vrot.slane %v5997, %v6001
        %v6003 = vlaneseq
        %v6004 = vshrl.u32 %v6003, 7
        %v6005 = vsub.s32 1, %v6004
        %v6006 = vrot.slane %v5997, %v6005
        %v6007 = vlaneseq
        %v6008 = vshrl.u32 %v6007, 7
        %v6009 = vsub.s32 2, %v6008
        %v6010 = vrot.slane %v5997, %v6009
        %v6011 = vlaneseq
        %v6012 = vshrl.u32 %v6011, 7
        %v6013 = vsub.s32 3, %v6012
        %v6014 = vrot.slane %v5997, %v6013
        %v6019 = vadd.f32 %v5901, %v6002
        %v6020 = vadd.f32 %v5914, %v6006
        %v6021 = vadd.f32 %v5927, %v6010
        %v6022 = vadd.f32 %v5940, %v6014
        %v6023 = vmul.f32 %v5786, %v5786
        %v6024 = vmul.f32 %v6023, 64.0
        %v6026 = vlaneseq
        %v6027 = vshrl.u32 %v6026, 7
        %v6028 = vsub.s32 0, %v6027
        %v6029 = vrot.slane %v6024, %v6028
        %v6030 = vlaneseq
        %v6031 = vshrl.u32 %v6030, 7
        %v6032 = vsub.s32 1, %v6031
        %v6033 = vrot.slane %v6024, %v6032
        %v6034 = vlaneseq
        %v6035 = vshrl.u32 %v6034, 7
        %v6036 = vsub.s32 2, %v6035
        %v6037 = vrot.slane %v6024, %v6036
        %v6038 = vlaneseq
        %v6039 = vshrl.u32 %v6038, 7
        %v6040 = vsub.s32 3, %v6039
        %v6041 = vrot.slane %v6024, %v6040
        %v6046 = vadd.f32 %v6019, %v6029
        %v6047 = vadd.f32 %v6020, %v6033
        %v6048 = vadd.f32 %v6021, %v6037
        %v6049 = vadd.f32 %v6022, %v6041
        %6050 = vmatprep.subr.mxu0 0.0
        %6051 = vmatpush1.xpose.msra.mxu0 0.0
        %6052 = vmatprep.subr.mxu0 0.0
        %6053 = vmatpush1.xpose.msra.mxu0 0.0
        %6054 = vmatprep.subr.mxu0 0.0
        %6055 = vmatpush1.xpose.msra.mxu0 0.0
        %6056 = vmatprep.subr.mxu0 0.0
        %6057 = vmatpush1.xpose.msra.mxu0 0.0
        %6058 = vmatprep.subr.mxu0 0.0
        %6059 = vmatpush1.xpose.msra.mxu0 0.0
        %6060 = vmatprep.subr.mxu0 0.0
        %6061 = vmatpush1.xpose.msra.mxu0 0.0
        %6062 = vmatprep.subr.mxu0 0.0
        %6063 = vmatpush1.xpose.msra.mxu0 0.0
        %6064 = vmatprep.subr.mxu0 0.0
        %6065 = vmatpush1.xpose.msra.mxu0 0.0
        %6066 = vmatprep.subr.mxu0 0.0
        %6067 = vmatpush1.xpose.msra.mxu0 0.0
        %6068 = vmatprep.subr.mxu0 0.0
        %6069 = vmatpush1.xpose.msra.mxu0 0.0
        %6070 = vmatprep.subr.mxu0 0.0
        %6071 = vmatpush1.xpose.msra.mxu0 0.0
        %6072 = vmatprep.subr.mxu0 0.0
        %6073 = vmatpush1.xpose.msra.mxu0 0.0
        %6074 = vmatprep.subr.mxu0 %v5802
        %6075 = vmatpush1.xpose.msra.mxu0 %v5801
        %6076 = vmatprep.subr.mxu0 %v5798
        %6077 = vmatpush1.xpose.msra.mxu0 %v5797
        %6078 = vmatprep.subr.mxu0 %v5794
        %6079 = vmatpush1.xpose.msra.mxu0 %v5793
        %6080 = vmatprep.subr.mxu0 %v5790
        %6081 = vmatpush1.xpose.msra.mxu0 %v5789
        %6082 = vmatprep.subr.mxu0 0.0
        %6083 = vmatpush2.xpose.msra.mxu0 0.0
        %6084 = vmatprep.subr.mxu0 0.0
        %6085 = vmatpush2.xpose.msra.mxu0 0.0
        %6086 = vmatprep.subr.mxu0 0.0
        %6087 = vmatpush2.xpose.msra.mxu0 0.0
        %6088 = vmatprep.subr.mxu0 0.0
        %6089 = vmatpush2.xpose.msra.mxu0 0.0
        %6090 = vmatprep.subr.mxu0 0.0
        %6091 = vmatpush2.xpose.msra.mxu0 0.0
        %6092 = vmatprep.subr.mxu0 0.0
        %6093 = vmatpush2.xpose.msra.mxu0 0.0
        %6094 = vmatprep.subr.mxu0 0.0
        %6095 = vmatpush2.xpose.msra.mxu0 0.0
        %6096 = vmatprep.subr.mxu0 0.0
        %6097 = vmatpush2.xpose.msra.mxu0 0.0
        %6098 = vmatprep.subr.mxu0 0.0
        %6099 = vmatpush2.xpose.msra.mxu0 0.0
        %6100 = vmatprep.subr.mxu0 0.0
        %6101 = vmatpush2.xpose.msra.mxu0 0.0
        %6102 = vmatprep.subr.mxu0 0.0
        %6103 = vmatpush2.xpose.msra.mxu0 0.0
        %6104 = vmatprep.subr.mxu0 0.0
        %6105 = vmatpush2.xpose.msra.mxu0 0.0
        %6106 = vmatprep.subr.mxu0 0.0
        %6107 = vmatpush2.xpose.msra.mxu0 0.0
        %6108 = vmatprep.subr.mxu0 0.0
        %6109 = vmatpush2.xpose.msra.mxu0 0.0
        %6110 = vmatprep.subr.mxu0 0.0
        %6111 = vmatpush2.xpose.msra.mxu0 0.0
        %6112 = vmatprep.subr.mxu0 0.0
        %6113 = vmatpush2.xpose.msra.mxu0 0.0
        %6114 = vmatprep.mubr.f32.mxu0 %v5964
        %6115 = vmatmul.mubr.f32.gmra.mxu0 %v5963
        %v6116 = vpop.f32.mrf.mxu0
        %v6117 = vadd.f32 0.0, %v6116
        %v6118 = vpop.f32.mrf.mxu0
        %6119 = vdwg.mxu0
        %6120 = vmatprep.subr.mxu0 0.0
        %6121 = vmatpush1.xpose.msra.mxu0 0.0
        %6122 = vmatprep.subr.mxu0 0.0
        %6123 = vmatpush1.xpose.msra.mxu0 0.0
        %6124 = vmatprep.subr.mxu0 0.0
        %6125 = vmatpush1.xpose.msra.mxu0 0.0
        %6126 = vmatprep.subr.mxu0 0.0
        %6127 = vmatpush1.xpose.msra.mxu0 0.0
        %6128 = vmatprep.subr.mxu0 0.0
        %6129 = vmatpush1.xpose.msra.mxu0 0.0
        %6130 = vmatprep.subr.mxu0 0.0
        %6131 = vmatpush1.xpose.msra.mxu0 0.0
        %6132 = vmatprep.subr.mxu0 0.0
        %6133 = vmatpush1.xpose.msra.mxu0 0.0
        %6134 = vmatprep.subr.mxu0 0.0
        %6135 = vmatpush1.xpose.msra.mxu0 0.0
        %6136 = vmatprep.subr.mxu0 0.0
        %6137 = vmatpush1.xpose.msra.mxu0 0.0
        %6138 = vmatprep.subr.mxu0 0.0
        %6139 = vmatpush1.xpose.msra.mxu0 0.0
        %6140 = vmatprep.subr.mxu0 0.0
        %6141 = vmatpush1.xpose.msra.mxu0 0.0
        %6142 = vmatprep.subr.mxu0 0.0
        %6143 = vmatpush1.xpose.msra.mxu0 0.0
        %6144 = vmatprep.subr.mxu0 %v5804
        %6145 = vmatpush1.xpose.msra.mxu0 %v5803
        %6146 = vmatprep.subr.mxu0 %v5800
        %6147 = vmatpush1.xpose.msra.mxu0 %v5799
        %6148 = vmatprep.subr.mxu0 %v5796
        %6149 = vmatpush1.xpose.msra.mxu0 %v5795
        %6150 = vmatprep.subr.mxu0 %v5792
        %6151 = vmatpush1.xpose.msra.mxu0 %v5791
        %6152 = vmatprep.subr.mxu0 0.0
        %6153 = vmatpush2.xpose.msra.mxu0 0.0
        %6154 = vmatprep.subr.mxu0 0.0
        %6155 = vmatpush2.xpose.msra.mxu0 0.0
        %6156 = vmatprep.subr.mxu0 0.0
        %6157 = vmatpush2.xpose.msra.mxu0 0.0
        %6158 = vmatprep.subr.mxu0 0.0
        %6159 = vmatpush2.xpose.msra.mxu0 0.0
        %6160 = vmatprep.subr.mxu0 0.0
        %6161 = vmatpush2.xpose.msra.mxu0 0.0
        %6162 = vmatprep.subr.mxu0 0.0
        %6163 = vmatpush2.xpose.msra.mxu0 0.0
        %6164 = vmatprep.subr.mxu0 0.0
        %6165 = vmatpush2.xpose.msra.mxu0 0.0
        %6166 = vmatprep.subr.mxu0 0.0
        %6167 = vmatpush2.xpose.msra.mxu0 0.0
        %6168 = vmatprep.subr.mxu0 0.0
        %6169 = vmatpush2.xpose.msra.mxu0 0.0
        %6170 = vmatprep.subr.mxu0 0.0
        %6171 = vmatpush2.xpose.msra.mxu0 0.0
        %6172 = vmatprep.subr.mxu0 0.0
        %6173 = vmatpush2.xpose.msra.mxu0 0.0
        %6174 = vmatprep.subr.mxu0 0.0
        %6175 = vmatpush2.xpose.msra.mxu0 0.0
        %6176 = vmatprep.subr.mxu0 0.0
        %6177 = vmatpush2.xpose.msra.mxu0 0.0
        %6178 = vmatprep.subr.mxu0 0.0
        %6179 = vmatpush2.xpose.msra.mxu0 0.0
        %6180 = vmatprep.subr.mxu0 0.0
        %6181 = vmatpush2.xpose.msra.mxu0 0.0
        %6182 = vmatprep.subr.mxu0 0.0
        %6183 = vmatpush2.xpose.msra.mxu0 0.0
        %6184 = vmatprep.mubr.f32.mxu0 %v5966
        %6185 = vmatmul.mubr.f32.gmra.mxu0 %v5965
        %v6186 = vpop.f32.mrf.mxu0
        %v6187 = vadd.f32 %v6117, %v6186
        %v6188 = vpop.f32.mrf.mxu0
        %6189 = vdwg.mxu0
        %6190 = vmatprep.subr.mxu0 0.0
        %6191 = vmatpush1.xpose.msra.mxu0 0.0
        %6192 = vmatprep.subr.mxu0 0.0
        %6193 = vmatpush1.xpose.msra.mxu0 0.0
        %6194 = vmatprep.subr.mxu0 0.0
        %6195 = vmatpush1.xpose.msra.mxu0 0.0
        %6196 = vmatprep.subr.mxu0 0.0
        %6197 = vmatpush1.xpose.msra.mxu0 0.0
        %6198 = vmatprep.subr.mxu0 0.0
        %6199 = vmatpush1.xpose.msra.mxu0 0.0
        %6200 = vmatprep.subr.mxu0 0.0
        %6201 = vmatpush1.xpose.msra.mxu0 0.0
        %6202 = vmatprep.subr.mxu0 0.0
        %6203 = vmatpush1.xpose.msra.mxu0 0.0
        %6204 = vmatprep.subr.mxu0 0.0
        %6205 = vmatpush1.xpose.msra.mxu0 0.0
        %6206 = vmatprep.subr.mxu0 0.0
        %6207 = vmatpush1.xpose.msra.mxu0 0.0
        %6208 = vmatprep.subr.mxu0 0.0
        %6209 = vmatpush1.xpose.msra.mxu0 0.0
        %6210 = vmatprep.subr.mxu0 0.0
        %6211 = vmatpush1.xpose.msra.mxu0 0.0
        %6212 = vmatprep.subr.mxu0 0.0
        %6213 = vmatpush1.xpose.msra.mxu0 0.0
        %6214 = vmatprep.subr.mxu0 %v5802
        %6215 = vmatpush1.xpose.msra.mxu0 %v5801
        %6216 = vmatprep.subr.mxu0 %v5798
        %6217 = vmatpush1.xpose.msra.mxu0 %v5797
        %6218 = vmatprep.subr.mxu0 %v5794
        %6219 = vmatpush1.xpose.msra.mxu0 %v5793
        %6220 = vmatprep.subr.mxu0 %v5790
        %6221 = vmatpush1.xpose.msra.mxu0 %v5789
        %6222 = vmatprep.subr.mxu0 0.0
        %6223 = vmatpush2.xpose.msra.mxu0 0.0
        %6224 = vmatprep.subr.mxu0 0.0
        %6225 = vmatpush2.xpose.msra.mxu0 0.0
        %6226 = vmatprep.subr.mxu0 0.0
        %6227 = vmatpush2.xpose.msra.mxu0 0.0
        %6228 = vmatprep.subr.mxu0 0.0
        %6229 = vmatpush2.xpose.msra.mxu0 0.0
        %6230 = vmatprep.subr.mxu0 0.0
        %6231 = vmatpush2.xpose.msra.mxu0 0.0
        %6232 = vmatprep.subr.mxu0 0.0
        %6233 = vmatpush2.xpose.msra.mxu0 0.0
        %6234 = vmatprep.subr.mxu0 0.0
        %6235 = vmatpush2.xpose.msra.mxu0 0.0
        %6236 = vmatprep.subr.mxu0 0.0
        %6237 = vmatpush2.xpose.msra.mxu0 0.0
        %6238 = vmatprep.subr.mxu0 0.0
        %6239 = vmatpush2.xpose.msra.mxu0 0.0
        %6240 = vmatprep.subr.mxu0 0.0
        %6241 = vmatpush2.xpose.msra.mxu0 0.0
        %6242 = vmatprep.subr.mxu0 0.0
        %6243 = vmatpush2.xpose.msra.mxu0 0.0
        %6244 = vmatprep.subr.mxu0 0.0
        %6245 = vmatpush2.xpose.msra.mxu0 0.0
        %6246 = vmatprep.subr.mxu0 0.0
        %6247 = vmatpush2.xpose.msra.mxu0 0.0
        %6248 = vmatprep.subr.mxu0 0.0
        %6249 = vmatpush2.xpose.msra.mxu0 0.0
        %6250 = vmatprep.subr.mxu0 0.0
        %6251 = vmatpush2.xpose.msra.mxu0 0.0
        %6252 = vmatprep.subr.mxu0 0.0
        %6253 = vmatpush2.xpose.msra.mxu0 0.0
        %6254 = vmatprep.mubr.f32.mxu0 %v6047
        %6255 = vmatmul.mubr.f32.gmra.mxu0 %v6046
        %v6256 = vpop.f32.mrf.mxu0
        %v6257 = vadd.f32 0.0, %v6256
        %v6258 = vpop.f32.mrf.mxu0
        %6259 = vdwg.mxu0
        %6260 = vmatprep.subr.mxu0 0.0
        %6261 = vmatpush1.xpose.msra.mxu0 0.0
        %6262 = vmatprep.subr.mxu0 0.0
        %6263 = vmatpush1.xpose.msra.mxu0 0.0
        %6264 = vmatprep.subr.mxu0 0.0
        %6265 = vmatpush1.xpose.msra.mxu0 0.0
        %6266 = vmatprep.subr.mxu0 0.0
        %6267 = vmatpush1.xpose.msra.mxu0 0.0
        %6268 = vmatprep.subr.mxu0 0.0
        %6269 = vmatpush1.xpose.msra.mxu0 0.0
        %6270 = vmatprep.subr.mxu0 0.0
        %6271 = vmatpush1.xpose.msra.mxu0 0.0
        %6272 = vmatprep.subr.mxu0 0.0
        %6273 = vmatpush1.xpose.msra.mxu0 0.0
        %6274 = vmatprep.subr.mxu0 0.0
        %6275 = vmatpush1.xpose.msra.mxu0 0.0
        %6276 = vmatprep.subr.mxu0 0.0
        %6277 = vmatpush1.xpose.msra.mxu0 0.0
        %6278 = vmatprep.subr.mxu0 0.0
        %6279 = vmatpush1.xpose.msra.mxu0 0.0
        %6280 = vmatprep.subr.mxu0 0.0
        %6281 = vmatpush1.xpose.msra.mxu0 0.0
        %6282 = vmatprep.subr.mxu0 0.0
        %6283 = vmatpush1.xpose.msra.mxu0 0.0
        %6284 = vmatprep.subr.mxu0 %v5804
        %6285 = vmatpush1.xpose.msra.mxu0 %v5803
        %6286 = vmatprep.subr.mxu0 %v5800
        %6287 = vmatpush1.xpose.msra.mxu0 %v5799
        %6288 = vmatprep.subr.mxu0 %v5796
        %6289 = vmatpush1.xpose.msra.mxu0 %v5795
        %6290 = vmatprep.subr.mxu0 %v5792
        %6291 = vmatpush1.xpose.msra.mxu0 %v5791
        %6292 = vmatprep.subr.mxu0 0.0
        %6293 = vmatpush2.xpose.msra.mxu0 0.0
        %6294 = vmatprep.subr.mxu0 0.0
        %6295 = vmatpush2.xpose.msra.mxu0 0.0
        %6296 = vmatprep.subr.mxu0 0.0
        %6297 = vmatpush2.xpose.msra.mxu0 0.0
        %6298 = vmatprep.subr.mxu0 0.0
        %6299 = vmatpush2.xpose.msra.mxu0 0.0
        %6300 = vmatprep.subr.mxu0 0.0
        %6301 = vmatpush2.xpose.msra.mxu0 0.0
        %6302 = vmatprep.subr.mxu0 0.0
        %6303 = vmatpush2.xpose.msra.mxu0 0.0
        %6304 = vmatprep.subr.mxu0 0.0
        %6305 = vmatpush2.xpose.msra.mxu0 0.0
        %6306 = vmatprep.subr.mxu0 0.0
        %6307 = vmatpush2.xpose.msra.mxu0 0.0
        %6308 = vmatprep.subr.mxu0 0.0
        %6309 = vmatpush2.xpose.msra.mxu0 0.0
        %6310 = vmatprep.subr.mxu0 0.0
        %6311 = vmatpush2.xpose.msra.mxu0 0.0
        %6312 = vmatprep.subr.mxu0 0.0
        %6313 = vmatpush2.xpose.msra.mxu0 0.0
        %6314 = vmatprep.subr.mxu0 0.0
        %6315 = vmatpush2.xpose.msra.mxu0 0.0
        %6316 = vmatprep.subr.mxu0 0.0
        %6317 = vmatpush2.xpose.msra.mxu0 0.0
        %6318 = vmatprep.subr.mxu0 0.0
        %6319 = vmatpush2.xpose.msra.mxu0 0.0
        %6320 = vmatprep.subr.mxu0 0.0
        %6321 = vmatpush2.xpose.msra.mxu0 0.0
        %6322 = vmatprep.subr.mxu0 0.0
        %6323 = vmatpush2.xpose.msra.mxu0 0.0
        %6324 = vmatprep.mubr.f32.mxu0 %v6049
        %6325 = vmatmul.mubr.f32.gmra.mxu0 %v6048
        %v6326 = vpop.f32.mrf.mxu0
        %v6327 = vadd.f32 %v6257, %v6326
        %v6328 = vpop.f32.mrf.mxu0
        %6329 = vdwg.mxu0
        %v6330 = vrcp.pop 1024.0
        %v6331 = vmul.f32 %v6187, %v6330
        %v6332 = vmul.f32 %v6327, %v6330
        %v6333 = vmul.f32 %v6331, %v6331
        %v6334 = vsub.f32 %v6332, %v6333
        %v6335 = vadd.f32 %v6334, 1e-05
        %v6336 = vrsqrt.pop %v6335
        %v6338 = vsel %vm2537, %v6331, 0
        %6340 = vmatprep.subr.mxu0 0.0
        %6341 = vmatpush1.msra.mxu0 0.0
        %6342 = vmatprep.subr.mxu0 0.0
        %6343 = vmatpush1.msra.mxu0 0.0
        %6344 = vmatprep.subr.mxu0 0.0
        %6345 = vmatpush1.msra.mxu0 0.0
        %6346 = vmatprep.subr.mxu0 0.0
        %6347 = vmatpush1.msra.mxu0 0.0
        %6348 = vmatprep.subr.mxu0 0.0
        %6349 = vmatpush1.msra.mxu0 0.0
        %6350 = vmatprep.subr.mxu0 0.0
        %6351 = vmatpush1.msra.mxu0 0.0
        %6352 = vmatprep.subr.mxu0 0.0
        %6353 = vmatpush1.msra.mxu0 0.0
        %6354 = vmatprep.subr.mxu0 0.0
        %6355 = vmatpush1.msra.mxu0 0.0
        %6356 = vmatprep.subr.mxu0 0.0
        %6357 = vmatpush1.msra.mxu0 0.0
        %6358 = vmatprep.subr.mxu0 0.0
        %6359 = vmatpush1.msra.mxu0 0.0
        %6360 = vmatprep.subr.mxu0 0.0
        %6361 = vmatpush1.msra.mxu0 0.0
        %6362 = vmatprep.subr.mxu0 0.0
        %6363 = vmatpush1.msra.mxu0 0.0
        %6364 = vmatprep.subr.mxu0 %v5802
        %6365 = vmatpush1.msra.mxu0 %v5801
        %6366 = vmatprep.subr.mxu0 %v5798
        %6367 = vmatpush1.msra.mxu0 %v5797
        %6368 = vmatprep.subr.mxu0 %v5794
        %6369 = vmatpush1.msra.mxu0 %v5793
        %6370 = vmatprep.subr.mxu0 %v5790
        %6371 = vmatpush1.msra.mxu0 %v5789
        %6372 = vmatprep.subr.mxu0 0.0
        %6373 = vmatpush2.msra.mxu0 0.0
        %6374 = vmatprep.subr.mxu0 0.0
        %6375 = vmatpush2.msra.mxu0 0.0
        %6376 = vmatprep.subr.mxu0 0.0
        %6377 = vmatpush2.msra.mxu0 0.0
        %6378 = vmatprep.subr.mxu0 0.0
        %6379 = vmatpush2.msra.mxu0 0.0
        %6380 = vmatprep.subr.mxu0 0.0
        %6381 = vmatpush2.msra.mxu0 0.0
        %6382 = vmatprep.subr.mxu0 0.0
        %6383 = vmatpush2.msra.mxu0 0.0
        %6384 = vmatprep.subr.mxu0 0.0
        %6385 = vmatpush2.msra.mxu0 0.0
        %6386 = vmatprep.subr.mxu0 0.0
        %6387 = vmatpush2.msra.mxu0 0.0
        %6388 = vmatprep.subr.mxu0 0.0
        %6389 = vmatpush2.msra.mxu0 0.0
        %6390 = vmatprep.subr.mxu0 0.0
        %6391 = vmatpush2.msra.mxu0 0.0
        %6392 = vmatprep.subr.mxu0 0.0
        %6393 = vmatpush2.msra.mxu0 0.0
        %6394 = vmatprep.subr.mxu0 0.0
        %6395 = vmatpush2.msra.mxu0 0.0
        %6396 = vmatprep.subr.mxu0 0.0
        %6397 = vmatpush2.msra.mxu0 0.0
        %6398 = vmatprep.subr.mxu0 0.0
        %6399 = vmatpush2.msra.mxu0 0.0
        %6400 = vmatprep.subr.mxu0 0.0
        %6401 = vmatpush2.msra.mxu0 0.0
        %6402 = vmatprep.subr.mxu0 0.0
        %6403 = vmatpush2.msra.mxu0 0.0
        %6404 = vmatprep.mubr.f32.mxu0 0.0
        %6405 = vmatmul.mubr.f32.gmra.mxu0 %v6338
        %v6406 = vpop.f32.mrf.mxu0
        %v6407 = vadd.f32 0.0, %v6406
        %v6408 = vpop.f32.mrf.mxu0
        %v6409 = vadd.f32 0.0, %v6408
        %6410 = vdwg.mxu0
        %6411 = vmatprep.subr.mxu0 0.0
        %6412 = vmatpush1.msra.mxu0 0.0
        %6413 = vmatprep.subr.mxu0 0.0
        %6414 = vmatpush1.msra.mxu0 0.0
        %6415 = vmatprep.subr.mxu0 0.0
        %6416 = vmatpush1.msra.mxu0 0.0
        %6417 = vmatprep.subr.mxu0 0.0
        %6418 = vmatpush1.msra.mxu0 0.0
        %6419 = vmatprep.subr.mxu0 0.0
        %6420 = vmatpush1.msra.mxu0 0.0
        %6421 = vmatprep.subr.mxu0 0.0
        %6422 = vmatpush1.msra.mxu0 0.0
        %6423 = vmatprep.subr.mxu0 0.0
        %6424 = vmatpush1.msra.mxu0 0.0
        %6425 = vmatprep.subr.mxu0 0.0
        %6426 = vmatpush1.msra.mxu0 0.0
        %6427 = vmatprep.subr.mxu0 0.0
        %6428 = vmatpush1.msra.mxu0 0.0
        %6429 = vmatprep.subr.mxu0 0.0
        %6430 = vmatpush1.msra.mxu0 0.0
        %6431 = vmatprep.subr.mxu0 0.0
        %6432 = vmatpush1.msra.mxu0 0.0
        %6433 = vmatprep.subr.mxu0 0.0
        %6434 = vmatpush1.msra.mxu0 0.0
        %6435 = vmatprep.subr.mxu0 %v5804
        %6436 = vmatpush1.msra.mxu0 %v5803
        %6437 = vmatprep.subr.mxu0 %v5800
        %6438 = vmatpush1.msra.mxu0 %v5799
        %6439 = vmatprep.subr.mxu0 %v5796
        %6440 = vmatpush1.msra.mxu0 %v5795
        %6441 = vmatprep.subr.mxu0 %v5792
        %6442 = vmatpush1.msra.mxu0 %v5791
        %6443 = vmatprep.subr.mxu0 0.0
        %6444 = vmatpush2.msra.mxu0 0.0
        %6445 = vmatprep.subr.mxu0 0.0
        %6446 = vmatpush2.msra.mxu0 0.0
        %6447 = vmatprep.subr.mxu0 0.0
        %6448 = vmatpush2.msra.mxu0 0.0
        %6449 = vmatprep.subr.mxu0 0.0
        %6450 = vmatpush2.msra.mxu0 0.0
        %6451 = vmatprep.subr.mxu0 0.0
        %6452 = vmatpush2.msra.mxu0 0.0
        %6453 = vmatprep.subr.mxu0 0.0
        %6454 = vmatpush2.msra.mxu0 0.0
        %6455 = vmatprep.subr.mxu0 0.0
        %6456 = vmatpush2.msra.mxu0 0.0
        %6457 = vmatprep.subr.mxu0 0.0
        %6458 = vmatpush2.msra.mxu0 0.0
        %6459 = vmatprep.subr.mxu0 0.0
        %6460 = vmatpush2.msra.mxu0 0.0
        %6461 = vmatprep.subr.mxu0 0.0
        %6462 = vmatpush2.msra.mxu0 0.0
        %6463 = vmatprep.subr.mxu0 0.0
        %6464 = vmatpush2.msra.mxu0 0.0
        %6465 = vmatprep.subr.mxu0 0.0
        %6466 = vmatpush2.msra.mxu0 0.0
        %6467 = vmatprep.subr.mxu0 0.0
        %6468 = vmatpush2.msra.mxu0 0.0
        %6469 = vmatprep.subr.mxu0 0.0
        %6470 = vmatpush2.msra.mxu0 0.0
        %6471 = vmatprep.subr.mxu0 0.0
        %6472 = vmatpush2.msra.mxu0 0.0
        %6473 = vmatprep.subr.mxu0 0.0
        %6474 = vmatpush2.msra.mxu0 0.0
        %6475 = vmatprep.mubr.f32.mxu0 0.0
        %6476 = vmatmul.mubr.f32.gmra.mxu0 %v6338
        %v6477 = vpop.f32.mrf.mxu0
        %v6478 = vadd.f32 0.0, %v6477
        %v6479 = vpop.f32.mrf.mxu0
        %v6480 = vadd.f32 0.0, %v6479
        %6481 = vdwg.mxu0
        %v6483 = vsel %vm2537, %v6336, 0
        %6485 = vmatprep.subr.mxu0 0.0
        %6486 = vmatpush1.msra.mxu0 0.0
        %6487 = vmatprep.subr.mxu0 0.0
        %6488 = vmatpush1.msra.mxu0 0.0
        %6489 = vmatprep.subr.mxu0 0.0
        %6490 = vmatpush1.msra.mxu0 0.0
        %6491 = vmatprep.subr.mxu0 0.0
        %6492 = vmatpush1.msra.mxu0 0.0
        %6493 = vmatprep.subr.mxu0 0.0
        %6494 = vmatpush1.msra.mxu0 0.0
        %6495 = vmatprep.subr.mxu0 0.0
        %6496 = vmatpush1.msra.mxu0 0.0
        %6497 = vmatprep.subr.mxu0 0.0
        %6498 = vmatpush1.msra.mxu0 0.0
        %6499 = vmatprep.subr.mxu0 0.0
        %6500 = vmatpush1.msra.mxu0 0.0
        %6501 = vmatprep.subr.mxu0 0.0
        %6502 = vmatpush1.msra.mxu0 0.0
        %6503 = vmatprep.subr.mxu0 0.0
        %6504 = vmatpush1.msra.mxu0 0.0
        %6505 = vmatprep.subr.mxu0 0.0
        %6506 = vmatpush1.msra.mxu0 0.0
        %6507 = vmatprep.subr.mxu0 0.0
        %6508 = vmatpush1.msra.mxu0 0.0
        %6509 = vmatprep.subr.mxu0 %v5802
        %6510 = vmatpush1.msra.mxu0 %v5801
        %6511 = vmatprep.subr.mxu0 %v5798
        %6512 = vmatpush1.msra.mxu0 %v5797
        %6513 = vmatprep.subr.mxu0 %v5794
        %6514 = vmatpush1.msra.mxu0 %v5793
        %6515 = vmatprep.subr.mxu0 %v5790
        %6516 = vmatpush1.msra.mxu0 %v5789
        %6517 = vmatprep.subr.mxu0 0.0
        %6518 = vmatpush2.msra.mxu0 0.0
        %6519 = vmatprep.subr.mxu0 0.0
        %6520 = vmatpush2.msra.mxu0 0.0
        %6521 = vmatprep.subr.mxu0 0.0
        %6522 = vmatpush2.msra.mxu0 0.0
        %6523 = vmatprep.subr.mxu0 0.0
        %6524 = vmatpush2.msra.mxu0 0.0
        %6525 = vmatprep.subr.mxu0 0.0
        %6526 = vmatpush2.msra.mxu0 0.0
        %6527 = vmatprep.subr.mxu0 0.0
        %6528 = vmatpush2.msra.mxu0 0.0
        %6529 = vmatprep.subr.mxu0 0.0
        %6530 = vmatpush2.msra.mxu0 0.0
        %6531 = vmatprep.subr.mxu0 0.0
        %6532 = vmatpush2.msra.mxu0 0.0
        %6533 = vmatprep.subr.mxu0 0.0
        %6534 = vmatpush2.msra.mxu0 0.0
        %6535 = vmatprep.subr.mxu0 0.0
        %6536 = vmatpush2.msra.mxu0 0.0
        %6537 = vmatprep.subr.mxu0 0.0
        %6538 = vmatpush2.msra.mxu0 0.0
        %6539 = vmatprep.subr.mxu0 0.0
        %6540 = vmatpush2.msra.mxu0 0.0
        %6541 = vmatprep.subr.mxu0 0.0
        %6542 = vmatpush2.msra.mxu0 0.0
        %6543 = vmatprep.subr.mxu0 0.0
        %6544 = vmatpush2.msra.mxu0 0.0
        %6545 = vmatprep.subr.mxu0 0.0
        %6546 = vmatpush2.msra.mxu0 0.0
        %6547 = vmatprep.subr.mxu0 0.0
        %6548 = vmatpush2.msra.mxu0 0.0
        %6549 = vmatprep.mubr.f32.mxu0 0.0
        %6550 = vmatmul.mubr.f32.gmra.mxu0 %v6483
        %v6551 = vpop.f32.mrf.mxu0
        %v6552 = vadd.f32 0.0, %v6551
        %v6553 = vpop.f32.mrf.mxu0
        %v6554 = vadd.f32 0.0, %v6553
        %6555 = vdwg.mxu0
        %6556 = vmatprep.subr.mxu0 0.0
        %6557 = vmatpush1.msra.mxu0 0.0
        %6558 = vmatprep.subr.mxu0 0.0
        %6559 = vmatpush1.msra.mxu0 0.0
        %6560 = vmatprep.subr.mxu0 0.0
        %6561 = vmatpush1.msra.mxu0 0.0
        %6562 = vmatprep.subr.mxu0 0.0
        %6563 = vmatpush1.msra.mxu0 0.0
        %6564 = vmatprep.subr.mxu0 0.0
        %6565 = vmatpush1.msra.mxu0 0.0
        %6566 = vmatprep.subr.mxu0 0.0
        %6567 = vmatpush1.msra.mxu0 0.0
        %6568 = vmatprep.subr.mxu0 0.0
        %6569 = vmatpush1.msra.mxu0 0.0
        %6570 = vmatprep.subr.mxu0 0.0
        %6571 = vmatpush1.msra.mxu0 0.0
        %6572 = vmatprep.subr.mxu0 0.0
        %6573 = vmatpush1.msra.mxu0 0.0
        %6574 = vmatprep.subr.mxu0 0.0
        %6575 = vmatpush1.msra.mxu0 0.0
        %6576 = vmatprep.subr.mxu0 0.0
        %6577 = vmatpush1.msra.mxu0 0.0
        %6578 = vmatprep.subr.mxu0 0.0
        %6579 = vmatpush1.msra.mxu0 0.0
        %6580 = vmatprep.subr.mxu0 %v5804
        %6581 = vmatpush1.msra.mxu0 %v5803
        %6582 = vmatprep.subr.mxu0 %v5800
        %6583 = vmatpush1.msra.mxu0 %v5799
        %6584 = vmatprep.subr.mxu0 %v5796
        %6585 = vmatpush1.msra.mxu0 %v5795
        %6586 = vmatprep.subr.mxu0 %v5792
        %6587 = vmatpush1.msra.mxu0 %v5791
        %6588 = vmatprep.subr.mxu0 0.0
        %6589 = vmatpush2.msra.mxu0 0.0
        %6590 = vmatprep.subr.mxu0 0.0
        %6591 = vmatpush2.msra.mxu0 0.0
        %6592 = vmatprep.subr.mxu0 0.0
        %6593 = vmatpush2.msra.mxu0 0.0
        %6594 = vmatprep.subr.mxu0 0.0
        %6595 = vmatpush2.msra.mxu0 0.0
        %6596 = vmatprep.subr.mxu0 0.0
        %6597 = vmatpush2.msra.mxu0 0.0
        %6598 = vmatprep.subr.mxu0 0.0
        %6599 = vmatpush2.msra.mxu0 0.0
        %6600 = vmatprep.subr.mxu0 0.0
        %6601 = vmatpush2.msra.mxu0 0.0
        %6602 = vmatprep.subr.mxu0 0.0
        %6603 = vmatpush2.msra.mxu0 0.0
        %6604 = vmatprep.subr.mxu0 0.0
        %6605 = vmatpush2.msra.mxu0 0.0
        %6606 = vmatprep.subr.mxu0 0.0
        %6607 = vmatpush2.msra.mxu0 0.0
        %6608 = vmatprep.subr.mxu0 0.0
        %6609 = vmatpush2.msra.mxu0 0.0
        %6610 = vmatprep.subr.mxu0 0.0
        %6611 = vmatpush2.msra.mxu0 0.0
        %6612 = vmatprep.subr.mxu0 0.0
        %6613 = vmatpush2.msra.mxu0 0.0
        %6614 = vmatprep.subr.mxu0 0.0
        %6615 = vmatpush2.msra.mxu0 0.0
        %6616 = vmatprep.subr.mxu0 0.0
        %6617 = vmatpush2.msra.mxu0 0.0
        %6618 = vmatprep.subr.mxu0 0.0
        %6619 = vmatpush2.msra.mxu0 0.0
        %6620 = vmatprep.mubr.f32.mxu0 0.0
        %6621 = vmatmul.mubr.f32.gmra.mxu0 %v6483
        %v6622 = vpop.f32.mrf.mxu0
        %v6623 = vadd.f32 0.0, %v6622
        %v6624 = vpop.f32.mrf.mxu0
        %v6625 = vadd.f32 0.0, %v6624
        %6626 = vdwg.mxu0
        %v6631 = vcombine.low %v6552, %v6554
        %v6632 = vcombine.low %v6623, %v6625
        %v6634 = vunpack.c.l.s4 1966171168
        %v6635 = vunpack.c.0.s8 %v6634
        %v6636 = vlaneseq
        %v6637 = vshrl.u32 %v6636, 7
        %v6638 = vsub.s32 %v6635, %v6637
        %v6639 = vrot.slane %v6631, %v6638
        %v6641 = vunpack.c.l.s4 1966171168
        %v6642 = vunpack.c.0.s8 %v6641
        %v6643 = vlaneseq
        %v6644 = vshrl.u32 %v6643, 7
        %v6645 = vsub.s32 %v6642, %v6644
        %v6646 = vrot.slane %v6632, %v6645
        %v6647 = vcombine.low %v6639, %v6646
        %v6649 = vunpack.c.l.s4 1966171168
        %v6650 = vunpack.c.0.s8 %v6649
        %v6651 = vlaneseq
        %v6652 = vshrl.u32 %v6651, 7
        %v6653 = vsub.s32 %v6650, %v6652
        %v6654 = vrot.slane %v6647, %v6653
        %v6656 = vmul.f32 %v5787, %v6654
        %v6661 = vcombine.low %v6407, %v6409
        %v6662 = vcombine.low %v6478, %v6480
        %v6664 = vunpack.c.l.s4 1966171168
        %v6665 = vunpack.c.0.s8 %v6664
        %v6666 = vlaneseq
        %v6667 = vshrl.u32 %v6666, 7
        %v6668 = vsub.s32 %v6665, %v6667
        %v6669 = vrot.slane %v6661, %v6668
        %v6671 = vunpack.c.l.s4 1966171168
        %v6672 = vunpack.c.0.s8 %v6671
        %v6673 = vlaneseq
        %v6674 = vshrl.u32 %v6673, 7
        %v6675 = vsub.s32 %v6672, %v6674
        %v6676 = vrot.slane %v6662, %v6675
        %v6677 = vcombine.low %v6669, %v6676
        %v6679 = vunpack.c.l.s4 1966171168
        %v6680 = vunpack.c.0.s8 %v6679
        %v6681 = vlaneseq
        %v6682 = vshrl.u32 %v6681, 7
        %v6683 = vsub.s32 %v6680, %v6682
        %v6684 = vrot.slane %v6677, %v6683
        %v6686 = vsub.f32 %v5786, %v6684
        %v6687 = vmul.f32 %v6686, %v6656
        %v6688 = vadd.f32 %v5788, %v6687
        %v6690 = vlaneseq
        %v6691 = vshrl.u32 %v6690, 7
        %v6692 = vsub.s32 0, %v6691
        %v6693 = vrot.slane %v6656, %v6692
        %v6694 = vlaneseq
        %v6695 = vshrl.u32 %v6694, 7
        %v6696 = vsub.s32 1, %v6695
        %v6697 = vrot.slane %v6656, %v6696
        %v6698 = vlaneseq
        %v6699 = vshrl.u32 %v6698, 7
        %v6700 = vsub.s32 2, %v6699
        %v6701 = vrot.slane %v6656, %v6700
        %v6702 = vlaneseq
        %v6703 = vshrl.u32 %v6702, 7
        %v6704 = vsub.s32 3, %v6703
        %v6705 = vrot.slane %v6656, %v6704
        %v6710 = vmul.f32 %v5456, %v6693
        %v6711 = vmul.f32 %v5458, %v6697
        %v6712 = vmul.f32 %v5748, %v6701
        %v6713 = vmul.f32 %v5750, %v6705
        %v6714 = vmul.f32 %v5460, %v6693
        %v6715 = vmul.f32 %v5462, %v6697
        %v6716 = vmul.f32 %v5752, %v6701
        %v6717 = vmul.f32 %v5754, %v6705
        %v6718 = vmul.f32 %v5466, %v6693
        %v6719 = vmul.f32 %v5468, %v6697
        %v6720 = vmul.f32 %v5758, %v6701
        %v6721 = vmul.f32 %v5760, %v6705
        %v6722 = vmul.f32 %v5470, %v6693
        %v6723 = vmul.f32 %v5472, %v6697
        %v6724 = vmul.f32 %v5762, %v6701
        %v6725 = vmul.f32 %v5764, %v6705
        %v6726 = vmul.f32 %v5476, %v6693
        %v6727 = vmul.f32 %v5478, %v6697
        %v6728 = vmul.f32 %v5768, %v6701
        %v6729 = vmul.f32 %v5770, %v6705
        %v6730 = vmul.f32 %v5480, %v6693
        %v6731 = vmul.f32 %v5482, %v6697
        %v6732 = vmul.f32 %v5772, %v6701
        %v6733 = vmul.f32 %v5774, %v6705
        %v6734 = vmul.f32 %v5486, %v6693
        %v6735 = vmul.f32 %v5488, %v6697
        %v6736 = vmul.f32 %v5778, %v6701
        %v6737 = vmul.f32 %v5780, %v6705
        %v6738 = vmul.f32 %v5490, %v6693
        %v6739 = vmul.f32 %v5492, %v6697
        %v6740 = vmul.f32 %v5782, %v6701
        %v6741 = vmul.f32 %v5784, %v6705
        %v6743 = vlaneseq
        %v6744 = vshrl.u32 %v6743, 7
        %v6745 = vsub.s32 0, %v6744
        %v6746 = vrot.slane %v6688, %v6745
        %v6747 = vlaneseq
        %v6748 = vshrl.u32 %v6747, 7
        %v6749 = vsub.s32 1, %v6748
        %v6750 = vrot.slane %v6688, %v6749
        %v6751 = vlaneseq
        %v6752 = vshrl.u32 %v6751, 7
        %v6753 = vsub.s32 2, %v6752
        %v6754 = vrot.slane %v6688, %v6753
        %v6755 = vlaneseq
        %v6756 = vshrl.u32 %v6755, 7
        %v6757 = vsub.s32 3, %v6756
        %v6758 = vrot.slane %v6688, %v6757
        %v6763 = vadd.f32 %v6710, %v6746
        %v6764 = vadd.f32 %v6711, %v6750
        %v6765 = vadd.f32 %v6712, %v6754
        %v6766 = vadd.f32 %v6713, %v6758
        %v6767 = vadd.f32 %v6714, %v6746
        %v6768 = vadd.f32 %v6715, %v6750
        %v6769 = vadd.f32 %v6716, %v6754
        %v6770 = vadd.f32 %v6717, %v6758
        %v6771 = vadd.f32 %v6718, %v6746
        %v6772 = vadd.f32 %v6719, %v6750
        %v6773 = vadd.f32 %v6720, %v6754
        %v6774 = vadd.f32 %v6721, %v6758
        %v6775 = vadd.f32 %v6722, %v6746
        %v6776 = vadd.f32 %v6723, %v6750
        %v6777 = vadd.f32 %v6724, %v6754
        %v6778 = vadd.f32 %v6725, %v6758
        %v6779 = vadd.f32 %v6726, %v6746
        %v6780 = vadd.f32 %v6727, %v6750
        %v6781 = vadd.f32 %v6728, %v6754
        %v6782 = vadd.f32 %v6729, %v6758
        %v6783 = vadd.f32 %v6730, %v6746
        %v6784 = vadd.f32 %v6731, %v6750
        %v6785 = vadd.f32 %v6732, %v6754
        %v6786 = vadd.f32 %v6733, %v6758
        %v6787 = vadd.f32 %v6734, %v6746
        %v6788 = vadd.f32 %v6735, %v6750
        %v6789 = vadd.f32 %v6736, %v6754
        %v6790 = vadd.f32 %v6737, %v6758
        %v6791 = vadd.f32 %v6738, %v6746
        %v6792 = vadd.f32 %v6739, %v6750
        %v6793 = vadd.f32 %v6740, %v6754
        %v6794 = vadd.f32 %v6741, %v6758
        %vm6795 = vcmp.ge.f32.partialorder %v6763, 0.0
        %vm6796 = vcmp.ge.f32.partialorder %v6764, 0.0
        %vm6797 = vcmp.ge.f32.partialorder %v6765, 0.0
        %vm6798 = vcmp.ge.f32.partialorder %v6766, 0.0
        %vm6799 = vcmp.ge.f32.partialorder %v6767, 0.0
        %vm6800 = vcmp.ge.f32.partialorder %v6768, 0.0
        %vm6801 = vcmp.ge.f32.partialorder %v6769, 0.0
        %vm6802 = vcmp.ge.f32.partialorder %v6770, 0.0
        %vm6803 = vcmp.ge.f32.partialorder %v6771, 0.0
        %vm6804 = vcmp.ge.f32.partialorder %v6772, 0.0
        %vm6805 = vcmp.ge.f32.partialorder %v6773, 0.0
        %vm6806 = vcmp.ge.f32.partialorder %v6774, 0.0
        %vm6807 = vcmp.ge.f32.partialorder %v6775, 0.0
        %vm6808 = vcmp.ge.f32.partialorder %v6776, 0.0
        %vm6809 = vcmp.ge.f32.partialorder %v6777, 0.0
        %vm6810 = vcmp.ge.f32.partialorder %v6778, 0.0
        %vm6811 = vcmp.ge.f32.partialorder %v6779, 0.0
        %vm6812 = vcmp.ge.f32.partialorder %v6780, 0.0
        %vm6813 = vcmp.ge.f32.partialorder %v6781, 0.0
        %vm6814 = vcmp.ge.f32.partialorder %v6782, 0.0
        %vm6815 = vcmp.ge.f32.partialorder %v6783, 0.0
        %vm6816 = vcmp.ge.f32.partialorder %v6784, 0.0
        %vm6817 = vcmp.ge.f32.partialorder %v6785, 0.0
        %vm6818 = vcmp.ge.f32.partialorder %v6786, 0.0
        %vm6819 = vcmp.ge.f32.partialorder %v6787, 0.0
        %vm6820 = vcmp.ge.f32.partialorder %v6788, 0.0
        %vm6821 = vcmp.ge.f32.partialorder %v6789, 0.0
        %vm6822 = vcmp.ge.f32.partialorder %v6790, 0.0
        %vm6823 = vcmp.ge.f32.partialorder %v6791, 0.0
        %vm6824 = vcmp.ge.f32.partialorder %v6792, 0.0
        %vm6825 = vcmp.ge.f32.partialorder %v6793, 0.0
        %vm6826 = vcmp.ge.f32.partialorder %v6794, 0.0
        %v6827 = vmul.f32 %v6763, 0.01
        %v6828 = vmul.f32 %v6764, 0.01
        %v6829 = vmul.f32 %v6765, 0.01
        %v6830 = vmul.f32 %v6766, 0.01
        %v6831 = vmul.f32 %v6767, 0.01
        %v6832 = vmul.f32 %v6768, 0.01
        %v6833 = vmul.f32 %v6769, 0.01
        %v6834 = vmul.f32 %v6770, 0.01
        %v6835 = vmul.f32 %v6771, 0.01
        %v6836 = vmul.f32 %v6772, 0.01
        %v6837 = vmul.f32 %v6773, 0.01
        %v6838 = vmul.f32 %v6774, 0.01
        %v6839 = vmul.f32 %v6775, 0.01
        %v6840 = vmul.f32 %v6776, 0.01
        %v6841 = vmul.f32 %v6777, 0.01
        %v6842 = vmul.f32 %v6778, 0.01
        %v6843 = vmul.f32 %v6779, 0.01
        %v6844 = vmul.f32 %v6780, 0.01
        %v6845 = vmul.f32 %v6781, 0.01
        %v6846 = vmul.f32 %v6782, 0.01
        %v6847 = vmul.f32 %v6783, 0.01
        %v6848 = vmul.f32 %v6784, 0.01
        %v6849 = vmul.f32 %v6785, 0.01
        %v6850 = vmul.f32 %v6786, 0.01
        %v6851 = vmul.f32 %v6787, 0.01
        %v6852 = vmul.f32 %v6788, 0.01
        %v6853 = vmul.f32 %v6789, 0.01
        %v6854 = vmul.f32 %v6790, 0.01
        %v6855 = vmul.f32 %v6791, 0.01
        %v6856 = vmul.f32 %v6792, 0.01
        %v6857 = vmul.f32 %v6793, 0.01
        %v6858 = vmul.f32 %v6794, 0.01
        %v6859 = vsel %vm6795, %v6763, %v6827
        %v6860 = vsel %vm6796, %v6764, %v6828
        %v6861 = vsel %vm6797, %v6765, %v6829
        %v6862 = vsel %vm6798, %v6766, %v6830
        %v6863 = vsel %vm6799, %v6767, %v6831
        %v6864 = vsel %vm6800, %v6768, %v6832
        %v6865 = vsel %vm6801, %v6769, %v6833
        %v6866 = vsel %vm6802, %v6770, %v6834
        %v6867 = vsel %vm6803, %v6771, %v6835
        %v6868 = vsel %vm6804, %v6772, %v6836
        %v6869 = vsel %vm6805, %v6773, %v6837
        %v6870 = vsel %vm6806, %v6774, %v6838
        %v6871 = vsel %vm6807, %v6775, %v6839
        %v6872 = vsel %vm6808, %v6776, %v6840
        %v6873 = vsel %vm6809, %v6777, %v6841
        %v6874 = vsel %vm6810, %v6778, %v6842
        %v6875 = vsel %vm6811, %v6779, %v6843
        %v6876 = vsel %vm6812, %v6780, %v6844
        %v6877 = vsel %vm6813, %v6781, %v6845
        %v6878 = vsel %vm6814, %v6782, %v6846
        %v6879 = vsel %vm6815, %v6783, %v6847
        %v6880 = vsel %vm6816, %v6784, %v6848
        %v6881 = vsel %vm6817, %v6785, %v6849
        %v6882 = vsel %vm6818, %v6786, %v6850
        %v6883 = vsel %vm6819, %v6787, %v6851
        %v6884 = vsel %vm6820, %v6788, %v6852
        %v6885 = vsel %vm6821, %v6789, %v6853
        %v6886 = vsel %vm6822, %v6790, %v6854
        %v6887 = vsel %vm6823, %v6791, %v6855
        %v6888 = vsel %vm6824, %v6792, %v6856
        %v6889 = vsel %vm6825, %v6793, %v6857
        %v6890 = vsel %vm6826, %v6794, %v6858
        %v6891 = vpack.c.bf16 %v6863, %v6859
        %v6892 = vpack.c.bf16 %v6864, %v6860
        %v6893 = vpack.c.bf16 %v6865, %v6861
        %v6894 = vpack.c.bf16 %v6866, %v6862
        %v6895 = vpack.c.bf16 %v6871, %v6867
        %v6896 = vpack.c.bf16 %v6872, %v6868
        %v6897 = vpack.c.bf16 %v6873, %v6869
        %v6898 = vpack.c.bf16 %v6874, %v6870
        %v6899 = vpack.c.bf16 %v6879, %v6875
        %v6900 = vpack.c.bf16 %v6880, %v6876
        %v6901 = vpack.c.bf16 %v6881, %v6877
        %v6902 = vpack.c.bf16 %v6882, %v6878
        %v6903 = vpack.c.bf16 %v6887, %v6883
        %v6904 = vpack.c.bf16 %v6888, %v6884
        %v6905 = vpack.c.bf16 %v6889, %v6885
        %v6906 = vpack.c.bf16 %v6890, %v6886
        %v6907 = vld [vmem:[#allocation17] sm:$0xff]
        %v6908 = vld [vmem:[#allocation17 + $0x8] sm:$0xff]
        %v6909 = vld [vmem:[#allocation17 + $0x10] sm:$0xff]
        %v6910 = vld [vmem:[#allocation17 + $0x18] sm:$0xff]
        %v6911 = vld [vmem:[#allocation17 + $0x20] sm:$0xff]
        %v6912 = vld [vmem:[#allocation17 + $0x28] sm:$0xff]
        %v6913 = vld [vmem:[#allocation17 + $0x30] sm:$0xff]
        %v6914 = vld [vmem:[#allocation17 + $0x38] sm:$0xff]
        %v6915 = vld [vmem:[#allocation17 + $0x40] sm:$0xff]
        %v6916 = vld [vmem:[#allocation17 + $0x48] sm:$0xff]
        %v6917 = vld [vmem:[#allocation17 + $0x50] sm:$0xff]
        %v6918 = vld [vmem:[#allocation17 + $0x58] sm:$0xff]
        %v6919 = vld [vmem:[#allocation17 + $0x60] sm:$0xff]
        %v6920 = vld [vmem:[#allocation17 + $0x68] sm:$0xff]
        %v6921 = vld [vmem:[#allocation17 + $0x70] sm:$0xff]
        %v6922 = vld [vmem:[#allocation17 + $0x78] sm:$0xff]
        %v6923 = vld [vmem:[#allocation17 + $0x80] sm:$0xff]
        %v6924 = vld [vmem:[#allocation17 + $0x88] sm:$0xff]
        %v6925 = vld [vmem:[#allocation17 + $0x90] sm:$0xff]
        %v6926 = vld [vmem:[#allocation17 + $0x98] sm:$0xff]
        %v6927 = vld [vmem:[#allocation17 + $0xa0] sm:$0xff]
        %v6928 = vld [vmem:[#allocation17 + $0xa8] sm:$0xff]
        %v6929 = vld [vmem:[#allocation17 + $0xb0] sm:$0xff]
        %v6930 = vld [vmem:[#allocation17 + $0xb8] sm:$0xff]
        %v6931 = vld [vmem:[#allocation17 + $0xc0] sm:$0xff]
        %v6932 = vld [vmem:[#allocation17 + $0xc8] sm:$0xff]
        %v6933 = vld [vmem:[#allocation17 + $0xd0] sm:$0xff]
        %v6934 = vld [vmem:[#allocation17 + $0xd8] sm:$0xff]
        %v6935 = vld [vmem:[#allocation17 + $0xe0] sm:$0xff]
        %v6936 = vld [vmem:[#allocation17 + $0xe8] sm:$0xff]
        %v6937 = vld [vmem:[#allocation17 + $0xf0] sm:$0xff]
        %v6938 = vld [vmem:[#allocation17 + $0xf8] sm:$0xff]
        %v6939 = vld [vmem:[#allocation17 + $0x100] sm:$0xff]
        %v6940 = vld [vmem:[#allocation17 + $0x108] sm:$0xff]
        %v6941 = vld [vmem:[#allocation17 + $0x110] sm:$0xff]
        %v6942 = vld [vmem:[#allocation17 + $0x118] sm:$0xff]
        %v6943 = vld [vmem:[#allocation17 + $0x120] sm:$0xff]
        %v6944 = vld [vmem:[#allocation17 + $0x128] sm:$0xff]
        %v6945 = vld [vmem:[#allocation17 + $0x130] sm:$0xff]
        %v6946 = vld [vmem:[#allocation17 + $0x138] sm:$0xff]
        %v6947 = vld [vmem:[#allocation17 + $0x140] sm:$0xff]
        %v6948 = vld [vmem:[#allocation17 + $0x148] sm:$0xff]
        %v6949 = vld [vmem:[#allocation17 + $0x150] sm:$0xff]
        %v6950 = vld [vmem:[#allocation17 + $0x158] sm:$0xff]
        %v6951 = vld [vmem:[#allocation17 + $0x160] sm:$0xff]
        %v6952 = vld [vmem:[#allocation17 + $0x168] sm:$0xff]
        %v6953 = vld [vmem:[#allocation17 + $0x170] sm:$0xff]
        %v6954 = vld [vmem:[#allocation17 + $0x178] sm:$0xff]
        %v6955 = vld [vmem:[#allocation17 + $0x180] sm:$0xff]
        %v6956 = vld [vmem:[#allocation17 + $0x188] sm:$0xff]
        %v6957 = vld [vmem:[#allocation17 + $0x190] sm:$0xff]
        %v6958 = vld [vmem:[#allocation17 + $0x198] sm:$0xff]
        %v6959 = vld [vmem:[#allocation17 + $0x1a0] sm:$0xff]
        %v6960 = vld [vmem:[#allocation17 + $0x1a8] sm:$0xff]
        %v6961 = vld [vmem:[#allocation17 + $0x1b0] sm:$0xff]
        %v6962 = vld [vmem:[#allocation17 + $0x1b8] sm:$0xff]
        %v6963 = vld [vmem:[#allocation17 + $0x1c0] sm:$0xff]
        %v6964 = vld [vmem:[#allocation17 + $0x1c8] sm:$0xff]
        %v6965 = vld [vmem:[#allocation17 + $0x1d0] sm:$0xff]
        %v6966 = vld [vmem:[#allocation17 + $0x1d8] sm:$0xff]
        %v6967 = vld [vmem:[#allocation17 + $0x1e0] sm:$0xff]
        %v6968 = vld [vmem:[#allocation17 + $0x1e8] sm:$0xff]
        %v6969 = vld [vmem:[#allocation17 + $0x1f0] sm:$0xff]
        %v6970 = vld [vmem:[#allocation17 + $0x1f8] sm:$0xff]
        %v7035 = vunpack.c.l.b16 %v6907
        %v7036 = vunpack.c.h.b16 %v6907
        %v7037 = vunpack.c.l.b16 %v6908
        %v7038 = vunpack.c.h.b16 %v6908
        %v7039 = vunpack.c.l.b16 %v6909
        %v7040 = vunpack.c.h.b16 %v6909
        %v7041 = vunpack.c.l.b16 %v6910
        %v7042 = vunpack.c.h.b16 %v6910
        %v7043 = vunpack.c.l.b16 %v6911
        %v7044 = vunpack.c.h.b16 %v6911
        %v7045 = vunpack.c.l.b16 %v6912
        %v7046 = vunpack.c.h.b16 %v6912
        %v7047 = vunpack.c.l.b16 %v6913
        %v7048 = vunpack.c.h.b16 %v6913
        %v7049 = vunpack.c.l.b16 %v6914
        %v7050 = vunpack.c.h.b16 %v6914
        %v7051 = vunpack.c.l.b16 %v6915
        %v7052 = vunpack.c.h.b16 %v6915
        %v7053 = vunpack.c.l.b16 %v6916
        %v7054 = vunpack.c.h.b16 %v6916
        %v7055 = vunpack.c.l.b16 %v6917
        %v7056 = vunpack.c.h.b16 %v6917
        %v7057 = vunpack.c.l.b16 %v6918
        %v7058 = vunpack.c.h.b16 %v6918
        %v7059 = vunpack.c.l.b16 %v6919
        %v7060 = vunpack.c.h.b16 %v6919
        %v7061 = vunpack.c.l.b16 %v6920
        %v7062 = vunpack.c.h.b16 %v6920
        %v7063 = vunpack.c.l.b16 %v6921
        %v7064 = vunpack.c.h.b16 %v6921
        %v7065 = vunpack.c.l.b16 %v6922
        %v7066 = vunpack.c.h.b16 %v6922
        %v7067 = vunpack.c.l.b16 %v6923
        %v7068 = vunpack.c.h.b16 %v6923
        %v7069 = vunpack.c.l.b16 %v6924
        %v7070 = vunpack.c.h.b16 %v6924
        %v7071 = vunpack.c.l.b16 %v6925
        %v7072 = vunpack.c.h.b16 %v6925
        %v7073 = vunpack.c.l.b16 %v6926
        %v7074 = vunpack.c.h.b16 %v6926
        %v7075 = vunpack.c.l.b16 %v6927
        %v7076 = vunpack.c.h.b16 %v6927
        %v7077 = vunpack.c.l.b16 %v6928
        %v7078 = vunpack.c.h.b16 %v6928
        %v7079 = vunpack.c.l.b16 %v6929
        %v7080 = vunpack.c.h.b16 %v6929
        %v7081 = vunpack.c.l.b16 %v6930
        %v7082 = vunpack.c.h.b16 %v6930
        %v7083 = vunpack.c.l.b16 %v6931
        %v7084 = vunpack.c.h.b16 %v6931
        %v7085 = vunpack.c.l.b16 %v6932
        %v7086 = vunpack.c.h.b16 %v6932
        %v7087 = vunpack.c.l.b16 %v6933
        %v7088 = vunpack.c.h.b16 %v6933
        %v7089 = vunpack.c.l.b16 %v6934
        %v7090 = vunpack.c.h.b16 %v6934
        %v7091 = vunpack.c.l.b16 %v6935
        %v7092 = vunpack.c.h.b16 %v6935
        %v7093 = vunpack.c.l.b16 %v6936
        %v7094 = vunpack.c.h.b16 %v6936
        %v7095 = vunpack.c.l.b16 %v6937
        %v7096 = vunpack.c.h.b16 %v6937
        %v7097 = vunpack.c.l.b16 %v6938
        %v7098 = vunpack.c.h.b16 %v6938
        %v7099 = vunpack.c.l.b16 %v6939
        %v7100 = vunpack.c.h.b16 %v6939
        %v7101 = vunpack.c.l.b16 %v6940
        %v7102 = vunpack.c.h.b16 %v6940
        %v7103 = vunpack.c.l.b16 %v6941
        %v7104 = vunpack.c.h.b16 %v6941
        %v7105 = vunpack.c.l.b16 %v6942
        %v7106 = vunpack.c.h.b16 %v6942
        %v7107 = vunpack.c.l.b16 %v6943
        %v7108 = vunpack.c.h.b16 %v6943
        %v7109 = vunpack.c.l.b16 %v6944
        %v7110 = vunpack.c.h.b16 %v6944
        %v7111 = vunpack.c.l.b16 %v6945
        %v7112 = vunpack.c.h.b16 %v6945
        %v7113 = vunpack.c.l.b16 %v6946
        %v7114 = vunpack.c.h.b16 %v6946
        %v7115 = vunpack.c.l.b16 %v6947
        %v7116 = vunpack.c.h.b16 %v6947
        %v7117 = vunpack.c.l.b16 %v6948
        %v7118 = vunpack.c.h.b16 %v6948
        %v7119 = vunpack.c.l.b16 %v6949
        %v7120 = vunpack.c.h.b16 %v6949
        %v7121 = vunpack.c.l.b16 %v6950
        %v7122 = vunpack.c.h.b16 %v6950
        %v7123 = vunpack.c.l.b16 %v6951
        %v7124 = vunpack.c.h.b16 %v6951
        %v7125 = vunpack.c.l.b16 %v6952
        %v7126 = vunpack.c.h.b16 %v6952
        %v7127 = vunpack.c.l.b16 %v6953
        %v7128 = vunpack.c.h.b16 %v6953
        %v7129 = vunpack.c.l.b16 %v6954
        %v7130 = vunpack.c.h.b16 %v6954
        %v7131 = vunpack.c.l.b16 %v6955
        %v7132 = vunpack.c.h.b16 %v6955
        %v7133 = vunpack.c.l.b16 %v6956
        %v7134 = vunpack.c.h.b16 %v6956
        %v7135 = vunpack.c.l.b16 %v6957
        %v7136 = vunpack.c.h.b16 %v6957
        %v7137 = vunpack.c.l.b16 %v6958
        %v7138 = vunpack.c.h.b16 %v6958
        %v7139 = vunpack.c.l.b16 %v6959
        %v7140 = vunpack.c.h.b16 %v6959
        %v7141 = vunpack.c.l.b16 %v6960
        %v7142 = vunpack.c.h.b16 %v6960
        %v7143 = vunpack.c.l.b16 %v6961
        %v7144 = vunpack.c.h.b16 %v6961
        %v7145 = vunpack.c.l.b16 %v6962
        %v7146 = vunpack.c.h.b16 %v6962
        %v7147 = vunpack.c.l.b16 %v6963
        %v7148 = vunpack.c.h.b16 %v6963
        %v7149 = vunpack.c.l.b16 %v6964
        %v7150 = vunpack.c.h.b16 %v6964
        %v7151 = vunpack.c.l.b16 %v6965
        %v7152 = vunpack.c.h.b16 %v6965
        %v7153 = vunpack.c.l.b16 %v6966
        %v7154 = vunpack.c.h.b16 %v6966
        %v7155 = vunpack.c.l.b16 %v6967
        %v7156 = vunpack.c.h.b16 %v6967
        %v7157 = vunpack.c.l.b16 %v6968
        %v7158 = vunpack.c.h.b16 %v6968
        %v7159 = vunpack.c.l.b16 %v6969
        %v7160 = vunpack.c.h.b16 %v6969
        %v7161 = vunpack.c.l.b16 %v6970
        %v7162 = vunpack.c.h.b16 %v6970
        %v7163 = vpack.c.b16 %v7037, %v7035
        %v7164 = vpack.c.b16 %v7038, %v7036
        %v7165 = vpack.c.b16 %v7041, %v7039
        %v7166 = vpack.c.b16 %v7042, %v7040
        %v7167 = vpack.c.b16 %v7045, %v7043
        %v7168 = vpack.c.b16 %v7046, %v7044
        %v7169 = vpack.c.b16 %v7049, %v7047
        %v7170 = vpack.c.b16 %v7050, %v7048
        %v7171 = vpack.c.b16 %v7053, %v7051
        %v7172 = vpack.c.b16 %v7054, %v7052
        %v7173 = vpack.c.b16 %v7057, %v7055
        %v7174 = vpack.c.b16 %v7058, %v7056
        %v7175 = vpack.c.b16 %v7061, %v7059
        %v7176 = vpack.c.b16 %v7062, %v7060
        %v7177 = vpack.c.b16 %v7065, %v7063
        %v7178 = vpack.c.b16 %v7066, %v7064
        %v7179 = vpack.c.b16 %v7069, %v7067
        %v7180 = vpack.c.b16 %v7070, %v7068
        %v7181 = vpack.c.b16 %v7073, %v7071
        %v7182 = vpack.c.b16 %v7074, %v7072
        %v7183 = vpack.c.b16 %v7077, %v7075
        %v7184 = vpack.c.b16 %v7078, %v7076
        %v7185 = vpack.c.b16 %v7081, %v7079
        %v7186 = vpack.c.b16 %v7082, %v7080
        %v7187 = vpack.c.b16 %v7085, %v7083
        %v7188 = vpack.c.b16 %v7086, %v7084
        %v7189 = vpack.c.b16 %v7089, %v7087
        %v7190 = vpack.c.b16 %v7090, %v7088
        %v7191 = vpack.c.b16 %v7093, %v7091
        %v7192 = vpack.c.b16 %v7094, %v7092
        %v7193 = vpack.c.b16 %v7097, %v7095
        %v7194 = vpack.c.b16 %v7098, %v7096
        %v7195 = vpack.c.b16 %v7101, %v7099
        %v7196 = vpack.c.b16 %v7102, %v7100
        %v7197 = vpack.c.b16 %v7105, %v7103
        %v7198 = vpack.c.b16 %v7106, %v7104
        %v7199 = vpack.c.b16 %v7109, %v7107
        %v7200 = vpack.c.b16 %v7110, %v7108
        %v7201 = vpack.c.b16 %v7113, %v7111
        %v7202 = vpack.c.b16 %v7114, %v7112
        %v7203 = vpack.c.b16 %v7117, %v7115
        %v7204 = vpack.c.b16 %v7118, %v7116
        %v7205 = vpack.c.b16 %v7121, %v7119
        %v7206 = vpack.c.b16 %v7122, %v7120
        %v7207 = vpack.c.b16 %v7125, %v7123
        %v7208 = vpack.c.b16 %v7126, %v7124
        %v7209 = vpack.c.b16 %v7129, %v7127
        %v7210 = vpack.c.b16 %v7130, %v7128
        %v7211 = vpack.c.b16 %v7133, %v7131
        %v7212 = vpack.c.b16 %v7134, %v7132
        %v7213 = vpack.c.b16 %v7137, %v7135
        %v7214 = vpack.c.b16 %v7138, %v7136
        %v7215 = vpack.c.b16 %v7141, %v7139
        %v7216 = vpack.c.b16 %v7142, %v7140
        %v7217 = vpack.c.b16 %v7145, %v7143
        %v7218 = vpack.c.b16 %v7146, %v7144
        %v7219 = vpack.c.b16 %v7149, %v7147
        %v7220 = vpack.c.b16 %v7150, %v7148
        %v7221 = vpack.c.b16 %v7153, %v7151
        %v7222 = vpack.c.b16 %v7154, %v7152
        %v7223 = vpack.c.b16 %v7157, %v7155
        %v7224 = vpack.c.b16 %v7158, %v7156
        %v7225 = vpack.c.b16 %v7161, %v7159
        %v7226 = vpack.c.b16 %v7162, %v7160
        %7291 = vmatprep.subr.bf16.mxu0 %v7178
        %7292 = vmatpush1.bf16.msra.mxu0 %v7177
        %7293 = vmatprep.subr.bf16.mxu0 %v7176
        %7294 = vmatpush1.bf16.msra.mxu0 %v7175
        %7295 = vmatprep.subr.bf16.mxu0 %v7174
        %7296 = vmatpush1.bf16.msra.mxu0 %v7173
        %7297 = vmatprep.subr.bf16.mxu0 %v7172
        %7298 = vmatpush1.bf16.msra.mxu0 %v7171
        %7299 = vmatprep.subr.bf16.mxu0 %v7170
        %7300 = vmatpush1.bf16.msra.mxu0 %v7169
        %7301 = vmatprep.subr.bf16.mxu0 %v7168
        %7302 = vmatpush1.bf16.msra.mxu0 %v7167
        %7303 = vmatprep.subr.bf16.mxu0 %v7166
        %7304 = vmatpush1.bf16.msra.mxu0 %v7165
        %7305 = vmatprep.subr.bf16.mxu0 %v7164
        %7306 = vmatpush1.bf16.msra.mxu0 %v7163
        %7307 = vmatprep.subr.bf16.mxu0 %v7194
        %7308 = vmatpush2.bf16.msra.mxu0 %v7193
        %7309 = vmatprep.subr.bf16.mxu0 %v7192
        %7310 = vmatpush2.bf16.msra.mxu0 %v7191
        %7311 = vmatprep.subr.bf16.mxu0 %v7190
        %7312 = vmatpush2.bf16.msra.mxu0 %v7189
        %7313 = vmatprep.subr.bf16.mxu0 %v7188
        %7314 = vmatpush2.bf16.msra.mxu0 %v7187
        %7315 = vmatprep.subr.bf16.mxu0 %v7186
        %7316 = vmatpush2.bf16.msra.mxu0 %v7185
        %7317 = vmatprep.subr.bf16.mxu0 %v7184
        %7318 = vmatpush2.bf16.msra.mxu0 %v7183
        %7319 = vmatprep.subr.bf16.mxu0 %v7182
        %7320 = vmatpush2.bf16.msra.mxu0 %v7181
        %7321 = vmatprep.subr.bf16.mxu0 %v7180
        %7322 = vmatpush2.bf16.msra.mxu0 %v7179
        %7323 = vmatprep.mubr.bf16.mxu0 %v6892
        %7324 = vmatmul.mubr.bf16.gmra.mxu0 %v6891
        %v7325 = vpop.f32.mrf.mxu0
        %v7326 = vadd.f32 0.0, %v7325
        %v7327 = vpop.f32.mrf.mxu0
        %v7328 = vadd.f32 0.0, %v7327
        %v7329 = vpop.f32.mrf.mxu0
        %v7330 = vadd.f32 0.0, %v7329
        %v7331 = vpop.f32.mrf.mxu0
        %v7332 = vadd.f32 0.0, %v7331
        %7333 = vmatprep.mubr.bf16.mxu0 %v6896
        %7334 = vmatmul.mubr.bf16.gmra.mxu0 %v6895
        %v7335 = vpop.f32.mrf.mxu0
        %v7336 = vadd.f32 0.0, %v7335
        %v7337 = vpop.f32.mrf.mxu0
        %v7338 = vadd.f32 0.0, %v7337
        %v7339 = vpop.f32.mrf.mxu0
        %v7340 = vadd.f32 0.0, %v7339
        %v7341 = vpop.f32.mrf.mxu0
        %v7342 = vadd.f32 0.0, %v7341
        %7343 = vmatprep.mubr.bf16.mxu0 %v6900
        %7344 = vmatmul.mubr.bf16.gmra.mxu0 %v6899
        %v7345 = vpop.f32.mrf.mxu0
        %v7346 = vadd.f32 0.0, %v7345
        %v7347 = vpop.f32.mrf.mxu0
        %v7348 = vadd.f32 0.0, %v7347
        %v7349 = vpop.f32.mrf.mxu0
        %v7350 = vadd.f32 0.0, %v7349
        %v7351 = vpop.f32.mrf.mxu0
        %v7352 = vadd.f32 0.0, %v7351
        %7353 = vmatprep.mubr.bf16.mxu0 %v6904
        %7354 = vmatmul.mubr.bf16.gmra.mxu0 %v6903
        %v7355 = vpop.f32.mrf.mxu0
        %v7356 = vadd.f32 0.0, %v7355
        %v7357 = vpop.f32.mrf.mxu0
        %v7358 = vadd.f32 0.0, %v7357
        %v7359 = vpop.f32.mrf.mxu0
        %v7360 = vadd.f32 0.0, %v7359
        %v7361 = vpop.f32.mrf.mxu0
        %v7362 = vadd.f32 0.0, %v7361
        %7363 = vdwg.mxu0
        %7364 = vmatprep.subr.bf16.mxu0 %v7210
        %7365 = vmatpush1.bf16.msra.mxu0 %v7209
        %7366 = vmatprep.subr.bf16.mxu0 %v7208
        %7367 = vmatpush1.bf16.msra.mxu0 %v7207
        %7368 = vmatprep.subr.bf16.mxu0 %v7206
        %7369 = vmatpush1.bf16.msra.mxu0 %v7205
        %7370 = vmatprep.subr.bf16.mxu0 %v7204
        %7371 = vmatpush1.bf16.msra.mxu0 %v7203
        %7372 = vmatprep.subr.bf16.mxu0 %v7202
        %7373 = vmatpush1.bf16.msra.mxu0 %v7201
        %7374 = vmatprep.subr.bf16.mxu0 %v7200
        %7375 = vmatpush1.bf16.msra.mxu0 %v7199
        %7376 = vmatprep.subr.bf16.mxu0 %v7198
        %7377 = vmatpush1.bf16.msra.mxu0 %v7197
        %7378 = vmatprep.subr.bf16.mxu0 %v7196
        %7379 = vmatpush1.bf16.msra.mxu0 %v7195
        %7380 = vmatprep.subr.bf16.mxu0 %v7226
        %7381 = vmatpush2.bf16.msra.mxu0 %v7225
        %7382 = vmatprep.subr.bf16.mxu0 %v7224
        %7383 = vmatpush2.bf16.msra.mxu0 %v7223
        %7384 = vmatprep.subr.bf16.mxu0 %v7222
        %7385 = vmatpush2.bf16.msra.mxu0 %v7221
        %7386 = vmatprep.subr.bf16.mxu0 %v7220
        %7387 = vmatpush2.bf16.msra.mxu0 %v7219
        %7388 = vmatprep.subr.bf16.mxu0 %v7218
        %7389 = vmatpush2.bf16.msra.mxu0 %v7217
        %7390 = vmatprep.subr.bf16.mxu0 %v7216
        %7391 = vmatpush2.bf16.msra.mxu0 %v7215
        %7392 = vmatprep.subr.bf16.mxu0 %v7214
        %7393 = vmatpush2.bf16.msra.mxu0 %v7213
        %7394 = vmatprep.subr.bf16.mxu0 %v7212
        %7395 = vmatpush2.bf16.msra.mxu0 %v7211
        %7396 = vmatprep.mubr.bf16.mxu0 %v6894
        %7397 = vmatmul.mubr.bf16.gmra.mxu0 %v6893
        %v7398 = vpop.f32.mrf.mxu0
        %v7399 = vadd.f32 %v7326, %v7398
        %v7400 = vpop.f32.mrf.mxu0
        %v7401 = vadd.f32 %v7328, %v7400
        %v7402 = vpop.f32.mrf.mxu0
        %v7403 = vadd.f32 %v7330, %v7402
        %v7404 = vpop.f32.mrf.mxu0
        %v7405 = vadd.f32 %v7332, %v7404
        %7406 = vmatprep.mubr.bf16.mxu0 %v6898
        %7407 = vmatmul.mubr.bf16.gmra.mxu0 %v6897
        %v7408 = vpop.f32.mrf.mxu0
        %v7409 = vadd.f32 %v7336, %v7408
        %v7410 = vpop.f32.mrf.mxu0
        %v7411 = vadd.f32 %v7338, %v7410
        %v7412 = vpop.f32.mrf.mxu0
        %v7413 = vadd.f32 %v7340, %v7412
        %v7414 = vpop.f32.mrf.mxu0
        %v7415 = vadd.f32 %v7342, %v7414
        %7416 = vmatprep.mubr.bf16.mxu0 %v6902
        %7417 = vmatmul.mubr.bf16.gmra.mxu0 %v6901
        %v7418 = vpop.f32.mrf.mxu0
        %v7419 = vadd.f32 %v7346, %v7418
        %v7420 = vpop.f32.mrf.mxu0
        %v7421 = vadd.f32 %v7348, %v7420
        %v7422 = vpop.f32.mrf.mxu0
        %v7423 = vadd.f32 %v7350, %v7422
        %v7424 = vpop.f32.mrf.mxu0
        %v7425 = vadd.f32 %v7352, %v7424
        %7426 = vmatprep.mubr.bf16.mxu0 %v6906
        %7427 = vmatmul.mubr.bf16.gmra.mxu0 %v6905
        %v7428 = vpop.f32.mrf.mxu0
        %v7429 = vadd.f32 %v7356, %v7428
        %v7430 = vpop.f32.mrf.mxu0
        %v7431 = vadd.f32 %v7358, %v7430
        %v7432 = vpop.f32.mrf.mxu0
        %v7433 = vadd.f32 %v7360, %v7432
        %v7434 = vpop.f32.mrf.mxu0
        %v7435 = vadd.f32 %v7362, %v7434
        %7436 = vdwg.mxu0
        %v7437 = vld [vmem:[%s12] sm:$0x3]
        %v7438 = vld [vmem:[%s13] sm:$0x3]
        %v7439 = vld [vmem:[%s14] sm:$0x3]
        %v7440 = vld [vmem:[#allocation18] sm:$0xff]
        %v7441 = vld [vmem:[#allocation18 + $0x8] sm:$0xff]
        %v7442 = vld [vmem:[#allocation18 + $0x10] sm:$0xff]
        %v7443 = vld [vmem:[#allocation18 + $0x18] sm:$0xff]
        %v7444 = vld [vmem:[#allocation18 + $0x20] sm:$0xff]
        %v7445 = vld [vmem:[#allocation18 + $0x28] sm:$0xff]
        %v7446 = vld [vmem:[#allocation18 + $0x30] sm:$0xff]
        %v7447 = vld [vmem:[#allocation18 + $0x38] sm:$0xff]
        %v7448 = vadd.f32 %v7399, %v7403
        %v7449 = vadd.f32 %v7448, %v7409
        %v7450 = vadd.f32 %v7449, %v7413
        %v7451 = vadd.f32 %v7450, %v7419
        %v7452 = vadd.f32 %v7451, %v7423
        %v7453 = vadd.f32 %v7452, %v7429
        %v7454 = vadd.f32 %v7453, %v7433
        %v7455 = vrot.slane %v7454, 4
        %v7456 = vadd.f32 %v7454, %v7455
        %v7457 = vrot.slane %v7456, 2
        %v7458 = vadd.f32 %v7456, %v7457
        %v7459 = vrot.slane %v7458, 1
        %v7460 = vadd.f32 %v7458, %v7459
        %v7461 = vadd.f32 %v7401, %v7405
        %v7462 = vadd.f32 %v7461, %v7411
        %v7463 = vadd.f32 %v7462, %v7415
        %v7464 = vadd.f32 %v7463, %v7421
        %v7465 = vadd.f32 %v7464, %v7425
        %v7466 = vadd.f32 %v7465, %v7431
        %v7467 = vadd.f32 %v7466, %v7435
        %v7468 = vrot.slane %v7467, 4
        %v7469 = vadd.f32 %v7467, %v7468
        %v7470 = vrot.slane %v7469, 2
        %v7471 = vadd.f32 %v7469, %v7470
        %v7472 = vrot.slane %v7471, 1
        %v7473 = vadd.f32 %v7471, %v7472
        %v7474 = vmul.f32 %v7399, %v7399
        %v7475 = vmul.f32 %v7401, %v7401
        %v7476 = vmul.f32 %v7403, %v7403
        %v7477 = vmul.f32 %v7405, %v7405
        %v7478 = vmul.f32 %v7409, %v7409
        %v7479 = vmul.f32 %v7411, %v7411
        %v7480 = vmul.f32 %v7413, %v7413
        %v7481 = vmul.f32 %v7415, %v7415
        %v7482 = vmul.f32 %v7419, %v7419
        %v7483 = vmul.f32 %v7421, %v7421
        %v7484 = vmul.f32 %v7423, %v7423
        %v7485 = vmul.f32 %v7425, %v7425
        %v7486 = vmul.f32 %v7429, %v7429
        %v7487 = vmul.f32 %v7431, %v7431
        %v7488 = vmul.f32 %v7433, %v7433
        %v7489 = vmul.f32 %v7435, %v7435
        %v7490 = vadd.f32 %v7474, %v7476
        %v7491 = vadd.f32 %v7490, %v7478
        %v7492 = vadd.f32 %v7491, %v7480
        %v7493 = vadd.f32 %v7492, %v7482
        %v7494 = vadd.f32 %v7493, %v7484
        %v7495 = vadd.f32 %v7494, %v7486
        %v7496 = vadd.f32 %v7495, %v7488
        %v7497 = vrot.slane %v7496, 4
        %v7498 = vadd.f32 %v7496, %v7497
        %v7499 = vrot.slane %v7498, 2
        %v7500 = vadd.f32 %v7498, %v7499
        %v7501 = vrot.slane %v7500, 1
        %v7502 = vadd.f32 %v7500, %v7501
        %v7503 = vadd.f32 %v7475, %v7477
        %v7504 = vadd.f32 %v7503, %v7479
        %v7505 = vadd.f32 %v7504, %v7481
        %v7506 = vadd.f32 %v7505, %v7483
        %v7507 = vadd.f32 %v7506, %v7485
        %v7508 = vadd.f32 %v7507, %v7487
        %v7509 = vadd.f32 %v7508, %v7489
        %v7510 = vrot.slane %v7509, 4
        %v7511 = vadd.f32 %v7509, %v7510
        %v7512 = vrot.slane %v7511, 2
        %v7513 = vadd.f32 %v7511, %v7512
        %v7514 = vrot.slane %v7513, 1
        %v7515 = vadd.f32 %v7513, %v7514
        %v7516 = vmul.f32 %v7437, 64.0
        %v7518 = vlaneseq
        %v7519 = vshrl.u32 %v7518, 7
        %v7520 = vsub.s32 0, %v7519
        %v7521 = vrot.slane %v7516, %v7520
        %v7522 = vlaneseq
        %v7523 = vshrl.u32 %v7522, 7
        %v7524 = vsub.s32 1, %v7523
        %v7525 = vrot.slane %v7516, %v7524
        %v7528 = vadd.f32 %v7460, %v7521
        %v7529 = vadd.f32 %v7473, %v7525
        %v7530 = vmul.f32 %v7437, 2.0
        %v7533 = vcombine.low %v7460, %v7473
        %v7535 = vunpack.c.l.s4 1966171168
        %v7536 = vunpack.c.0.s8 %v7535
        %v7537 = vlaneseq
        %v7538 = vshrl.u32 %v7537, 7
        %v7539 = vsub.s32 %v7536, %v7538
        %v7540 = vrot.slane %v7533, %v7539
        %v7542 = vunpack.c.l.s4 1966171168
        %v7543 = vunpack.c.0.s8 %v7542
        %v7544 = vlaneseq
        %v7545 = vshrl.u32 %v7544, 7
        %v7546 = vsub.s32 %v7543, %v7545
        %v7547 = vrot.slane %v7540, %v7546
        %v7549 = vmul.f32 %v7530, %v7547
        %v7551 = vlaneseq
        %v7552 = vshrl.u32 %v7551, 7
        %v7553 = vsub.s32 0, %v7552
        %v7554 = vrot.slane %v7549, %v7553
        %v7555 = vlaneseq
        %v7556 = vshrl.u32 %v7555, 7
        %v7557 = vsub.s32 1, %v7556
        %v7558 = vrot.slane %v7549, %v7557
        %v7561 = vadd.f32 %v7502, %v7554
        %v7562 = vadd.f32 %v7515, %v7558
        %v7563 = vmul.f32 %v7437, %v7437
        %v7564 = vmul.f32 %v7563, 64.0
        %v7566 = vlaneseq
        %v7567 = vshrl.u32 %v7566, 7
        %v7568 = vsub.s32 0, %v7567
        %v7569 = vrot.slane %v7564, %v7568
        %v7570 = vlaneseq
        %v7571 = vshrl.u32 %v7570, 7
        %v7572 = vsub.s32 1, %v7571
        %v7573 = vrot.slane %v7564, %v7572
        %v7576 = vadd.f32 %v7561, %v7569
        %v7577 = vadd.f32 %v7562, %v7573
        %7578 = vmatprep.subr.mxu0 0.0
        %7579 = vmatpush1.xpose.msra.mxu0 0.0
        %7580 = vmatprep.subr.mxu0 0.0
        %7581 = vmatpush1.xpose.msra.mxu0 0.0
        %7582 = vmatprep.subr.mxu0 0.0
        %7583 = vmatpush1.xpose.msra.mxu0 0.0
        %7584 = vmatprep.subr.mxu0 0.0
        %7585 = vmatpush1.xpose.msra.mxu0 0.0
        %7586 = vmatprep.subr.mxu0 0.0
        %7587 = vmatpush1.xpose.msra.mxu0 0.0
        %7588 = vmatprep.subr.mxu0 0.0
        %7589 = vmatpush1.xpose.msra.mxu0 0.0
        %7590 = vmatprep.subr.mxu0 0.0
        %7591 = vmatpush1.xpose.msra.mxu0 0.0
        %7592 = vmatprep.subr.mxu0 0.0
        %7593 = vmatpush1.xpose.msra.mxu0 0.0
        %7594 = vmatprep.subr.mxu0 0.0
        %7595 = vmatpush1.xpose.msra.mxu0 0.0
        %7596 = vmatprep.subr.mxu0 0.0
        %7597 = vmatpush1.xpose.msra.mxu0 0.0
        %7598 = vmatprep.subr.mxu0 0.0
        %7599 = vmatpush1.xpose.msra.mxu0 0.0
        %7600 = vmatprep.subr.mxu0 0.0
        %7601 = vmatpush1.xpose.msra.mxu0 0.0
        %7602 = vmatprep.subr.mxu0 %v7447
        %7603 = vmatpush1.xpose.msra.mxu0 %v7446
        %7604 = vmatprep.subr.mxu0 %v7445
        %7605 = vmatpush1.xpose.msra.mxu0 %v7444
        %7606 = vmatprep.subr.mxu0 %v7443
        %7607 = vmatpush1.xpose.msra.mxu0 %v7442
        %7608 = vmatprep.subr.mxu0 %v7441
        %7609 = vmatpush1.xpose.msra.mxu0 %v7440
        %7610 = vmatprep.subr.mxu0 0.0
        %7611 = vmatpush2.xpose.msra.mxu0 0.0
        %7612 = vmatprep.subr.mxu0 0.0
        %7613 = vmatpush2.xpose.msra.mxu0 0.0
        %7614 = vmatprep.subr.mxu0 0.0
        %7615 = vmatpush2.xpose.msra.mxu0 0.0
        %7616 = vmatprep.subr.mxu0 0.0
        %7617 = vmatpush2.xpose.msra.mxu0 0.0
        %7618 = vmatprep.subr.mxu0 0.0
        %7619 = vmatpush2.xpose.msra.mxu0 0.0
        %7620 = vmatprep.subr.mxu0 0.0
        %7621 = vmatpush2.xpose.msra.mxu0 0.0
        %7622 = vmatprep.subr.mxu0 0.0
        %7623 = vmatpush2.xpose.msra.mxu0 0.0
        %7624 = vmatprep.subr.mxu0 0.0
        %7625 = vmatpush2.xpose.msra.mxu0 0.0
        %7626 = vmatprep.subr.mxu0 0.0
        %7627 = vmatpush2.xpose.msra.mxu0 0.0
        %7628 = vmatprep.subr.mxu0 0.0
        %7629 = vmatpush2.xpose.msra.mxu0 0.0
        %7630 = vmatprep.subr.mxu0 0.0
        %7631 = vmatpush2.xpose.msra.mxu0 0.0
        %7632 = vmatprep.subr.mxu0 0.0
        %7633 = vmatpush2.xpose.msra.mxu0 0.0
        %7634 = vmatprep.subr.mxu0 0.0
        %7635 = vmatpush2.xpose.msra.mxu0 0.0
        %7636 = vmatprep.subr.mxu0 0.0
        %7637 = vmatpush2.xpose.msra.mxu0 0.0
        %7638 = vmatprep.subr.mxu0 0.0
        %7639 = vmatpush2.xpose.msra.mxu0 0.0
        %7640 = vmatprep.subr.mxu0 0.0
        %7641 = vmatpush2.xpose.msra.mxu0 0.0
        %7642 = vmatprep.mubr.f32.mxu0 %v7529
        %7643 = vmatmul.mubr.f32.gmra.mxu0 %v7528
        %v7644 = vpop.f32.mrf.mxu0
        %v7645 = vadd.f32 0.0, %v7644
        %v7646 = vpop.f32.mrf.mxu0
        %7647 = vdwg.mxu0
        %7648 = vmatprep.subr.mxu0 0.0
        %7649 = vmatpush1.xpose.msra.mxu0 0.0
        %7650 = vmatprep.subr.mxu0 0.0
        %7651 = vmatpush1.xpose.msra.mxu0 0.0
        %7652 = vmatprep.subr.mxu0 0.0
        %7653 = vmatpush1.xpose.msra.mxu0 0.0
        %7654 = vmatprep.subr.mxu0 0.0
        %7655 = vmatpush1.xpose.msra.mxu0 0.0
        %7656 = vmatprep.subr.mxu0 0.0
        %7657 = vmatpush1.xpose.msra.mxu0 0.0
        %7658 = vmatprep.subr.mxu0 0.0
        %7659 = vmatpush1.xpose.msra.mxu0 0.0
        %7660 = vmatprep.subr.mxu0 0.0
        %7661 = vmatpush1.xpose.msra.mxu0 0.0
        %7662 = vmatprep.subr.mxu0 0.0
        %7663 = vmatpush1.xpose.msra.mxu0 0.0
        %7664 = vmatprep.subr.mxu0 0.0
        %7665 = vmatpush1.xpose.msra.mxu0 0.0
        %7666 = vmatprep.subr.mxu0 0.0
        %7667 = vmatpush1.xpose.msra.mxu0 0.0
        %7668 = vmatprep.subr.mxu0 0.0
        %7669 = vmatpush1.xpose.msra.mxu0 0.0
        %7670 = vmatprep.subr.mxu0 0.0
        %7671 = vmatpush1.xpose.msra.mxu0 0.0
        %7672 = vmatprep.subr.mxu0 %v7447
        %7673 = vmatpush1.xpose.msra.mxu0 %v7446
        %7674 = vmatprep.subr.mxu0 %v7445
        %7675 = vmatpush1.xpose.msra.mxu0 %v7444
        %7676 = vmatprep.subr.mxu0 %v7443
        %7677 = vmatpush1.xpose.msra.mxu0 %v7442
        %7678 = vmatprep.subr.mxu0 %v7441
        %7679 = vmatpush1.xpose.msra.mxu0 %v7440
        %7680 = vmatprep.subr.mxu0 0.0
        %7681 = vmatpush2.xpose.msra.mxu0 0.0
        %7682 = vmatprep.subr.mxu0 0.0
        %7683 = vmatpush2.xpose.msra.mxu0 0.0
        %7684 = vmatprep.subr.mxu0 0.0
        %7685 = vmatpush2.xpose.msra.mxu0 0.0
        %7686 = vmatprep.subr.mxu0 0.0
        %7687 = vmatpush2.xpose.msra.mxu0 0.0
        %7688 = vmatprep.subr.mxu0 0.0
        %7689 = vmatpush2.xpose.msra.mxu0 0.0
        %7690 = vmatprep.subr.mxu0 0.0
        %7691 = vmatpush2.xpose.msra.mxu0 0.0
        %7692 = vmatprep.subr.mxu0 0.0
        %7693 = vmatpush2.xpose.msra.mxu0 0.0
        %7694 = vmatprep.subr.mxu0 0.0
        %7695 = vmatpush2.xpose.msra.mxu0 0.0
        %7696 = vmatprep.subr.mxu0 0.0
        %7697 = vmatpush2.xpose.msra.mxu0 0.0
        %7698 = vmatprep.subr.mxu0 0.0
        %7699 = vmatpush2.xpose.msra.mxu0 0.0
        %7700 = vmatprep.subr.mxu0 0.0
        %7701 = vmatpush2.xpose.msra.mxu0 0.0
        %7702 = vmatprep.subr.mxu0 0.0
        %7703 = vmatpush2.xpose.msra.mxu0 0.0
        %7704 = vmatprep.subr.mxu0 0.0
        %7705 = vmatpush2.xpose.msra.mxu0 0.0
        %7706 = vmatprep.subr.mxu0 0.0
        %7707 = vmatpush2.xpose.msra.mxu0 0.0
        %7708 = vmatprep.subr.mxu0 0.0
        %7709 = vmatpush2.xpose.msra.mxu0 0.0
        %7710 = vmatprep.subr.mxu0 0.0
        %7711 = vmatpush2.xpose.msra.mxu0 0.0
        %7712 = vmatprep.mubr.f32.mxu0 %v7577
        %7713 = vmatmul.mubr.f32.gmra.mxu0 %v7576
        %v7714 = vpop.f32.mrf.mxu0
        %v7715 = vadd.f32 0.0, %v7714
        %v7716 = vpop.f32.mrf.mxu0
        %7717 = vdwg.mxu0
        %v7718 = vrcp.pop 512.0
        %v7719 = vmul.f32 %v7645, %v7718
        %v7720 = vmul.f32 %v7715, %v7718
        %v7721 = vmul.f32 %v7719, %v7719
        %v7722 = vsub.f32 %v7720, %v7721
        %v7723 = vadd.f32 %v7722, 1e-05
        %v7724 = vrsqrt.pop %v7723
        %v7726 = vsel %vm2537, %v7719, 0
        %7728 = vmatprep.subr.mxu0 0.0
        %7729 = vmatpush1.msra.mxu0 0.0
        %7730 = vmatprep.subr.mxu0 0.0
        %7731 = vmatpush1.msra.mxu0 0.0
        %7732 = vmatprep.subr.mxu0 0.0
        %7733 = vmatpush1.msra.mxu0 0.0
        %7734 = vmatprep.subr.mxu0 0.0
        %7735 = vmatpush1.msra.mxu0 0.0
        %7736 = vmatprep.subr.mxu0 0.0
        %7737 = vmatpush1.msra.mxu0 0.0
        %7738 = vmatprep.subr.mxu0 0.0
        %7739 = vmatpush1.msra.mxu0 0.0
        %7740 = vmatprep.subr.mxu0 0.0
        %7741 = vmatpush1.msra.mxu0 0.0
        %7742 = vmatprep.subr.mxu0 0.0
        %7743 = vmatpush1.msra.mxu0 0.0
        %7744 = vmatprep.subr.mxu0 0.0
        %7745 = vmatpush1.msra.mxu0 0.0
        %7746 = vmatprep.subr.mxu0 0.0
        %7747 = vmatpush1.msra.mxu0 0.0
        %7748 = vmatprep.subr.mxu0 0.0
        %7749 = vmatpush1.msra.mxu0 0.0
        %7750 = vmatprep.subr.mxu0 0.0
        %7751 = vmatpush1.msra.mxu0 0.0
        %7752 = vmatprep.subr.mxu0 %v7447
        %7753 = vmatpush1.msra.mxu0 %v7446
        %7754 = vmatprep.subr.mxu0 %v7445
        %7755 = vmatpush1.msra.mxu0 %v7444
        %7756 = vmatprep.subr.mxu0 %v7443
        %7757 = vmatpush1.msra.mxu0 %v7442
        %7758 = vmatprep.subr.mxu0 %v7441
        %7759 = vmatpush1.msra.mxu0 %v7440
        %7760 = vmatprep.subr.mxu0 0.0
        %7761 = vmatpush2.msra.mxu0 0.0
        %7762 = vmatprep.subr.mxu0 0.0
        %7763 = vmatpush2.msra.mxu0 0.0
        %7764 = vmatprep.subr.mxu0 0.0
        %7765 = vmatpush2.msra.mxu0 0.0
        %7766 = vmatprep.subr.mxu0 0.0
        %7767 = vmatpush2.msra.mxu0 0.0
        %7768 = vmatprep.subr.mxu0 0.0
        %7769 = vmatpush2.msra.mxu0 0.0
        %7770 = vmatprep.subr.mxu0 0.0
        %7771 = vmatpush2.msra.mxu0 0.0
        %7772 = vmatprep.subr.mxu0 0.0
        %7773 = vmatpush2.msra.mxu0 0.0
        %7774 = vmatprep.subr.mxu0 0.0
        %7775 = vmatpush2.msra.mxu0 0.0
        %7776 = vmatprep.subr.mxu0 0.0
        %7777 = vmatpush2.msra.mxu0 0.0
        %7778 = vmatprep.subr.mxu0 0.0
        %7779 = vmatpush2.msra.mxu0 0.0
        %7780 = vmatprep.subr.mxu0 0.0
        %7781 = vmatpush2.msra.mxu0 0.0
        %7782 = vmatprep.subr.mxu0 0.0
        %7783 = vmatpush2.msra.mxu0 0.0
        %7784 = vmatprep.subr.mxu0 0.0
        %7785 = vmatpush2.msra.mxu0 0.0
        %7786 = vmatprep.subr.mxu0 0.0
        %7787 = vmatpush2.msra.mxu0 0.0
        %7788 = vmatprep.subr.mxu0 0.0
        %7789 = vmatpush2.msra.mxu0 0.0
        %7790 = vmatprep.subr.mxu0 0.0
        %7791 = vmatpush2.msra.mxu0 0.0
        %7792 = vmatprep.mubr.f32.mxu0 0.0
        %7793 = vmatmul.mubr.f32.gmra.mxu0 %v7726
        %v7794 = vpop.f32.mrf.mxu0
        %v7795 = vadd.f32 0.0, %v7794
        %v7796 = vpop.f32.mrf.mxu0
        %v7797 = vadd.f32 0.0, %v7796
        %7798 = vdwg.mxu0
        %v7800 = vsel %vm2537, %v7724, 0
        %7802 = vmatprep.subr.mxu0 0.0
        %7803 = vmatpush1.msra.mxu0 0.0
        %7804 = vmatprep.subr.mxu0 0.0
        %7805 = vmatpush1.msra.mxu0 0.0
        %7806 = vmatprep.subr.mxu0 0.0
        %7807 = vmatpush1.msra.mxu0 0.0
        %7808 = vmatprep.subr.mxu0 0.0
        %7809 = vmatpush1.msra.mxu0 0.0
        %7810 = vmatprep.subr.mxu0 0.0
        %7811 = vmatpush1.msra.mxu0 0.0
        %7812 = vmatprep.subr.mxu0 0.0
        %7813 = vmatpush1.msra.mxu0 0.0
        %7814 = vmatprep.subr.mxu0 0.0
        %7815 = vmatpush1.msra.mxu0 0.0
        %7816 = vmatprep.subr.mxu0 0.0
        %7817 = vmatpush1.msra.mxu0 0.0
        %7818 = vmatprep.subr.mxu0 0.0
        %7819 = vmatpush1.msra.mxu0 0.0
        %7820 = vmatprep.subr.mxu0 0.0
        %7821 = vmatpush1.msra.mxu0 0.0
        %7822 = vmatprep.subr.mxu0 0.0
        %7823 = vmatpush1.msra.mxu0 0.0
        %7824 = vmatprep.subr.mxu0 0.0
        %7825 = vmatpush1.msra.mxu0 0.0
        %7826 = vmatprep.subr.mxu0 %v7447
        %7827 = vmatpush1.msra.mxu0 %v7446
        %7828 = vmatprep.subr.mxu0 %v7445
        %7829 = vmatpush1.msra.mxu0 %v7444
        %7830 = vmatprep.subr.mxu0 %v7443
        %7831 = vmatpush1.msra.mxu0 %v7442
        %7832 = vmatprep.subr.mxu0 %v7441
        %7833 = vmatpush1.msra.mxu0 %v7440
        %7834 = vmatprep.subr.mxu0 0.0
        %7835 = vmatpush2.msra.mxu0 0.0
        %7836 = vmatprep.subr.mxu0 0.0
        %7837 = vmatpush2.msra.mxu0 0.0
        %7838 = vmatprep.subr.mxu0 0.0
        %7839 = vmatpush2.msra.mxu0 0.0
        %7840 = vmatprep.subr.mxu0 0.0
        %7841 = vmatpush2.msra.mxu0 0.0
        %7842 = vmatprep.subr.mxu0 0.0
        %7843 = vmatpush2.msra.mxu0 0.0
        %7844 = vmatprep.subr.mxu0 0.0
        %7845 = vmatpush2.msra.mxu0 0.0
        %7846 = vmatprep.subr.mxu0 0.0
        %7847 = vmatpush2.msra.mxu0 0.0
        %7848 = vmatprep.subr.mxu0 0.0
        %7849 = vmatpush2.msra.mxu0 0.0
        %7850 = vmatprep.subr.mxu0 0.0
        %7851 = vmatpush2.msra.mxu0 0.0
        %7852 = vmatprep.subr.mxu0 0.0
        %7853 = vmatpush2.msra.mxu0 0.0
        %7854 = vmatprep.subr.mxu0 0.0
        %7855 = vmatpush2.msra.mxu0 0.0
        %7856 = vmatprep.subr.mxu0 0.0
        %7857 = vmatpush2.msra.mxu0 0.0
        %7858 = vmatprep.subr.mxu0 0.0
        %7859 = vmatpush2.msra.mxu0 0.0
        %7860 = vmatprep.subr.mxu0 0.0
        %7861 = vmatpush2.msra.mxu0 0.0
        %7862 = vmatprep.subr.mxu0 0.0
        %7863 = vmatpush2.msra.mxu0 0.0
        %7864 = vmatprep.subr.mxu0 0.0
        %7865 = vmatpush2.msra.mxu0 0.0
        %7866 = vmatprep.mubr.f32.mxu0 0.0
        %7867 = vmatmul.mubr.f32.gmra.mxu0 %v7800
        %v7868 = vpop.f32.mrf.mxu0
        %v7869 = vadd.f32 0.0, %v7868
        %v7870 = vpop.f32.mrf.mxu0
        %v7871 = vadd.f32 0.0, %v7870
        %7872 = vdwg.mxu0
        %v7875 = vcombine.low %v7869, %v7871
        %v7877 = vunpack.c.l.s4 1966171168
        %v7878 = vunpack.c.0.s8 %v7877
        %v7879 = vlaneseq
        %v7880 = vshrl.u32 %v7879, 7
        %v7881 = vsub.s32 %v7878, %v7880
        %v7882 = vrot.slane %v7875, %v7881
        %v7884 = vunpack.c.l.s4 1966171168
        %v7885 = vunpack.c.0.s8 %v7884
        %v7886 = vlaneseq
        %v7887 = vshrl.u32 %v7886, 7
        %v7888 = vsub.s32 %v7885, %v7887
        %v7889 = vrot.slane %v7882, %v7888
        %v7891 = vmul.f32 %v7438, %v7889
        %v7894 = vcombine.low %v7795, %v7797
        %v7896 = vunpack.c.l.s4 1966171168
        %v7897 = vunpack.c.0.s8 %v7896
        %v7898 = vlaneseq
        %v7899 = vshrl.u32 %v7898, 7
        %v7900 = vsub.s32 %v7897, %v7899
        %v7901 = vrot.slane %v7894, %v7900
        %v7903 = vunpack.c.l.s4 1966171168
        %v7904 = vunpack.c.0.s8 %v7903
        %v7905 = vlaneseq
        %v7906 = vshrl.u32 %v7905, 7
        %v7907 = vsub.s32 %v7904, %v7906
        %v7908 = vrot.slane %v7901, %v7907
        %v7910 = vsub.f32 %v7437, %v7908
        %v7911 = vmul.f32 %v7910, %v7891
        %v7912 = vadd.f32 %v7439, %v7911
        %v7914 = vlaneseq
        %v7915 = vshrl.u32 %v7914, 7
        %v7916 = vsub.s32 0, %v7915
        %v7917 = vrot.slane %v7891, %v7916
        %v7918 = vlaneseq
        %v7919 = vshrl.u32 %v7918, 7
        %v7920 = vsub.s32 1, %v7919
        %v7921 = vrot.slane %v7891, %v7920
        %v7924 = vmul.f32 %v7399, %v7917
        %v7925 = vmul.f32 %v7401, %v7921
        %v7926 = vmul.f32 %v7403, %v7917
        %v7927 = vmul.f32 %v7405, %v7921
        %v7928 = vmul.f32 %v7409, %v7917
        %v7929 = vmul.f32 %v7411, %v7921
        %v7930 = vmul.f32 %v7413, %v7917
        %v7931 = vmul.f32 %v7415, %v7921
        %v7932 = vmul.f32 %v7419, %v7917
        %v7933 = vmul.f32 %v7421, %v7921
        %v7934 = vmul.f32 %v7423, %v7917
        %v7935 = vmul.f32 %v7425, %v7921
        %v7936 = vmul.f32 %v7429, %v7917
        %v7937 = vmul.f32 %v7431, %v7921
        %v7938 = vmul.f32 %v7433, %v7917
        %v7939 = vmul.f32 %v7435, %v7921
        %v7941 = vlaneseq
        %v7942 = vshrl.u32 %v7941, 7
        %v7943 = vsub.s32 0, %v7942
        %v7944 = vrot.slane %v7912, %v7943
        %v7945 = vlaneseq
        %v7946 = vshrl.u32 %v7945, 7
        %v7947 = vsub.s32 1, %v7946
        %v7948 = vrot.slane %v7912, %v7947
        %v7951 = vadd.f32 %v7924, %v7944
        %v7952 = vadd.f32 %v7925, %v7948
        %v7953 = vadd.f32 %v7926, %v7944
        %v7954 = vadd.f32 %v7927, %v7948
        %v7955 = vadd.f32 %v7928, %v7944
        %v7956 = vadd.f32 %v7929, %v7948
        %v7957 = vadd.f32 %v7930, %v7944
        %v7958 = vadd.f32 %v7931, %v7948
        %v7959 = vadd.f32 %v7932, %v7944
        %v7960 = vadd.f32 %v7933, %v7948
        %v7961 = vadd.f32 %v7934, %v7944
        %v7962 = vadd.f32 %v7935, %v7948
        %v7963 = vadd.f32 %v7936, %v7944
        %v7964 = vadd.f32 %v7937, %v7948
        %v7965 = vadd.f32 %v7938, %v7944
        %v7966 = vadd.f32 %v7939, %v7948
        %vm7967 = vcmp.ge.f32.partialorder %v7951, 0.0
        %vm7968 = vcmp.ge.f32.partialorder %v7952, 0.0
        %vm7969 = vcmp.ge.f32.partialorder %v7953, 0.0
        %vm7970 = vcmp.ge.f32.partialorder %v7954, 0.0
        %vm7971 = vcmp.ge.f32.partialorder %v7955, 0.0
        %vm7972 = vcmp.ge.f32.partialorder %v7956, 0.0
        %vm7973 = vcmp.ge.f32.partialorder %v7957, 0.0
        %vm7974 = vcmp.ge.f32.partialorder %v7958, 0.0
        %vm7975 = vcmp.ge.f32.partialorder %v7959, 0.0
        %vm7976 = vcmp.ge.f32.partialorder %v7960, 0.0
        %vm7977 = vcmp.ge.f32.partialorder %v7961, 0.0
        %vm7978 = vcmp.ge.f32.partialorder %v7962, 0.0
        %vm7979 = vcmp.ge.f32.partialorder %v7963, 0.0
        %vm7980 = vcmp.ge.f32.partialorder %v7964, 0.0
        %vm7981 = vcmp.ge.f32.partialorder %v7965, 0.0
        %vm7982 = vcmp.ge.f32.partialorder %v7966, 0.0
        %v7983 = vmul.f32 %v7951, 0.01
        %v7984 = vmul.f32 %v7952, 0.01
        %v7985 = vmul.f32 %v7953, 0.01
        %v7986 = vmul.f32 %v7954, 0.01
        %v7987 = vmul.f32 %v7955, 0.01
        %v7988 = vmul.f32 %v7956, 0.01
        %v7989 = vmul.f32 %v7957, 0.01
        %v7990 = vmul.f32 %v7958, 0.01
        %v7991 = vmul.f32 %v7959, 0.01
        %v7992 = vmul.f32 %v7960, 0.01
        %v7993 = vmul.f32 %v7961, 0.01
        %v7994 = vmul.f32 %v7962, 0.01
        %v7995 = vmul.f32 %v7963, 0.01
        %v7996 = vmul.f32 %v7964, 0.01
        %v7997 = vmul.f32 %v7965, 0.01
        %v7998 = vmul.f32 %v7966, 0.01
        %v7999 = vsel %vm7967, %v7951, %v7983
        %v8000 = vsel %vm7968, %v7952, %v7984
        %v8001 = vsel %vm7969, %v7953, %v7985
        %v8002 = vsel %vm7970, %v7954, %v7986
        %v8003 = vsel %vm7971, %v7955, %v7987
        %v8004 = vsel %vm7972, %v7956, %v7988
        %v8005 = vsel %vm7973, %v7957, %v7989
        %v8006 = vsel %vm7974, %v7958, %v7990
        %v8007 = vsel %vm7975, %v7959, %v7991
        %v8008 = vsel %vm7976, %v7960, %v7992
        %v8009 = vsel %vm7977, %v7961, %v7993
        %v8010 = vsel %vm7978, %v7962, %v7994
        %v8011 = vsel %vm7979, %v7963, %v7995
        %v8012 = vsel %vm7980, %v7964, %v7996
        %v8013 = vsel %vm7981, %v7965, %v7997
        %v8014 = vsel %vm7982, %v7966, %v7998
        %v8015 = vld [vmem:[%s16] sm:$0x3]
        %v8017 = vlaneseq
        %v8018 = vshrl.u32 %v8017, 7
        %v8019 = vsub.s32 0, %v8018
        %v8020 = vrot.slane %v8015, %v8019
        %v8021 = vlaneseq
        %v8022 = vshrl.u32 %v8021, 7
        %v8023 = vsub.s32 1, %v8022
        %v8024 = vrot.slane %v8015, %v8023
        %v8027 = vmul.f32 %v7999, %v8020
        %v8028 = vmul.f32 %v8000, %v8024
        %v8029 = vmul.f32 %v8001, %v8020
        %v8030 = vmul.f32 %v8002, %v8024
        %v8031 = vmul.f32 %v8003, %v8020
        %v8032 = vmul.f32 %v8004, %v8024
        %v8033 = vmul.f32 %v8005, %v8020
        %v8034 = vmul.f32 %v8006, %v8024
        %v8035 = vmul.f32 %v8007, %v8020
        %v8036 = vmul.f32 %v8008, %v8024
        %v8037 = vmul.f32 %v8009, %v8020
        %v8038 = vmul.f32 %v8010, %v8024
        %v8039 = vmul.f32 %v8011, %v8020
        %v8040 = vmul.f32 %v8012, %v8024
        %v8041 = vmul.f32 %v8013, %v8020
        %v8042 = vmul.f32 %v8014, %v8024
        %v8043 = vadd.f32 %v8027, %v8028
        %8044 = vadd.xlane.f32.xlu0 %v8043
        %v8045 = vpop.xlane.xlu0 %8044
        %v8046 = vadd.f32 %v8029, %v8030
        %8047 = vadd.xlane.f32.xlu0 %v8046
        %v8048 = vpop.xlane.xlu0 %8047
        %v8049 = vadd.f32 %v8031, %v8032
        %8050 = vadd.xlane.f32.xlu0 %v8049
        %v8051 = vpop.xlane.xlu0 %8050
        %v8052 = vadd.f32 %v8033, %v8034
        %8053 = vadd.xlane.f32.xlu0 %v8052
        %v8054 = vpop.xlane.xlu0 %8053
        %v8055 = vadd.f32 %v8035, %v8036
        %8056 = vadd.xlane.f32.xlu0 %v8055
        %v8057 = vpop.xlane.xlu0 %8056
        %v8058 = vadd.f32 %v8037, %v8038
        %8059 = vadd.xlane.f32.xlu0 %v8058
        %v8060 = vpop.xlane.xlu0 %8059
        %v8061 = vadd.f32 %v8039, %v8040
        %8062 = vadd.xlane.f32.xlu0 %v8061
        %v8063 = vpop.xlane.xlu0 %8062
        %v8064 = vadd.f32 %v8041, %v8042
        %8065 = vadd.xlane.f32.xlu0 %v8064
        %v8066 = vpop.xlane.xlu0 %8065
        %s8067 = sld [smem:[#allocation2]]
        %v8068 = vstv %s8067
        %v8069 = vadd.f32 %v8045, %v8068
        %v8070 = vadd.f32 %v8048, %v8068
        %v8071 = vadd.f32 %v8051, %v8068
        %v8072 = vadd.f32 %v8054, %v8068
        %v8073 = vadd.f32 %v8057, %v8068
        %v8074 = vadd.f32 %v8060, %v8068
        %v8075 = vadd.f32 %v8063, %v8068
        %v8076 = vadd.f32 %v8066, %v8068
        %v8085 = vlaneseq
        %v8086 = vand.u32 %v8085, 127
        %v8087 = vlaneseq
        %v8088 = vshrl.u32 %v8087, 7
        %v8089 = vsub.s32 %v8086, %v8088
        %v8090 = vrot.slane %v8069, %v8089
        %v8091 = vadd.s32 %v8086, 4294967288
        %v8092 = vlaneseq
        %v8093 = vshrl.u32 %v8092, 7
        %v8094 = vsub.s32 %v8091, %v8093
        %v8095 = vrot.slane %v8070, %v8094
        %vm8096 = vcmask 130112
        %v8097 = vsel %vm8096, %v8095, %v8090
        %v8098 = vadd.s32 %v8086, 4294967280
        %v8099 = vlaneseq
        %v8100 = vshrl.u32 %v8099, 7
        %v8101 = vsub.s32 %v8098, %v8100
        %v8102 = vrot.slane %v8071, %v8101
        %vm8103 = vcmask 195712
        %v8104 = vsel %vm8103, %v8102, %v8097
        %v8105 = vadd.s32 %v8086, 4294967272
        %v8106 = vlaneseq
        %v8107 = vshrl.u32 %v8106, 7
        %v8108 = vsub.s32 %v8105, %v8107
        %v8109 = vrot.slane %v8072, %v8108
        %vm8110 = vcmask 261312
        %v8111 = vsel %vm8110, %v8109, %v8104
        %v8112 = vadd.s32 %v8086, 4294967264
        %v8113 = vlaneseq
        %v8114 = vshrl.u32 %v8113, 7
        %v8115 = vsub.s32 %v8112, %v8114
        %v8116 = vrot.slane %v8073, %v8115
        %vm8117 = vcmask 326912
        %v8118 = vsel %vm8117, %v8116, %v8111
        %v8119 = vadd.s32 %v8086, 4294967256
        %v8120 = vlaneseq
        %v8121 = vshrl.u32 %v8120, 7
        %v8122 = vsub.s32 %v8119, %v8121
        %v8123 = vrot.slane %v8074, %v8122
        %vm8124 = vcmask 392512
        %v8125 = vsel %vm8124, %v8123, %v8118
        %v8126 = vadd.s32 %v8086, 4294967248
        %v8127 = vlaneseq
        %v8128 = vshrl.u32 %v8127, 7
        %v8129 = vsub.s32 %v8126, %v8128
        %v8130 = vrot.slane %v8075, %v8129
        %vm8131 = vcmask 458112
        %v8132 = vsel %vm8131, %v8130, %v8125
        %v8133 = vadd.s32 %v8086, 4294967240
        %v8134 = vlaneseq
        %v8135 = vshrl.u32 %v8134, 7
        %v8136 = vsub.s32 %v8133, %v8135
        %v8137 = vrot.slane %v8076, %v8136
        %vm8138 = vcmask 523712
        %v8139 = vsel %vm8138, %v8137, %v8132
        %vm8141 = vcmask 516096
        %8142 = vst.msk [vmem:[%s743] sm:$0x1] %vm8141, %v8139
        %s8143 = sand.u32 %s439, 1
        %s8144 = scalar_lea.sflag [#allocation5], %s8143
        %s8145 = sand.u32 %s439, 1
        %s8146 = scalar_lea.vmem [#allocation20], %s8145
        // Predicated region
        $region133: #{tpu_custom_call.1} parent=91 // pred_check
          %p8147 = pneg %p449
        $region134: #{tpu_custom_call.1} parent=91 // pred_check_branch
          %8149 = sbr.rel (%p8147) target = $region136
        $region135: #{tpu_custom_call.1} parent=91 // pred_region
          %s8151 = ssub.s32 16, 16
          %8152 = vsyncadd %s8144, %s8151
          %s8153 = smul.addr %s43, 16
          %s8154 = scalar_lea.hbm %s18, %s8153
          %s8156 = sshll.u32 %s8146, 4
          %s8157 = int_to_ptr.vmem [resolvable:$true] %s8156
          %8159 = dma.vmem_to_hbm [thread:$0]  %s8157, 16, %s8154, %s8144
        $region136: #{tpu_custom_call.1} parent=91 // pred_fallthru
          _
      $region92: #{tpu_custom_call.1} parent=5 // pred_fallthru
        _
      %p8160 = scmp.le.s32.totalorder 2, %s38
      // Predicated region
      $region137: #{tpu_custom_call.1} parent=5 // pred_check
        %p8161 = pneg %p8160
      $region138: #{tpu_custom_call.1} parent=5 // pred_check_branch
        %8163 = sbr.rel (%p8161) target = $region140
      $region139: #{tpu_custom_call.1} parent=5 // pred_region
        %s8164 = ssub.s32 %s38, 2
        // Predicated region
        $region141: #{tpu_custom_call.1} parent=139 // pred_check
          %p8165 = pneg %p455
        $region142: #{tpu_custom_call.1} parent=139 // pred_check_branch
          %8167 = sbr.rel (%p8165) target = $region144
        $region143: #{tpu_custom_call.1} parent=139 // pred_region
          %s8168 = sand.u32 %s440, 1
          %s8169 = scalar_lea.sflag [#allocation5], %s8168
          %s8170 = sand.u32 %s440, 1
          %s8171 = scalar_lea.vmem [#allocation20], %s8170
          %8172 = dma.done %s8169, 16
        $region144: #{tpu_custom_call.1} parent=139 // pred_fallthru
          _
      $region140: #{tpu_custom_call.1} parent=5 // pred_fallthru
        _
    $region6: #{tpu_custom_call.1} parent=1 // loop_footer
      %s42 = sadd.s32 1, %s38
    $region7: #{tpu_custom_call.1} parent=1 // loop_footer_branch
      %37 = sbr.rel target = $region3
    $region8: #{tpu_custom_call.1} parent=1 // loop_exit
      _
    %8173 = vsyncpa [#allocation4], 1
    %s8174 = scalar_lea.sflag [#allocation4], 1
    %8175 = vsyncpa %s8174, 1
    %8176 = vsyncpa [#allocation7], 1
    %s8177 = scalar_lea.sflag [#allocation7], 1
    %8178 = vsyncpa %s8177, 1
    %8179 = vsyncpa [#allocation10], 1
    %8180 = vsyncpa [#allocation13], 1
    %8181 = vsyncpa [#allocation16], 1
    %8182 = vsyncpa [#allocation19], 1
    %8183 = vsyncpa [#allocation5], 1
    %s8184 = scalar_lea.sflag [#allocation5], 1
    %8185 = vsyncpa %s8184, 1

</llo_original>
